<compile_context>
chip_gen: v7x
topology: tpu7x:2x2x1
jax: 0.10.0
libtpu: 0.0.40
codegen_flags: <defaults>
</compile_context>

<pallas_src>
import jax
import jax.numpy as jnp
from jax.experimental import pallas as pl
from jax.experimental.pallas import tpu as pltpu


D_IN, D_H1, D_H2, D_OUT = 64 * 64 * 3, 512, 256, 1
TK = 4096            # K-tile of the first (large) matmul: 12288 / 4096 = 3 steps
TM_MAX = 256         # batch tile when B is large (matches MXU height)


def _leaky_relu(x, slope=0.2):
    return jnp.where(x > 0, x, slope * x)


def discriminator_kernel(x_ref, w1_ref, b1_ref, w2_ref, b2_ref, w3_ref, b3_ref,
                         out_ref, h1_acc):
    """Fused 3-layer MLP.

    Grid = (M blocks, K tiles of the first matmul).  x/W1 tiles arrive as
    bf16; partial products accumulate in an f32 VMEM scratch.  On the last K
    step we apply bias + LeakyReLU and run the small remaining layers fully
    in-kernel, writing the sigmoid output.
    """
    k = pl.program_id(1)

    @pl.when(k == 0)
    def _():
        h1_acc[...] = jnp.zeros_like(h1_acc)

    h1_acc[...] += jnp.dot(x_ref[...], w1_ref[...],
                           preferred_element_type=jnp.float32)

    @pl.when(k == pl.num_programs(1) - 1)
    def _():
        h1 = _leaky_relu(h1_acc[...] + b1_ref[...])
        h2 = _leaky_relu(
            jnp.dot(h1, w2_ref[...], preferred_element_type=jnp.float32)
            + b2_ref[...])
        # N=1 final layer is lane-sparse; negligible at these sizes.
        h3 = (jnp.dot(h2, w3_ref[...], preferred_element_type=jnp.float32)
              + b3_ref[...])
        out_ref[...] = jax.nn.sigmoid(h3).astype(out_ref.dtype)


def discriminator_forward(img, params):
    """img: (B, 3, 64, 64) float32, NCHW (PyTorch convention). Returns (B, 1)."""
    w1, b1, w2, b2, w3, b3 = params
    B = img.shape[0]

    # Same flattening as torch .view(B, -1); stream x and W1 as bf16.
    x = img.reshape(B, -1).astype(jnp.bfloat16)
    w1_bf = w1.astype(jnp.bfloat16)

    # Batch tiling: sublane-aligned single block for small B, TM_MAX blocks
    # (zero-padded) for training-sized batches.
    if B <= TM_MAX:
        tm = max(8, ((B + 7) // 8) * 8)
    else:
        tm = TM_MAX
    pad = (-B) % tm
    x_p = jnp.pad(x, ((0, pad), (0, 0))) if pad else x
    Bp = B + pad

    grid = (Bp // tm, D_IN // TK)

    out = pl.pallas_call(
        discriminator_kernel,
        out_shape=jax.ShapeDtypeStruct((Bp, D_OUT), jnp.float32),
        grid_spec=pltpu.PrefetchScalarGridSpec(
            num_scalar_prefetch=0,
            grid=grid,
            in_specs=[
                pl.BlockSpec((tm, TK), lambda m, k: (m, k)),       # x tile (bf16)
                pl.BlockSpec((TK, D_H1), lambda m, k: (k, 0)),     # W1 tile (bf16)
                pl.BlockSpec((1, D_H1), lambda m, k: (0, 0)),      # b1
                pl.BlockSpec((D_H1, D_H2), lambda m, k: (0, 0)),   # W2
                pl.BlockSpec((1, D_H2), lambda m, k: (0, 0)),      # b2
                pl.BlockSpec((D_H2, D_OUT), lambda m, k: (0, 0)),  # W3
                pl.BlockSpec((1, D_OUT), lambda m, k: (0, 0)),     # b3
            ],
            out_specs=pl.BlockSpec((tm, D_OUT), lambda m, k: (m, 0)),
            scratch_shapes=[pltpu.VMEM((tm, D_H1), jnp.float32)],
        ),
        compiler_params=pltpu.CompilerParams(
            dimension_semantics=("parallel", "arbitrary"),
            vmem_limit_bytes=48 * 1024 * 1024,
        ),
    )(x_p, w1_bf, b1, w2, b2, w3, b3)

    return out[:B]


def init_params(key):
    """Deterministic init mimicking torch.nn.Linear default (U(-1/sqrt(fan_in)))."""
    ks = jax.random.split(key, 6)

    def lin(kw, kb, fan_in, fan_out):
        bound = 1.0 / jnp.sqrt(fan_in)
        w = jax.random.uniform(kw, (fan_in, fan_out), jnp.float32, -bound, bound)
        b = jax.random.uniform(kb, (1, fan_out), jnp.float32, -bound, bound)
        return w, b

    w1, b1 = lin(ks[0], ks[1], D_IN, D_H1)
    w2, b2 = lin(ks[2], ks[3], D_H1, D_H2)
    w3, b3 = lin(ks[4], ks[5], D_H2, D_OUT)
    return (w1, b1, w2, b2, w3, b3)


def reference_forward(img, params, bf16_layer1=False):
    w1, b1, w2, b2, w3, b3 = params
    x = img.reshape(img.shape[0], -1)
    if bf16_layer1:
        # Match the kernel's bf16 streaming of x / W1 (accumulation in f32).
        x = x.astype(jnp.bfloat16).astype(jnp.float32)
        w1 = w1.astype(jnp.bfloat16).astype(jnp.float32)
    h1 = _leaky_relu(x @ w1 + b1)
    h2 = _leaky_relu(h1 @ w2 + b2)
    return jax.nn.sigmoid(h2 @ w3 + b3)


if __name__ == "__main__":
    key = jax.random.PRNGKey(0)
    k_img, k_par = jax.random.split(key)

    B = 2
    img = jax.random.normal(k_img, (B, 3, 64, 64), jnp.float32)  # NCHW like PyTorch
    params = init_params(k_par)

    out = discriminator_forward(img, params)
    out = jax.block_until_ready(out)
    assert out.shape == (B, 1), out.shape

    # Tight check against a reference using the same bf16 layer-1 inputs.
    ref_bf16 = reference_forward(img, params, bf16_layer1=True)
    assert jnp.allclose(out, ref_bf16, atol=1e-3, rtol=1e-3), (out, ref_bf16)

    # Looser sanity check against the full-f32 PyTorch-equivalent reference.
    ref_f32 = reference_forward(img, params, bf16_layer1=False)
    assert jnp.allclose(out, ref_f32, atol=2e-2, rtol=2e-2), (out, ref_f32)

    print("KERNEL_OK")
</pallas_src>

<mosaic_0001>
module attributes {stable_mosaic.version = 11 : i64} {
  func.func @discriminator_kernel(%arg0: i32, %arg1: i32, %arg2: memref<8x4096xbf16, #tpu.memory_space<vmem>>, %arg3: memref<4096x512xbf16, #tpu.memory_space<vmem>>, %arg4: memref<1x512xf32, #tpu.memory_space<vmem>>, %arg5: memref<512x256xf32, #tpu.memory_space<vmem>>, %arg6: memref<1x256xf32, #tpu.memory_space<vmem>>, %arg7: memref<256x1xf32, #tpu.memory_space<vmem>>, %arg8: memref<1x1xf32, #tpu.memory_space<vmem>>, %arg9: memref<8x1xf32, #tpu.memory_space<vmem>>, %arg10: memref<8x512xf32, #tpu.memory_space<vmem>>) attributes {dimension_semantics = [#tpu.dimension_semantics<parallel>, #tpu.dimension_semantics<arbitrary>], iteration_bounds = array<i64: 1, 3>, scalar_prefetch = 0 : i64, scratch_operands = 1 : i64, tpu.core_type = #tpu.core_type<tc>, window_params = [{transform_indices = @transform_0, window_bounds = array<i64: 8, 4096>}, {transform_indices = @transform_1, window_bounds = array<i64: 4096, 512>}, {pipeline_mode = #tpu.pipeline_mode<synchronous>, transform_indices = @transform_2, window_bounds = array<i64: 1, 512>}, {pipeline_mode = #tpu.pipeline_mode<synchronous>, transform_indices = @transform_3, window_bounds = array<i64: 512, 256>}, {pipeline_mode = #tpu.pipeline_mode<synchronous>, transform_indices = @transform_4, window_bounds = array<i64: 1, 256>}, {pipeline_mode = #tpu.pipeline_mode<synchronous>, transform_indices = @transform_5, window_bounds = array<i64: 256, 1>}, {pipeline_mode = #tpu.pipeline_mode<synchronous>, transform_indices = @transform_6, window_bounds = array<i64: 1, 1>}, {transform_indices = @transform_7, window_bounds = array<i64: 8, 1>}]} {
    %c0_i32 = arith.constant 0 : i32
    %0 = arith.cmpi eq, %arg1, %c0_i32 : i32
    %1 = arith.extui %0 : i1 to i32
    %c0_i32_0 = arith.constant 0 : i32
    %2 = arith.cmpi ne, %1, %c0_i32_0 : i32
    scf.if %2 {
      %cst_9 = arith.constant 0.000000e+00 : f32
      %12 = vector.broadcast %cst_9 : f32 to vector<8x512xf32>
      %c0_10 = arith.constant 0 : index
      %c0_11 = arith.constant 0 : index
      %13 = vector.load %arg10[%c0_10, %c0_11] : memref<8x512xf32, #tpu.memory_space<vmem>>, vector<8x512xf32>
      tpu.vector_store %arg10[%c0_10, %c0_11], %12 {strides = array<i32>} : memref<8x512xf32, #tpu.memory_space<vmem>>, vector<8x512xf32>,
    } else {
    }
    %c0 = arith.constant 0 : index
    %c0_1 = arith.constant 0 : index
    %3 = vector.load %arg10[%c0, %c0_1] : memref<8x512xf32, #tpu.memory_space<vmem>>, vector<8x512xf32>
    %c0_2 = arith.constant 0 : index
    %c0_3 = arith.constant 0 : index
    %4 = vector.load %arg2[%c0_2, %c0_3] : memref<8x4096xbf16, #tpu.memory_space<vmem>>, vector<8x4096xbf16>
    %c0_4 = arith.constant 0 : index
    %c0_5 = arith.constant 0 : index
    %5 = vector.load %arg3[%c0_4, %c0_5] : memref<4096x512xbf16, #tpu.memory_space<vmem>>, vector<4096x512xbf16>
    %cst = arith.constant dense<0.000000e+00> : vector<8x512xf32>
    %6 = tpu.matmul %4, %5, %cst {dimension_numbers = #tpu.dot_dimension_numbers<[1], [0], [0], [1], [0, 0, 1, 1], [], []>} : vector<8x4096xbf16>, vector<4096x512xbf16>, vector<8x512xf32> -> vector<8x512xf32>
    %7 = arith.addf %3, %6 : vector<8x512xf32>
    %c0_6 = arith.constant 0 : index
    %c0_7 = arith.constant 0 : index
    %8 = vector.load %arg10[%c0_6, %c0_7] : memref<8x512xf32, #tpu.memory_space<vmem>>, vector<8x512xf32>
    tpu.vector_store %arg10[%c0_6, %c0_7], %7 {strides = array<i32>} : memref<8x512xf32, #tpu.memory_space<vmem>>, vector<8x512xf32>,
    %c2_i32 = arith.constant 2 : i32
    %9 = arith.cmpi eq, %arg1, %c2_i32 : i32
    %10 = arith.extui %9 : i1 to i32
    %c0_i32_8 = arith.constant 0 : i32
    %11 = arith.cmpi ne, %10, %c0_i32_8 : i32
    scf.if %11 {
      %c0_9 = arith.constant 0 : index
      %c0_10 = arith.constant 0 : index
      %12 = vector.load %arg10[%c0_9, %c0_10] : memref<8x512xf32, #tpu.memory_space<vmem>>, vector<8x512xf32>
      %c0_11 = arith.constant 0 : index
      %c0_12 = arith.constant 0 : index
      %13 = vector.load %arg4[%c0_11, %c0_12] : memref<1x512xf32, #tpu.memory_space<vmem>>, vector<1x512xf32>
      %14 = vector.broadcast %13 : vector<1x512xf32> to vector<8x512xf32>
      %15 = arith.addf %12, %14 : vector<8x512xf32>
      %cst_13 = arith.constant 0.000000e+00 : f32
      %16 = vector.broadcast %cst_13 : f32 to vector<8x512xf32>
      %17 = arith.cmpf ogt, %15, %16 : vector<8x512xf32>
      %cst_14 = arith.constant 2.000000e-01 : f32
      %18 = vector.broadcast %cst_14 : f32 to vector<8x512xf32>
      %19 = arith.mulf %18, %15 : vector<8x512xf32>
      %20 = arith.select %17, %15, %19 : vector<8x512xi1>, vector<8x512xf32>
      %c0_15 = arith.constant 0 : index
      %c0_16 = arith.constant 0 : index
      %21 = vector.load %arg5[%c0_15, %c0_16] : memref<512x256xf32, #tpu.memory_space<vmem>>, vector<512x256xf32>
      %cst_17 = arith.constant dense<0.000000e+00> : vector<8x256xf32>
      %22 = tpu.matmul %20, %21, %cst_17 {dimension_numbers = #tpu.dot_dimension_numbers<[1], [0], [0], [1], [0, 0, 1, 1], [], []>} : vector<8x512xf32>, vector<512x256xf32>, vector<8x256xf32> -> vector<8x256xf32>
      %c0_18 = arith.constant 0 : index
      %c0_19 = arith.constant 0 : index
      %23 = vector.load %arg6[%c0_18, %c0_19] : memref<1x256xf32, #tpu.memory_space<vmem>>, vector<1x256xf32>
      %24 = vector.broadcast %23 : vector<1x256xf32> to vector<8x256xf32>
      %25 = arith.addf %22, %24 : vector<8x256xf32>
      %cst_20 = arith.constant 0.000000e+00 : f32
      %26 = vector.broadcast %cst_20 : f32 to vector<8x256xf32>
      %27 = arith.cmpf ogt, %25, %26 : vector<8x256xf32>
      %cst_21 = arith.constant 2.000000e-01 : f32
      %28 = vector.broadcast %cst_21 : f32 to vector<8x256xf32>
      %29 = arith.mulf %28, %25 : vector<8x256xf32>
      %30 = arith.select %27, %25, %29 : vector<8x256xi1>, vector<8x256xf32>
      %c0_22 = arith.constant 0 : index
      %c0_23 = arith.constant 0 : index
      %31 = vector.load %arg7[%c0_22, %c0_23] : memref<256x1xf32, #tpu.memory_space<vmem>>, vector<256x1xf32>
      %cst_24 = arith.constant dense<0.000000e+00> : vector<8x1xf32>
      %32 = tpu.matmul %30, %31, %cst_24 {dimension_numbers = #tpu.dot_dimension_numbers<[1], [0], [0], [1], [0, 0, 1, 1], [], []>} : vector<8x256xf32>, vector<256x1xf32>, vector<8x1xf32> -> vector<8x1xf32>
      %c0_25 = arith.constant 0 : index
      %c0_26 = arith.constant 0 : index
      %33 = vector.load %arg8[%c0_25, %c0_26] : memref<1x1xf32, #tpu.memory_space<vmem>>, vector<1x1xf32>
      %34 = vector.broadcast %33 : vector<1x1xf32> to vector<8x1xf32>
      %35 = arith.addf %32, %34 : vector<8x1xf32>
      %36 = arith.negf %35 : vector<8x1xf32>
      %37 = math.exp %36 : vector<8x1xf32>
      %cst_27 = arith.constant 1.000000e+00 : f32
      %38 = vector.broadcast %cst_27 : f32 to vector<8x1xf32>
      %39 = arith.addf %38, %37 : vector<8x1xf32>
      %40 = arith.divf %38, %39 : vector<8x1xf32>
      %c0_28 = arith.constant 0 : index
      %c0_29 = arith.constant 0 : index
      %41 = vector.load %arg9[%c0_28, %c0_29] : memref<8x1xf32, #tpu.memory_space<vmem>>, vector<8x1xf32>
      tpu.vector_store %arg9[%c0_28, %c0_29], %40 {strides = array<i32>} : memref<8x1xf32, #tpu.memory_space<vmem>>, vector<8x1xf32>,
    } else {
    }
    return
  }
  func.func @transform_0(%arg0: i32, %arg1: i32) -> (i32, i32) {
    %c0_i32 = arith.constant 0 : i32
    return %arg0, %arg1 : i32, i32
  }
  func.func @transform_1(%arg0: i32, %arg1: i32) -> (i32, i32) {
    %c0_i32 = arith.constant 0 : i32
    %c0_i32_0 = arith.constant 0 : i32
    return %arg1, %c0_i32 : i32, i32
  }
  func.func @transform_2(%arg0: i32, %arg1: i32) -> (i32, i32) {
    %c0_i32 = arith.constant 0 : i32
    %c0_i32_0 = arith.constant 0 : i32
    %c0_i32_1 = arith.constant 0 : i32
    return %c0_i32, %c0_i32_0 : i32, i32
  }
  func.func @transform_3(%arg0: i32, %arg1: i32) -> (i32, i32) {
    %c0_i32 = arith.constant 0 : i32
    %c0_i32_0 = arith.constant 0 : i32
    %c0_i32_1 = arith.constant 0 : i32
    return %c0_i32, %c0_i32_0 : i32, i32
  }
  func.func @transform_4(%arg0: i32, %arg1: i32) -> (i32, i32) {
    %c0_i32 = arith.constant 0 : i32
    %c0_i32_0 = arith.constant 0 : i32
    %c0_i32_1 = arith.constant 0 : i32
    return %c0_i32, %c0_i32_0 : i32, i32
  }
  func.func @transform_5(%arg0: i32, %arg1: i32) -> (i32, i32) {
    %c0_i32 = arith.constant 0 : i32
    %c0_i32_0 = arith.constant 0 : i32
    %c0_i32_1 = arith.constant 0 : i32
    return %c0_i32, %c0_i32_0 : i32, i32
  }
  func.func @transform_6(%arg0: i32, %arg1: i32) -> (i32, i32) {
    %c0_i32 = arith.constant 0 : i32
    %c0_i32_0 = arith.constant 0 : i32
    %c0_i32_1 = arith.constant 0 : i32
    return %c0_i32, %c0_i32_0 : i32, i32
  }
  func.func @transform_7(%arg0: i32, %arg1: i32) -> (i32, i32) {
    %c0_i32 = arith.constant 0 : i32
    %c0_i32_0 = arith.constant 0 : i32
    return %arg0, %c0_i32 : i32, i32
  }
}

</mosaic_0001>

<llo_original>
// kernel: tpu_custom_call.1
$region0: #{tpu_custom_call.1}
  #allocation0 [shape = 'u32[]', space=smem, size = 0x4, offset = 0x4, fixed_abs, tag = 'smem constant byte address 0x4 - core index']
  #allocation1 [shape = 'u32[144,128]{1,0:T(1,128)}', space=vmem, size = 0x12000, scoped, tag = 'internal scratch']
  #allocation2 [shape = 'f32[8,512]{1,0:T(8,128)}', space=vmem, size = 0x4000, scoped, tag = 'scratch operand']
  #allocation3 [shape = 'f32[1,1]{1,0:T(1,128)S(1)}', space=vmem, size = 0x200, scoped, tag = 'scoped memory for tpu_custom_call.1']
  %s0 = inlined_call_operand.hbm [shape: bf16[8,12288], index: 0, kind: input, shape index: {}]
  %s1 = inlined_call_operand.hbm [shape: bf16[12288,512], index: 1, kind: input, shape index: {}]
  %s2 = inlined_call_operand.hbm [shape: f32[1,512], index: 2, kind: input, shape index: {}]
  %s3 = inlined_call_operand.hbm [shape: f32[512,256], index: 3, kind: input, shape index: {}]
  %s4 = inlined_call_operand.hbm [shape: f32[1,256], index: 4, kind: input, shape index: {}]
  %s5 = inlined_call_operand.vmem [shape: f32[256,1], index: 5, kind: input, shape index: {}]
  %s6 = inlined_call_operand.<no memory space> [shape: f32[1,1], index: 6, kind: input, shape index: {}]
  %s7 = inlined_call_operand.vmem [shape: f32[8,1], index: 7, kind: output, shape index: {}]
  %s8 = sld [smem:[#allocation0]]
  $region89: #{tpu_custom_call.1} parent=0
    _
  %s10 = ssub.s32 1, %s8
  %s11 = scalar_select 0, %s10, %s8
  %v12 = vstv %s6
  %13 = vst [vmem:[#allocation3] sm:$0x1] %v12
  $region1: #{tpu_custom_call.1} parent=0
    #allocation4 [shape = 'u8[131072]{0}', space=vmem, size = 0x20000, scoped, tag = 'input window, operand 0']
    #allocation5 [shape = 's32[2]{0}', space=sflag, size = 0x8, scoped, tag = 'scoped memory for tpu_custom_call.1']
    #allocation6 [shape = 'u8[8388608]{0}', space=vmem, size = 0x800000, scoped, tag = 'input window, operand 1']
    #allocation7 [shape = 's32[2]{0}', space=sflag, size = 0x8, scoped, tag = 'scoped memory for tpu_custom_call.1']
    #allocation8 [shape = 'u8[2048]{0}', space=vmem, size = 0x800, scoped, tag = 'input window, operand 2, single buffered']
    #allocation9 [shape = 'u8[524288]{0}', space=vmem, size = 0x80000, scoped, tag = 'input window, operand 3, single buffered']
    #allocation10 [shape = 's32[1]{0}', space=sflag, size = 0x4, scoped, tag = 'scoped memory for tpu_custom_call.1']
    #allocation11 [shape = 'u8[1024]{0}', space=vmem, size = 0x400, scoped, tag = 'input window, operand 4, single buffered']
    %14 = vsyncpa [#allocation5], 0
    %s15 = scalar_lea.sflag [#allocation5], 1
    %16 = vsyncpa %s15, 0
    %17 = vsyncpa [#allocation7], 0
    %s18 = scalar_lea.sflag [#allocation7], 1
    %19 = vsyncpa %s18, 0
    %20 = vsyncpa [#allocation10], 0
    loop: start=0, step=1, limit=5
    $region2: #{tpu_custom_call.1} parent=1 // loop_pre_header
      _
    $region3: #{tpu_custom_call.1} parent=1 // loop_header
      %s22 = sphi 0, %s26
      %p23 = scmp.ge.s32.totalorder %s22, 5
      %s29 = sphi 0, %s41
      %s30 = sphi 0, %s37
      %s31 = sphi 0, %s29
      %s32 = sphi 0, %s30
      %s33 = sphi 0, %s31
      %s34 = sphi 0, %s32
      %s46 = sphi 0, %s48
      %s49 = sphi 0, %s46
      %s50 = sphi 0, %s49
      %s66 = sphi 0, %s50
      %s72 = sphi 0, %s74
      %s75 = sphi 0, %s72
      %s76 = sphi 0, %s75
      %s92 = sphi 0, %s76
      %s96 = sphi 0, %s96
      %s98 = sphi 0, %s96
      %s99 = sphi 0, %s98
      %s113 = sphi 0, %s99
      %s117 = sphi 0, %s117
      %s119 = sphi 0, %s117
      %s120 = sphi 0, %s119
      %s134 = sphi 0, %s120
      %s138 = sphi 0, %s138
      %s140 = sphi 0, %s138
      %s141 = sphi 0, %s140
      %s155 = sphi 0, %s141
      %s159 = sphi 0, %s159
      %s161 = sphi 0, %s159
      %s162 = sphi 0, %s161
      %s176 = sphi 0, %s162
      %s180 = sphi 0, %s180
      %s182 = sphi 0, %s180
      %s183 = sphi 0, %s182
      %s197 = sphi 0, %s183
      %s203 = sphi 0, %s205
      %s206 = sphi 0, %s203
      %s207 = sphi 0, %s206
      %s223 = sphi 0, %s207
    $region4: #{tpu_custom_call.1} parent=1 // loop_header_branch
      %25 = sbr.rel (%p23) target = $region8
    $region5: #{tpu_custom_call.1} parent=1 // loop_body
      %s27 = ssub.s32 %s22, 1
      %s28 = ssub.s32 %s22, 2
      %s35 = sadd.s32 1, %s30
      %p36 = scmp.ge.s32.totalorder %s35, 3
      %s37 = scalar_select %p36, 0, %s35
      %s38 = sadd.s32 1, %s29
      %s39 = scalar_select %p36, %s38, %s29
      %p40 = scmp.ge.s32.totalorder %s39, 1
      %s41 = scalar_select %p40, 0, %s39
      %s42 = ssub.s32 %s29, %s41
      %s43 = ssub.s32 %s30, %s37
      %s44 = sor.u32 %s42, %s43
      %p45 = scmp.eq.s32.totalorder %s44, 0
      %s47 = sadd.s32 %s46, 1
      %s48 = scalar_select %p45, %s46, %s47
      %p51 = pneg %p45
      %p52 = scmp.eq.s32.totalorder %s22, 2
      %p53 = por %p51, %p52
      %p54 = scmp.ne.s32.totalorder %s46, %s49
      %p55 = scmp.eq.s32.totalorder %s22, 0
      %p56 = por %p54, %p55
      %p57 = scmp.ne.s32.totalorder %s46, %s49
      %p58 = scmp.eq.s32.totalorder %s27, 2
      %p59 = por %p57, %p58
      %p60 = scmp.ne.s32.totalorder %s49, %s50
      %p61 = scmp.eq.s32.totalorder %s27, 0
      %p62 = por %p60, %p61
      %p63 = scmp.ne.s32.totalorder %s49, %s50
      %p64 = scmp.eq.s32.totalorder %s28, 2
      %p65 = por %p63, %p64
      %p67 = scmp.ne.s32.totalorder %s50, %s66
      %p68 = scmp.eq.s32.totalorder %s28, 0
      %p69 = por %p67, %p68
      %s70 = ssub.s32 %s30, %s37
      %p71 = scmp.eq.s32.totalorder %s70, 0
      %s73 = sadd.s32 %s72, 1
      %s74 = scalar_select %p71, %s72, %s73
      %p77 = pneg %p71
      %p78 = scmp.eq.s32.totalorder %s22, 2
      %p79 = por %p77, %p78
      %p80 = scmp.ne.s32.totalorder %s72, %s75
      %p81 = scmp.eq.s32.totalorder %s22, 0
      %p82 = por %p80, %p81
      %p83 = scmp.ne.s32.totalorder %s72, %s75
      %p84 = scmp.eq.s32.totalorder %s27, 2
      %p85 = por %p83, %p84
      %p86 = scmp.ne.s32.totalorder %s75, %s76
      %p87 = scmp.eq.s32.totalorder %s27, 0
      %p88 = por %p86, %p87
      %p89 = scmp.ne.s32.totalorder %s75, %s76
      %p90 = scmp.eq.s32.totalorder %s28, 2
      %p91 = por %p89, %p90
      %p93 = scmp.ne.s32.totalorder %s76, %s92
      %p94 = scmp.eq.s32.totalorder %s28, 0
      %p95 = por %p93, %p94
      %s97 = sadd.s32 %s96, 1
      %p100 = scmp.eq.s32.totalorder %s22, 2
      %p101 = scmp.ne.s32.totalorder %s96, %s98
      %p102 = scmp.eq.s32.totalorder %s22, 0
      %p103 = por %p101, %p102
      %p104 = scmp.ne.s32.totalorder %s96, %s98
      %p105 = scmp.eq.s32.totalorder %s27, 2
      %p106 = por %p104, %p105
      %p107 = scmp.ne.s32.totalorder %s98, %s99
      %p108 = scmp.eq.s32.totalorder %s27, 0
      %p109 = por %p107, %p108
      %p110 = scmp.ne.s32.totalorder %s98, %s99
      %p111 = scmp.eq.s32.totalorder %s28, 2
      %p112 = por %p110, %p111
      %p114 = scmp.ne.s32.totalorder %s99, %s113
      %p115 = scmp.eq.s32.totalorder %s28, 0
      %p116 = por %p114, %p115
      %s118 = sadd.s32 %s117, 1
      %p121 = scmp.eq.s32.totalorder %s22, 2
      %p122 = scmp.ne.s32.totalorder %s117, %s119
      %p123 = scmp.eq.s32.totalorder %s22, 0
      %p124 = por %p122, %p123
      %p125 = scmp.ne.s32.totalorder %s117, %s119
      %p126 = scmp.eq.s32.totalorder %s27, 2
      %p127 = por %p125, %p126
      %p128 = scmp.ne.s32.totalorder %s119, %s120
      %p129 = scmp.eq.s32.totalorder %s27, 0
      %p130 = por %p128, %p129
      %p131 = scmp.ne.s32.totalorder %s119, %s120
      %p132 = scmp.eq.s32.totalorder %s28, 2
      %p133 = por %p131, %p132
      %p135 = scmp.ne.s32.totalorder %s120, %s134
      %p136 = scmp.eq.s32.totalorder %s28, 0
      %p137 = por %p135, %p136
      %s139 = sadd.s32 %s138, 1
      %p142 = scmp.eq.s32.totalorder %s22, 2
      %p143 = scmp.ne.s32.totalorder %s138, %s140
      %p144 = scmp.eq.s32.totalorder %s22, 0
      %p145 = por %p143, %p144
      %p146 = scmp.ne.s32.totalorder %s138, %s140
      %p147 = scmp.eq.s32.totalorder %s27, 2
      %p148 = por %p146, %p147
      %p149 = scmp.ne.s32.totalorder %s140, %s141
      %p150 = scmp.eq.s32.totalorder %s27, 0
      %p151 = por %p149, %p150
      %p152 = scmp.ne.s32.totalorder %s140, %s141
      %p153 = scmp.eq.s32.totalorder %s28, 2
      %p154 = por %p152, %p153
      %p156 = scmp.ne.s32.totalorder %s141, %s155
      %p157 = scmp.eq.s32.totalorder %s28, 0
      %p158 = por %p156, %p157
      %s160 = sadd.s32 %s159, 1
      %p163 = scmp.eq.s32.totalorder %s22, 2
      %p164 = scmp.ne.s32.totalorder %s159, %s161
      %p165 = scmp.eq.s32.totalorder %s22, 0
      %p166 = por %p164, %p165
      %p167 = scmp.ne.s32.totalorder %s159, %s161
      %p168 = scmp.eq.s32.totalorder %s27, 2
      %p169 = por %p167, %p168
      %p170 = scmp.ne.s32.totalorder %s161, %s162
      %p171 = scmp.eq.s32.totalorder %s27, 0
      %p172 = por %p170, %p171
      %p173 = scmp.ne.s32.totalorder %s161, %s162
      %p174 = scmp.eq.s32.totalorder %s28, 2
      %p175 = por %p173, %p174
      %p177 = scmp.ne.s32.totalorder %s162, %s176
      %p178 = scmp.eq.s32.totalorder %s28, 0
      %p179 = por %p177, %p178
      %s181 = sadd.s32 %s180, 1
      %p184 = scmp.eq.s32.totalorder %s22, 2
      %p185 = scmp.ne.s32.totalorder %s180, %s182
      %p186 = scmp.eq.s32.totalorder %s22, 0
      %p187 = por %p185, %p186
      %p188 = scmp.ne.s32.totalorder %s180, %s182
      %p189 = scmp.eq.s32.totalorder %s27, 2
      %p190 = por %p188, %p189
      %p191 = scmp.ne.s32.totalorder %s182, %s183
      %p192 = scmp.eq.s32.totalorder %s27, 0
      %p193 = por %p191, %p192
      %p194 = scmp.ne.s32.totalorder %s182, %s183
      %p195 = scmp.eq.s32.totalorder %s28, 2
      %p196 = por %p194, %p195
      %p198 = scmp.ne.s32.totalorder %s183, %s197
      %p199 = scmp.eq.s32.totalorder %s28, 0
      %p200 = por %p198, %p199
      %s201 = ssub.s32 %s29, %s41
      %p202 = scmp.eq.s32.totalorder %s201, 0
      %s204 = sadd.s32 %s203, 1
      %s205 = scalar_select %p202, %s203, %s204
      %p208 = pneg %p202
      %p209 = scmp.eq.s32.totalorder %s22, 2
      %p210 = por %p208, %p209
      %p211 = scmp.ne.s32.totalorder %s203, %s206
      %p212 = scmp.eq.s32.totalorder %s22, 0
      %p213 = por %p211, %p212
      %p214 = scmp.ne.s32.totalorder %s203, %s206
      %p215 = scmp.eq.s32.totalorder %s27, 2
      %p216 = por %p214, %p215
      %p217 = scmp.ne.s32.totalorder %s206, %s207
      %p218 = scmp.eq.s32.totalorder %s27, 0
      %p219 = por %p217, %p218
      %p220 = scmp.ne.s32.totalorder %s206, %s207
      %p221 = scmp.eq.s32.totalorder %s28, 2
      %p222 = por %p220, %p221
      %p224 = scmp.ne.s32.totalorder %s207, %s223
      %p225 = scmp.eq.s32.totalorder %s28, 0
      %p226 = por %p224, %p225
      %p227 = scmp.le.s32.totalorder 1, %s22
      %p228 = scmp.lt.s32.totalorder %s22, 4
      %p229 = pnand %p227, %p228
      %p230 = pneg %p229
      // Predicated region
      $region9: #{tpu_custom_call.1} parent=5 // pred_check
        _
      $region10: #{tpu_custom_call.1} parent=5 // pred_check_branch
        %232 = sbr.rel (%p229) target = $region12
      $region11: #{tpu_custom_call.1} parent=5 // pred_region
        %s233 = ssub.s32 %s22, 1
        // Predicated region
        $region13: #{tpu_custom_call.1} parent=11 // pred_check
          %p234 = pneg %p109
        $region14: #{tpu_custom_call.1} parent=11 // pred_check_branch
          %236 = sbr.rel (%p234) target = $region16
        $region15: #{tpu_custom_call.1} parent=11 // pred_region
          %s238 = ssub.s32 64, 64
          %239 = vsyncadd [#allocation7], %s238
          %s241 = sshll.u32 [#allocation8], 4
          %s242 = int_to_ptr.vmem [resolvable:$true] %s241
          %244 = dma.hbm_to_vmem [thread:$0]  %s2, 64, %s242, [#allocation7]
        $region16: #{tpu_custom_call.1} parent=11 // pred_fallthru
          _
        // Predicated region
        $region17: #{tpu_custom_call.1} parent=11 // pred_check
          %p245 = pneg %p130
        $region18: #{tpu_custom_call.1} parent=11 // pred_check_branch
          %247 = sbr.rel (%p245) target = $region20
        $region19: #{tpu_custom_call.1} parent=11 // pred_region
          %s249 = ssub.s32 16384, 16384
          %250 = vsyncadd [#allocation10], %s249
          %s251 = sshll.u32 [#allocation9], 4
          %s252 = int_to_ptr.vmem [resolvable:$true] %s251
          %257 = dma.hbm_to_vmem [thread:$0]  %s3, 16384, %s252, [#allocation10], 256, 256, 16
        $region20: #{tpu_custom_call.1} parent=11 // pred_fallthru
          _
        // Predicated region
        $region21: #{tpu_custom_call.1} parent=11 // pred_check
          %p258 = pneg %p151
        $region22: #{tpu_custom_call.1} parent=11 // pred_check_branch
          %260 = sbr.rel (%p258) target = $region24
        $region23: #{tpu_custom_call.1} parent=11 // pred_region
          %s262 = ssub.s32 32, 32
          %263 = vsyncadd [#allocation10], %s262
          %s265 = sshll.u32 [#allocation11], 4
          %s266 = int_to_ptr.vmem [resolvable:$true] %s265
          %268 = dma.hbm_to_vmem [thread:$0]  %s4, 32, %s266, [#allocation10]
        $region24: #{tpu_custom_call.1} parent=11 // pred_fallthru
          _
        // Predicated region
        $region25: #{tpu_custom_call.1} parent=11 // pred_check
          %p269 = pneg %p172
        $region26: #{tpu_custom_call.1} parent=11 // pred_check_branch
          %271 = sbr.rel (%p269) target = $region28
        $region27: #{tpu_custom_call.1} parent=11 // pred_region
          _
        $region28: #{tpu_custom_call.1} parent=11 // pred_fallthru
          _
        // Predicated region
        $region29: #{tpu_custom_call.1} parent=11 // pred_check
          %p272 = pneg %p193
        $region30: #{tpu_custom_call.1} parent=11 // pred_check_branch
          %274 = sbr.rel (%p272) target = $region32
        $region31: #{tpu_custom_call.1} parent=11 // pred_region
          _
        $region32: #{tpu_custom_call.1} parent=11 // pred_fallthru
          _
      $region12: #{tpu_custom_call.1} parent=5 // pred_fallthru
        _
      %p275 = scmp.lt.s32.totalorder %s22, 3
      // Predicated region
      $region33: #{tpu_custom_call.1} parent=5 // pred_check
        %p276 = pneg %p275
      $region34: #{tpu_custom_call.1} parent=5 // pred_check_branch
        %278 = sbr.rel (%p276) target = $region36
      $region35: #{tpu_custom_call.1} parent=5 // pred_region
        // Predicated region
        $region37: #{tpu_custom_call.1} parent=35 // pred_check
          %p279 = pneg %p56
        $region38: #{tpu_custom_call.1} parent=35 // pred_check_branch
          %281 = sbr.rel (%p279) target = $region40
        $region39: #{tpu_custom_call.1} parent=35 // pred_region
          %s282 = sand.u32 %s46, 1
          %s283 = scalar_lea.sflag [#allocation5], %s282
          %s284 = sand.u32 %s46, 1
          %s285 = smul.addr %s284, 128
          %s286 = scalar_lea.vmem [#allocation4], %s285
          %s287 = smul.u32 32, %s30
          %s289 = ssub.s32 2048, 2048
          %290 = vsyncadd %s283, %s289
          %s291 = smul.addr %s29, 96
          %s292 = sadd.s32 %s287, %s291
          %s293 = smul.addr %s292, 64
          %s294 = scalar_lea.hbm %s0, %s293
          %s296 = sshll.u32 %s286, 4
          %s297 = int_to_ptr.vmem [resolvable:$true] %s296
          %299 = dma.hbm_to_vmem [thread:$0]  %s294, 2048, %s297, %s283
        $region40: #{tpu_custom_call.1} parent=35 // pred_fallthru
          _
        // Predicated region
        $region41: #{tpu_custom_call.1} parent=35 // pred_check
          %p300 = pneg %p82
        $region42: #{tpu_custom_call.1} parent=35 // pred_check_branch
          %302 = sbr.rel (%p300) target = $region44
        $region43: #{tpu_custom_call.1} parent=35 // pred_region
          %s303 = sand.u32 %s22, 1
          %s304 = scalar_lea.sflag [#allocation7], %s303
          %s305 = sand.u32 %s72, 1
          %s306 = smul.addr %s305, 8192
          %s307 = scalar_lea.vmem [#allocation6], %s306
          %s308 = smul.u32 512, %s30
          %s310 = ssub.s32 131072, 131072
          %311 = vsyncadd %s304, %s310
          %s312 = smul.addr %s308, 4
          %s313 = smul.addr %s312, 64
          %s314 = scalar_lea.hbm %s1, %s313
          %s315 = sshll.u32 %s307, 4
          %s316 = int_to_ptr.vmem [resolvable:$true] %s315
          %321 = dma.hbm_to_vmem [thread:$0]  %s314, 131072, %s316, %s304, 256, 256, 16
        $region44: #{tpu_custom_call.1} parent=35 // pred_fallthru
          _
      $region36: #{tpu_custom_call.1} parent=5 // pred_fallthru
        _
      %p322 = scmp.le.s32.totalorder 1, %s22
      %p323 = scmp.lt.s32.totalorder %s22, 4
      %p324 = pnand %p322, %p323
      %p325 = pneg %p324
      // Predicated region
      $region45: #{tpu_custom_call.1} parent=5 // pred_check
        _
      $region46: #{tpu_custom_call.1} parent=5 // pred_check_branch
        %327 = sbr.rel (%p324) target = $region48
      $region47: #{tpu_custom_call.1} parent=5 // pred_region
        %s328 = ssub.s32 %s22, 1
        %s329 = sand.u32 %s49, 1
        %s330 = scalar_lea.sflag [#allocation5], %s329
        %s331 = sand.u32 %s49, 1
        %s332 = smul.addr %s331, 128
        %s333 = scalar_lea.vmem [#allocation4], %s332
        // Predicated region
        $region49: #{tpu_custom_call.1} parent=47 // pred_check
          %p334 = pneg %p62
        $region50: #{tpu_custom_call.1} parent=47 // pred_check_branch
          %336 = sbr.rel (%p334) target = $region52
        $region51: #{tpu_custom_call.1} parent=47 // pred_region
          %337 = dma.done %s330, 2048
        $region52: #{tpu_custom_call.1} parent=47 // pred_fallthru
          _
        %s338 = sand.u32 %s27, 1
        %s339 = scalar_lea.sflag [#allocation7], %s338
        %s340 = sand.u32 %s75, 1
        %s341 = smul.addr %s340, 8192
        %s342 = scalar_lea.vmem [#allocation6], %s341
        // Predicated region
        $region53: #{tpu_custom_call.1} parent=47 // pred_check
          %p343 = pneg %p88
        $region54: #{tpu_custom_call.1} parent=47 // pred_check_branch
          %345 = sbr.rel (%p343) target = $region56
        $region55: #{tpu_custom_call.1} parent=47 // pred_region
          %346 = dma.done %s339, 131072
        $region56: #{tpu_custom_call.1} parent=47 // pred_fallthru
          _
        // Predicated region
        $region57: #{tpu_custom_call.1} parent=47 // pred_check
          %p347 = pneg %p109
        $region58: #{tpu_custom_call.1} parent=47 // pred_check_branch
          %349 = sbr.rel (%p347) target = $region60
        $region59: #{tpu_custom_call.1} parent=47 // pred_region
          %350 = dma.done [#allocation7], 64
        $region60: #{tpu_custom_call.1} parent=47 // pred_fallthru
          _
        // Predicated region
        $region61: #{tpu_custom_call.1} parent=47 // pred_check
          %p351 = pneg %p130
        $region62: #{tpu_custom_call.1} parent=47 // pred_check_branch
          %353 = sbr.rel (%p351) target = $region64
        $region63: #{tpu_custom_call.1} parent=47 // pred_region
          %354 = dma.done [#allocation10], 16384
        $region64: #{tpu_custom_call.1} parent=47 // pred_fallthru
          _
        // Predicated region
        $region65: #{tpu_custom_call.1} parent=47 // pred_check
          %p355 = pneg %p151
        $region66: #{tpu_custom_call.1} parent=47 // pred_check_branch
          %357 = sbr.rel (%p355) target = $region68
        $region67: #{tpu_custom_call.1} parent=47 // pred_region
          %358 = dma.done [#allocation10], 32
        $region68: #{tpu_custom_call.1} parent=47 // pred_fallthru
          _
        %s359 = sand.u32 %s49, 1
        %s360 = scalar_lea.sflag [#allocation5], %s359
        %s361 = sand.u32 %s49, 1
        %s362 = smul.addr %s361, 128
        %s363 = scalar_lea.vmem [#allocation4], %s362
        %p364 = pneg %p62
        %p365 = pneg %p59
        %s366 = sand.u32 %s27, 1
        %s367 = scalar_lea.sflag [#allocation7], %s366
        %s368 = sand.u32 %s75, 1
        %s369 = smul.addr %s368, 8192
        %s370 = scalar_lea.vmem [#allocation6], %s369
        %p371 = pneg %p88
        %p372 = pneg %p85
        %p373 = pneg %p109
        %p374 = pneg %p106
        %p375 = pneg %p130
        %p376 = pneg %p127
        %p377 = pneg %p151
        %p378 = pneg %p148
        %p379 = pneg %p172
        %p380 = pneg %p169
        %p381 = pneg %p193
        %p382 = pneg %p190
        %p383 = pneg %p219
        %p384 = pneg %p216
        %p385 = scmp.lt.s32.totalorder %s31, 0
        %s386 = scalar_select %p385, %s31, 0
        %s387 = smul.addr %s386, 8
        %s388 = scalar_lea.vmem %s7, %s387
        %s389 = smul.u32 32, %s32
        %s390 = smul.u32 512, %s32
        %p391 = scmp.lt.s32.totalorder %s31, 0
        %s392 = scalar_select %p391, %s31, 0
        %s393 = smul.addr %s392, 8
        %s394 = scalar_lea.vmem %s7, %s393
        %p395 = scmp.eq.s32.totalorder %s32, 0
        // Predicated region
        $region69: #{tpu_custom_call.1} parent=47 // pred_check
          %p396 = pneg %p395
        $region70: #{tpu_custom_call.1} parent=47 // pred_check_branch
          %398 = sbr.rel (%p396) target = $region72
        $region71: #{tpu_custom_call.1} parent=47 // pred_region
          %399 = vst [vmem:[#allocation2] sm:$0xff] 0.0
          %400 = vst [vmem:[#allocation2 + $0x8] sm:$0xff] 0.0
          %401 = vst [vmem:[#allocation2 + $0x10] sm:$0xff] 0.0
          %402 = vst [vmem:[#allocation2 + $0x18] sm:$0xff] 0.0
        $region72: #{tpu_custom_call.1} parent=47 // pred_fallthru
          _
        %v403 = vld [vmem:[#allocation2] sm:$0xff]
        %v404 = vld [vmem:[#allocation2 + $0x8] sm:$0xff]
        %v405 = vld [vmem:[#allocation2 + $0x10] sm:$0xff]
        %v406 = vld [vmem:[#allocation2 + $0x18] sm:$0xff]
        %v407 = vld [vmem:[%s333] sm:$0xff]
        %v408 = vld [vmem:[%s333 + $0x8] sm:$0xff]
        %v409 = vld [vmem:[%s333 + $0x10] sm:$0xff]
        %v410 = vld [vmem:[%s333 + $0x18] sm:$0xff]
        %v411 = vld [vmem:[%s333 + $0x20] sm:$0xff]
        %v412 = vld [vmem:[%s333 + $0x28] sm:$0xff]
        %v413 = vld [vmem:[%s333 + $0x30] sm:$0xff]
        %v414 = vld [vmem:[%s333 + $0x38] sm:$0xff]
        %v415 = vld [vmem:[%s333 + $0x40] sm:$0xff]
        %v416 = vld [vmem:[%s333 + $0x48] sm:$0xff]
        %v417 = vld [vmem:[%s333 + $0x50] sm:$0xff]
        %v418 = vld [vmem:[%s333 + $0x58] sm:$0xff]
        %v419 = vld [vmem:[%s333 + $0x60] sm:$0xff]
        %v420 = vld [vmem:[%s333 + $0x68] sm:$0xff]
        %v421 = vld [vmem:[%s333 + $0x70] sm:$0xff]
        %v422 = vld [vmem:[%s333 + $0x78] sm:$0xff]
        %v423 = vld [vmem:[%s342] sm:$0xff]
        %v424 = vld [vmem:[%s342 + $0x8] sm:$0xff]
        %v425 = vld [vmem:[%s342 + $0x10] sm:$0xff]
        %v426 = vld [vmem:[%s342 + $0x18] sm:$0xff]
        %v427 = vld [vmem:[%s342 + $0x20] sm:$0xff]
        %v428 = vld [vmem:[%s342 + $0x28] sm:$0xff]
        %v429 = vld [vmem:[%s342 + $0x30] sm:$0xff]
        %v430 = vld [vmem:[%s342 + $0x38] sm:$0xff]
        %v431 = vld [vmem:[%s342 + $0x40] sm:$0xff]
        %v432 = vld [vmem:[%s342 + $0x48] sm:$0xff]
        %v433 = vld [vmem:[%s342 + $0x50] sm:$0xff]
        %v434 = vld [vmem:[%s342 + $0x58] sm:$0xff]
        %v435 = vld [vmem:[%s342 + $0x60] sm:$0xff]
        %v436 = vld [vmem:[%s342 + $0x68] sm:$0xff]
        %v437 = vld [vmem:[%s342 + $0x70] sm:$0xff]
        %v438 = vld [vmem:[%s342 + $0x78] sm:$0xff]
        %v439 = vld [vmem:[%s342 + $0x80] sm:$0xff]
        %v440 = vld [vmem:[%s342 + $0x88] sm:$0xff]
        %v441 = vld [vmem:[%s342 + $0x90] sm:$0xff]
        %v442 = vld [vmem:[%s342 + $0x98] sm:$0xff]
        %v443 = vld [vmem:[%s342 + $0xa0] sm:$0xff]
        %v444 = vld [vmem:[%s342 + $0xa8] sm:$0xff]
        %v445 = vld [vmem:[%s342 + $0xb0] sm:$0xff]
        %v446 = vld [vmem:[%s342 + $0xb8] sm:$0xff]
        %v447 = vld [vmem:[%s342 + $0xc0] sm:$0xff]
        %v448 = vld [vmem:[%s342 + $0xc8] sm:$0xff]
        %v449 = vld [vmem:[%s342 + $0xd0] sm:$0xff]
        %v450 = vld [vmem:[%s342 + $0xd8] sm:$0xff]
        %v451 = vld [vmem:[%s342 + $0xe0] sm:$0xff]
        %v452 = vld [vmem:[%s342 + $0xe8] sm:$0xff]
        %v453 = vld [vmem:[%s342 + $0xf0] sm:$0xff]
        %v454 = vld [vmem:[%s342 + $0xf8] sm:$0xff]
        %v455 = vld [vmem:[%s342 + $0x100] sm:$0xff]
        %v456 = vld [vmem:[%s342 + $0x108] sm:$0xff]
        %v457 = vld [vmem:[%s342 + $0x110] sm:$0xff]
        %v458 = vld [vmem:[%s342 + $0x118] sm:$0xff]
        %v459 = vld [vmem:[%s342 + $0x120] sm:$0xff]
        %v460 = vld [vmem:[%s342 + $0x128] sm:$0xff]
        %v461 = vld [vmem:[%s342 + $0x130] sm:$0xff]
        %v462 = vld [vmem:[%s342 + $0x138] sm:$0xff]
        %v463 = vld [vmem:[%s342 + $0x140] sm:$0xff]
        %v464 = vld [vmem:[%s342 + $0x148] sm:$0xff]
        %v465 = vld [vmem:[%s342 + $0x150] sm:$0xff]
        %v466 = vld [vmem:[%s342 + $0x158] sm:$0xff]
        %v467 = vld [vmem:[%s342 + $0x160] sm:$0xff]
        %v468 = vld [vmem:[%s342 + $0x168] sm:$0xff]
        %v469 = vld [vmem:[%s342 + $0x170] sm:$0xff]
        %v470 = vld [vmem:[%s342 + $0x178] sm:$0xff]
        %v471 = vld [vmem:[%s342 + $0x180] sm:$0xff]
        %v472 = vld [vmem:[%s342 + $0x188] sm:$0xff]
        %v473 = vld [vmem:[%s342 + $0x190] sm:$0xff]
        %v474 = vld [vmem:[%s342 + $0x198] sm:$0xff]
        %v475 = vld [vmem:[%s342 + $0x1a0] sm:$0xff]
        %v476 = vld [vmem:[%s342 + $0x1a8] sm:$0xff]
        %v477 = vld [vmem:[%s342 + $0x1b0] sm:$0xff]
        %v478 = vld [vmem:[%s342 + $0x1b8] sm:$0xff]
        %v479 = vld [vmem:[%s342 + $0x1c0] sm:$0xff]
        %v480 = vld [vmem:[%s342 + $0x1c8] sm:$0xff]
        %v481 = vld [vmem:[%s342 + $0x1d0] sm:$0xff]
        %v482 = vld [vmem:[%s342 + $0x1d8] sm:$0xff]
        %v483 = vld [vmem:[%s342 + $0x1e0] sm:$0xff]
        %v484 = vld [vmem:[%s342 + $0x1e8] sm:$0xff]
        %v485 = vld [vmem:[%s342 + $0x1f0] sm:$0xff]
        %v486 = vld [vmem:[%s342 + $0x1f8] sm:$0xff]
        %v487 = vld [vmem:[%s342 + $0x200] sm:$0xff]
        %v488 = vld [vmem:[%s342 + $0x208] sm:$0xff]
        %v489 = vld [vmem:[%s342 + $0x210] sm:$0xff]
        %v490 = vld [vmem:[%s342 + $0x218] sm:$0xff]
        %v491 = vld [vmem:[%s342 + $0x220] sm:$0xff]
        %v492 = vld [vmem:[%s342 + $0x228] sm:$0xff]
        %v493 = vld [vmem:[%s342 + $0x230] sm:$0xff]
        %v494 = vld [vmem:[%s342 + $0x238] sm:$0xff]
        %v495 = vld [vmem:[%s342 + $0x240] sm:$0xff]
        %v496 = vld [vmem:[%s342 + $0x248] sm:$0xff]
        %v497 = vld [vmem:[%s342 + $0x250] sm:$0xff]
        %v498 = vld [vmem:[%s342 + $0x258] sm:$0xff]
        %v499 = vld [vmem:[%s342 + $0x260] sm:$0xff]
        %v500 = vld [vmem:[%s342 + $0x268] sm:$0xff]
        %v501 = vld [vmem:[%s342 + $0x270] sm:$0xff]
        %v502 = vld [vmem:[%s342 + $0x278] sm:$0xff]
        %v503 = vld [vmem:[%s342 + $0x280] sm:$0xff]
        %v504 = vld [vmem:[%s342 + $0x288] sm:$0xff]
        %v505 = vld [vmem:[%s342 + $0x290] sm:$0xff]
        %v506 = vld [vmem:[%s342 + $0x298] sm:$0xff]
        %v507 = vld [vmem:[%s342 + $0x2a0] sm:$0xff]
        %v508 = vld [vmem:[%s342 + $0x2a8] sm:$0xff]
        %v509 = vld [vmem:[%s342 + $0x2b0] sm:$0xff]
        %v510 = vld [vmem:[%s342 + $0x2b8] sm:$0xff]
        %v511 = vld [vmem:[%s342 + $0x2c0] sm:$0xff]
        %v512 = vld [vmem:[%s342 + $0x2c8] sm:$0xff]
        %v513 = vld [vmem:[%s342 + $0x2d0] sm:$0xff]
        %v514 = vld [vmem:[%s342 + $0x2d8] sm:$0xff]
        %v515 = vld [vmem:[%s342 + $0x2e0] sm:$0xff]
        %v516 = vld [vmem:[%s342 + $0x2e8] sm:$0xff]
        %v517 = vld [vmem:[%s342 + $0x2f0] sm:$0xff]
        %v518 = vld [vmem:[%s342 + $0x2f8] sm:$0xff]
        %v519 = vld [vmem:[%s342 + $0x300] sm:$0xff]
        %v520 = vld [vmem:[%s342 + $0x308] sm:$0xff]
        %v521 = vld [vmem:[%s342 + $0x310] sm:$0xff]
        %v522 = vld [vmem:[%s342 + $0x318] sm:$0xff]
        %v523 = vld [vmem:[%s342 + $0x320] sm:$0xff]
        %v524 = vld [vmem:[%s342 + $0x328] sm:$0xff]
        %v525 = vld [vmem:[%s342 + $0x330] sm:$0xff]
        %v526 = vld [vmem:[%s342 + $0x338] sm:$0xff]
        %v527 = vld [vmem:[%s342 + $0x340] sm:$0xff]
        %v528 = vld [vmem:[%s342 + $0x348] sm:$0xff]
        %v529 = vld [vmem:[%s342 + $0x350] sm:$0xff]
        %v530 = vld [vmem:[%s342 + $0x358] sm:$0xff]
        %v531 = vld [vmem:[%s342 + $0x360] sm:$0xff]
        %v532 = vld [vmem:[%s342 + $0x368] sm:$0xff]
        %v533 = vld [vmem:[%s342 + $0x370] sm:$0xff]
        %v534 = vld [vmem:[%s342 + $0x378] sm:$0xff]
        %v535 = vld [vmem:[%s342 + $0x380] sm:$0xff]
        %v536 = vld [vmem:[%s342 + $0x388] sm:$0xff]
        %v537 = vld [vmem:[%s342 + $0x390] sm:$0xff]
        %v538 = vld [vmem:[%s342 + $0x398] sm:$0xff]
        %v539 = vld [vmem:[%s342 + $0x3a0] sm:$0xff]
        %v540 = vld [vmem:[%s342 + $0x3a8] sm:$0xff]
        %v541 = vld [vmem:[%s342 + $0x3b0] sm:$0xff]
        %v542 = vld [vmem:[%s342 + $0x3b8] sm:$0xff]
        %v543 = vld [vmem:[%s342 + $0x3c0] sm:$0xff]
        %v544 = vld [vmem:[%s342 + $0x3c8] sm:$0xff]
        %v545 = vld [vmem:[%s342 + $0x3d0] sm:$0xff]
        %v546 = vld [vmem:[%s342 + $0x3d8] sm:$0xff]
        %v547 = vld [vmem:[%s342 + $0x3e0] sm:$0xff]
        %v548 = vld [vmem:[%s342 + $0x3e8] sm:$0xff]
        %v549 = vld [vmem:[%s342 + $0x3f0] sm:$0xff]
        %v550 = vld [vmem:[%s342 + $0x3f8] sm:$0xff]
        %v551 = vld [vmem:[%s342 + $0x400] sm:$0xff]
        %v552 = vld [vmem:[%s342 + $0x408] sm:$0xff]
        %v553 = vld [vmem:[%s342 + $0x410] sm:$0xff]
        %v554 = vld [vmem:[%s342 + $0x418] sm:$0xff]
        %v555 = vld [vmem:[%s342 + $0x420] sm:$0xff]
        %v556 = vld [vmem:[%s342 + $0x428] sm:$0xff]
        %v557 = vld [vmem:[%s342 + $0x430] sm:$0xff]
        %v558 = vld [vmem:[%s342 + $0x438] sm:$0xff]
        %v559 = vld [vmem:[%s342 + $0x440] sm:$0xff]
        %v560 = vld [vmem:[%s342 + $0x448] sm:$0xff]
        %v561 = vld [vmem:[%s342 + $0x450] sm:$0xff]
        %v562 = vld [vmem:[%s342 + $0x458] sm:$0xff]
        %v563 = vld [vmem:[%s342 + $0x460] sm:$0xff]
        %v564 = vld [vmem:[%s342 + $0x468] sm:$0xff]
        %v565 = vld [vmem:[%s342 + $0x470] sm:$0xff]
        %v566 = vld [vmem:[%s342 + $0x478] sm:$0xff]
        %v567 = vld [vmem:[%s342 + $0x480] sm:$0xff]
        %v568 = vld [vmem:[%s342 + $0x488] sm:$0xff]
        %v569 = vld [vmem:[%s342 + $0x490] sm:$0xff]
        %v570 = vld [vmem:[%s342 + $0x498] sm:$0xff]
        %v571 = vld [vmem:[%s342 + $0x4a0] sm:$0xff]
        %v572 = vld [vmem:[%s342 + $0x4a8] sm:$0xff]
        %v573 = vld [vmem:[%s342 + $0x4b0] sm:$0xff]
        %v574 = vld [vmem:[%s342 + $0x4b8] sm:$0xff]
        %v575 = vld [vmem:[%s342 + $0x4c0] sm:$0xff]
        %v576 = vld [vmem:[%s342 + $0x4c8] sm:$0xff]
        %v577 = vld [vmem:[%s342 + $0x4d0] sm:$0xff]
        %v578 = vld [vmem:[%s342 + $0x4d8] sm:$0xff]
        %v579 = vld [vmem:[%s342 + $0x4e0] sm:$0xff]
        %v580 = vld [vmem:[%s342 + $0x4e8] sm:$0xff]
        %v581 = vld [vmem:[%s342 + $0x4f0] sm:$0xff]
        %v582 = vld [vmem:[%s342 + $0x4f8] sm:$0xff]
        %v583 = vld [vmem:[%s342 + $0x500] sm:$0xff]
        %v584 = vld [vmem:[%s342 + $0x508] sm:$0xff]
        %v585 = vld [vmem:[%s342 + $0x510] sm:$0xff]
        %v586 = vld [vmem:[%s342 + $0x518] sm:$0xff]
        %v587 = vld [vmem:[%s342 + $0x520] sm:$0xff]
        %v588 = vld [vmem:[%s342 + $0x528] sm:$0xff]
        %v589 = vld [vmem:[%s342 + $0x530] sm:$0xff]
        %v590 = vld [vmem:[%s342 + $0x538] sm:$0xff]
        %v591 = vld [vmem:[%s342 + $0x540] sm:$0xff]
        %v592 = vld [vmem:[%s342 + $0x548] sm:$0xff]
        %v593 = vld [vmem:[%s342 + $0x550] sm:$0xff]
        %v594 = vld [vmem:[%s342 + $0x558] sm:$0xff]
        %v595 = vld [vmem:[%s342 + $0x560] sm:$0xff]
        %v596 = vld [vmem:[%s342 + $0x568] sm:$0xff]
        %v597 = vld [vmem:[%s342 + $0x570] sm:$0xff]
        %v598 = vld [vmem:[%s342 + $0x578] sm:$0xff]
        %v599 = vld [vmem:[%s342 + $0x580] sm:$0xff]
        %v600 = vld [vmem:[%s342 + $0x588] sm:$0xff]
        %v601 = vld [vmem:[%s342 + $0x590] sm:$0xff]
        %v602 = vld [vmem:[%s342 + $0x598] sm:$0xff]
        %v603 = vld [vmem:[%s342 + $0x5a0] sm:$0xff]
        %v604 = vld [vmem:[%s342 + $0x5a8] sm:$0xff]
        %v605 = vld [vmem:[%s342 + $0x5b0] sm:$0xff]
        %v606 = vld [vmem:[%s342 + $0x5b8] sm:$0xff]
        %v607 = vld [vmem:[%s342 + $0x5c0] sm:$0xff]
        %v608 = vld [vmem:[%s342 + $0x5c8] sm:$0xff]
        %v609 = vld [vmem:[%s342 + $0x5d0] sm:$0xff]
        %v610 = vld [vmem:[%s342 + $0x5d8] sm:$0xff]
        %v611 = vld [vmem:[%s342 + $0x5e0] sm:$0xff]
        %v612 = vld [vmem:[%s342 + $0x5e8] sm:$0xff]
        %v613 = vld [vmem:[%s342 + $0x5f0] sm:$0xff]
        %v614 = vld [vmem:[%s342 + $0x5f8] sm:$0xff]
        %v615 = vld [vmem:[%s342 + $0x600] sm:$0xff]
        %v616 = vld [vmem:[%s342 + $0x608] sm:$0xff]
        %v617 = vld [vmem:[%s342 + $0x610] sm:$0xff]
        %v618 = vld [vmem:[%s342 + $0x618] sm:$0xff]
        %v619 = vld [vmem:[%s342 + $0x620] sm:$0xff]
        %v620 = vld [vmem:[%s342 + $0x628] sm:$0xff]
        %v621 = vld [vmem:[%s342 + $0x630] sm:$0xff]
        %v622 = vld [vmem:[%s342 + $0x638] sm:$0xff]
        %v623 = vld [vmem:[%s342 + $0x640] sm:$0xff]
        %v624 = vld [vmem:[%s342 + $0x648] sm:$0xff]
        %v625 = vld [vmem:[%s342 + $0x650] sm:$0xff]
        %v626 = vld [vmem:[%s342 + $0x658] sm:$0xff]
        %v627 = vld [vmem:[%s342 + $0x660] sm:$0xff]
        %v628 = vld [vmem:[%s342 + $0x668] sm:$0xff]
        %v629 = vld [vmem:[%s342 + $0x670] sm:$0xff]
        %v630 = vld [vmem:[%s342 + $0x678] sm:$0xff]
        %v631 = vld [vmem:[%s342 + $0x680] sm:$0xff]
        %v632 = vld [vmem:[%s342 + $0x688] sm:$0xff]
        %v633 = vld [vmem:[%s342 + $0x690] sm:$0xff]
        %v634 = vld [vmem:[%s342 + $0x698] sm:$0xff]
        %v635 = vld [vmem:[%s342 + $0x6a0] sm:$0xff]
        %v636 = vld [vmem:[%s342 + $0x6a8] sm:$0xff]
        %v637 = vld [vmem:[%s342 + $0x6b0] sm:$0xff]
        %v638 = vld [vmem:[%s342 + $0x6b8] sm:$0xff]
        %v639 = vld [vmem:[%s342 + $0x6c0] sm:$0xff]
        %v640 = vld [vmem:[%s342 + $0x6c8] sm:$0xff]
        %v641 = vld [vmem:[%s342 + $0x6d0] sm:$0xff]
        %v642 = vld [vmem:[%s342 + $0x6d8] sm:$0xff]
        %v643 = vld [vmem:[%s342 + $0x6e0] sm:$0xff]
        %v644 = vld [vmem:[%s342 + $0x6e8] sm:$0xff]
        %v645 = vld [vmem:[%s342 + $0x6f0] sm:$0xff]
        %v646 = vld [vmem:[%s342 + $0x6f8] sm:$0xff]
        %v647 = vld [vmem:[%s342 + $0x700] sm:$0xff]
        %v648 = vld [vmem:[%s342 + $0x708] sm:$0xff]
        %v649 = vld [vmem:[%s342 + $0x710] sm:$0xff]
        %v650 = vld [vmem:[%s342 + $0x718] sm:$0xff]
        %v651 = vld [vmem:[%s342 + $0x720] sm:$0xff]
        %v652 = vld [vmem:[%s342 + $0x728] sm:$0xff]
        %v653 = vld [vmem:[%s342 + $0x730] sm:$0xff]
        %v654 = vld [vmem:[%s342 + $0x738] sm:$0xff]
        %v655 = vld [vmem:[%s342 + $0x740] sm:$0xff]
        %v656 = vld [vmem:[%s342 + $0x748] sm:$0xff]
        %v657 = vld [vmem:[%s342 + $0x750] sm:$0xff]
        %v658 = vld [vmem:[%s342 + $0x758] sm:$0xff]
        %v659 = vld [vmem:[%s342 + $0x760] sm:$0xff]
        %v660 = vld [vmem:[%s342 + $0x768] sm:$0xff]
        %v661 = vld [vmem:[%s342 + $0x770] sm:$0xff]
        %v662 = vld [vmem:[%s342 + $0x778] sm:$0xff]
        %v663 = vld [vmem:[%s342 + $0x780] sm:$0xff]
        %v664 = vld [vmem:[%s342 + $0x788] sm:$0xff]
        %v665 = vld [vmem:[%s342 + $0x790] sm:$0xff]
        %v666 = vld [vmem:[%s342 + $0x798] sm:$0xff]
        %v667 = vld [vmem:[%s342 + $0x7a0] sm:$0xff]
        %v668 = vld [vmem:[%s342 + $0x7a8] sm:$0xff]
        %v669 = vld [vmem:[%s342 + $0x7b0] sm:$0xff]
        %v670 = vld [vmem:[%s342 + $0x7b8] sm:$0xff]
        %v671 = vld [vmem:[%s342 + $0x7c0] sm:$0xff]
        %v672 = vld [vmem:[%s342 + $0x7c8] sm:$0xff]
        %v673 = vld [vmem:[%s342 + $0x7d0] sm:$0xff]
        %v674 = vld [vmem:[%s342 + $0x7d8] sm:$0xff]
        %v675 = vld [vmem:[%s342 + $0x7e0] sm:$0xff]
        %v676 = vld [vmem:[%s342 + $0x7e8] sm:$0xff]
        %v677 = vld [vmem:[%s342 + $0x7f0] sm:$0xff]
        %v678 = vld [vmem:[%s342 + $0x7f8] sm:$0xff]
        %v679 = vld [vmem:[%s342 + $0x800] sm:$0xff]
        %v680 = vld [vmem:[%s342 + $0x808] sm:$0xff]
        %v681 = vld [vmem:[%s342 + $0x810] sm:$0xff]
        %v682 = vld [vmem:[%s342 + $0x818] sm:$0xff]
        %v683 = vld [vmem:[%s342 + $0x820] sm:$0xff]
        %v684 = vld [vmem:[%s342 + $0x828] sm:$0xff]
        %v685 = vld [vmem:[%s342 + $0x830] sm:$0xff]
        %v686 = vld [vmem:[%s342 + $0x838] sm:$0xff]
        %v687 = vld [vmem:[%s342 + $0x840] sm:$0xff]
        %v688 = vld [vmem:[%s342 + $0x848] sm:$0xff]
        %v689 = vld [vmem:[%s342 + $0x850] sm:$0xff]
        %v690 = vld [vmem:[%s342 + $0x858] sm:$0xff]
        %v691 = vld [vmem:[%s342 + $0x860] sm:$0xff]
        %v692 = vld [vmem:[%s342 + $0x868] sm:$0xff]
        %v693 = vld [vmem:[%s342 + $0x870] sm:$0xff]
        %v694 = vld [vmem:[%s342 + $0x878] sm:$0xff]
        %v695 = vld [vmem:[%s342 + $0x880] sm:$0xff]
        %v696 = vld [vmem:[%s342 + $0x888] sm:$0xff]
        %v697 = vld [vmem:[%s342 + $0x890] sm:$0xff]
        %v698 = vld [vmem:[%s342 + $0x898] sm:$0xff]
        %v699 = vld [vmem:[%s342 + $0x8a0] sm:$0xff]
        %v700 = vld [vmem:[%s342 + $0x8a8] sm:$0xff]
        %v701 = vld [vmem:[%s342 + $0x8b0] sm:$0xff]
        %v702 = vld [vmem:[%s342 + $0x8b8] sm:$0xff]
        %v703 = vld [vmem:[%s342 + $0x8c0] sm:$0xff]
        %v704 = vld [vmem:[%s342 + $0x8c8] sm:$0xff]
        %v705 = vld [vmem:[%s342 + $0x8d0] sm:$0xff]
        %v706 = vld [vmem:[%s342 + $0x8d8] sm:$0xff]
        %v707 = vld [vmem:[%s342 + $0x8e0] sm:$0xff]
        %v708 = vld [vmem:[%s342 + $0x8e8] sm:$0xff]
        %v709 = vld [vmem:[%s342 + $0x8f0] sm:$0xff]
        %v710 = vld [vmem:[%s342 + $0x8f8] sm:$0xff]
        %v711 = vld [vmem:[%s342 + $0x900] sm:$0xff]
        %v712 = vld [vmem:[%s342 + $0x908] sm:$0xff]
        %v713 = vld [vmem:[%s342 + $0x910] sm:$0xff]
        %v714 = vld [vmem:[%s342 + $0x918] sm:$0xff]
        %v715 = vld [vmem:[%s342 + $0x920] sm:$0xff]
        %v716 = vld [vmem:[%s342 + $0x928] sm:$0xff]
        %v717 = vld [vmem:[%s342 + $0x930] sm:$0xff]
        %v718 = vld [vmem:[%s342 + $0x938] sm:$0xff]
        %v719 = vld [vmem:[%s342 + $0x940] sm:$0xff]
        %v720 = vld [vmem:[%s342 + $0x948] sm:$0xff]
        %v721 = vld [vmem:[%s342 + $0x950] sm:$0xff]
        %v722 = vld [vmem:[%s342 + $0x958] sm:$0xff]
        %v723 = vld [vmem:[%s342 + $0x960] sm:$0xff]
        %v724 = vld [vmem:[%s342 + $0x968] sm:$0xff]
        %v725 = vld [vmem:[%s342 + $0x970] sm:$0xff]
        %v726 = vld [vmem:[%s342 + $0x978] sm:$0xff]
        %v727 = vld [vmem:[%s342 + $0x980] sm:$0xff]
        %v728 = vld [vmem:[%s342 + $0x988] sm:$0xff]
        %v729 = vld [vmem:[%s342 + $0x990] sm:$0xff]
        %v730 = vld [vmem:[%s342 + $0x998] sm:$0xff]
        %v731 = vld [vmem:[%s342 + $0x9a0] sm:$0xff]
        %v732 = vld [vmem:[%s342 + $0x9a8] sm:$0xff]
        %v733 = vld [vmem:[%s342 + $0x9b0] sm:$0xff]
        %v734 = vld [vmem:[%s342 + $0x9b8] sm:$0xff]
        %v735 = vld [vmem:[%s342 + $0x9c0] sm:$0xff]
        %v736 = vld [vmem:[%s342 + $0x9c8] sm:$0xff]
        %v737 = vld [vmem:[%s342 + $0x9d0] sm:$0xff]
        %v738 = vld [vmem:[%s342 + $0x9d8] sm:$0xff]
        %v739 = vld [vmem:[%s342 + $0x9e0] sm:$0xff]
        %v740 = vld [vmem:[%s342 + $0x9e8] sm:$0xff]
        %v741 = vld [vmem:[%s342 + $0x9f0] sm:$0xff]
        %v742 = vld [vmem:[%s342 + $0x9f8] sm:$0xff]
        %v743 = vld [vmem:[%s342 + $0xa00] sm:$0xff]
        %v744 = vld [vmem:[%s342 + $0xa08] sm:$0xff]
        %v745 = vld [vmem:[%s342 + $0xa10] sm:$0xff]
        %v746 = vld [vmem:[%s342 + $0xa18] sm:$0xff]
        %v747 = vld [vmem:[%s342 + $0xa20] sm:$0xff]
        %v748 = vld [vmem:[%s342 + $0xa28] sm:$0xff]
        %v749 = vld [vmem:[%s342 + $0xa30] sm:$0xff]
        %v750 = vld [vmem:[%s342 + $0xa38] sm:$0xff]
        %v751 = vld [vmem:[%s342 + $0xa40] sm:$0xff]
        %v752 = vld [vmem:[%s342 + $0xa48] sm:$0xff]
        %v753 = vld [vmem:[%s342 + $0xa50] sm:$0xff]
        %v754 = vld [vmem:[%s342 + $0xa58] sm:$0xff]
        %v755 = vld [vmem:[%s342 + $0xa60] sm:$0xff]
        %v756 = vld [vmem:[%s342 + $0xa68] sm:$0xff]
        %v757 = vld [vmem:[%s342 + $0xa70] sm:$0xff]
        %v758 = vld [vmem:[%s342 + $0xa78] sm:$0xff]
        %v759 = vld [vmem:[%s342 + $0xa80] sm:$0xff]
        %v760 = vld [vmem:[%s342 + $0xa88] sm:$0xff]
        %v761 = vld [vmem:[%s342 + $0xa90] sm:$0xff]
        %v762 = vld [vmem:[%s342 + $0xa98] sm:$0xff]
        %v763 = vld [vmem:[%s342 + $0xaa0] sm:$0xff]
        %v764 = vld [vmem:[%s342 + $0xaa8] sm:$0xff]
        %v765 = vld [vmem:[%s342 + $0xab0] sm:$0xff]
        %v766 = vld [vmem:[%s342 + $0xab8] sm:$0xff]
        %v767 = vld [vmem:[%s342 + $0xac0] sm:$0xff]
        %v768 = vld [vmem:[%s342 + $0xac8] sm:$0xff]
        %v769 = vld [vmem:[%s342 + $0xad0] sm:$0xff]
        %v770 = vld [vmem:[%s342 + $0xad8] sm:$0xff]
        %v771 = vld [vmem:[%s342 + $0xae0] sm:$0xff]
        %v772 = vld [vmem:[%s342 + $0xae8] sm:$0xff]
        %v773 = vld [vmem:[%s342 + $0xaf0] sm:$0xff]
        %v774 = vld [vmem:[%s342 + $0xaf8] sm:$0xff]
        %v775 = vld [vmem:[%s342 + $0xb00] sm:$0xff]
        %v776 = vld [vmem:[%s342 + $0xb08] sm:$0xff]
        %v777 = vld [vmem:[%s342 + $0xb10] sm:$0xff]
        %v778 = vld [vmem:[%s342 + $0xb18] sm:$0xff]
        %v779 = vld [vmem:[%s342 + $0xb20] sm:$0xff]
        %v780 = vld [vmem:[%s342 + $0xb28] sm:$0xff]
        %v781 = vld [vmem:[%s342 + $0xb30] sm:$0xff]
        %v782 = vld [vmem:[%s342 + $0xb38] sm:$0xff]
        %v783 = vld [vmem:[%s342 + $0xb40] sm:$0xff]
        %v784 = vld [vmem:[%s342 + $0xb48] sm:$0xff]
        %v785 = vld [vmem:[%s342 + $0xb50] sm:$0xff]
        %v786 = vld [vmem:[%s342 + $0xb58] sm:$0xff]
        %v787 = vld [vmem:[%s342 + $0xb60] sm:$0xff]
        %v788 = vld [vmem:[%s342 + $0xb68] sm:$0xff]
        %v789 = vld [vmem:[%s342 + $0xb70] sm:$0xff]
        %v790 = vld [vmem:[%s342 + $0xb78] sm:$0xff]
        %v791 = vld [vmem:[%s342 + $0xb80] sm:$0xff]
        %v792 = vld [vmem:[%s342 + $0xb88] sm:$0xff]
        %v793 = vld [vmem:[%s342 + $0xb90] sm:$0xff]
        %v794 = vld [vmem:[%s342 + $0xb98] sm:$0xff]
        %v795 = vld [vmem:[%s342 + $0xba0] sm:$0xff]
        %v796 = vld [vmem:[%s342 + $0xba8] sm:$0xff]
        %v797 = vld [vmem:[%s342 + $0xbb0] sm:$0xff]
        %v798 = vld [vmem:[%s342 + $0xbb8] sm:$0xff]
        %v799 = vld [vmem:[%s342 + $0xbc0] sm:$0xff]
        %v800 = vld [vmem:[%s342 + $0xbc8] sm:$0xff]
        %v801 = vld [vmem:[%s342 + $0xbd0] sm:$0xff]
        %v802 = vld [vmem:[%s342 + $0xbd8] sm:$0xff]
        %v803 = vld [vmem:[%s342 + $0xbe0] sm:$0xff]
        %v804 = vld [vmem:[%s342 + $0xbe8] sm:$0xff]
        %v805 = vld [vmem:[%s342 + $0xbf0] sm:$0xff]
        %v806 = vld [vmem:[%s342 + $0xbf8] sm:$0xff]
        %v807 = vld [vmem:[%s342 + $0xc00] sm:$0xff]
        %v808 = vld [vmem:[%s342 + $0xc08] sm:$0xff]
        %v809 = vld [vmem:[%s342 + $0xc10] sm:$0xff]
        %v810 = vld [vmem:[%s342 + $0xc18] sm:$0xff]
        %v811 = vld [vmem:[%s342 + $0xc20] sm:$0xff]
        %v812 = vld [vmem:[%s342 + $0xc28] sm:$0xff]
        %v813 = vld [vmem:[%s342 + $0xc30] sm:$0xff]
        %v814 = vld [vmem:[%s342 + $0xc38] sm:$0xff]
        %v815 = vld [vmem:[%s342 + $0xc40] sm:$0xff]
        %v816 = vld [vmem:[%s342 + $0xc48] sm:$0xff]
        %v817 = vld [vmem:[%s342 + $0xc50] sm:$0xff]
        %v818 = vld [vmem:[%s342 + $0xc58] sm:$0xff]
        %v819 = vld [vmem:[%s342 + $0xc60] sm:$0xff]
        %v820 = vld [vmem:[%s342 + $0xc68] sm:$0xff]
        %v821 = vld [vmem:[%s342 + $0xc70] sm:$0xff]
        %v822 = vld [vmem:[%s342 + $0xc78] sm:$0xff]
        %v823 = vld [vmem:[%s342 + $0xc80] sm:$0xff]
        %v824 = vld [vmem:[%s342 + $0xc88] sm:$0xff]
        %v825 = vld [vmem:[%s342 + $0xc90] sm:$0xff]
        %v826 = vld [vmem:[%s342 + $0xc98] sm:$0xff]
        %v827 = vld [vmem:[%s342 + $0xca0] sm:$0xff]
        %v828 = vld [vmem:[%s342 + $0xca8] sm:$0xff]
        %v829 = vld [vmem:[%s342 + $0xcb0] sm:$0xff]
        %v830 = vld [vmem:[%s342 + $0xcb8] sm:$0xff]
        %v831 = vld [vmem:[%s342 + $0xcc0] sm:$0xff]
        %v832 = vld [vmem:[%s342 + $0xcc8] sm:$0xff]
        %v833 = vld [vmem:[%s342 + $0xcd0] sm:$0xff]
        %v834 = vld [vmem:[%s342 + $0xcd8] sm:$0xff]
        %v835 = vld [vmem:[%s342 + $0xce0] sm:$0xff]
        %v836 = vld [vmem:[%s342 + $0xce8] sm:$0xff]
        %v837 = vld [vmem:[%s342 + $0xcf0] sm:$0xff]
        %v838 = vld [vmem:[%s342 + $0xcf8] sm:$0xff]
        %v839 = vld [vmem:[%s342 + $0xd00] sm:$0xff]
        %v840 = vld [vmem:[%s342 + $0xd08] sm:$0xff]
        %v841 = vld [vmem:[%s342 + $0xd10] sm:$0xff]
        %v842 = vld [vmem:[%s342 + $0xd18] sm:$0xff]
        %v843 = vld [vmem:[%s342 + $0xd20] sm:$0xff]
        %v844 = vld [vmem:[%s342 + $0xd28] sm:$0xff]
        %v845 = vld [vmem:[%s342 + $0xd30] sm:$0xff]
        %v846 = vld [vmem:[%s342 + $0xd38] sm:$0xff]
        %v847 = vld [vmem:[%s342 + $0xd40] sm:$0xff]
        %v848 = vld [vmem:[%s342 + $0xd48] sm:$0xff]
        %v849 = vld [vmem:[%s342 + $0xd50] sm:$0xff]
        %v850 = vld [vmem:[%s342 + $0xd58] sm:$0xff]
        %v851 = vld [vmem:[%s342 + $0xd60] sm:$0xff]
        %v852 = vld [vmem:[%s342 + $0xd68] sm:$0xff]
        %v853 = vld [vmem:[%s342 + $0xd70] sm:$0xff]
        %v854 = vld [vmem:[%s342 + $0xd78] sm:$0xff]
        %v855 = vld [vmem:[%s342 + $0xd80] sm:$0xff]
        %v856 = vld [vmem:[%s342 + $0xd88] sm:$0xff]
        %v857 = vld [vmem:[%s342 + $0xd90] sm:$0xff]
        %v858 = vld [vmem:[%s342 + $0xd98] sm:$0xff]
        %v859 = vld [vmem:[%s342 + $0xda0] sm:$0xff]
        %v860 = vld [vmem:[%s342 + $0xda8] sm:$0xff]
        %v861 = vld [vmem:[%s342 + $0xdb0] sm:$0xff]
        %v862 = vld [vmem:[%s342 + $0xdb8] sm:$0xff]
        %v863 = vld [vmem:[%s342 + $0xdc0] sm:$0xff]
        %v864 = vld [vmem:[%s342 + $0xdc8] sm:$0xff]
        %v865 = vld [vmem:[%s342 + $0xdd0] sm:$0xff]
        %v866 = vld [vmem:[%s342 + $0xdd8] sm:$0xff]
        %v867 = vld [vmem:[%s342 + $0xde0] sm:$0xff]
        %v868 = vld [vmem:[%s342 + $0xde8] sm:$0xff]
        %v869 = vld [vmem:[%s342 + $0xdf0] sm:$0xff]
        %v870 = vld [vmem:[%s342 + $0xdf8] sm:$0xff]
        %v871 = vld [vmem:[%s342 + $0xe00] sm:$0xff]
        %v872 = vld [vmem:[%s342 + $0xe08] sm:$0xff]
        %v873 = vld [vmem:[%s342 + $0xe10] sm:$0xff]
        %v874 = vld [vmem:[%s342 + $0xe18] sm:$0xff]
        %v875 = vld [vmem:[%s342 + $0xe20] sm:$0xff]
        %v876 = vld [vmem:[%s342 + $0xe28] sm:$0xff]
        %v877 = vld [vmem:[%s342 + $0xe30] sm:$0xff]
        %v878 = vld [vmem:[%s342 + $0xe38] sm:$0xff]
        %v879 = vld [vmem:[%s342 + $0xe40] sm:$0xff]
        %v880 = vld [vmem:[%s342 + $0xe48] sm:$0xff]
        %v881 = vld [vmem:[%s342 + $0xe50] sm:$0xff]
        %v882 = vld [vmem:[%s342 + $0xe58] sm:$0xff]
        %v883 = vld [vmem:[%s342 + $0xe60] sm:$0xff]
        %v884 = vld [vmem:[%s342 + $0xe68] sm:$0xff]
        %v885 = vld [vmem:[%s342 + $0xe70] sm:$0xff]
        %v886 = vld [vmem:[%s342 + $0xe78] sm:$0xff]
        %v887 = vld [vmem:[%s342 + $0xe80] sm:$0xff]
        %v888 = vld [vmem:[%s342 + $0xe88] sm:$0xff]
        %v889 = vld [vmem:[%s342 + $0xe90] sm:$0xff]
        %v890 = vld [vmem:[%s342 + $0xe98] sm:$0xff]
        %v891 = vld [vmem:[%s342 + $0xea0] sm:$0xff]
        %v892 = vld [vmem:[%s342 + $0xea8] sm:$0xff]
        %v893 = vld [vmem:[%s342 + $0xeb0] sm:$0xff]
        %v894 = vld [vmem:[%s342 + $0xeb8] sm:$0xff]
        %v895 = vld [vmem:[%s342 + $0xec0] sm:$0xff]
        %v896 = vld [vmem:[%s342 + $0xec8] sm:$0xff]
        %v897 = vld [vmem:[%s342 + $0xed0] sm:$0xff]
        %v898 = vld [vmem:[%s342 + $0xed8] sm:$0xff]
        %v899 = vld [vmem:[%s342 + $0xee0] sm:$0xff]
        %v900 = vld [vmem:[%s342 + $0xee8] sm:$0xff]
        %v901 = vld [vmem:[%s342 + $0xef0] sm:$0xff]
        %v902 = vld [vmem:[%s342 + $0xef8] sm:$0xff]
        %v903 = vld [vmem:[%s342 + $0xf00] sm:$0xff]
        %v904 = vld [vmem:[%s342 + $0xf08] sm:$0xff]
        %v905 = vld [vmem:[%s342 + $0xf10] sm:$0xff]
        %v906 = vld [vmem:[%s342 + $0xf18] sm:$0xff]
        %v907 = vld [vmem:[%s342 + $0xf20] sm:$0xff]
        %v908 = vld [vmem:[%s342 + $0xf28] sm:$0xff]
        %v909 = vld [vmem:[%s342 + $0xf30] sm:$0xff]
        %v910 = vld [vmem:[%s342 + $0xf38] sm:$0xff]
        %v911 = vld [vmem:[%s342 + $0xf40] sm:$0xff]
        %v912 = vld [vmem:[%s342 + $0xf48] sm:$0xff]
        %v913 = vld [vmem:[%s342 + $0xf50] sm:$0xff]
        %v914 = vld [vmem:[%s342 + $0xf58] sm:$0xff]
        %v915 = vld [vmem:[%s342 + $0xf60] sm:$0xff]
        %v916 = vld [vmem:[%s342 + $0xf68] sm:$0xff]
        %v917 = vld [vmem:[%s342 + $0xf70] sm:$0xff]
        %v918 = vld [vmem:[%s342 + $0xf78] sm:$0xff]
        %v919 = vld [vmem:[%s342 + $0xf80] sm:$0xff]
        %v920 = vld [vmem:[%s342 + $0xf88] sm:$0xff]
        %v921 = vld [vmem:[%s342 + $0xf90] sm:$0xff]
        %v922 = vld [vmem:[%s342 + $0xf98] sm:$0xff]
        %v923 = vld [vmem:[%s342 + $0xfa0] sm:$0xff]
        %v924 = vld [vmem:[%s342 + $0xfa8] sm:$0xff]
        %v925 = vld [vmem:[%s342 + $0xfb0] sm:$0xff]
        %v926 = vld [vmem:[%s342 + $0xfb8] sm:$0xff]
        %v927 = vld [vmem:[%s342 + $0xfc0] sm:$0xff]
        %v928 = vld [vmem:[%s342 + $0xfc8] sm:$0xff]
        %v929 = vld [vmem:[%s342 + $0xfd0] sm:$0xff]
        %v930 = vld [vmem:[%s342 + $0xfd8] sm:$0xff]
        %v931 = vld [vmem:[%s342 + $0xfe0] sm:$0xff]
        %v932 = vld [vmem:[%s342 + $0xfe8] sm:$0xff]
        %v933 = vld [vmem:[%s342 + $0xff0] sm:$0xff]
        %v934 = vld [vmem:[%s342 + $0xff8] sm:$0xff]
        %v935 = vld [vmem:[%s342 + $0x1000] sm:$0xff]
        %v936 = vld [vmem:[%s342 + $0x1008] sm:$0xff]
        %v937 = vld [vmem:[%s342 + $0x1010] sm:$0xff]
        %v938 = vld [vmem:[%s342 + $0x1018] sm:$0xff]
        %v939 = vld [vmem:[%s342 + $0x1020] sm:$0xff]
        %v940 = vld [vmem:[%s342 + $0x1028] sm:$0xff]
        %v941 = vld [vmem:[%s342 + $0x1030] sm:$0xff]
        %v942 = vld [vmem:[%s342 + $0x1038] sm:$0xff]
        %v943 = vld [vmem:[%s342 + $0x1040] sm:$0xff]
        %v944 = vld [vmem:[%s342 + $0x1048] sm:$0xff]
        %v945 = vld [vmem:[%s342 + $0x1050] sm:$0xff]
        %v946 = vld [vmem:[%s342 + $0x1058] sm:$0xff]
        %v947 = vld [vmem:[%s342 + $0x1060] sm:$0xff]
        %v948 = vld [vmem:[%s342 + $0x1068] sm:$0xff]
        %v949 = vld [vmem:[%s342 + $0x1070] sm:$0xff]
        %v950 = vld [vmem:[%s342 + $0x1078] sm:$0xff]
        %v951 = vld [vmem:[%s342 + $0x1080] sm:$0xff]
        %v952 = vld [vmem:[%s342 + $0x1088] sm:$0xff]
        %v953 = vld [vmem:[%s342 + $0x1090] sm:$0xff]
        %v954 = vld [vmem:[%s342 + $0x1098] sm:$0xff]
        %v955 = vld [vmem:[%s342 + $0x10a0] sm:$0xff]
        %v956 = vld [vmem:[%s342 + $0x10a8] sm:$0xff]
        %v957 = vld [vmem:[%s342 + $0x10b0] sm:$0xff]
        %v958 = vld [vmem:[%s342 + $0x10b8] sm:$0xff]
        %v959 = vld [vmem:[%s342 + $0x10c0] sm:$0xff]
        %v960 = vld [vmem:[%s342 + $0x10c8] sm:$0xff]
        %v961 = vld [vmem:[%s342 + $0x10d0] sm:$0xff]
        %v962 = vld [vmem:[%s342 + $0x10d8] sm:$0xff]
        %v963 = vld [vmem:[%s342 + $0x10e0] sm:$0xff]
        %v964 = vld [vmem:[%s342 + $0x10e8] sm:$0xff]
        %v965 = vld [vmem:[%s342 + $0x10f0] sm:$0xff]
        %v966 = vld [vmem:[%s342 + $0x10f8] sm:$0xff]
        %v967 = vld [vmem:[%s342 + $0x1100] sm:$0xff]
        %v968 = vld [vmem:[%s342 + $0x1108] sm:$0xff]
        %v969 = vld [vmem:[%s342 + $0x1110] sm:$0xff]
        %v970 = vld [vmem:[%s342 + $0x1118] sm:$0xff]
        %v971 = vld [vmem:[%s342 + $0x1120] sm:$0xff]
        %v972 = vld [vmem:[%s342 + $0x1128] sm:$0xff]
        %v973 = vld [vmem:[%s342 + $0x1130] sm:$0xff]
        %v974 = vld [vmem:[%s342 + $0x1138] sm:$0xff]
        %v975 = vld [vmem:[%s342 + $0x1140] sm:$0xff]
        %v976 = vld [vmem:[%s342 + $0x1148] sm:$0xff]
        %v977 = vld [vmem:[%s342 + $0x1150] sm:$0xff]
        %v978 = vld [vmem:[%s342 + $0x1158] sm:$0xff]
        %v979 = vld [vmem:[%s342 + $0x1160] sm:$0xff]
        %v980 = vld [vmem:[%s342 + $0x1168] sm:$0xff]
        %v981 = vld [vmem:[%s342 + $0x1170] sm:$0xff]
        %v982 = vld [vmem:[%s342 + $0x1178] sm:$0xff]
        %v983 = vld [vmem:[%s342 + $0x1180] sm:$0xff]
        %v984 = vld [vmem:[%s342 + $0x1188] sm:$0xff]
        %v985 = vld [vmem:[%s342 + $0x1190] sm:$0xff]
        %v986 = vld [vmem:[%s342 + $0x1198] sm:$0xff]
        %v987 = vld [vmem:[%s342 + $0x11a0] sm:$0xff]
        %v988 = vld [vmem:[%s342 + $0x11a8] sm:$0xff]
        %v989 = vld [vmem:[%s342 + $0x11b0] sm:$0xff]
        %v990 = vld [vmem:[%s342 + $0x11b8] sm:$0xff]
        %v991 = vld [vmem:[%s342 + $0x11c0] sm:$0xff]
        %v992 = vld [vmem:[%s342 + $0x11c8] sm:$0xff]
        %v993 = vld [vmem:[%s342 + $0x11d0] sm:$0xff]
        %v994 = vld [vmem:[%s342 + $0x11d8] sm:$0xff]
        %v995 = vld [vmem:[%s342 + $0x11e0] sm:$0xff]
        %v996 = vld [vmem:[%s342 + $0x11e8] sm:$0xff]
        %v997 = vld [vmem:[%s342 + $0x11f0] sm:$0xff]
        %v998 = vld [vmem:[%s342 + $0x11f8] sm:$0xff]
        %v999 = vld [vmem:[%s342 + $0x1200] sm:$0xff]
        %v1000 = vld [vmem:[%s342 + $0x1208] sm:$0xff]
        %v1001 = vld [vmem:[%s342 + $0x1210] sm:$0xff]
        %v1002 = vld [vmem:[%s342 + $0x1218] sm:$0xff]
        %v1003 = vld [vmem:[%s342 + $0x1220] sm:$0xff]
        %v1004 = vld [vmem:[%s342 + $0x1228] sm:$0xff]
        %v1005 = vld [vmem:[%s342 + $0x1230] sm:$0xff]
        %v1006 = vld [vmem:[%s342 + $0x1238] sm:$0xff]
        %v1007 = vld [vmem:[%s342 + $0x1240] sm:$0xff]
        %v1008 = vld [vmem:[%s342 + $0x1248] sm:$0xff]
        %v1009 = vld [vmem:[%s342 + $0x1250] sm:$0xff]
        %v1010 = vld [vmem:[%s342 + $0x1258] sm:$0xff]
        %v1011 = vld [vmem:[%s342 + $0x1260] sm:$0xff]
        %v1012 = vld [vmem:[%s342 + $0x1268] sm:$0xff]
        %v1013 = vld [vmem:[%s342 + $0x1270] sm:$0xff]
        %v1014 = vld [vmem:[%s342 + $0x1278] sm:$0xff]
        %v1015 = vld [vmem:[%s342 + $0x1280] sm:$0xff]
        %v1016 = vld [vmem:[%s342 + $0x1288] sm:$0xff]
        %v1017 = vld [vmem:[%s342 + $0x1290] sm:$0xff]
        %v1018 = vld [vmem:[%s342 + $0x1298] sm:$0xff]
        %v1019 = vld [vmem:[%s342 + $0x12a0] sm:$0xff]
        %v1020 = vld [vmem:[%s342 + $0x12a8] sm:$0xff]
        %v1021 = vld [vmem:[%s342 + $0x12b0] sm:$0xff]
        %v1022 = vld [vmem:[%s342 + $0x12b8] sm:$0xff]
        %v1023 = vld [vmem:[%s342 + $0x12c0] sm:$0xff]
        %v1024 = vld [vmem:[%s342 + $0x12c8] sm:$0xff]
        %v1025 = vld [vmem:[%s342 + $0x12d0] sm:$0xff]
        %v1026 = vld [vmem:[%s342 + $0x12d8] sm:$0xff]
        %v1027 = vld [vmem:[%s342 + $0x12e0] sm:$0xff]
        %v1028 = vld [vmem:[%s342 + $0x12e8] sm:$0xff]
        %v1029 = vld [vmem:[%s342 + $0x12f0] sm:$0xff]
        %v1030 = vld [vmem:[%s342 + $0x12f8] sm:$0xff]
        %v1031 = vld [vmem:[%s342 + $0x1300] sm:$0xff]
        %v1032 = vld [vmem:[%s342 + $0x1308] sm:$0xff]
        %v1033 = vld [vmem:[%s342 + $0x1310] sm:$0xff]
        %v1034 = vld [vmem:[%s342 + $0x1318] sm:$0xff]
        %v1035 = vld [vmem:[%s342 + $0x1320] sm:$0xff]
        %v1036 = vld [vmem:[%s342 + $0x1328] sm:$0xff]
        %v1037 = vld [vmem:[%s342 + $0x1330] sm:$0xff]
        %v1038 = vld [vmem:[%s342 + $0x1338] sm:$0xff]
        %v1039 = vld [vmem:[%s342 + $0x1340] sm:$0xff]
        %v1040 = vld [vmem:[%s342 + $0x1348] sm:$0xff]
        %v1041 = vld [vmem:[%s342 + $0x1350] sm:$0xff]
        %v1042 = vld [vmem:[%s342 + $0x1358] sm:$0xff]
        %v1043 = vld [vmem:[%s342 + $0x1360] sm:$0xff]
        %v1044 = vld [vmem:[%s342 + $0x1368] sm:$0xff]
        %v1045 = vld [vmem:[%s342 + $0x1370] sm:$0xff]
        %v1046 = vld [vmem:[%s342 + $0x1378] sm:$0xff]
        %v1047 = vld [vmem:[%s342 + $0x1380] sm:$0xff]
        %v1048 = vld [vmem:[%s342 + $0x1388] sm:$0xff]
        %v1049 = vld [vmem:[%s342 + $0x1390] sm:$0xff]
        %v1050 = vld [vmem:[%s342 + $0x1398] sm:$0xff]
        %v1051 = vld [vmem:[%s342 + $0x13a0] sm:$0xff]
        %v1052 = vld [vmem:[%s342 + $0x13a8] sm:$0xff]
        %v1053 = vld [vmem:[%s342 + $0x13b0] sm:$0xff]
        %v1054 = vld [vmem:[%s342 + $0x13b8] sm:$0xff]
        %v1055 = vld [vmem:[%s342 + $0x13c0] sm:$0xff]
        %v1056 = vld [vmem:[%s342 + $0x13c8] sm:$0xff]
        %v1057 = vld [vmem:[%s342 + $0x13d0] sm:$0xff]
        %v1058 = vld [vmem:[%s342 + $0x13d8] sm:$0xff]
        %v1059 = vld [vmem:[%s342 + $0x13e0] sm:$0xff]
        %v1060 = vld [vmem:[%s342 + $0x13e8] sm:$0xff]
        %v1061 = vld [vmem:[%s342 + $0x13f0] sm:$0xff]
        %v1062 = vld [vmem:[%s342 + $0x13f8] sm:$0xff]
        %v1063 = vld [vmem:[%s342 + $0x1400] sm:$0xff]
        %v1064 = vld [vmem:[%s342 + $0x1408] sm:$0xff]
        %v1065 = vld [vmem:[%s342 + $0x1410] sm:$0xff]
        %v1066 = vld [vmem:[%s342 + $0x1418] sm:$0xff]
        %v1067 = vld [vmem:[%s342 + $0x1420] sm:$0xff]
        %v1068 = vld [vmem:[%s342 + $0x1428] sm:$0xff]
        %v1069 = vld [vmem:[%s342 + $0x1430] sm:$0xff]
        %v1070 = vld [vmem:[%s342 + $0x1438] sm:$0xff]
        %v1071 = vld [vmem:[%s342 + $0x1440] sm:$0xff]
        %v1072 = vld [vmem:[%s342 + $0x1448] sm:$0xff]
        %v1073 = vld [vmem:[%s342 + $0x1450] sm:$0xff]
        %v1074 = vld [vmem:[%s342 + $0x1458] sm:$0xff]
        %v1075 = vld [vmem:[%s342 + $0x1460] sm:$0xff]
        %v1076 = vld [vmem:[%s342 + $0x1468] sm:$0xff]
        %v1077 = vld [vmem:[%s342 + $0x1470] sm:$0xff]
        %v1078 = vld [vmem:[%s342 + $0x1478] sm:$0xff]
        %v1079 = vld [vmem:[%s342 + $0x1480] sm:$0xff]
        %v1080 = vld [vmem:[%s342 + $0x1488] sm:$0xff]
        %v1081 = vld [vmem:[%s342 + $0x1490] sm:$0xff]
        %v1082 = vld [vmem:[%s342 + $0x1498] sm:$0xff]
        %v1083 = vld [vmem:[%s342 + $0x14a0] sm:$0xff]
        %v1084 = vld [vmem:[%s342 + $0x14a8] sm:$0xff]
        %v1085 = vld [vmem:[%s342 + $0x14b0] sm:$0xff]
        %v1086 = vld [vmem:[%s342 + $0x14b8] sm:$0xff]
        %v1087 = vld [vmem:[%s342 + $0x14c0] sm:$0xff]
        %v1088 = vld [vmem:[%s342 + $0x14c8] sm:$0xff]
        %v1089 = vld [vmem:[%s342 + $0x14d0] sm:$0xff]
        %v1090 = vld [vmem:[%s342 + $0x14d8] sm:$0xff]
        %v1091 = vld [vmem:[%s342 + $0x14e0] sm:$0xff]
        %v1092 = vld [vmem:[%s342 + $0x14e8] sm:$0xff]
        %v1093 = vld [vmem:[%s342 + $0x14f0] sm:$0xff]
        %v1094 = vld [vmem:[%s342 + $0x14f8] sm:$0xff]
        %v1095 = vld [vmem:[%s342 + $0x1500] sm:$0xff]
        %v1096 = vld [vmem:[%s342 + $0x1508] sm:$0xff]
        %v1097 = vld [vmem:[%s342 + $0x1510] sm:$0xff]
        %v1098 = vld [vmem:[%s342 + $0x1518] sm:$0xff]
        %v1099 = vld [vmem:[%s342 + $0x1520] sm:$0xff]
        %v1100 = vld [vmem:[%s342 + $0x1528] sm:$0xff]
        %v1101 = vld [vmem:[%s342 + $0x1530] sm:$0xff]
        %v1102 = vld [vmem:[%s342 + $0x1538] sm:$0xff]
        %v1103 = vld [vmem:[%s342 + $0x1540] sm:$0xff]
        %v1104 = vld [vmem:[%s342 + $0x1548] sm:$0xff]
        %v1105 = vld [vmem:[%s342 + $0x1550] sm:$0xff]
        %v1106 = vld [vmem:[%s342 + $0x1558] sm:$0xff]
        %v1107 = vld [vmem:[%s342 + $0x1560] sm:$0xff]
        %v1108 = vld [vmem:[%s342 + $0x1568] sm:$0xff]
        %v1109 = vld [vmem:[%s342 + $0x1570] sm:$0xff]
        %v1110 = vld [vmem:[%s342 + $0x1578] sm:$0xff]
        %v1111 = vld [vmem:[%s342 + $0x1580] sm:$0xff]
        %v1112 = vld [vmem:[%s342 + $0x1588] sm:$0xff]
        %v1113 = vld [vmem:[%s342 + $0x1590] sm:$0xff]
        %v1114 = vld [vmem:[%s342 + $0x1598] sm:$0xff]
        %v1115 = vld [vmem:[%s342 + $0x15a0] sm:$0xff]
        %v1116 = vld [vmem:[%s342 + $0x15a8] sm:$0xff]
        %v1117 = vld [vmem:[%s342 + $0x15b0] sm:$0xff]
        %v1118 = vld [vmem:[%s342 + $0x15b8] sm:$0xff]
        %v1119 = vld [vmem:[%s342 + $0x15c0] sm:$0xff]
        %v1120 = vld [vmem:[%s342 + $0x15c8] sm:$0xff]
        %v1121 = vld [vmem:[%s342 + $0x15d0] sm:$0xff]
        %v1122 = vld [vmem:[%s342 + $0x15d8] sm:$0xff]
        %v1123 = vld [vmem:[%s342 + $0x15e0] sm:$0xff]
        %v1124 = vld [vmem:[%s342 + $0x15e8] sm:$0xff]
        %v1125 = vld [vmem:[%s342 + $0x15f0] sm:$0xff]
        %v1126 = vld [vmem:[%s342 + $0x15f8] sm:$0xff]
        %v1127 = vld [vmem:[%s342 + $0x1600] sm:$0xff]
        %v1128 = vld [vmem:[%s342 + $0x1608] sm:$0xff]
        %v1129 = vld [vmem:[%s342 + $0x1610] sm:$0xff]
        %v1130 = vld [vmem:[%s342 + $0x1618] sm:$0xff]
        %v1131 = vld [vmem:[%s342 + $0x1620] sm:$0xff]
        %v1132 = vld [vmem:[%s342 + $0x1628] sm:$0xff]
        %v1133 = vld [vmem:[%s342 + $0x1630] sm:$0xff]
        %v1134 = vld [vmem:[%s342 + $0x1638] sm:$0xff]
        %v1135 = vld [vmem:[%s342 + $0x1640] sm:$0xff]
        %v1136 = vld [vmem:[%s342 + $0x1648] sm:$0xff]
        %v1137 = vld [vmem:[%s342 + $0x1650] sm:$0xff]
        %v1138 = vld [vmem:[%s342 + $0x1658] sm:$0xff]
        %v1139 = vld [vmem:[%s342 + $0x1660] sm:$0xff]
        %v1140 = vld [vmem:[%s342 + $0x1668] sm:$0xff]
        %v1141 = vld [vmem:[%s342 + $0x1670] sm:$0xff]
        %v1142 = vld [vmem:[%s342 + $0x1678] sm:$0xff]
        %v1143 = vld [vmem:[%s342 + $0x1680] sm:$0xff]
        %v1144 = vld [vmem:[%s342 + $0x1688] sm:$0xff]
        %v1145 = vld [vmem:[%s342 + $0x1690] sm:$0xff]
        %v1146 = vld [vmem:[%s342 + $0x1698] sm:$0xff]
        %v1147 = vld [vmem:[%s342 + $0x16a0] sm:$0xff]
        %v1148 = vld [vmem:[%s342 + $0x16a8] sm:$0xff]
        %v1149 = vld [vmem:[%s342 + $0x16b0] sm:$0xff]
        %v1150 = vld [vmem:[%s342 + $0x16b8] sm:$0xff]
        %v1151 = vld [vmem:[%s342 + $0x16c0] sm:$0xff]
        %v1152 = vld [vmem:[%s342 + $0x16c8] sm:$0xff]
        %v1153 = vld [vmem:[%s342 + $0x16d0] sm:$0xff]
        %v1154 = vld [vmem:[%s342 + $0x16d8] sm:$0xff]
        %v1155 = vld [vmem:[%s342 + $0x16e0] sm:$0xff]
        %v1156 = vld [vmem:[%s342 + $0x16e8] sm:$0xff]
        %v1157 = vld [vmem:[%s342 + $0x16f0] sm:$0xff]
        %v1158 = vld [vmem:[%s342 + $0x16f8] sm:$0xff]
        %v1159 = vld [vmem:[%s342 + $0x1700] sm:$0xff]
        %v1160 = vld [vmem:[%s342 + $0x1708] sm:$0xff]
        %v1161 = vld [vmem:[%s342 + $0x1710] sm:$0xff]
        %v1162 = vld [vmem:[%s342 + $0x1718] sm:$0xff]
        %v1163 = vld [vmem:[%s342 + $0x1720] sm:$0xff]
        %v1164 = vld [vmem:[%s342 + $0x1728] sm:$0xff]
        %v1165 = vld [vmem:[%s342 + $0x1730] sm:$0xff]
        %v1166 = vld [vmem:[%s342 + $0x1738] sm:$0xff]
        %v1167 = vld [vmem:[%s342 + $0x1740] sm:$0xff]
        %v1168 = vld [vmem:[%s342 + $0x1748] sm:$0xff]
        %v1169 = vld [vmem:[%s342 + $0x1750] sm:$0xff]
        %v1170 = vld [vmem:[%s342 + $0x1758] sm:$0xff]
        %v1171 = vld [vmem:[%s342 + $0x1760] sm:$0xff]
        %v1172 = vld [vmem:[%s342 + $0x1768] sm:$0xff]
        %v1173 = vld [vmem:[%s342 + $0x1770] sm:$0xff]
        %v1174 = vld [vmem:[%s342 + $0x1778] sm:$0xff]
        %v1175 = vld [vmem:[%s342 + $0x1780] sm:$0xff]
        %v1176 = vld [vmem:[%s342 + $0x1788] sm:$0xff]
        %v1177 = vld [vmem:[%s342 + $0x1790] sm:$0xff]
        %v1178 = vld [vmem:[%s342 + $0x1798] sm:$0xff]
        %v1179 = vld [vmem:[%s342 + $0x17a0] sm:$0xff]
        %v1180 = vld [vmem:[%s342 + $0x17a8] sm:$0xff]
        %v1181 = vld [vmem:[%s342 + $0x17b0] sm:$0xff]
        %v1182 = vld [vmem:[%s342 + $0x17b8] sm:$0xff]
        %v1183 = vld [vmem:[%s342 + $0x17c0] sm:$0xff]
        %v1184 = vld [vmem:[%s342 + $0x17c8] sm:$0xff]
        %v1185 = vld [vmem:[%s342 + $0x17d0] sm:$0xff]
        %v1186 = vld [vmem:[%s342 + $0x17d8] sm:$0xff]
        %v1187 = vld [vmem:[%s342 + $0x17e0] sm:$0xff]
        %v1188 = vld [vmem:[%s342 + $0x17e8] sm:$0xff]
        %v1189 = vld [vmem:[%s342 + $0x17f0] sm:$0xff]
        %v1190 = vld [vmem:[%s342 + $0x17f8] sm:$0xff]
        %v1191 = vld [vmem:[%s342 + $0x1800] sm:$0xff]
        %v1192 = vld [vmem:[%s342 + $0x1808] sm:$0xff]
        %v1193 = vld [vmem:[%s342 + $0x1810] sm:$0xff]
        %v1194 = vld [vmem:[%s342 + $0x1818] sm:$0xff]
        %v1195 = vld [vmem:[%s342 + $0x1820] sm:$0xff]
        %v1196 = vld [vmem:[%s342 + $0x1828] sm:$0xff]
        %v1197 = vld [vmem:[%s342 + $0x1830] sm:$0xff]
        %v1198 = vld [vmem:[%s342 + $0x1838] sm:$0xff]
        %v1199 = vld [vmem:[%s342 + $0x1840] sm:$0xff]
        %v1200 = vld [vmem:[%s342 + $0x1848] sm:$0xff]
        %v1201 = vld [vmem:[%s342 + $0x1850] sm:$0xff]
        %v1202 = vld [vmem:[%s342 + $0x1858] sm:$0xff]
        %v1203 = vld [vmem:[%s342 + $0x1860] sm:$0xff]
        %v1204 = vld [vmem:[%s342 + $0x1868] sm:$0xff]
        %v1205 = vld [vmem:[%s342 + $0x1870] sm:$0xff]
        %v1206 = vld [vmem:[%s342 + $0x1878] sm:$0xff]
        %v1207 = vld [vmem:[%s342 + $0x1880] sm:$0xff]
        %v1208 = vld [vmem:[%s342 + $0x1888] sm:$0xff]
        %v1209 = vld [vmem:[%s342 + $0x1890] sm:$0xff]
        %v1210 = vld [vmem:[%s342 + $0x1898] sm:$0xff]
        %v1211 = vld [vmem:[%s342 + $0x18a0] sm:$0xff]
        %v1212 = vld [vmem:[%s342 + $0x18a8] sm:$0xff]
        %v1213 = vld [vmem:[%s342 + $0x18b0] sm:$0xff]
        %v1214 = vld [vmem:[%s342 + $0x18b8] sm:$0xff]
        %v1215 = vld [vmem:[%s342 + $0x18c0] sm:$0xff]
        %v1216 = vld [vmem:[%s342 + $0x18c8] sm:$0xff]
        %v1217 = vld [vmem:[%s342 + $0x18d0] sm:$0xff]
        %v1218 = vld [vmem:[%s342 + $0x18d8] sm:$0xff]
        %v1219 = vld [vmem:[%s342 + $0x18e0] sm:$0xff]
        %v1220 = vld [vmem:[%s342 + $0x18e8] sm:$0xff]
        %v1221 = vld [vmem:[%s342 + $0x18f0] sm:$0xff]
        %v1222 = vld [vmem:[%s342 + $0x18f8] sm:$0xff]
        %v1223 = vld [vmem:[%s342 + $0x1900] sm:$0xff]
        %v1224 = vld [vmem:[%s342 + $0x1908] sm:$0xff]
        %v1225 = vld [vmem:[%s342 + $0x1910] sm:$0xff]
        %v1226 = vld [vmem:[%s342 + $0x1918] sm:$0xff]
        %v1227 = vld [vmem:[%s342 + $0x1920] sm:$0xff]
        %v1228 = vld [vmem:[%s342 + $0x1928] sm:$0xff]
        %v1229 = vld [vmem:[%s342 + $0x1930] sm:$0xff]
        %v1230 = vld [vmem:[%s342 + $0x1938] sm:$0xff]
        %v1231 = vld [vmem:[%s342 + $0x1940] sm:$0xff]
        %v1232 = vld [vmem:[%s342 + $0x1948] sm:$0xff]
        %v1233 = vld [vmem:[%s342 + $0x1950] sm:$0xff]
        %v1234 = vld [vmem:[%s342 + $0x1958] sm:$0xff]
        %v1235 = vld [vmem:[%s342 + $0x1960] sm:$0xff]
        %v1236 = vld [vmem:[%s342 + $0x1968] sm:$0xff]
        %v1237 = vld [vmem:[%s342 + $0x1970] sm:$0xff]
        %v1238 = vld [vmem:[%s342 + $0x1978] sm:$0xff]
        %v1239 = vld [vmem:[%s342 + $0x1980] sm:$0xff]
        %v1240 = vld [vmem:[%s342 + $0x1988] sm:$0xff]
        %v1241 = vld [vmem:[%s342 + $0x1990] sm:$0xff]
        %v1242 = vld [vmem:[%s342 + $0x1998] sm:$0xff]
        %v1243 = vld [vmem:[%s342 + $0x19a0] sm:$0xff]
        %v1244 = vld [vmem:[%s342 + $0x19a8] sm:$0xff]
        %v1245 = vld [vmem:[%s342 + $0x19b0] sm:$0xff]
        %v1246 = vld [vmem:[%s342 + $0x19b8] sm:$0xff]
        %v1247 = vld [vmem:[%s342 + $0x19c0] sm:$0xff]
        %v1248 = vld [vmem:[%s342 + $0x19c8] sm:$0xff]
        %v1249 = vld [vmem:[%s342 + $0x19d0] sm:$0xff]
        %v1250 = vld [vmem:[%s342 + $0x19d8] sm:$0xff]
        %v1251 = vld [vmem:[%s342 + $0x19e0] sm:$0xff]
        %v1252 = vld [vmem:[%s342 + $0x19e8] sm:$0xff]
        %v1253 = vld [vmem:[%s342 + $0x19f0] sm:$0xff]
        %v1254 = vld [vmem:[%s342 + $0x19f8] sm:$0xff]
        %v1255 = vld [vmem:[%s342 + $0x1a00] sm:$0xff]
        %v1256 = vld [vmem:[%s342 + $0x1a08] sm:$0xff]
        %v1257 = vld [vmem:[%s342 + $0x1a10] sm:$0xff]
        %v1258 = vld [vmem:[%s342 + $0x1a18] sm:$0xff]
        %v1259 = vld [vmem:[%s342 + $0x1a20] sm:$0xff]
        %v1260 = vld [vmem:[%s342 + $0x1a28] sm:$0xff]
        %v1261 = vld [vmem:[%s342 + $0x1a30] sm:$0xff]
        %v1262 = vld [vmem:[%s342 + $0x1a38] sm:$0xff]
        %v1263 = vld [vmem:[%s342 + $0x1a40] sm:$0xff]
        %v1264 = vld [vmem:[%s342 + $0x1a48] sm:$0xff]
        %v1265 = vld [vmem:[%s342 + $0x1a50] sm:$0xff]
        %v1266 = vld [vmem:[%s342 + $0x1a58] sm:$0xff]
        %v1267 = vld [vmem:[%s342 + $0x1a60] sm:$0xff]
        %v1268 = vld [vmem:[%s342 + $0x1a68] sm:$0xff]
        %v1269 = vld [vmem:[%s342 + $0x1a70] sm:$0xff]
        %v1270 = vld [vmem:[%s342 + $0x1a78] sm:$0xff]
        %v1271 = vld [vmem:[%s342 + $0x1a80] sm:$0xff]
        %v1272 = vld [vmem:[%s342 + $0x1a88] sm:$0xff]
        %v1273 = vld [vmem:[%s342 + $0x1a90] sm:$0xff]
        %v1274 = vld [vmem:[%s342 + $0x1a98] sm:$0xff]
        %v1275 = vld [vmem:[%s342 + $0x1aa0] sm:$0xff]
        %v1276 = vld [vmem:[%s342 + $0x1aa8] sm:$0xff]
        %v1277 = vld [vmem:[%s342 + $0x1ab0] sm:$0xff]
        %v1278 = vld [vmem:[%s342 + $0x1ab8] sm:$0xff]
        %v1279 = vld [vmem:[%s342 + $0x1ac0] sm:$0xff]
        %v1280 = vld [vmem:[%s342 + $0x1ac8] sm:$0xff]
        %v1281 = vld [vmem:[%s342 + $0x1ad0] sm:$0xff]
        %v1282 = vld [vmem:[%s342 + $0x1ad8] sm:$0xff]
        %v1283 = vld [vmem:[%s342 + $0x1ae0] sm:$0xff]
        %v1284 = vld [vmem:[%s342 + $0x1ae8] sm:$0xff]
        %v1285 = vld [vmem:[%s342 + $0x1af0] sm:$0xff]
        %v1286 = vld [vmem:[%s342 + $0x1af8] sm:$0xff]
        %v1287 = vld [vmem:[%s342 + $0x1b00] sm:$0xff]
        %v1288 = vld [vmem:[%s342 + $0x1b08] sm:$0xff]
        %v1289 = vld [vmem:[%s342 + $0x1b10] sm:$0xff]
        %v1290 = vld [vmem:[%s342 + $0x1b18] sm:$0xff]
        %v1291 = vld [vmem:[%s342 + $0x1b20] sm:$0xff]
        %v1292 = vld [vmem:[%s342 + $0x1b28] sm:$0xff]
        %v1293 = vld [vmem:[%s342 + $0x1b30] sm:$0xff]
        %v1294 = vld [vmem:[%s342 + $0x1b38] sm:$0xff]
        %v1295 = vld [vmem:[%s342 + $0x1b40] sm:$0xff]
        %v1296 = vld [vmem:[%s342 + $0x1b48] sm:$0xff]
        %v1297 = vld [vmem:[%s342 + $0x1b50] sm:$0xff]
        %v1298 = vld [vmem:[%s342 + $0x1b58] sm:$0xff]
        %v1299 = vld [vmem:[%s342 + $0x1b60] sm:$0xff]
        %v1300 = vld [vmem:[%s342 + $0x1b68] sm:$0xff]
        %v1301 = vld [vmem:[%s342 + $0x1b70] sm:$0xff]
        %v1302 = vld [vmem:[%s342 + $0x1b78] sm:$0xff]
        %v1303 = vld [vmem:[%s342 + $0x1b80] sm:$0xff]
        %v1304 = vld [vmem:[%s342 + $0x1b88] sm:$0xff]
        %v1305 = vld [vmem:[%s342 + $0x1b90] sm:$0xff]
        %v1306 = vld [vmem:[%s342 + $0x1b98] sm:$0xff]
        %v1307 = vld [vmem:[%s342 + $0x1ba0] sm:$0xff]
        %v1308 = vld [vmem:[%s342 + $0x1ba8] sm:$0xff]
        %v1309 = vld [vmem:[%s342 + $0x1bb0] sm:$0xff]
        %v1310 = vld [vmem:[%s342 + $0x1bb8] sm:$0xff]
        %v1311 = vld [vmem:[%s342 + $0x1bc0] sm:$0xff]
        %v1312 = vld [vmem:[%s342 + $0x1bc8] sm:$0xff]
        %v1313 = vld [vmem:[%s342 + $0x1bd0] sm:$0xff]
        %v1314 = vld [vmem:[%s342 + $0x1bd8] sm:$0xff]
        %v1315 = vld [vmem:[%s342 + $0x1be0] sm:$0xff]
        %v1316 = vld [vmem:[%s342 + $0x1be8] sm:$0xff]
        %v1317 = vld [vmem:[%s342 + $0x1bf0] sm:$0xff]
        %v1318 = vld [vmem:[%s342 + $0x1bf8] sm:$0xff]
        %v1319 = vld [vmem:[%s342 + $0x1c00] sm:$0xff]
        %v1320 = vld [vmem:[%s342 + $0x1c08] sm:$0xff]
        %v1321 = vld [vmem:[%s342 + $0x1c10] sm:$0xff]
        %v1322 = vld [vmem:[%s342 + $0x1c18] sm:$0xff]
        %v1323 = vld [vmem:[%s342 + $0x1c20] sm:$0xff]
        %v1324 = vld [vmem:[%s342 + $0x1c28] sm:$0xff]
        %v1325 = vld [vmem:[%s342 + $0x1c30] sm:$0xff]
        %v1326 = vld [vmem:[%s342 + $0x1c38] sm:$0xff]
        %v1327 = vld [vmem:[%s342 + $0x1c40] sm:$0xff]
        %v1328 = vld [vmem:[%s342 + $0x1c48] sm:$0xff]
        %v1329 = vld [vmem:[%s342 + $0x1c50] sm:$0xff]
        %v1330 = vld [vmem:[%s342 + $0x1c58] sm:$0xff]
        %v1331 = vld [vmem:[%s342 + $0x1c60] sm:$0xff]
        %v1332 = vld [vmem:[%s342 + $0x1c68] sm:$0xff]
        %v1333 = vld [vmem:[%s342 + $0x1c70] sm:$0xff]
        %v1334 = vld [vmem:[%s342 + $0x1c78] sm:$0xff]
        %v1335 = vld [vmem:[%s342 + $0x1c80] sm:$0xff]
        %v1336 = vld [vmem:[%s342 + $0x1c88] sm:$0xff]
        %v1337 = vld [vmem:[%s342 + $0x1c90] sm:$0xff]
        %v1338 = vld [vmem:[%s342 + $0x1c98] sm:$0xff]
        %v1339 = vld [vmem:[%s342 + $0x1ca0] sm:$0xff]
        %v1340 = vld [vmem:[%s342 + $0x1ca8] sm:$0xff]
        %v1341 = vld [vmem:[%s342 + $0x1cb0] sm:$0xff]
        %v1342 = vld [vmem:[%s342 + $0x1cb8] sm:$0xff]
        %v1343 = vld [vmem:[%s342 + $0x1cc0] sm:$0xff]
        %v1344 = vld [vmem:[%s342 + $0x1cc8] sm:$0xff]
        %v1345 = vld [vmem:[%s342 + $0x1cd0] sm:$0xff]
        %v1346 = vld [vmem:[%s342 + $0x1cd8] sm:$0xff]
        %v1347 = vld [vmem:[%s342 + $0x1ce0] sm:$0xff]
        %v1348 = vld [vmem:[%s342 + $0x1ce8] sm:$0xff]
        %v1349 = vld [vmem:[%s342 + $0x1cf0] sm:$0xff]
        %v1350 = vld [vmem:[%s342 + $0x1cf8] sm:$0xff]
        %v1351 = vld [vmem:[%s342 + $0x1d00] sm:$0xff]
        %v1352 = vld [vmem:[%s342 + $0x1d08] sm:$0xff]
        %v1353 = vld [vmem:[%s342 + $0x1d10] sm:$0xff]
        %v1354 = vld [vmem:[%s342 + $0x1d18] sm:$0xff]
        %v1355 = vld [vmem:[%s342 + $0x1d20] sm:$0xff]
        %v1356 = vld [vmem:[%s342 + $0x1d28] sm:$0xff]
        %v1357 = vld [vmem:[%s342 + $0x1d30] sm:$0xff]
        %v1358 = vld [vmem:[%s342 + $0x1d38] sm:$0xff]
        %v1359 = vld [vmem:[%s342 + $0x1d40] sm:$0xff]
        %v1360 = vld [vmem:[%s342 + $0x1d48] sm:$0xff]
        %v1361 = vld [vmem:[%s342 + $0x1d50] sm:$0xff]
        %v1362 = vld [vmem:[%s342 + $0x1d58] sm:$0xff]
        %v1363 = vld [vmem:[%s342 + $0x1d60] sm:$0xff]
        %v1364 = vld [vmem:[%s342 + $0x1d68] sm:$0xff]
        %v1365 = vld [vmem:[%s342 + $0x1d70] sm:$0xff]
        %v1366 = vld [vmem:[%s342 + $0x1d78] sm:$0xff]
        %v1367 = vld [vmem:[%s342 + $0x1d80] sm:$0xff]
        %v1368 = vld [vmem:[%s342 + $0x1d88] sm:$0xff]
        %v1369 = vld [vmem:[%s342 + $0x1d90] sm:$0xff]
        %v1370 = vld [vmem:[%s342 + $0x1d98] sm:$0xff]
        %v1371 = vld [vmem:[%s342 + $0x1da0] sm:$0xff]
        %v1372 = vld [vmem:[%s342 + $0x1da8] sm:$0xff]
        %v1373 = vld [vmem:[%s342 + $0x1db0] sm:$0xff]
        %v1374 = vld [vmem:[%s342 + $0x1db8] sm:$0xff]
        %v1375 = vld [vmem:[%s342 + $0x1dc0] sm:$0xff]
        %v1376 = vld [vmem:[%s342 + $0x1dc8] sm:$0xff]
        %v1377 = vld [vmem:[%s342 + $0x1dd0] sm:$0xff]
        %v1378 = vld [vmem:[%s342 + $0x1dd8] sm:$0xff]
        %v1379 = vld [vmem:[%s342 + $0x1de0] sm:$0xff]
        %v1380 = vld [vmem:[%s342 + $0x1de8] sm:$0xff]
        %v1381 = vld [vmem:[%s342 + $0x1df0] sm:$0xff]
        %v1382 = vld [vmem:[%s342 + $0x1df8] sm:$0xff]
        %v1383 = vld [vmem:[%s342 + $0x1e00] sm:$0xff]
        %v1384 = vld [vmem:[%s342 + $0x1e08] sm:$0xff]
        %v1385 = vld [vmem:[%s342 + $0x1e10] sm:$0xff]
        %v1386 = vld [vmem:[%s342 + $0x1e18] sm:$0xff]
        %v1387 = vld [vmem:[%s342 + $0x1e20] sm:$0xff]
        %v1388 = vld [vmem:[%s342 + $0x1e28] sm:$0xff]
        %v1389 = vld [vmem:[%s342 + $0x1e30] sm:$0xff]
        %v1390 = vld [vmem:[%s342 + $0x1e38] sm:$0xff]
        %v1391 = vld [vmem:[%s342 + $0x1e40] sm:$0xff]
        %v1392 = vld [vmem:[%s342 + $0x1e48] sm:$0xff]
        %v1393 = vld [vmem:[%s342 + $0x1e50] sm:$0xff]
        %v1394 = vld [vmem:[%s342 + $0x1e58] sm:$0xff]
        %v1395 = vld [vmem:[%s342 + $0x1e60] sm:$0xff]
        %v1396 = vld [vmem:[%s342 + $0x1e68] sm:$0xff]
        %v1397 = vld [vmem:[%s342 + $0x1e70] sm:$0xff]
        %v1398 = vld [vmem:[%s342 + $0x1e78] sm:$0xff]
        %v1399 = vld [vmem:[%s342 + $0x1e80] sm:$0xff]
        %v1400 = vld [vmem:[%s342 + $0x1e88] sm:$0xff]
        %v1401 = vld [vmem:[%s342 + $0x1e90] sm:$0xff]
        %v1402 = vld [vmem:[%s342 + $0x1e98] sm:$0xff]
        %v1403 = vld [vmem:[%s342 + $0x1ea0] sm:$0xff]
        %v1404 = vld [vmem:[%s342 + $0x1ea8] sm:$0xff]
        %v1405 = vld [vmem:[%s342 + $0x1eb0] sm:$0xff]
        %v1406 = vld [vmem:[%s342 + $0x1eb8] sm:$0xff]
        %v1407 = vld [vmem:[%s342 + $0x1ec0] sm:$0xff]
        %v1408 = vld [vmem:[%s342 + $0x1ec8] sm:$0xff]
        %v1409 = vld [vmem:[%s342 + $0x1ed0] sm:$0xff]
        %v1410 = vld [vmem:[%s342 + $0x1ed8] sm:$0xff]
        %v1411 = vld [vmem:[%s342 + $0x1ee0] sm:$0xff]
        %v1412 = vld [vmem:[%s342 + $0x1ee8] sm:$0xff]
        %v1413 = vld [vmem:[%s342 + $0x1ef0] sm:$0xff]
        %v1414 = vld [vmem:[%s342 + $0x1ef8] sm:$0xff]
        %v1415 = vld [vmem:[%s342 + $0x1f00] sm:$0xff]
        %v1416 = vld [vmem:[%s342 + $0x1f08] sm:$0xff]
        %v1417 = vld [vmem:[%s342 + $0x1f10] sm:$0xff]
        %v1418 = vld [vmem:[%s342 + $0x1f18] sm:$0xff]
        %v1419 = vld [vmem:[%s342 + $0x1f20] sm:$0xff]
        %v1420 = vld [vmem:[%s342 + $0x1f28] sm:$0xff]
        %v1421 = vld [vmem:[%s342 + $0x1f30] sm:$0xff]
        %v1422 = vld [vmem:[%s342 + $0x1f38] sm:$0xff]
        %v1423 = vld [vmem:[%s342 + $0x1f40] sm:$0xff]
        %v1424 = vld [vmem:[%s342 + $0x1f48] sm:$0xff]
        %v1425 = vld [vmem:[%s342 + $0x1f50] sm:$0xff]
        %v1426 = vld [vmem:[%s342 + $0x1f58] sm:$0xff]
        %v1427 = vld [vmem:[%s342 + $0x1f60] sm:$0xff]
        %v1428 = vld [vmem:[%s342 + $0x1f68] sm:$0xff]
        %v1429 = vld [vmem:[%s342 + $0x1f70] sm:$0xff]
        %v1430 = vld [vmem:[%s342 + $0x1f78] sm:$0xff]
        %v1431 = vld [vmem:[%s342 + $0x1f80] sm:$0xff]
        %v1432 = vld [vmem:[%s342 + $0x1f88] sm:$0xff]
        %v1433 = vld [vmem:[%s342 + $0x1f90] sm:$0xff]
        %v1434 = vld [vmem:[%s342 + $0x1f98] sm:$0xff]
        %v1435 = vld [vmem:[%s342 + $0x1fa0] sm:$0xff]
        %v1436 = vld [vmem:[%s342 + $0x1fa8] sm:$0xff]
        %v1437 = vld [vmem:[%s342 + $0x1fb0] sm:$0xff]
        %v1438 = vld [vmem:[%s342 + $0x1fb8] sm:$0xff]
        %v1439 = vld [vmem:[%s342 + $0x1fc0] sm:$0xff]
        %v1440 = vld [vmem:[%s342 + $0x1fc8] sm:$0xff]
        %v1441 = vld [vmem:[%s342 + $0x1fd0] sm:$0xff]
        %v1442 = vld [vmem:[%s342 + $0x1fd8] sm:$0xff]
        %v1443 = vld [vmem:[%s342 + $0x1fe0] sm:$0xff]
        %v1444 = vld [vmem:[%s342 + $0x1fe8] sm:$0xff]
        %v1445 = vld [vmem:[%s342 + $0x1ff0] sm:$0xff]
        %v1446 = vld [vmem:[%s342 + $0x1ff8] sm:$0xff]
        %v1463 = vunpack.c.l.b16 %v407
        %v1464 = vunpack.c.h.b16 %v407
        %v1465 = vunpack.c.l.b16 %v408
        %v1466 = vunpack.c.h.b16 %v408
        %v1467 = vunpack.c.l.b16 %v409
        %v1468 = vunpack.c.h.b16 %v409
        %v1469 = vunpack.c.l.b16 %v410
        %v1470 = vunpack.c.h.b16 %v410
        %v1471 = vunpack.c.l.b16 %v411
        %v1472 = vunpack.c.h.b16 %v411
        %v1473 = vunpack.c.l.b16 %v412
        %v1474 = vunpack.c.h.b16 %v412
        %v1475 = vunpack.c.l.b16 %v413
        %v1476 = vunpack.c.h.b16 %v413
        %v1477 = vunpack.c.l.b16 %v414
        %v1478 = vunpack.c.h.b16 %v414
        %v1479 = vunpack.c.l.b16 %v415
        %v1480 = vunpack.c.h.b16 %v415
        %v1481 = vunpack.c.l.b16 %v416
        %v1482 = vunpack.c.h.b16 %v416
        %v1483 = vunpack.c.l.b16 %v417
        %v1484 = vunpack.c.h.b16 %v417
        %v1485 = vunpack.c.l.b16 %v418
        %v1486 = vunpack.c.h.b16 %v418
        %v1487 = vunpack.c.l.b16 %v419
        %v1488 = vunpack.c.h.b16 %v419
        %v1489 = vunpack.c.l.b16 %v420
        %v1490 = vunpack.c.h.b16 %v420
        %v1491 = vunpack.c.l.b16 %v421
        %v1492 = vunpack.c.h.b16 %v421
        %v1493 = vunpack.c.l.b16 %v422
        %v1494 = vunpack.c.h.b16 %v422
        %v1495 = vpack.c.b16 %v1463, %v1463
        %v1496 = vpack.c.b16 %v1464, %v1464
        %v1497 = vpack.c.b16 %v1465, %v1465
        %v1498 = vpack.c.b16 %v1466, %v1466
        %v1499 = vpack.c.b16 %v1467, %v1467
        %v1500 = vpack.c.b16 %v1468, %v1468
        %v1501 = vpack.c.b16 %v1469, %v1469
        %v1502 = vpack.c.b16 %v1470, %v1470
        %v1503 = vpack.c.b16 %v1471, %v1471
        %v1504 = vpack.c.b16 %v1472, %v1472
        %v1505 = vpack.c.b16 %v1473, %v1473
        %v1506 = vpack.c.b16 %v1474, %v1474
        %v1507 = vpack.c.b16 %v1475, %v1475
        %v1508 = vpack.c.b16 %v1476, %v1476
        %v1509 = vpack.c.b16 %v1477, %v1477
        %v1510 = vpack.c.b16 %v1478, %v1478
        %v1511 = vpack.c.b16 %v1479, %v1479
        %v1512 = vpack.c.b16 %v1480, %v1480
        %v1513 = vpack.c.b16 %v1481, %v1481
        %v1514 = vpack.c.b16 %v1482, %v1482
        %v1515 = vpack.c.b16 %v1483, %v1483
        %v1516 = vpack.c.b16 %v1484, %v1484
        %v1517 = vpack.c.b16 %v1485, %v1485
        %v1518 = vpack.c.b16 %v1486, %v1486
        %v1519 = vpack.c.b16 %v1487, %v1487
        %v1520 = vpack.c.b16 %v1488, %v1488
        %v1521 = vpack.c.b16 %v1489, %v1489
        %v1522 = vpack.c.b16 %v1490, %v1490
        %v1523 = vpack.c.b16 %v1491, %v1491
        %v1524 = vpack.c.b16 %v1492, %v1492
        %v1525 = vpack.c.b16 %v1493, %v1493
        %v1526 = vpack.c.b16 %v1494, %v1494
        %v2583 = vunpack.c.l.b16 %v423
        %v2584 = vunpack.c.h.b16 %v423
        %v2585 = vunpack.c.l.b16 %v424
        %v2586 = vunpack.c.h.b16 %v424
        %v2587 = vunpack.c.l.b16 %v425
        %v2588 = vunpack.c.h.b16 %v425
        %v2589 = vunpack.c.l.b16 %v426
        %v2590 = vunpack.c.h.b16 %v426
        %v2591 = vunpack.c.l.b16 %v427
        %v2592 = vunpack.c.h.b16 %v427
        %v2593 = vunpack.c.l.b16 %v428
        %v2594 = vunpack.c.h.b16 %v428
        %v2595 = vunpack.c.l.b16 %v429
        %v2596 = vunpack.c.h.b16 %v429
        %v2597 = vunpack.c.l.b16 %v430
        %v2598 = vunpack.c.h.b16 %v430
        %v2599 = vunpack.c.l.b16 %v431
        %v2600 = vunpack.c.h.b16 %v431
        %v2601 = vunpack.c.l.b16 %v432
        %v2602 = vunpack.c.h.b16 %v432
        %v2603 = vunpack.c.l.b16 %v433
        %v2604 = vunpack.c.h.b16 %v433
        %v2605 = vunpack.c.l.b16 %v434
        %v2606 = vunpack.c.h.b16 %v434
        %v2607 = vunpack.c.l.b16 %v435
        %v2608 = vunpack.c.h.b16 %v435
        %v2609 = vunpack.c.l.b16 %v436
        %v2610 = vunpack.c.h.b16 %v436
        %v2611 = vunpack.c.l.b16 %v437
        %v2612 = vunpack.c.h.b16 %v437
        %v2613 = vunpack.c.l.b16 %v438
        %v2614 = vunpack.c.h.b16 %v438
        %v2615 = vunpack.c.l.b16 %v439
        %v2616 = vunpack.c.h.b16 %v439
        %v2617 = vunpack.c.l.b16 %v440
        %v2618 = vunpack.c.h.b16 %v440
        %v2619 = vunpack.c.l.b16 %v441
        %v2620 = vunpack.c.h.b16 %v441
        %v2621 = vunpack.c.l.b16 %v442
        %v2622 = vunpack.c.h.b16 %v442
        %v2623 = vunpack.c.l.b16 %v443
        %v2624 = vunpack.c.h.b16 %v443
        %v2625 = vunpack.c.l.b16 %v444
        %v2626 = vunpack.c.h.b16 %v444
        %v2627 = vunpack.c.l.b16 %v445
        %v2628 = vunpack.c.h.b16 %v445
        %v2629 = vunpack.c.l.b16 %v446
        %v2630 = vunpack.c.h.b16 %v446
        %v2631 = vunpack.c.l.b16 %v447
        %v2632 = vunpack.c.h.b16 %v447
        %v2633 = vunpack.c.l.b16 %v448
        %v2634 = vunpack.c.h.b16 %v448
        %v2635 = vunpack.c.l.b16 %v449
        %v2636 = vunpack.c.h.b16 %v449
        %v2637 = vunpack.c.l.b16 %v450
        %v2638 = vunpack.c.h.b16 %v450
        %v2639 = vunpack.c.l.b16 %v451
        %v2640 = vunpack.c.h.b16 %v451
        %v2641 = vunpack.c.l.b16 %v452
        %v2642 = vunpack.c.h.b16 %v452
        %v2643 = vunpack.c.l.b16 %v453
        %v2644 = vunpack.c.h.b16 %v453
        %v2645 = vunpack.c.l.b16 %v454
        %v2646 = vunpack.c.h.b16 %v454
        %v2647 = vunpack.c.l.b16 %v455
        %v2648 = vunpack.c.h.b16 %v455
        %v2649 = vunpack.c.l.b16 %v456
        %v2650 = vunpack.c.h.b16 %v456
        %v2651 = vunpack.c.l.b16 %v457
        %v2652 = vunpack.c.h.b16 %v457
        %v2653 = vunpack.c.l.b16 %v458
        %v2654 = vunpack.c.h.b16 %v458
        %v2655 = vunpack.c.l.b16 %v459
        %v2656 = vunpack.c.h.b16 %v459
        %v2657 = vunpack.c.l.b16 %v460
        %v2658 = vunpack.c.h.b16 %v460
        %v2659 = vunpack.c.l.b16 %v461
        %v2660 = vunpack.c.h.b16 %v461
        %v2661 = vunpack.c.l.b16 %v462
        %v2662 = vunpack.c.h.b16 %v462
        %v2663 = vunpack.c.l.b16 %v463
        %v2664 = vunpack.c.h.b16 %v463
        %v2665 = vunpack.c.l.b16 %v464
        %v2666 = vunpack.c.h.b16 %v464
        %v2667 = vunpack.c.l.b16 %v465
        %v2668 = vunpack.c.h.b16 %v465
        %v2669 = vunpack.c.l.b16 %v466
        %v2670 = vunpack.c.h.b16 %v466
        %v2671 = vunpack.c.l.b16 %v467
        %v2672 = vunpack.c.h.b16 %v467
        %v2673 = vunpack.c.l.b16 %v468
        %v2674 = vunpack.c.h.b16 %v468
        %v2675 = vunpack.c.l.b16 %v469
        %v2676 = vunpack.c.h.b16 %v469
        %v2677 = vunpack.c.l.b16 %v470
        %v2678 = vunpack.c.h.b16 %v470
        %v2679 = vunpack.c.l.b16 %v471
        %v2680 = vunpack.c.h.b16 %v471
        %v2681 = vunpack.c.l.b16 %v472
        %v2682 = vunpack.c.h.b16 %v472
        %v2683 = vunpack.c.l.b16 %v473
        %v2684 = vunpack.c.h.b16 %v473
        %v2685 = vunpack.c.l.b16 %v474
        %v2686 = vunpack.c.h.b16 %v474
        %v2687 = vunpack.c.l.b16 %v475
        %v2688 = vunpack.c.h.b16 %v475
        %v2689 = vunpack.c.l.b16 %v476
        %v2690 = vunpack.c.h.b16 %v476
        %v2691 = vunpack.c.l.b16 %v477
        %v2692 = vunpack.c.h.b16 %v477
        %v2693 = vunpack.c.l.b16 %v478
        %v2694 = vunpack.c.h.b16 %v478
        %v2695 = vunpack.c.l.b16 %v479
        %v2696 = vunpack.c.h.b16 %v479
        %v2697 = vunpack.c.l.b16 %v480
        %v2698 = vunpack.c.h.b16 %v480
        %v2699 = vunpack.c.l.b16 %v481
        %v2700 = vunpack.c.h.b16 %v481
        %v2701 = vunpack.c.l.b16 %v482
        %v2702 = vunpack.c.h.b16 %v482
        %v2703 = vunpack.c.l.b16 %v483
        %v2704 = vunpack.c.h.b16 %v483
        %v2705 = vunpack.c.l.b16 %v484
        %v2706 = vunpack.c.h.b16 %v484
        %v2707 = vunpack.c.l.b16 %v485
        %v2708 = vunpack.c.h.b16 %v485
        %v2709 = vunpack.c.l.b16 %v486
        %v2710 = vunpack.c.h.b16 %v486
        %v2711 = vunpack.c.l.b16 %v487
        %v2712 = vunpack.c.h.b16 %v487
        %v2713 = vunpack.c.l.b16 %v488
        %v2714 = vunpack.c.h.b16 %v488
        %v2715 = vunpack.c.l.b16 %v489
        %v2716 = vunpack.c.h.b16 %v489
        %v2717 = vunpack.c.l.b16 %v490
        %v2718 = vunpack.c.h.b16 %v490
        %v2719 = vunpack.c.l.b16 %v491
        %v2720 = vunpack.c.h.b16 %v491
        %v2721 = vunpack.c.l.b16 %v492
        %v2722 = vunpack.c.h.b16 %v492
        %v2723 = vunpack.c.l.b16 %v493
        %v2724 = vunpack.c.h.b16 %v493
        %v2725 = vunpack.c.l.b16 %v494
        %v2726 = vunpack.c.h.b16 %v494
        %v2727 = vunpack.c.l.b16 %v495
        %v2728 = vunpack.c.h.b16 %v495
        %v2729 = vunpack.c.l.b16 %v496
        %v2730 = vunpack.c.h.b16 %v496
        %v2731 = vunpack.c.l.b16 %v497
        %v2732 = vunpack.c.h.b16 %v497
        %v2733 = vunpack.c.l.b16 %v498
        %v2734 = vunpack.c.h.b16 %v498
        %v2735 = vunpack.c.l.b16 %v499
        %v2736 = vunpack.c.h.b16 %v499
        %v2737 = vunpack.c.l.b16 %v500
        %v2738 = vunpack.c.h.b16 %v500
        %v2739 = vunpack.c.l.b16 %v501
        %v2740 = vunpack.c.h.b16 %v501
        %v2741 = vunpack.c.l.b16 %v502
        %v2742 = vunpack.c.h.b16 %v502
        %v2743 = vunpack.c.l.b16 %v503
        %v2744 = vunpack.c.h.b16 %v503
        %v2745 = vunpack.c.l.b16 %v504
        %v2746 = vunpack.c.h.b16 %v504
        %v2747 = vunpack.c.l.b16 %v505
        %v2748 = vunpack.c.h.b16 %v505
        %v2749 = vunpack.c.l.b16 %v506
        %v2750 = vunpack.c.h.b16 %v506
        %v2751 = vunpack.c.l.b16 %v507
        %v2752 = vunpack.c.h.b16 %v507
        %v2753 = vunpack.c.l.b16 %v508
        %v2754 = vunpack.c.h.b16 %v508
        %v2755 = vunpack.c.l.b16 %v509
        %v2756 = vunpack.c.h.b16 %v509
        %v2757 = vunpack.c.l.b16 %v510
        %v2758 = vunpack.c.h.b16 %v510
        %v2759 = vunpack.c.l.b16 %v511
        %v2760 = vunpack.c.h.b16 %v511
        %v2761 = vunpack.c.l.b16 %v512
        %v2762 = vunpack.c.h.b16 %v512
        %v2763 = vunpack.c.l.b16 %v513
        %v2764 = vunpack.c.h.b16 %v513
        %v2765 = vunpack.c.l.b16 %v514
        %v2766 = vunpack.c.h.b16 %v514
        %v2767 = vunpack.c.l.b16 %v515
        %v2768 = vunpack.c.h.b16 %v515
        %v2769 = vunpack.c.l.b16 %v516
        %v2770 = vunpack.c.h.b16 %v516
        %v2771 = vunpack.c.l.b16 %v517
        %v2772 = vunpack.c.h.b16 %v517
        %v2773 = vunpack.c.l.b16 %v518
        %v2774 = vunpack.c.h.b16 %v518
        %v2775 = vunpack.c.l.b16 %v519
        %v2776 = vunpack.c.h.b16 %v519
        %v2777 = vunpack.c.l.b16 %v520
        %v2778 = vunpack.c.h.b16 %v520
        %v2779 = vunpack.c.l.b16 %v521
        %v2780 = vunpack.c.h.b16 %v521
        %v2781 = vunpack.c.l.b16 %v522
        %v2782 = vunpack.c.h.b16 %v522
        %v2783 = vunpack.c.l.b16 %v523
        %v2784 = vunpack.c.h.b16 %v523
        %v2785 = vunpack.c.l.b16 %v524
        %v2786 = vunpack.c.h.b16 %v524
        %v2787 = vunpack.c.l.b16 %v525
        %v2788 = vunpack.c.h.b16 %v525
        %v2789 = vunpack.c.l.b16 %v526
        %v2790 = vunpack.c.h.b16 %v526
        %v2791 = vunpack.c.l.b16 %v527
        %v2792 = vunpack.c.h.b16 %v527
        %v2793 = vunpack.c.l.b16 %v528
        %v2794 = vunpack.c.h.b16 %v528
        %v2795 = vunpack.c.l.b16 %v529
        %v2796 = vunpack.c.h.b16 %v529
        %v2797 = vunpack.c.l.b16 %v530
        %v2798 = vunpack.c.h.b16 %v530
        %v2799 = vunpack.c.l.b16 %v531
        %v2800 = vunpack.c.h.b16 %v531
        %v2801 = vunpack.c.l.b16 %v532
        %v2802 = vunpack.c.h.b16 %v532
        %v2803 = vunpack.c.l.b16 %v533
        %v2804 = vunpack.c.h.b16 %v533
        %v2805 = vunpack.c.l.b16 %v534
        %v2806 = vunpack.c.h.b16 %v534
        %v2807 = vunpack.c.l.b16 %v535
        %v2808 = vunpack.c.h.b16 %v535
        %v2809 = vunpack.c.l.b16 %v536
        %v2810 = vunpack.c.h.b16 %v536
        %v2811 = vunpack.c.l.b16 %v537
        %v2812 = vunpack.c.h.b16 %v537
        %v2813 = vunpack.c.l.b16 %v538
        %v2814 = vunpack.c.h.b16 %v538
        %v2815 = vunpack.c.l.b16 %v539
        %v2816 = vunpack.c.h.b16 %v539
        %v2817 = vunpack.c.l.b16 %v540
        %v2818 = vunpack.c.h.b16 %v540
        %v2819 = vunpack.c.l.b16 %v541
        %v2820 = vunpack.c.h.b16 %v541
        %v2821 = vunpack.c.l.b16 %v542
        %v2822 = vunpack.c.h.b16 %v542
        %v2823 = vunpack.c.l.b16 %v543
        %v2824 = vunpack.c.h.b16 %v543
        %v2825 = vunpack.c.l.b16 %v544
        %v2826 = vunpack.c.h.b16 %v544
        %v2827 = vunpack.c.l.b16 %v545
        %v2828 = vunpack.c.h.b16 %v545
        %v2829 = vunpack.c.l.b16 %v546
        %v2830 = vunpack.c.h.b16 %v546
        %v2831 = vunpack.c.l.b16 %v547
        %v2832 = vunpack.c.h.b16 %v547
        %v2833 = vunpack.c.l.b16 %v548
        %v2834 = vunpack.c.h.b16 %v548
        %v2835 = vunpack.c.l.b16 %v549
        %v2836 = vunpack.c.h.b16 %v549
        %v2837 = vunpack.c.l.b16 %v550
        %v2838 = vunpack.c.h.b16 %v550
        %v2839 = vunpack.c.l.b16 %v551
        %v2840 = vunpack.c.h.b16 %v551
        %v2841 = vunpack.c.l.b16 %v552
        %v2842 = vunpack.c.h.b16 %v552
        %v2843 = vunpack.c.l.b16 %v553
        %v2844 = vunpack.c.h.b16 %v553
        %v2845 = vunpack.c.l.b16 %v554
        %v2846 = vunpack.c.h.b16 %v554
        %v2847 = vunpack.c.l.b16 %v555
        %v2848 = vunpack.c.h.b16 %v555
        %v2849 = vunpack.c.l.b16 %v556
        %v2850 = vunpack.c.h.b16 %v556
        %v2851 = vunpack.c.l.b16 %v557
        %v2852 = vunpack.c.h.b16 %v557
        %v2853 = vunpack.c.l.b16 %v558
        %v2854 = vunpack.c.h.b16 %v558
        %v2855 = vunpack.c.l.b16 %v559
        %v2856 = vunpack.c.h.b16 %v559
        %v2857 = vunpack.c.l.b16 %v560
        %v2858 = vunpack.c.h.b16 %v560
        %v2859 = vunpack.c.l.b16 %v561
        %v2860 = vunpack.c.h.b16 %v561
        %v2861 = vunpack.c.l.b16 %v562
        %v2862 = vunpack.c.h.b16 %v562
        %v2863 = vunpack.c.l.b16 %v563
        %v2864 = vunpack.c.h.b16 %v563
        %v2865 = vunpack.c.l.b16 %v564
        %v2866 = vunpack.c.h.b16 %v564
        %v2867 = vunpack.c.l.b16 %v565
        %v2868 = vunpack.c.h.b16 %v565
        %v2869 = vunpack.c.l.b16 %v566
        %v2870 = vunpack.c.h.b16 %v566
        %v2871 = vunpack.c.l.b16 %v567
        %v2872 = vunpack.c.h.b16 %v567
        %v2873 = vunpack.c.l.b16 %v568
        %v2874 = vunpack.c.h.b16 %v568
        %v2875 = vunpack.c.l.b16 %v569
        %v2876 = vunpack.c.h.b16 %v569
        %v2877 = vunpack.c.l.b16 %v570
        %v2878 = vunpack.c.h.b16 %v570
        %v2879 = vunpack.c.l.b16 %v571
        %v2880 = vunpack.c.h.b16 %v571
        %v2881 = vunpack.c.l.b16 %v572
        %v2882 = vunpack.c.h.b16 %v572
        %v2883 = vunpack.c.l.b16 %v573
        %v2884 = vunpack.c.h.b16 %v573
        %v2885 = vunpack.c.l.b16 %v574
        %v2886 = vunpack.c.h.b16 %v574
        %v2887 = vunpack.c.l.b16 %v575
        %v2888 = vunpack.c.h.b16 %v575
        %v2889 = vunpack.c.l.b16 %v576
        %v2890 = vunpack.c.h.b16 %v576
        %v2891 = vunpack.c.l.b16 %v577
        %v2892 = vunpack.c.h.b16 %v577
        %v2893 = vunpack.c.l.b16 %v578
        %v2894 = vunpack.c.h.b16 %v578
        %v2895 = vunpack.c.l.b16 %v579
        %v2896 = vunpack.c.h.b16 %v579
        %v2897 = vunpack.c.l.b16 %v580
        %v2898 = vunpack.c.h.b16 %v580
        %v2899 = vunpack.c.l.b16 %v581
        %v2900 = vunpack.c.h.b16 %v581
        %v2901 = vunpack.c.l.b16 %v582
        %v2902 = vunpack.c.h.b16 %v582
        %v2903 = vunpack.c.l.b16 %v583
        %v2904 = vunpack.c.h.b16 %v583
        %v2905 = vunpack.c.l.b16 %v584
        %v2906 = vunpack.c.h.b16 %v584
        %v2907 = vunpack.c.l.b16 %v585
        %v2908 = vunpack.c.h.b16 %v585
        %v2909 = vunpack.c.l.b16 %v586
        %v2910 = vunpack.c.h.b16 %v586
        %v2911 = vunpack.c.l.b16 %v587
        %v2912 = vunpack.c.h.b16 %v587
        %v2913 = vunpack.c.l.b16 %v588
        %v2914 = vunpack.c.h.b16 %v588
        %v2915 = vunpack.c.l.b16 %v589
        %v2916 = vunpack.c.h.b16 %v589
        %v2917 = vunpack.c.l.b16 %v590
        %v2918 = vunpack.c.h.b16 %v590
        %v2919 = vunpack.c.l.b16 %v591
        %v2920 = vunpack.c.h.b16 %v591
        %v2921 = vunpack.c.l.b16 %v592
        %v2922 = vunpack.c.h.b16 %v592
        %v2923 = vunpack.c.l.b16 %v593
        %v2924 = vunpack.c.h.b16 %v593
        %v2925 = vunpack.c.l.b16 %v594
        %v2926 = vunpack.c.h.b16 %v594
        %v2927 = vunpack.c.l.b16 %v595
        %v2928 = vunpack.c.h.b16 %v595
        %v2929 = vunpack.c.l.b16 %v596
        %v2930 = vunpack.c.h.b16 %v596
        %v2931 = vunpack.c.l.b16 %v597
        %v2932 = vunpack.c.h.b16 %v597
        %v2933 = vunpack.c.l.b16 %v598
        %v2934 = vunpack.c.h.b16 %v598
        %v2935 = vunpack.c.l.b16 %v599
        %v2936 = vunpack.c.h.b16 %v599
        %v2937 = vunpack.c.l.b16 %v600
        %v2938 = vunpack.c.h.b16 %v600
        %v2939 = vunpack.c.l.b16 %v601
        %v2940 = vunpack.c.h.b16 %v601
        %v2941 = vunpack.c.l.b16 %v602
        %v2942 = vunpack.c.h.b16 %v602
        %v2943 = vunpack.c.l.b16 %v603
        %v2944 = vunpack.c.h.b16 %v603
        %v2945 = vunpack.c.l.b16 %v604
        %v2946 = vunpack.c.h.b16 %v604
        %v2947 = vunpack.c.l.b16 %v605
        %v2948 = vunpack.c.h.b16 %v605
        %v2949 = vunpack.c.l.b16 %v606
        %v2950 = vunpack.c.h.b16 %v606
        %v2951 = vunpack.c.l.b16 %v607
        %v2952 = vunpack.c.h.b16 %v607
        %v2953 = vunpack.c.l.b16 %v608
        %v2954 = vunpack.c.h.b16 %v608
        %v2955 = vunpack.c.l.b16 %v609
        %v2956 = vunpack.c.h.b16 %v609
        %v2957 = vunpack.c.l.b16 %v610
        %v2958 = vunpack.c.h.b16 %v610
        %v2959 = vunpack.c.l.b16 %v611
        %v2960 = vunpack.c.h.b16 %v611
        %v2961 = vunpack.c.l.b16 %v612
        %v2962 = vunpack.c.h.b16 %v612
        %v2963 = vunpack.c.l.b16 %v613
        %v2964 = vunpack.c.h.b16 %v613
        %v2965 = vunpack.c.l.b16 %v614
        %v2966 = vunpack.c.h.b16 %v614
        %v2967 = vunpack.c.l.b16 %v615
        %v2968 = vunpack.c.h.b16 %v615
        %v2969 = vunpack.c.l.b16 %v616
        %v2970 = vunpack.c.h.b16 %v616
        %v2971 = vunpack.c.l.b16 %v617
        %v2972 = vunpack.c.h.b16 %v617
        %v2973 = vunpack.c.l.b16 %v618
        %v2974 = vunpack.c.h.b16 %v618
        %v2975 = vunpack.c.l.b16 %v619
        %v2976 = vunpack.c.h.b16 %v619
        %v2977 = vunpack.c.l.b16 %v620
        %v2978 = vunpack.c.h.b16 %v620
        %v2979 = vunpack.c.l.b16 %v621
        %v2980 = vunpack.c.h.b16 %v621
        %v2981 = vunpack.c.l.b16 %v622
        %v2982 = vunpack.c.h.b16 %v622
        %v2983 = vunpack.c.l.b16 %v623
        %v2984 = vunpack.c.h.b16 %v623
        %v2985 = vunpack.c.l.b16 %v624
        %v2986 = vunpack.c.h.b16 %v624
        %v2987 = vunpack.c.l.b16 %v625
        %v2988 = vunpack.c.h.b16 %v625
        %v2989 = vunpack.c.l.b16 %v626
        %v2990 = vunpack.c.h.b16 %v626
        %v2991 = vunpack.c.l.b16 %v627
        %v2992 = vunpack.c.h.b16 %v627
        %v2993 = vunpack.c.l.b16 %v628
        %v2994 = vunpack.c.h.b16 %v628
        %v2995 = vunpack.c.l.b16 %v629
        %v2996 = vunpack.c.h.b16 %v629
        %v2997 = vunpack.c.l.b16 %v630
        %v2998 = vunpack.c.h.b16 %v630
        %v2999 = vunpack.c.l.b16 %v631
        %v3000 = vunpack.c.h.b16 %v631
        %v3001 = vunpack.c.l.b16 %v632
        %v3002 = vunpack.c.h.b16 %v632
        %v3003 = vunpack.c.l.b16 %v633
        %v3004 = vunpack.c.h.b16 %v633
        %v3005 = vunpack.c.l.b16 %v634
        %v3006 = vunpack.c.h.b16 %v634
        %v3007 = vunpack.c.l.b16 %v635
        %v3008 = vunpack.c.h.b16 %v635
        %v3009 = vunpack.c.l.b16 %v636
        %v3010 = vunpack.c.h.b16 %v636
        %v3011 = vunpack.c.l.b16 %v637
        %v3012 = vunpack.c.h.b16 %v637
        %v3013 = vunpack.c.l.b16 %v638
        %v3014 = vunpack.c.h.b16 %v638
        %v3015 = vunpack.c.l.b16 %v639
        %v3016 = vunpack.c.h.b16 %v639
        %v3017 = vunpack.c.l.b16 %v640
        %v3018 = vunpack.c.h.b16 %v640
        %v3019 = vunpack.c.l.b16 %v641
        %v3020 = vunpack.c.h.b16 %v641
        %v3021 = vunpack.c.l.b16 %v642
        %v3022 = vunpack.c.h.b16 %v642
        %v3023 = vunpack.c.l.b16 %v643
        %v3024 = vunpack.c.h.b16 %v643
        %v3025 = vunpack.c.l.b16 %v644
        %v3026 = vunpack.c.h.b16 %v644
        %v3027 = vunpack.c.l.b16 %v645
        %v3028 = vunpack.c.h.b16 %v645
        %v3029 = vunpack.c.l.b16 %v646
        %v3030 = vunpack.c.h.b16 %v646
        %v3031 = vunpack.c.l.b16 %v647
        %v3032 = vunpack.c.h.b16 %v647
        %v3033 = vunpack.c.l.b16 %v648
        %v3034 = vunpack.c.h.b16 %v648
        %v3035 = vunpack.c.l.b16 %v649
        %v3036 = vunpack.c.h.b16 %v649
        %v3037 = vunpack.c.l.b16 %v650
        %v3038 = vunpack.c.h.b16 %v650
        %v3039 = vunpack.c.l.b16 %v651
        %v3040 = vunpack.c.h.b16 %v651
        %v3041 = vunpack.c.l.b16 %v652
        %v3042 = vunpack.c.h.b16 %v652
        %v3043 = vunpack.c.l.b16 %v653
        %v3044 = vunpack.c.h.b16 %v653
        %v3045 = vunpack.c.l.b16 %v654
        %v3046 = vunpack.c.h.b16 %v654
        %v3047 = vunpack.c.l.b16 %v655
        %v3048 = vunpack.c.h.b16 %v655
        %v3049 = vunpack.c.l.b16 %v656
        %v3050 = vunpack.c.h.b16 %v656
        %v3051 = vunpack.c.l.b16 %v657
        %v3052 = vunpack.c.h.b16 %v657
        %v3053 = vunpack.c.l.b16 %v658
        %v3054 = vunpack.c.h.b16 %v658
        %v3055 = vunpack.c.l.b16 %v659
        %v3056 = vunpack.c.h.b16 %v659
        %v3057 = vunpack.c.l.b16 %v660
        %v3058 = vunpack.c.h.b16 %v660
        %v3059 = vunpack.c.l.b16 %v661
        %v3060 = vunpack.c.h.b16 %v661
        %v3061 = vunpack.c.l.b16 %v662
        %v3062 = vunpack.c.h.b16 %v662
        %v3063 = vunpack.c.l.b16 %v663
        %v3064 = vunpack.c.h.b16 %v663
        %v3065 = vunpack.c.l.b16 %v664
        %v3066 = vunpack.c.h.b16 %v664
        %v3067 = vunpack.c.l.b16 %v665
        %v3068 = vunpack.c.h.b16 %v665
        %v3069 = vunpack.c.l.b16 %v666
        %v3070 = vunpack.c.h.b16 %v666
        %v3071 = vunpack.c.l.b16 %v667
        %v3072 = vunpack.c.h.b16 %v667
        %v3073 = vunpack.c.l.b16 %v668
        %v3074 = vunpack.c.h.b16 %v668
        %v3075 = vunpack.c.l.b16 %v669
        %v3076 = vunpack.c.h.b16 %v669
        %v3077 = vunpack.c.l.b16 %v670
        %v3078 = vunpack.c.h.b16 %v670
        %v3079 = vunpack.c.l.b16 %v671
        %v3080 = vunpack.c.h.b16 %v671
        %v3081 = vunpack.c.l.b16 %v672
        %v3082 = vunpack.c.h.b16 %v672
        %v3083 = vunpack.c.l.b16 %v673
        %v3084 = vunpack.c.h.b16 %v673
        %v3085 = vunpack.c.l.b16 %v674
        %v3086 = vunpack.c.h.b16 %v674
        %v3087 = vunpack.c.l.b16 %v675
        %v3088 = vunpack.c.h.b16 %v675
        %v3089 = vunpack.c.l.b16 %v676
        %v3090 = vunpack.c.h.b16 %v676
        %v3091 = vunpack.c.l.b16 %v677
        %v3092 = vunpack.c.h.b16 %v677
        %v3093 = vunpack.c.l.b16 %v678
        %v3094 = vunpack.c.h.b16 %v678
        %v3095 = vunpack.c.l.b16 %v679
        %v3096 = vunpack.c.h.b16 %v679
        %v3097 = vunpack.c.l.b16 %v680
        %v3098 = vunpack.c.h.b16 %v680
        %v3099 = vunpack.c.l.b16 %v681
        %v3100 = vunpack.c.h.b16 %v681
        %v3101 = vunpack.c.l.b16 %v682
        %v3102 = vunpack.c.h.b16 %v682
        %v3103 = vunpack.c.l.b16 %v683
        %v3104 = vunpack.c.h.b16 %v683
        %v3105 = vunpack.c.l.b16 %v684
        %v3106 = vunpack.c.h.b16 %v684
        %v3107 = vunpack.c.l.b16 %v685
        %v3108 = vunpack.c.h.b16 %v685
        %v3109 = vunpack.c.l.b16 %v686
        %v3110 = vunpack.c.h.b16 %v686
        %v3111 = vunpack.c.l.b16 %v687
        %v3112 = vunpack.c.h.b16 %v687
        %v3113 = vunpack.c.l.b16 %v688
        %v3114 = vunpack.c.h.b16 %v688
        %v3115 = vunpack.c.l.b16 %v689
        %v3116 = vunpack.c.h.b16 %v689
        %v3117 = vunpack.c.l.b16 %v690
        %v3118 = vunpack.c.h.b16 %v690
        %v3119 = vunpack.c.l.b16 %v691
        %v3120 = vunpack.c.h.b16 %v691
        %v3121 = vunpack.c.l.b16 %v692
        %v3122 = vunpack.c.h.b16 %v692
        %v3123 = vunpack.c.l.b16 %v693
        %v3124 = vunpack.c.h.b16 %v693
        %v3125 = vunpack.c.l.b16 %v694
        %v3126 = vunpack.c.h.b16 %v694
        %v3127 = vunpack.c.l.b16 %v695
        %v3128 = vunpack.c.h.b16 %v695
        %v3129 = vunpack.c.l.b16 %v696
        %v3130 = vunpack.c.h.b16 %v696
        %v3131 = vunpack.c.l.b16 %v697
        %v3132 = vunpack.c.h.b16 %v697
        %v3133 = vunpack.c.l.b16 %v698
        %v3134 = vunpack.c.h.b16 %v698
        %v3135 = vunpack.c.l.b16 %v699
        %v3136 = vunpack.c.h.b16 %v699
        %v3137 = vunpack.c.l.b16 %v700
        %v3138 = vunpack.c.h.b16 %v700
        %v3139 = vunpack.c.l.b16 %v701
        %v3140 = vunpack.c.h.b16 %v701
        %v3141 = vunpack.c.l.b16 %v702
        %v3142 = vunpack.c.h.b16 %v702
        %v3143 = vunpack.c.l.b16 %v703
        %v3144 = vunpack.c.h.b16 %v703
        %v3145 = vunpack.c.l.b16 %v704
        %v3146 = vunpack.c.h.b16 %v704
        %v3147 = vunpack.c.l.b16 %v705
        %v3148 = vunpack.c.h.b16 %v705
        %v3149 = vunpack.c.l.b16 %v706
        %v3150 = vunpack.c.h.b16 %v706
        %v3151 = vunpack.c.l.b16 %v707
        %v3152 = vunpack.c.h.b16 %v707
        %v3153 = vunpack.c.l.b16 %v708
        %v3154 = vunpack.c.h.b16 %v708
        %v3155 = vunpack.c.l.b16 %v709
        %v3156 = vunpack.c.h.b16 %v709
        %v3157 = vunpack.c.l.b16 %v710
        %v3158 = vunpack.c.h.b16 %v710
        %v3159 = vunpack.c.l.b16 %v711
        %v3160 = vunpack.c.h.b16 %v711
        %v3161 = vunpack.c.l.b16 %v712
        %v3162 = vunpack.c.h.b16 %v712
        %v3163 = vunpack.c.l.b16 %v713
        %v3164 = vunpack.c.h.b16 %v713
        %v3165 = vunpack.c.l.b16 %v714
        %v3166 = vunpack.c.h.b16 %v714
        %v3167 = vunpack.c.l.b16 %v715
        %v3168 = vunpack.c.h.b16 %v715
        %v3169 = vunpack.c.l.b16 %v716
        %v3170 = vunpack.c.h.b16 %v716
        %v3171 = vunpack.c.l.b16 %v717
        %v3172 = vunpack.c.h.b16 %v717
        %v3173 = vunpack.c.l.b16 %v718
        %v3174 = vunpack.c.h.b16 %v718
        %v3175 = vunpack.c.l.b16 %v719
        %v3176 = vunpack.c.h.b16 %v719
        %v3177 = vunpack.c.l.b16 %v720
        %v3178 = vunpack.c.h.b16 %v720
        %v3179 = vunpack.c.l.b16 %v721
        %v3180 = vunpack.c.h.b16 %v721
        %v3181 = vunpack.c.l.b16 %v722
        %v3182 = vunpack.c.h.b16 %v722
        %v3183 = vunpack.c.l.b16 %v723
        %v3184 = vunpack.c.h.b16 %v723
        %v3185 = vunpack.c.l.b16 %v724
        %v3186 = vunpack.c.h.b16 %v724
        %v3187 = vunpack.c.l.b16 %v725
        %v3188 = vunpack.c.h.b16 %v725
        %v3189 = vunpack.c.l.b16 %v726
        %v3190 = vunpack.c.h.b16 %v726
        %v3191 = vunpack.c.l.b16 %v727
        %v3192 = vunpack.c.h.b16 %v727
        %v3193 = vunpack.c.l.b16 %v728
        %v3194 = vunpack.c.h.b16 %v728
        %v3195 = vunpack.c.l.b16 %v729
        %v3196 = vunpack.c.h.b16 %v729
        %v3197 = vunpack.c.l.b16 %v730
        %v3198 = vunpack.c.h.b16 %v730
        %v3199 = vunpack.c.l.b16 %v731
        %v3200 = vunpack.c.h.b16 %v731
        %v3201 = vunpack.c.l.b16 %v732
        %v3202 = vunpack.c.h.b16 %v732
        %v3203 = vunpack.c.l.b16 %v733
        %v3204 = vunpack.c.h.b16 %v733
        %v3205 = vunpack.c.l.b16 %v734
        %v3206 = vunpack.c.h.b16 %v734
        %v3207 = vunpack.c.l.b16 %v735
        %v3208 = vunpack.c.h.b16 %v735
        %v3209 = vunpack.c.l.b16 %v736
        %v3210 = vunpack.c.h.b16 %v736
        %v3211 = vunpack.c.l.b16 %v737
        %v3212 = vunpack.c.h.b16 %v737
        %v3213 = vunpack.c.l.b16 %v738
        %v3214 = vunpack.c.h.b16 %v738
        %v3215 = vunpack.c.l.b16 %v739
        %v3216 = vunpack.c.h.b16 %v739
        %v3217 = vunpack.c.l.b16 %v740
        %v3218 = vunpack.c.h.b16 %v740
        %v3219 = vunpack.c.l.b16 %v741
        %v3220 = vunpack.c.h.b16 %v741
        %v3221 = vunpack.c.l.b16 %v742
        %v3222 = vunpack.c.h.b16 %v742
        %v3223 = vunpack.c.l.b16 %v743
        %v3224 = vunpack.c.h.b16 %v743
        %v3225 = vunpack.c.l.b16 %v744
        %v3226 = vunpack.c.h.b16 %v744
        %v3227 = vunpack.c.l.b16 %v745
        %v3228 = vunpack.c.h.b16 %v745
        %v3229 = vunpack.c.l.b16 %v746
        %v3230 = vunpack.c.h.b16 %v746
        %v3231 = vunpack.c.l.b16 %v747
        %v3232 = vunpack.c.h.b16 %v747
        %v3233 = vunpack.c.l.b16 %v748
        %v3234 = vunpack.c.h.b16 %v748
        %v3235 = vunpack.c.l.b16 %v749
        %v3236 = vunpack.c.h.b16 %v749
        %v3237 = vunpack.c.l.b16 %v750
        %v3238 = vunpack.c.h.b16 %v750
        %v3239 = vunpack.c.l.b16 %v751
        %v3240 = vunpack.c.h.b16 %v751
        %v3241 = vunpack.c.l.b16 %v752
        %v3242 = vunpack.c.h.b16 %v752
        %v3243 = vunpack.c.l.b16 %v753
        %v3244 = vunpack.c.h.b16 %v753
        %v3245 = vunpack.c.l.b16 %v754
        %v3246 = vunpack.c.h.b16 %v754
        %v3247 = vunpack.c.l.b16 %v755
        %v3248 = vunpack.c.h.b16 %v755
        %v3249 = vunpack.c.l.b16 %v756
        %v3250 = vunpack.c.h.b16 %v756
        %v3251 = vunpack.c.l.b16 %v757
        %v3252 = vunpack.c.h.b16 %v757
        %v3253 = vunpack.c.l.b16 %v758
        %v3254 = vunpack.c.h.b16 %v758
        %v3255 = vunpack.c.l.b16 %v759
        %v3256 = vunpack.c.h.b16 %v759
        %v3257 = vunpack.c.l.b16 %v760
        %v3258 = vunpack.c.h.b16 %v760
        %v3259 = vunpack.c.l.b16 %v761
        %v3260 = vunpack.c.h.b16 %v761
        %v3261 = vunpack.c.l.b16 %v762
        %v3262 = vunpack.c.h.b16 %v762
        %v3263 = vunpack.c.l.b16 %v763
        %v3264 = vunpack.c.h.b16 %v763
        %v3265 = vunpack.c.l.b16 %v764
        %v3266 = vunpack.c.h.b16 %v764
        %v3267 = vunpack.c.l.b16 %v765
        %v3268 = vunpack.c.h.b16 %v765
        %v3269 = vunpack.c.l.b16 %v766
        %v3270 = vunpack.c.h.b16 %v766
        %v3271 = vunpack.c.l.b16 %v767
        %v3272 = vunpack.c.h.b16 %v767
        %v3273 = vunpack.c.l.b16 %v768
        %v3274 = vunpack.c.h.b16 %v768
        %v3275 = vunpack.c.l.b16 %v769
        %v3276 = vunpack.c.h.b16 %v769
        %v3277 = vunpack.c.l.b16 %v770
        %v3278 = vunpack.c.h.b16 %v770
        %v3279 = vunpack.c.l.b16 %v771
        %v3280 = vunpack.c.h.b16 %v771
        %v3281 = vunpack.c.l.b16 %v772
        %v3282 = vunpack.c.h.b16 %v772
        %v3283 = vunpack.c.l.b16 %v773
        %v3284 = vunpack.c.h.b16 %v773
        %v3285 = vunpack.c.l.b16 %v774
        %v3286 = vunpack.c.h.b16 %v774
        %v3287 = vunpack.c.l.b16 %v775
        %v3288 = vunpack.c.h.b16 %v775
        %v3289 = vunpack.c.l.b16 %v776
        %v3290 = vunpack.c.h.b16 %v776
        %v3291 = vunpack.c.l.b16 %v777
        %v3292 = vunpack.c.h.b16 %v777
        %v3293 = vunpack.c.l.b16 %v778
        %v3294 = vunpack.c.h.b16 %v778
        %v3295 = vunpack.c.l.b16 %v779
        %v3296 = vunpack.c.h.b16 %v779
        %v3297 = vunpack.c.l.b16 %v780
        %v3298 = vunpack.c.h.b16 %v780
        %v3299 = vunpack.c.l.b16 %v781
        %v3300 = vunpack.c.h.b16 %v781
        %v3301 = vunpack.c.l.b16 %v782
        %v3302 = vunpack.c.h.b16 %v782
        %v3303 = vunpack.c.l.b16 %v783
        %v3304 = vunpack.c.h.b16 %v783
        %v3305 = vunpack.c.l.b16 %v784
        %v3306 = vunpack.c.h.b16 %v784
        %v3307 = vunpack.c.l.b16 %v785
        %v3308 = vunpack.c.h.b16 %v785
        %v3309 = vunpack.c.l.b16 %v786
        %v3310 = vunpack.c.h.b16 %v786
        %v3311 = vunpack.c.l.b16 %v787
        %v3312 = vunpack.c.h.b16 %v787
        %v3313 = vunpack.c.l.b16 %v788
        %v3314 = vunpack.c.h.b16 %v788
        %v3315 = vunpack.c.l.b16 %v789
        %v3316 = vunpack.c.h.b16 %v789
        %v3317 = vunpack.c.l.b16 %v790
        %v3318 = vunpack.c.h.b16 %v790
        %v3319 = vunpack.c.l.b16 %v791
        %v3320 = vunpack.c.h.b16 %v791
        %v3321 = vunpack.c.l.b16 %v792
        %v3322 = vunpack.c.h.b16 %v792
        %v3323 = vunpack.c.l.b16 %v793
        %v3324 = vunpack.c.h.b16 %v793
        %v3325 = vunpack.c.l.b16 %v794
        %v3326 = vunpack.c.h.b16 %v794
        %v3327 = vunpack.c.l.b16 %v795
        %v3328 = vunpack.c.h.b16 %v795
        %v3329 = vunpack.c.l.b16 %v796
        %v3330 = vunpack.c.h.b16 %v796
        %v3331 = vunpack.c.l.b16 %v797
        %v3332 = vunpack.c.h.b16 %v797
        %v3333 = vunpack.c.l.b16 %v798
        %v3334 = vunpack.c.h.b16 %v798
        %v3335 = vunpack.c.l.b16 %v799
        %v3336 = vunpack.c.h.b16 %v799
        %v3337 = vunpack.c.l.b16 %v800
        %v3338 = vunpack.c.h.b16 %v800
        %v3339 = vunpack.c.l.b16 %v801
        %v3340 = vunpack.c.h.b16 %v801
        %v3341 = vunpack.c.l.b16 %v802
        %v3342 = vunpack.c.h.b16 %v802
        %v3343 = vunpack.c.l.b16 %v803
        %v3344 = vunpack.c.h.b16 %v803
        %v3345 = vunpack.c.l.b16 %v804
        %v3346 = vunpack.c.h.b16 %v804
        %v3347 = vunpack.c.l.b16 %v805
        %v3348 = vunpack.c.h.b16 %v805
        %v3349 = vunpack.c.l.b16 %v806
        %v3350 = vunpack.c.h.b16 %v806
        %v3351 = vunpack.c.l.b16 %v807
        %v3352 = vunpack.c.h.b16 %v807
        %v3353 = vunpack.c.l.b16 %v808
        %v3354 = vunpack.c.h.b16 %v808
        %v3355 = vunpack.c.l.b16 %v809
        %v3356 = vunpack.c.h.b16 %v809
        %v3357 = vunpack.c.l.b16 %v810
        %v3358 = vunpack.c.h.b16 %v810
        %v3359 = vunpack.c.l.b16 %v811
        %v3360 = vunpack.c.h.b16 %v811
        %v3361 = vunpack.c.l.b16 %v812
        %v3362 = vunpack.c.h.b16 %v812
        %v3363 = vunpack.c.l.b16 %v813
        %v3364 = vunpack.c.h.b16 %v813
        %v3365 = vunpack.c.l.b16 %v814
        %v3366 = vunpack.c.h.b16 %v814
        %v3367 = vunpack.c.l.b16 %v815
        %v3368 = vunpack.c.h.b16 %v815
        %v3369 = vunpack.c.l.b16 %v816
        %v3370 = vunpack.c.h.b16 %v816
        %v3371 = vunpack.c.l.b16 %v817
        %v3372 = vunpack.c.h.b16 %v817
        %v3373 = vunpack.c.l.b16 %v818
        %v3374 = vunpack.c.h.b16 %v818
        %v3375 = vunpack.c.l.b16 %v819
        %v3376 = vunpack.c.h.b16 %v819
        %v3377 = vunpack.c.l.b16 %v820
        %v3378 = vunpack.c.h.b16 %v820
        %v3379 = vunpack.c.l.b16 %v821
        %v3380 = vunpack.c.h.b16 %v821
        %v3381 = vunpack.c.l.b16 %v822
        %v3382 = vunpack.c.h.b16 %v822
        %v3383 = vunpack.c.l.b16 %v823
        %v3384 = vunpack.c.h.b16 %v823
        %v3385 = vunpack.c.l.b16 %v824
        %v3386 = vunpack.c.h.b16 %v824
        %v3387 = vunpack.c.l.b16 %v825
        %v3388 = vunpack.c.h.b16 %v825
        %v3389 = vunpack.c.l.b16 %v826
        %v3390 = vunpack.c.h.b16 %v826
        %v3391 = vunpack.c.l.b16 %v827
        %v3392 = vunpack.c.h.b16 %v827
        %v3393 = vunpack.c.l.b16 %v828
        %v3394 = vunpack.c.h.b16 %v828
        %v3395 = vunpack.c.l.b16 %v829
        %v3396 = vunpack.c.h.b16 %v829
        %v3397 = vunpack.c.l.b16 %v830
        %v3398 = vunpack.c.h.b16 %v830
        %v3399 = vunpack.c.l.b16 %v831
        %v3400 = vunpack.c.h.b16 %v831
        %v3401 = vunpack.c.l.b16 %v832
        %v3402 = vunpack.c.h.b16 %v832
        %v3403 = vunpack.c.l.b16 %v833
        %v3404 = vunpack.c.h.b16 %v833
        %v3405 = vunpack.c.l.b16 %v834
        %v3406 = vunpack.c.h.b16 %v834
        %v3407 = vunpack.c.l.b16 %v835
        %v3408 = vunpack.c.h.b16 %v835
        %v3409 = vunpack.c.l.b16 %v836
        %v3410 = vunpack.c.h.b16 %v836
        %v3411 = vunpack.c.l.b16 %v837
        %v3412 = vunpack.c.h.b16 %v837
        %v3413 = vunpack.c.l.b16 %v838
        %v3414 = vunpack.c.h.b16 %v838
        %v3415 = vunpack.c.l.b16 %v839
        %v3416 = vunpack.c.h.b16 %v839
        %v3417 = vunpack.c.l.b16 %v840
        %v3418 = vunpack.c.h.b16 %v840
        %v3419 = vunpack.c.l.b16 %v841
        %v3420 = vunpack.c.h.b16 %v841
        %v3421 = vunpack.c.l.b16 %v842
        %v3422 = vunpack.c.h.b16 %v842
        %v3423 = vunpack.c.l.b16 %v843
        %v3424 = vunpack.c.h.b16 %v843
        %v3425 = vunpack.c.l.b16 %v844
        %v3426 = vunpack.c.h.b16 %v844
        %v3427 = vunpack.c.l.b16 %v845
        %v3428 = vunpack.c.h.b16 %v845
        %v3429 = vunpack.c.l.b16 %v846
        %v3430 = vunpack.c.h.b16 %v846
        %v3431 = vunpack.c.l.b16 %v847
        %v3432 = vunpack.c.h.b16 %v847
        %v3433 = vunpack.c.l.b16 %v848
        %v3434 = vunpack.c.h.b16 %v848
        %v3435 = vunpack.c.l.b16 %v849
        %v3436 = vunpack.c.h.b16 %v849
        %v3437 = vunpack.c.l.b16 %v850
        %v3438 = vunpack.c.h.b16 %v850
        %v3439 = vunpack.c.l.b16 %v851
        %v3440 = vunpack.c.h.b16 %v851
        %v3441 = vunpack.c.l.b16 %v852
        %v3442 = vunpack.c.h.b16 %v852
        %v3443 = vunpack.c.l.b16 %v853
        %v3444 = vunpack.c.h.b16 %v853
        %v3445 = vunpack.c.l.b16 %v854
        %v3446 = vunpack.c.h.b16 %v854
        %v3447 = vunpack.c.l.b16 %v855
        %v3448 = vunpack.c.h.b16 %v855
        %v3449 = vunpack.c.l.b16 %v856
        %v3450 = vunpack.c.h.b16 %v856
        %v3451 = vunpack.c.l.b16 %v857
        %v3452 = vunpack.c.h.b16 %v857
        %v3453 = vunpack.c.l.b16 %v858
        %v3454 = vunpack.c.h.b16 %v858
        %v3455 = vunpack.c.l.b16 %v859
        %v3456 = vunpack.c.h.b16 %v859
        %v3457 = vunpack.c.l.b16 %v860
        %v3458 = vunpack.c.h.b16 %v860
        %v3459 = vunpack.c.l.b16 %v861
        %v3460 = vunpack.c.h.b16 %v861
        %v3461 = vunpack.c.l.b16 %v862
        %v3462 = vunpack.c.h.b16 %v862
        %v3463 = vunpack.c.l.b16 %v863
        %v3464 = vunpack.c.h.b16 %v863
        %v3465 = vunpack.c.l.b16 %v864
        %v3466 = vunpack.c.h.b16 %v864
        %v3467 = vunpack.c.l.b16 %v865
        %v3468 = vunpack.c.h.b16 %v865
        %v3469 = vunpack.c.l.b16 %v866
        %v3470 = vunpack.c.h.b16 %v866
        %v3471 = vunpack.c.l.b16 %v867
        %v3472 = vunpack.c.h.b16 %v867
        %v3473 = vunpack.c.l.b16 %v868
        %v3474 = vunpack.c.h.b16 %v868
        %v3475 = vunpack.c.l.b16 %v869
        %v3476 = vunpack.c.h.b16 %v869
        %v3477 = vunpack.c.l.b16 %v870
        %v3478 = vunpack.c.h.b16 %v870
        %v3479 = vunpack.c.l.b16 %v871
        %v3480 = vunpack.c.h.b16 %v871
        %v3481 = vunpack.c.l.b16 %v872
        %v3482 = vunpack.c.h.b16 %v872
        %v3483 = vunpack.c.l.b16 %v873
        %v3484 = vunpack.c.h.b16 %v873
        %v3485 = vunpack.c.l.b16 %v874
        %v3486 = vunpack.c.h.b16 %v874
        %v3487 = vunpack.c.l.b16 %v875
        %v3488 = vunpack.c.h.b16 %v875
        %v3489 = vunpack.c.l.b16 %v876
        %v3490 = vunpack.c.h.b16 %v876
        %v3491 = vunpack.c.l.b16 %v877
        %v3492 = vunpack.c.h.b16 %v877
        %v3493 = vunpack.c.l.b16 %v878
        %v3494 = vunpack.c.h.b16 %v878
        %v3495 = vunpack.c.l.b16 %v879
        %v3496 = vunpack.c.h.b16 %v879
        %v3497 = vunpack.c.l.b16 %v880
        %v3498 = vunpack.c.h.b16 %v880
        %v3499 = vunpack.c.l.b16 %v881
        %v3500 = vunpack.c.h.b16 %v881
        %v3501 = vunpack.c.l.b16 %v882
        %v3502 = vunpack.c.h.b16 %v882
        %v3503 = vunpack.c.l.b16 %v883
        %v3504 = vunpack.c.h.b16 %v883
        %v3505 = vunpack.c.l.b16 %v884
        %v3506 = vunpack.c.h.b16 %v884
        %v3507 = vunpack.c.l.b16 %v885
        %v3508 = vunpack.c.h.b16 %v885
        %v3509 = vunpack.c.l.b16 %v886
        %v3510 = vunpack.c.h.b16 %v886
        %v3511 = vunpack.c.l.b16 %v887
        %v3512 = vunpack.c.h.b16 %v887
        %v3513 = vunpack.c.l.b16 %v888
        %v3514 = vunpack.c.h.b16 %v888
        %v3515 = vunpack.c.l.b16 %v889
        %v3516 = vunpack.c.h.b16 %v889
        %v3517 = vunpack.c.l.b16 %v890
        %v3518 = vunpack.c.h.b16 %v890
        %v3519 = vunpack.c.l.b16 %v891
        %v3520 = vunpack.c.h.b16 %v891
        %v3521 = vunpack.c.l.b16 %v892
        %v3522 = vunpack.c.h.b16 %v892
        %v3523 = vunpack.c.l.b16 %v893
        %v3524 = vunpack.c.h.b16 %v893
        %v3525 = vunpack.c.l.b16 %v894
        %v3526 = vunpack.c.h.b16 %v894
        %v3527 = vunpack.c.l.b16 %v895
        %v3528 = vunpack.c.h.b16 %v895
        %v3529 = vunpack.c.l.b16 %v896
        %v3530 = vunpack.c.h.b16 %v896
        %v3531 = vunpack.c.l.b16 %v897
        %v3532 = vunpack.c.h.b16 %v897
        %v3533 = vunpack.c.l.b16 %v898
        %v3534 = vunpack.c.h.b16 %v898
        %v3535 = vunpack.c.l.b16 %v899
        %v3536 = vunpack.c.h.b16 %v899
        %v3537 = vunpack.c.l.b16 %v900
        %v3538 = vunpack.c.h.b16 %v900
        %v3539 = vunpack.c.l.b16 %v901
        %v3540 = vunpack.c.h.b16 %v901
        %v3541 = vunpack.c.l.b16 %v902
        %v3542 = vunpack.c.h.b16 %v902
        %v3543 = vunpack.c.l.b16 %v903
        %v3544 = vunpack.c.h.b16 %v903
        %v3545 = vunpack.c.l.b16 %v904
        %v3546 = vunpack.c.h.b16 %v904
        %v3547 = vunpack.c.l.b16 %v905
        %v3548 = vunpack.c.h.b16 %v905
        %v3549 = vunpack.c.l.b16 %v906
        %v3550 = vunpack.c.h.b16 %v906
        %v3551 = vunpack.c.l.b16 %v907
        %v3552 = vunpack.c.h.b16 %v907
        %v3553 = vunpack.c.l.b16 %v908
        %v3554 = vunpack.c.h.b16 %v908
        %v3555 = vunpack.c.l.b16 %v909
        %v3556 = vunpack.c.h.b16 %v909
        %v3557 = vunpack.c.l.b16 %v910
        %v3558 = vunpack.c.h.b16 %v910
        %v3559 = vunpack.c.l.b16 %v911
        %v3560 = vunpack.c.h.b16 %v911
        %v3561 = vunpack.c.l.b16 %v912
        %v3562 = vunpack.c.h.b16 %v912
        %v3563 = vunpack.c.l.b16 %v913
        %v3564 = vunpack.c.h.b16 %v913
        %v3565 = vunpack.c.l.b16 %v914
        %v3566 = vunpack.c.h.b16 %v914
        %v3567 = vunpack.c.l.b16 %v915
        %v3568 = vunpack.c.h.b16 %v915
        %v3569 = vunpack.c.l.b16 %v916
        %v3570 = vunpack.c.h.b16 %v916
        %v3571 = vunpack.c.l.b16 %v917
        %v3572 = vunpack.c.h.b16 %v917
        %v3573 = vunpack.c.l.b16 %v918
        %v3574 = vunpack.c.h.b16 %v918
        %v3575 = vunpack.c.l.b16 %v919
        %v3576 = vunpack.c.h.b16 %v919
        %v3577 = vunpack.c.l.b16 %v920
        %v3578 = vunpack.c.h.b16 %v920
        %v3579 = vunpack.c.l.b16 %v921
        %v3580 = vunpack.c.h.b16 %v921
        %v3581 = vunpack.c.l.b16 %v922
        %v3582 = vunpack.c.h.b16 %v922
        %v3583 = vunpack.c.l.b16 %v923
        %v3584 = vunpack.c.h.b16 %v923
        %v3585 = vunpack.c.l.b16 %v924
        %v3586 = vunpack.c.h.b16 %v924
        %v3587 = vunpack.c.l.b16 %v925
        %v3588 = vunpack.c.h.b16 %v925
        %v3589 = vunpack.c.l.b16 %v926
        %v3590 = vunpack.c.h.b16 %v926
        %v3591 = vunpack.c.l.b16 %v927
        %v3592 = vunpack.c.h.b16 %v927
        %v3593 = vunpack.c.l.b16 %v928
        %v3594 = vunpack.c.h.b16 %v928
        %v3595 = vunpack.c.l.b16 %v929
        %v3596 = vunpack.c.h.b16 %v929
        %v3597 = vunpack.c.l.b16 %v930
        %v3598 = vunpack.c.h.b16 %v930
        %v3599 = vunpack.c.l.b16 %v931
        %v3600 = vunpack.c.h.b16 %v931
        %v3601 = vunpack.c.l.b16 %v932
        %v3602 = vunpack.c.h.b16 %v932
        %v3603 = vunpack.c.l.b16 %v933
        %v3604 = vunpack.c.h.b16 %v933
        %v3605 = vunpack.c.l.b16 %v934
        %v3606 = vunpack.c.h.b16 %v934
        %v3607 = vunpack.c.l.b16 %v935
        %v3608 = vunpack.c.h.b16 %v935
        %v3609 = vunpack.c.l.b16 %v936
        %v3610 = vunpack.c.h.b16 %v936
        %v3611 = vunpack.c.l.b16 %v937
        %v3612 = vunpack.c.h.b16 %v937
        %v3613 = vunpack.c.l.b16 %v938
        %v3614 = vunpack.c.h.b16 %v938
        %v3615 = vunpack.c.l.b16 %v939
        %v3616 = vunpack.c.h.b16 %v939
        %v3617 = vunpack.c.l.b16 %v940
        %v3618 = vunpack.c.h.b16 %v940
        %v3619 = vunpack.c.l.b16 %v941
        %v3620 = vunpack.c.h.b16 %v941
        %v3621 = vunpack.c.l.b16 %v942
        %v3622 = vunpack.c.h.b16 %v942
        %v3623 = vunpack.c.l.b16 %v943
        %v3624 = vunpack.c.h.b16 %v943
        %v3625 = vunpack.c.l.b16 %v944
        %v3626 = vunpack.c.h.b16 %v944
        %v3627 = vunpack.c.l.b16 %v945
        %v3628 = vunpack.c.h.b16 %v945
        %v3629 = vunpack.c.l.b16 %v946
        %v3630 = vunpack.c.h.b16 %v946
        %v3631 = vunpack.c.l.b16 %v947
        %v3632 = vunpack.c.h.b16 %v947
        %v3633 = vunpack.c.l.b16 %v948
        %v3634 = vunpack.c.h.b16 %v948
        %v3635 = vunpack.c.l.b16 %v949
        %v3636 = vunpack.c.h.b16 %v949
        %v3637 = vunpack.c.l.b16 %v950
        %v3638 = vunpack.c.h.b16 %v950
        %v3639 = vunpack.c.l.b16 %v951
        %v3640 = vunpack.c.h.b16 %v951
        %v3641 = vunpack.c.l.b16 %v952
        %v3642 = vunpack.c.h.b16 %v952
        %v3643 = vunpack.c.l.b16 %v953
        %v3644 = vunpack.c.h.b16 %v953
        %v3645 = vunpack.c.l.b16 %v954
        %v3646 = vunpack.c.h.b16 %v954
        %v3647 = vunpack.c.l.b16 %v955
        %v3648 = vunpack.c.h.b16 %v955
        %v3649 = vunpack.c.l.b16 %v956
        %v3650 = vunpack.c.h.b16 %v956
        %v3651 = vunpack.c.l.b16 %v957
        %v3652 = vunpack.c.h.b16 %v957
        %v3653 = vunpack.c.l.b16 %v958
        %v3654 = vunpack.c.h.b16 %v958
        %v3655 = vunpack.c.l.b16 %v959
        %v3656 = vunpack.c.h.b16 %v959
        %v3657 = vunpack.c.l.b16 %v960
        %v3658 = vunpack.c.h.b16 %v960
        %v3659 = vunpack.c.l.b16 %v961
        %v3660 = vunpack.c.h.b16 %v961
        %v3661 = vunpack.c.l.b16 %v962
        %v3662 = vunpack.c.h.b16 %v962
        %v3663 = vunpack.c.l.b16 %v963
        %v3664 = vunpack.c.h.b16 %v963
        %v3665 = vunpack.c.l.b16 %v964
        %v3666 = vunpack.c.h.b16 %v964
        %v3667 = vunpack.c.l.b16 %v965
        %v3668 = vunpack.c.h.b16 %v965
        %v3669 = vunpack.c.l.b16 %v966
        %v3670 = vunpack.c.h.b16 %v966
        %v3671 = vunpack.c.l.b16 %v967
        %v3672 = vunpack.c.h.b16 %v967
        %v3673 = vunpack.c.l.b16 %v968
        %v3674 = vunpack.c.h.b16 %v968
        %v3675 = vunpack.c.l.b16 %v969
        %v3676 = vunpack.c.h.b16 %v969
        %v3677 = vunpack.c.l.b16 %v970
        %v3678 = vunpack.c.h.b16 %v970
        %v3679 = vunpack.c.l.b16 %v971
        %v3680 = vunpack.c.h.b16 %v971
        %v3681 = vunpack.c.l.b16 %v972
        %v3682 = vunpack.c.h.b16 %v972
        %v3683 = vunpack.c.l.b16 %v973
        %v3684 = vunpack.c.h.b16 %v973
        %v3685 = vunpack.c.l.b16 %v974
        %v3686 = vunpack.c.h.b16 %v974
        %v3687 = vunpack.c.l.b16 %v975
        %v3688 = vunpack.c.h.b16 %v975
        %v3689 = vunpack.c.l.b16 %v976
        %v3690 = vunpack.c.h.b16 %v976
        %v3691 = vunpack.c.l.b16 %v977
        %v3692 = vunpack.c.h.b16 %v977
        %v3693 = vunpack.c.l.b16 %v978
        %v3694 = vunpack.c.h.b16 %v978
        %v3695 = vunpack.c.l.b16 %v979
        %v3696 = vunpack.c.h.b16 %v979
        %v3697 = vunpack.c.l.b16 %v980
        %v3698 = vunpack.c.h.b16 %v980
        %v3699 = vunpack.c.l.b16 %v981
        %v3700 = vunpack.c.h.b16 %v981
        %v3701 = vunpack.c.l.b16 %v982
        %v3702 = vunpack.c.h.b16 %v982
        %v3703 = vunpack.c.l.b16 %v983
        %v3704 = vunpack.c.h.b16 %v983
        %v3705 = vunpack.c.l.b16 %v984
        %v3706 = vunpack.c.h.b16 %v984
        %v3707 = vunpack.c.l.b16 %v985
        %v3708 = vunpack.c.h.b16 %v985
        %v3709 = vunpack.c.l.b16 %v986
        %v3710 = vunpack.c.h.b16 %v986
        %v3711 = vunpack.c.l.b16 %v987
        %v3712 = vunpack.c.h.b16 %v987
        %v3713 = vunpack.c.l.b16 %v988
        %v3714 = vunpack.c.h.b16 %v988
        %v3715 = vunpack.c.l.b16 %v989
        %v3716 = vunpack.c.h.b16 %v989
        %v3717 = vunpack.c.l.b16 %v990
        %v3718 = vunpack.c.h.b16 %v990
        %v3719 = vunpack.c.l.b16 %v991
        %v3720 = vunpack.c.h.b16 %v991
        %v3721 = vunpack.c.l.b16 %v992
        %v3722 = vunpack.c.h.b16 %v992
        %v3723 = vunpack.c.l.b16 %v993
        %v3724 = vunpack.c.h.b16 %v993
        %v3725 = vunpack.c.l.b16 %v994
        %v3726 = vunpack.c.h.b16 %v994
        %v3727 = vunpack.c.l.b16 %v995
        %v3728 = vunpack.c.h.b16 %v995
        %v3729 = vunpack.c.l.b16 %v996
        %v3730 = vunpack.c.h.b16 %v996
        %v3731 = vunpack.c.l.b16 %v997
        %v3732 = vunpack.c.h.b16 %v997
        %v3733 = vunpack.c.l.b16 %v998
        %v3734 = vunpack.c.h.b16 %v998
        %v3735 = vunpack.c.l.b16 %v999
        %v3736 = vunpack.c.h.b16 %v999
        %v3737 = vunpack.c.l.b16 %v1000
        %v3738 = vunpack.c.h.b16 %v1000
        %v3739 = vunpack.c.l.b16 %v1001
        %v3740 = vunpack.c.h.b16 %v1001
        %v3741 = vunpack.c.l.b16 %v1002
        %v3742 = vunpack.c.h.b16 %v1002
        %v3743 = vunpack.c.l.b16 %v1003
        %v3744 = vunpack.c.h.b16 %v1003
        %v3745 = vunpack.c.l.b16 %v1004
        %v3746 = vunpack.c.h.b16 %v1004
        %v3747 = vunpack.c.l.b16 %v1005
        %v3748 = vunpack.c.h.b16 %v1005
        %v3749 = vunpack.c.l.b16 %v1006
        %v3750 = vunpack.c.h.b16 %v1006
        %v3751 = vunpack.c.l.b16 %v1007
        %v3752 = vunpack.c.h.b16 %v1007
        %v3753 = vunpack.c.l.b16 %v1008
        %v3754 = vunpack.c.h.b16 %v1008
        %v3755 = vunpack.c.l.b16 %v1009
        %v3756 = vunpack.c.h.b16 %v1009
        %v3757 = vunpack.c.l.b16 %v1010
        %v3758 = vunpack.c.h.b16 %v1010
        %v3759 = vunpack.c.l.b16 %v1011
        %v3760 = vunpack.c.h.b16 %v1011
        %v3761 = vunpack.c.l.b16 %v1012
        %v3762 = vunpack.c.h.b16 %v1012
        %v3763 = vunpack.c.l.b16 %v1013
        %v3764 = vunpack.c.h.b16 %v1013
        %v3765 = vunpack.c.l.b16 %v1014
        %v3766 = vunpack.c.h.b16 %v1014
        %v3767 = vunpack.c.l.b16 %v1015
        %v3768 = vunpack.c.h.b16 %v1015
        %v3769 = vunpack.c.l.b16 %v1016
        %v3770 = vunpack.c.h.b16 %v1016
        %v3771 = vunpack.c.l.b16 %v1017
        %v3772 = vunpack.c.h.b16 %v1017
        %v3773 = vunpack.c.l.b16 %v1018
        %v3774 = vunpack.c.h.b16 %v1018
        %v3775 = vunpack.c.l.b16 %v1019
        %v3776 = vunpack.c.h.b16 %v1019
        %v3777 = vunpack.c.l.b16 %v1020
        %v3778 = vunpack.c.h.b16 %v1020
        %v3779 = vunpack.c.l.b16 %v1021
        %v3780 = vunpack.c.h.b16 %v1021
        %v3781 = vunpack.c.l.b16 %v1022
        %v3782 = vunpack.c.h.b16 %v1022
        %v3783 = vunpack.c.l.b16 %v1023
        %v3784 = vunpack.c.h.b16 %v1023
        %v3785 = vunpack.c.l.b16 %v1024
        %v3786 = vunpack.c.h.b16 %v1024
        %v3787 = vunpack.c.l.b16 %v1025
        %v3788 = vunpack.c.h.b16 %v1025
        %v3789 = vunpack.c.l.b16 %v1026
        %v3790 = vunpack.c.h.b16 %v1026
        %v3791 = vunpack.c.l.b16 %v1027
        %v3792 = vunpack.c.h.b16 %v1027
        %v3793 = vunpack.c.l.b16 %v1028
        %v3794 = vunpack.c.h.b16 %v1028
        %v3795 = vunpack.c.l.b16 %v1029
        %v3796 = vunpack.c.h.b16 %v1029
        %v3797 = vunpack.c.l.b16 %v1030
        %v3798 = vunpack.c.h.b16 %v1030
        %v3799 = vunpack.c.l.b16 %v1031
        %v3800 = vunpack.c.h.b16 %v1031
        %v3801 = vunpack.c.l.b16 %v1032
        %v3802 = vunpack.c.h.b16 %v1032
        %v3803 = vunpack.c.l.b16 %v1033
        %v3804 = vunpack.c.h.b16 %v1033
        %v3805 = vunpack.c.l.b16 %v1034
        %v3806 = vunpack.c.h.b16 %v1034
        %v3807 = vunpack.c.l.b16 %v1035
        %v3808 = vunpack.c.h.b16 %v1035
        %v3809 = vunpack.c.l.b16 %v1036
        %v3810 = vunpack.c.h.b16 %v1036
        %v3811 = vunpack.c.l.b16 %v1037
        %v3812 = vunpack.c.h.b16 %v1037
        %v3813 = vunpack.c.l.b16 %v1038
        %v3814 = vunpack.c.h.b16 %v1038
        %v3815 = vunpack.c.l.b16 %v1039
        %v3816 = vunpack.c.h.b16 %v1039
        %v3817 = vunpack.c.l.b16 %v1040
        %v3818 = vunpack.c.h.b16 %v1040
        %v3819 = vunpack.c.l.b16 %v1041
        %v3820 = vunpack.c.h.b16 %v1041
        %v3821 = vunpack.c.l.b16 %v1042
        %v3822 = vunpack.c.h.b16 %v1042
        %v3823 = vunpack.c.l.b16 %v1043
        %v3824 = vunpack.c.h.b16 %v1043
        %v3825 = vunpack.c.l.b16 %v1044
        %v3826 = vunpack.c.h.b16 %v1044
        %v3827 = vunpack.c.l.b16 %v1045
        %v3828 = vunpack.c.h.b16 %v1045
        %v3829 = vunpack.c.l.b16 %v1046
        %v3830 = vunpack.c.h.b16 %v1046
        %v3831 = vunpack.c.l.b16 %v1047
        %v3832 = vunpack.c.h.b16 %v1047
        %v3833 = vunpack.c.l.b16 %v1048
        %v3834 = vunpack.c.h.b16 %v1048
        %v3835 = vunpack.c.l.b16 %v1049
        %v3836 = vunpack.c.h.b16 %v1049
        %v3837 = vunpack.c.l.b16 %v1050
        %v3838 = vunpack.c.h.b16 %v1050
        %v3839 = vunpack.c.l.b16 %v1051
        %v3840 = vunpack.c.h.b16 %v1051
        %v3841 = vunpack.c.l.b16 %v1052
        %v3842 = vunpack.c.h.b16 %v1052
        %v3843 = vunpack.c.l.b16 %v1053
        %v3844 = vunpack.c.h.b16 %v1053
        %v3845 = vunpack.c.l.b16 %v1054
        %v3846 = vunpack.c.h.b16 %v1054
        %v3847 = vunpack.c.l.b16 %v1055
        %v3848 = vunpack.c.h.b16 %v1055
        %v3849 = vunpack.c.l.b16 %v1056
        %v3850 = vunpack.c.h.b16 %v1056
        %v3851 = vunpack.c.l.b16 %v1057
        %v3852 = vunpack.c.h.b16 %v1057
        %v3853 = vunpack.c.l.b16 %v1058
        %v3854 = vunpack.c.h.b16 %v1058
        %v3855 = vunpack.c.l.b16 %v1059
        %v3856 = vunpack.c.h.b16 %v1059
        %v3857 = vunpack.c.l.b16 %v1060
        %v3858 = vunpack.c.h.b16 %v1060
        %v3859 = vunpack.c.l.b16 %v1061
        %v3860 = vunpack.c.h.b16 %v1061
        %v3861 = vunpack.c.l.b16 %v1062
        %v3862 = vunpack.c.h.b16 %v1062
        %v3863 = vunpack.c.l.b16 %v1063
        %v3864 = vunpack.c.h.b16 %v1063
        %v3865 = vunpack.c.l.b16 %v1064
        %v3866 = vunpack.c.h.b16 %v1064
        %v3867 = vunpack.c.l.b16 %v1065
        %v3868 = vunpack.c.h.b16 %v1065
        %v3869 = vunpack.c.l.b16 %v1066
        %v3870 = vunpack.c.h.b16 %v1066
        %v3871 = vunpack.c.l.b16 %v1067
        %v3872 = vunpack.c.h.b16 %v1067
        %v3873 = vunpack.c.l.b16 %v1068
        %v3874 = vunpack.c.h.b16 %v1068
        %v3875 = vunpack.c.l.b16 %v1069
        %v3876 = vunpack.c.h.b16 %v1069
        %v3877 = vunpack.c.l.b16 %v1070
        %v3878 = vunpack.c.h.b16 %v1070
        %v3879 = vunpack.c.l.b16 %v1071
        %v3880 = vunpack.c.h.b16 %v1071
        %v3881 = vunpack.c.l.b16 %v1072
        %v3882 = vunpack.c.h.b16 %v1072
        %v3883 = vunpack.c.l.b16 %v1073
        %v3884 = vunpack.c.h.b16 %v1073
        %v3885 = vunpack.c.l.b16 %v1074
        %v3886 = vunpack.c.h.b16 %v1074
        %v3887 = vunpack.c.l.b16 %v1075
        %v3888 = vunpack.c.h.b16 %v1075
        %v3889 = vunpack.c.l.b16 %v1076
        %v3890 = vunpack.c.h.b16 %v1076
        %v3891 = vunpack.c.l.b16 %v1077
        %v3892 = vunpack.c.h.b16 %v1077
        %v3893 = vunpack.c.l.b16 %v1078
        %v3894 = vunpack.c.h.b16 %v1078
        %v3895 = vunpack.c.l.b16 %v1079
        %v3896 = vunpack.c.h.b16 %v1079
        %v3897 = vunpack.c.l.b16 %v1080
        %v3898 = vunpack.c.h.b16 %v1080
        %v3899 = vunpack.c.l.b16 %v1081
        %v3900 = vunpack.c.h.b16 %v1081
        %v3901 = vunpack.c.l.b16 %v1082
        %v3902 = vunpack.c.h.b16 %v1082
        %v3903 = vunpack.c.l.b16 %v1083
        %v3904 = vunpack.c.h.b16 %v1083
        %v3905 = vunpack.c.l.b16 %v1084
        %v3906 = vunpack.c.h.b16 %v1084
        %v3907 = vunpack.c.l.b16 %v1085
        %v3908 = vunpack.c.h.b16 %v1085
        %v3909 = vunpack.c.l.b16 %v1086
        %v3910 = vunpack.c.h.b16 %v1086
        %v3911 = vunpack.c.l.b16 %v1087
        %v3912 = vunpack.c.h.b16 %v1087
        %v3913 = vunpack.c.l.b16 %v1088
        %v3914 = vunpack.c.h.b16 %v1088
        %v3915 = vunpack.c.l.b16 %v1089
        %v3916 = vunpack.c.h.b16 %v1089
        %v3917 = vunpack.c.l.b16 %v1090
        %v3918 = vunpack.c.h.b16 %v1090
        %v3919 = vunpack.c.l.b16 %v1091
        %v3920 = vunpack.c.h.b16 %v1091
        %v3921 = vunpack.c.l.b16 %v1092
        %v3922 = vunpack.c.h.b16 %v1092
        %v3923 = vunpack.c.l.b16 %v1093
        %v3924 = vunpack.c.h.b16 %v1093
        %v3925 = vunpack.c.l.b16 %v1094
        %v3926 = vunpack.c.h.b16 %v1094
        %v3927 = vunpack.c.l.b16 %v1095
        %v3928 = vunpack.c.h.b16 %v1095
        %v3929 = vunpack.c.l.b16 %v1096
        %v3930 = vunpack.c.h.b16 %v1096
        %v3931 = vunpack.c.l.b16 %v1097
        %v3932 = vunpack.c.h.b16 %v1097
        %v3933 = vunpack.c.l.b16 %v1098
        %v3934 = vunpack.c.h.b16 %v1098
        %v3935 = vunpack.c.l.b16 %v1099
        %v3936 = vunpack.c.h.b16 %v1099
        %v3937 = vunpack.c.l.b16 %v1100
        %v3938 = vunpack.c.h.b16 %v1100
        %v3939 = vunpack.c.l.b16 %v1101
        %v3940 = vunpack.c.h.b16 %v1101
        %v3941 = vunpack.c.l.b16 %v1102
        %v3942 = vunpack.c.h.b16 %v1102
        %v3943 = vunpack.c.l.b16 %v1103
        %v3944 = vunpack.c.h.b16 %v1103
        %v3945 = vunpack.c.l.b16 %v1104
        %v3946 = vunpack.c.h.b16 %v1104
        %v3947 = vunpack.c.l.b16 %v1105
        %v3948 = vunpack.c.h.b16 %v1105
        %v3949 = vunpack.c.l.b16 %v1106
        %v3950 = vunpack.c.h.b16 %v1106
        %v3951 = vunpack.c.l.b16 %v1107
        %v3952 = vunpack.c.h.b16 %v1107
        %v3953 = vunpack.c.l.b16 %v1108
        %v3954 = vunpack.c.h.b16 %v1108
        %v3955 = vunpack.c.l.b16 %v1109
        %v3956 = vunpack.c.h.b16 %v1109
        %v3957 = vunpack.c.l.b16 %v1110
        %v3958 = vunpack.c.h.b16 %v1110
        %v3959 = vunpack.c.l.b16 %v1111
        %v3960 = vunpack.c.h.b16 %v1111
        %v3961 = vunpack.c.l.b16 %v1112
        %v3962 = vunpack.c.h.b16 %v1112
        %v3963 = vunpack.c.l.b16 %v1113
        %v3964 = vunpack.c.h.b16 %v1113
        %v3965 = vunpack.c.l.b16 %v1114
        %v3966 = vunpack.c.h.b16 %v1114
        %v3967 = vunpack.c.l.b16 %v1115
        %v3968 = vunpack.c.h.b16 %v1115
        %v3969 = vunpack.c.l.b16 %v1116
        %v3970 = vunpack.c.h.b16 %v1116
        %v3971 = vunpack.c.l.b16 %v1117
        %v3972 = vunpack.c.h.b16 %v1117
        %v3973 = vunpack.c.l.b16 %v1118
        %v3974 = vunpack.c.h.b16 %v1118
        %v3975 = vunpack.c.l.b16 %v1119
        %v3976 = vunpack.c.h.b16 %v1119
        %v3977 = vunpack.c.l.b16 %v1120
        %v3978 = vunpack.c.h.b16 %v1120
        %v3979 = vunpack.c.l.b16 %v1121
        %v3980 = vunpack.c.h.b16 %v1121
        %v3981 = vunpack.c.l.b16 %v1122
        %v3982 = vunpack.c.h.b16 %v1122
        %v3983 = vunpack.c.l.b16 %v1123
        %v3984 = vunpack.c.h.b16 %v1123
        %v3985 = vunpack.c.l.b16 %v1124
        %v3986 = vunpack.c.h.b16 %v1124
        %v3987 = vunpack.c.l.b16 %v1125
        %v3988 = vunpack.c.h.b16 %v1125
        %v3989 = vunpack.c.l.b16 %v1126
        %v3990 = vunpack.c.h.b16 %v1126
        %v3991 = vunpack.c.l.b16 %v1127
        %v3992 = vunpack.c.h.b16 %v1127
        %v3993 = vunpack.c.l.b16 %v1128
        %v3994 = vunpack.c.h.b16 %v1128
        %v3995 = vunpack.c.l.b16 %v1129
        %v3996 = vunpack.c.h.b16 %v1129
        %v3997 = vunpack.c.l.b16 %v1130
        %v3998 = vunpack.c.h.b16 %v1130
        %v3999 = vunpack.c.l.b16 %v1131
        %v4000 = vunpack.c.h.b16 %v1131
        %v4001 = vunpack.c.l.b16 %v1132
        %v4002 = vunpack.c.h.b16 %v1132
        %v4003 = vunpack.c.l.b16 %v1133
        %v4004 = vunpack.c.h.b16 %v1133
        %v4005 = vunpack.c.l.b16 %v1134
        %v4006 = vunpack.c.h.b16 %v1134
        %v4007 = vunpack.c.l.b16 %v1135
        %v4008 = vunpack.c.h.b16 %v1135
        %v4009 = vunpack.c.l.b16 %v1136
        %v4010 = vunpack.c.h.b16 %v1136
        %v4011 = vunpack.c.l.b16 %v1137
        %v4012 = vunpack.c.h.b16 %v1137
        %v4013 = vunpack.c.l.b16 %v1138
        %v4014 = vunpack.c.h.b16 %v1138
        %v4015 = vunpack.c.l.b16 %v1139
        %v4016 = vunpack.c.h.b16 %v1139
        %v4017 = vunpack.c.l.b16 %v1140
        %v4018 = vunpack.c.h.b16 %v1140
        %v4019 = vunpack.c.l.b16 %v1141
        %v4020 = vunpack.c.h.b16 %v1141
        %v4021 = vunpack.c.l.b16 %v1142
        %v4022 = vunpack.c.h.b16 %v1142
        %v4023 = vunpack.c.l.b16 %v1143
        %v4024 = vunpack.c.h.b16 %v1143
        %v4025 = vunpack.c.l.b16 %v1144
        %v4026 = vunpack.c.h.b16 %v1144
        %v4027 = vunpack.c.l.b16 %v1145
        %v4028 = vunpack.c.h.b16 %v1145
        %v4029 = vunpack.c.l.b16 %v1146
        %v4030 = vunpack.c.h.b16 %v1146
        %v4031 = vunpack.c.l.b16 %v1147
        %v4032 = vunpack.c.h.b16 %v1147
        %v4033 = vunpack.c.l.b16 %v1148
        %v4034 = vunpack.c.h.b16 %v1148
        %v4035 = vunpack.c.l.b16 %v1149
        %v4036 = vunpack.c.h.b16 %v1149
        %v4037 = vunpack.c.l.b16 %v1150
        %v4038 = vunpack.c.h.b16 %v1150
        %v4039 = vunpack.c.l.b16 %v1151
        %v4040 = vunpack.c.h.b16 %v1151
        %v4041 = vunpack.c.l.b16 %v1152
        %v4042 = vunpack.c.h.b16 %v1152
        %v4043 = vunpack.c.l.b16 %v1153
        %v4044 = vunpack.c.h.b16 %v1153
        %v4045 = vunpack.c.l.b16 %v1154
        %v4046 = vunpack.c.h.b16 %v1154
        %v4047 = vunpack.c.l.b16 %v1155
        %v4048 = vunpack.c.h.b16 %v1155
        %v4049 = vunpack.c.l.b16 %v1156
        %v4050 = vunpack.c.h.b16 %v1156
        %v4051 = vunpack.c.l.b16 %v1157
        %v4052 = vunpack.c.h.b16 %v1157
        %v4053 = vunpack.c.l.b16 %v1158
        %v4054 = vunpack.c.h.b16 %v1158
        %v4055 = vunpack.c.l.b16 %v1159
        %v4056 = vunpack.c.h.b16 %v1159
        %v4057 = vunpack.c.l.b16 %v1160
        %v4058 = vunpack.c.h.b16 %v1160
        %v4059 = vunpack.c.l.b16 %v1161
        %v4060 = vunpack.c.h.b16 %v1161
        %v4061 = vunpack.c.l.b16 %v1162
        %v4062 = vunpack.c.h.b16 %v1162
        %v4063 = vunpack.c.l.b16 %v1163
        %v4064 = vunpack.c.h.b16 %v1163
        %v4065 = vunpack.c.l.b16 %v1164
        %v4066 = vunpack.c.h.b16 %v1164
        %v4067 = vunpack.c.l.b16 %v1165
        %v4068 = vunpack.c.h.b16 %v1165
        %v4069 = vunpack.c.l.b16 %v1166
        %v4070 = vunpack.c.h.b16 %v1166
        %v4071 = vunpack.c.l.b16 %v1167
        %v4072 = vunpack.c.h.b16 %v1167
        %v4073 = vunpack.c.l.b16 %v1168
        %v4074 = vunpack.c.h.b16 %v1168
        %v4075 = vunpack.c.l.b16 %v1169
        %v4076 = vunpack.c.h.b16 %v1169
        %v4077 = vunpack.c.l.b16 %v1170
        %v4078 = vunpack.c.h.b16 %v1170
        %v4079 = vunpack.c.l.b16 %v1171
        %v4080 = vunpack.c.h.b16 %v1171
        %v4081 = vunpack.c.l.b16 %v1172
        %v4082 = vunpack.c.h.b16 %v1172
        %v4083 = vunpack.c.l.b16 %v1173
        %v4084 = vunpack.c.h.b16 %v1173
        %v4085 = vunpack.c.l.b16 %v1174
        %v4086 = vunpack.c.h.b16 %v1174
        %v4087 = vunpack.c.l.b16 %v1175
        %v4088 = vunpack.c.h.b16 %v1175
        %v4089 = vunpack.c.l.b16 %v1176
        %v4090 = vunpack.c.h.b16 %v1176
        %v4091 = vunpack.c.l.b16 %v1177
        %v4092 = vunpack.c.h.b16 %v1177
        %v4093 = vunpack.c.l.b16 %v1178
        %v4094 = vunpack.c.h.b16 %v1178
        %v4095 = vunpack.c.l.b16 %v1179
        %v4096 = vunpack.c.h.b16 %v1179
        %v4097 = vunpack.c.l.b16 %v1180
        %v4098 = vunpack.c.h.b16 %v1180
        %v4099 = vunpack.c.l.b16 %v1181
        %v4100 = vunpack.c.h.b16 %v1181
        %v4101 = vunpack.c.l.b16 %v1182
        %v4102 = vunpack.c.h.b16 %v1182
        %v4103 = vunpack.c.l.b16 %v1183
        %v4104 = vunpack.c.h.b16 %v1183
        %v4105 = vunpack.c.l.b16 %v1184
        %v4106 = vunpack.c.h.b16 %v1184
        %v4107 = vunpack.c.l.b16 %v1185
        %v4108 = vunpack.c.h.b16 %v1185
        %v4109 = vunpack.c.l.b16 %v1186
        %v4110 = vunpack.c.h.b16 %v1186
        %v4111 = vunpack.c.l.b16 %v1187
        %v4112 = vunpack.c.h.b16 %v1187
        %v4113 = vunpack.c.l.b16 %v1188
        %v4114 = vunpack.c.h.b16 %v1188
        %v4115 = vunpack.c.l.b16 %v1189
        %v4116 = vunpack.c.h.b16 %v1189
        %v4117 = vunpack.c.l.b16 %v1190
        %v4118 = vunpack.c.h.b16 %v1190
        %v4119 = vunpack.c.l.b16 %v1191
        %v4120 = vunpack.c.h.b16 %v1191
        %v4121 = vunpack.c.l.b16 %v1192
        %v4122 = vunpack.c.h.b16 %v1192
        %v4123 = vunpack.c.l.b16 %v1193
        %v4124 = vunpack.c.h.b16 %v1193
        %v4125 = vunpack.c.l.b16 %v1194
        %v4126 = vunpack.c.h.b16 %v1194
        %v4127 = vunpack.c.l.b16 %v1195
        %v4128 = vunpack.c.h.b16 %v1195
        %v4129 = vunpack.c.l.b16 %v1196
        %v4130 = vunpack.c.h.b16 %v1196
        %v4131 = vunpack.c.l.b16 %v1197
        %v4132 = vunpack.c.h.b16 %v1197
        %v4133 = vunpack.c.l.b16 %v1198
        %v4134 = vunpack.c.h.b16 %v1198
        %v4135 = vunpack.c.l.b16 %v1199
        %v4136 = vunpack.c.h.b16 %v1199
        %v4137 = vunpack.c.l.b16 %v1200
        %v4138 = vunpack.c.h.b16 %v1200
        %v4139 = vunpack.c.l.b16 %v1201
        %v4140 = vunpack.c.h.b16 %v1201
        %v4141 = vunpack.c.l.b16 %v1202
        %v4142 = vunpack.c.h.b16 %v1202
        %v4143 = vunpack.c.l.b16 %v1203
        %v4144 = vunpack.c.h.b16 %v1203
        %v4145 = vunpack.c.l.b16 %v1204
        %v4146 = vunpack.c.h.b16 %v1204
        %v4147 = vunpack.c.l.b16 %v1205
        %v4148 = vunpack.c.h.b16 %v1205
        %v4149 = vunpack.c.l.b16 %v1206
        %v4150 = vunpack.c.h.b16 %v1206
        %v4151 = vunpack.c.l.b16 %v1207
        %v4152 = vunpack.c.h.b16 %v1207
        %v4153 = vunpack.c.l.b16 %v1208
        %v4154 = vunpack.c.h.b16 %v1208
        %v4155 = vunpack.c.l.b16 %v1209
        %v4156 = vunpack.c.h.b16 %v1209
        %v4157 = vunpack.c.l.b16 %v1210
        %v4158 = vunpack.c.h.b16 %v1210
        %v4159 = vunpack.c.l.b16 %v1211
        %v4160 = vunpack.c.h.b16 %v1211
        %v4161 = vunpack.c.l.b16 %v1212
        %v4162 = vunpack.c.h.b16 %v1212
        %v4163 = vunpack.c.l.b16 %v1213
        %v4164 = vunpack.c.h.b16 %v1213
        %v4165 = vunpack.c.l.b16 %v1214
        %v4166 = vunpack.c.h.b16 %v1214
        %v4167 = vunpack.c.l.b16 %v1215
        %v4168 = vunpack.c.h.b16 %v1215
        %v4169 = vunpack.c.l.b16 %v1216
        %v4170 = vunpack.c.h.b16 %v1216
        %v4171 = vunpack.c.l.b16 %v1217
        %v4172 = vunpack.c.h.b16 %v1217
        %v4173 = vunpack.c.l.b16 %v1218
        %v4174 = vunpack.c.h.b16 %v1218
        %v4175 = vunpack.c.l.b16 %v1219
        %v4176 = vunpack.c.h.b16 %v1219
        %v4177 = vunpack.c.l.b16 %v1220
        %v4178 = vunpack.c.h.b16 %v1220
        %v4179 = vunpack.c.l.b16 %v1221
        %v4180 = vunpack.c.h.b16 %v1221
        %v4181 = vunpack.c.l.b16 %v1222
        %v4182 = vunpack.c.h.b16 %v1222
        %v4183 = vunpack.c.l.b16 %v1223
        %v4184 = vunpack.c.h.b16 %v1223
        %v4185 = vunpack.c.l.b16 %v1224
        %v4186 = vunpack.c.h.b16 %v1224
        %v4187 = vunpack.c.l.b16 %v1225
        %v4188 = vunpack.c.h.b16 %v1225
        %v4189 = vunpack.c.l.b16 %v1226
        %v4190 = vunpack.c.h.b16 %v1226
        %v4191 = vunpack.c.l.b16 %v1227
        %v4192 = vunpack.c.h.b16 %v1227
        %v4193 = vunpack.c.l.b16 %v1228
        %v4194 = vunpack.c.h.b16 %v1228
        %v4195 = vunpack.c.l.b16 %v1229
        %v4196 = vunpack.c.h.b16 %v1229
        %v4197 = vunpack.c.l.b16 %v1230
        %v4198 = vunpack.c.h.b16 %v1230
        %v4199 = vunpack.c.l.b16 %v1231
        %v4200 = vunpack.c.h.b16 %v1231
        %v4201 = vunpack.c.l.b16 %v1232
        %v4202 = vunpack.c.h.b16 %v1232
        %v4203 = vunpack.c.l.b16 %v1233
        %v4204 = vunpack.c.h.b16 %v1233
        %v4205 = vunpack.c.l.b16 %v1234
        %v4206 = vunpack.c.h.b16 %v1234
        %v4207 = vunpack.c.l.b16 %v1235
        %v4208 = vunpack.c.h.b16 %v1235
        %v4209 = vunpack.c.l.b16 %v1236
        %v4210 = vunpack.c.h.b16 %v1236
        %v4211 = vunpack.c.l.b16 %v1237
        %v4212 = vunpack.c.h.b16 %v1237
        %v4213 = vunpack.c.l.b16 %v1238
        %v4214 = vunpack.c.h.b16 %v1238
        %v4215 = vunpack.c.l.b16 %v1239
        %v4216 = vunpack.c.h.b16 %v1239
        %v4217 = vunpack.c.l.b16 %v1240
        %v4218 = vunpack.c.h.b16 %v1240
        %v4219 = vunpack.c.l.b16 %v1241
        %v4220 = vunpack.c.h.b16 %v1241
        %v4221 = vunpack.c.l.b16 %v1242
        %v4222 = vunpack.c.h.b16 %v1242
        %v4223 = vunpack.c.l.b16 %v1243
        %v4224 = vunpack.c.h.b16 %v1243
        %v4225 = vunpack.c.l.b16 %v1244
        %v4226 = vunpack.c.h.b16 %v1244
        %v4227 = vunpack.c.l.b16 %v1245
        %v4228 = vunpack.c.h.b16 %v1245
        %v4229 = vunpack.c.l.b16 %v1246
        %v4230 = vunpack.c.h.b16 %v1246
        %v4231 = vunpack.c.l.b16 %v1247
        %v4232 = vunpack.c.h.b16 %v1247
        %v4233 = vunpack.c.l.b16 %v1248
        %v4234 = vunpack.c.h.b16 %v1248
        %v4235 = vunpack.c.l.b16 %v1249
        %v4236 = vunpack.c.h.b16 %v1249
        %v4237 = vunpack.c.l.b16 %v1250
        %v4238 = vunpack.c.h.b16 %v1250
        %v4239 = vunpack.c.l.b16 %v1251
        %v4240 = vunpack.c.h.b16 %v1251
        %v4241 = vunpack.c.l.b16 %v1252
        %v4242 = vunpack.c.h.b16 %v1252
        %v4243 = vunpack.c.l.b16 %v1253
        %v4244 = vunpack.c.h.b16 %v1253
        %v4245 = vunpack.c.l.b16 %v1254
        %v4246 = vunpack.c.h.b16 %v1254
        %v4247 = vunpack.c.l.b16 %v1255
        %v4248 = vunpack.c.h.b16 %v1255
        %v4249 = vunpack.c.l.b16 %v1256
        %v4250 = vunpack.c.h.b16 %v1256
        %v4251 = vunpack.c.l.b16 %v1257
        %v4252 = vunpack.c.h.b16 %v1257
        %v4253 = vunpack.c.l.b16 %v1258
        %v4254 = vunpack.c.h.b16 %v1258
        %v4255 = vunpack.c.l.b16 %v1259
        %v4256 = vunpack.c.h.b16 %v1259
        %v4257 = vunpack.c.l.b16 %v1260
        %v4258 = vunpack.c.h.b16 %v1260
        %v4259 = vunpack.c.l.b16 %v1261
        %v4260 = vunpack.c.h.b16 %v1261
        %v4261 = vunpack.c.l.b16 %v1262
        %v4262 = vunpack.c.h.b16 %v1262
        %v4263 = vunpack.c.l.b16 %v1263
        %v4264 = vunpack.c.h.b16 %v1263
        %v4265 = vunpack.c.l.b16 %v1264
        %v4266 = vunpack.c.h.b16 %v1264
        %v4267 = vunpack.c.l.b16 %v1265
        %v4268 = vunpack.c.h.b16 %v1265
        %v4269 = vunpack.c.l.b16 %v1266
        %v4270 = vunpack.c.h.b16 %v1266
        %v4271 = vunpack.c.l.b16 %v1267
        %v4272 = vunpack.c.h.b16 %v1267
        %v4273 = vunpack.c.l.b16 %v1268
        %v4274 = vunpack.c.h.b16 %v1268
        %v4275 = vunpack.c.l.b16 %v1269
        %v4276 = vunpack.c.h.b16 %v1269
        %v4277 = vunpack.c.l.b16 %v1270
        %v4278 = vunpack.c.h.b16 %v1270
        %v4279 = vunpack.c.l.b16 %v1271
        %v4280 = vunpack.c.h.b16 %v1271
        %v4281 = vunpack.c.l.b16 %v1272
        %v4282 = vunpack.c.h.b16 %v1272
        %v4283 = vunpack.c.l.b16 %v1273
        %v4284 = vunpack.c.h.b16 %v1273
        %v4285 = vunpack.c.l.b16 %v1274
        %v4286 = vunpack.c.h.b16 %v1274
        %v4287 = vunpack.c.l.b16 %v1275
        %v4288 = vunpack.c.h.b16 %v1275
        %v4289 = vunpack.c.l.b16 %v1276
        %v4290 = vunpack.c.h.b16 %v1276
        %v4291 = vunpack.c.l.b16 %v1277
        %v4292 = vunpack.c.h.b16 %v1277
        %v4293 = vunpack.c.l.b16 %v1278
        %v4294 = vunpack.c.h.b16 %v1278
        %v4295 = vunpack.c.l.b16 %v1279
        %v4296 = vunpack.c.h.b16 %v1279
        %v4297 = vunpack.c.l.b16 %v1280
        %v4298 = vunpack.c.h.b16 %v1280
        %v4299 = vunpack.c.l.b16 %v1281
        %v4300 = vunpack.c.h.b16 %v1281
        %v4301 = vunpack.c.l.b16 %v1282
        %v4302 = vunpack.c.h.b16 %v1282
        %v4303 = vunpack.c.l.b16 %v1283
        %v4304 = vunpack.c.h.b16 %v1283
        %v4305 = vunpack.c.l.b16 %v1284
        %v4306 = vunpack.c.h.b16 %v1284
        %v4307 = vunpack.c.l.b16 %v1285
        %v4308 = vunpack.c.h.b16 %v1285
        %v4309 = vunpack.c.l.b16 %v1286
        %v4310 = vunpack.c.h.b16 %v1286
        %v4311 = vunpack.c.l.b16 %v1287
        %v4312 = vunpack.c.h.b16 %v1287
        %v4313 = vunpack.c.l.b16 %v1288
        %v4314 = vunpack.c.h.b16 %v1288
        %v4315 = vunpack.c.l.b16 %v1289
        %v4316 = vunpack.c.h.b16 %v1289
        %v4317 = vunpack.c.l.b16 %v1290
        %v4318 = vunpack.c.h.b16 %v1290
        %v4319 = vunpack.c.l.b16 %v1291
        %v4320 = vunpack.c.h.b16 %v1291
        %v4321 = vunpack.c.l.b16 %v1292
        %v4322 = vunpack.c.h.b16 %v1292
        %v4323 = vunpack.c.l.b16 %v1293
        %v4324 = vunpack.c.h.b16 %v1293
        %v4325 = vunpack.c.l.b16 %v1294
        %v4326 = vunpack.c.h.b16 %v1294
        %v4327 = vunpack.c.l.b16 %v1295
        %v4328 = vunpack.c.h.b16 %v1295
        %v4329 = vunpack.c.l.b16 %v1296
        %v4330 = vunpack.c.h.b16 %v1296
        %v4331 = vunpack.c.l.b16 %v1297
        %v4332 = vunpack.c.h.b16 %v1297
        %v4333 = vunpack.c.l.b16 %v1298
        %v4334 = vunpack.c.h.b16 %v1298
        %v4335 = vunpack.c.l.b16 %v1299
        %v4336 = vunpack.c.h.b16 %v1299
        %v4337 = vunpack.c.l.b16 %v1300
        %v4338 = vunpack.c.h.b16 %v1300
        %v4339 = vunpack.c.l.b16 %v1301
        %v4340 = vunpack.c.h.b16 %v1301
        %v4341 = vunpack.c.l.b16 %v1302
        %v4342 = vunpack.c.h.b16 %v1302
        %v4343 = vunpack.c.l.b16 %v1303
        %v4344 = vunpack.c.h.b16 %v1303
        %v4345 = vunpack.c.l.b16 %v1304
        %v4346 = vunpack.c.h.b16 %v1304
        %v4347 = vunpack.c.l.b16 %v1305
        %v4348 = vunpack.c.h.b16 %v1305
        %v4349 = vunpack.c.l.b16 %v1306
        %v4350 = vunpack.c.h.b16 %v1306
        %v4351 = vunpack.c.l.b16 %v1307
        %v4352 = vunpack.c.h.b16 %v1307
        %v4353 = vunpack.c.l.b16 %v1308
        %v4354 = vunpack.c.h.b16 %v1308
        %v4355 = vunpack.c.l.b16 %v1309
        %v4356 = vunpack.c.h.b16 %v1309
        %v4357 = vunpack.c.l.b16 %v1310
        %v4358 = vunpack.c.h.b16 %v1310
        %v4359 = vunpack.c.l.b16 %v1311
        %v4360 = vunpack.c.h.b16 %v1311
        %v4361 = vunpack.c.l.b16 %v1312
        %v4362 = vunpack.c.h.b16 %v1312
        %v4363 = vunpack.c.l.b16 %v1313
        %v4364 = vunpack.c.h.b16 %v1313
        %v4365 = vunpack.c.l.b16 %v1314
        %v4366 = vunpack.c.h.b16 %v1314
        %v4367 = vunpack.c.l.b16 %v1315
        %v4368 = vunpack.c.h.b16 %v1315
        %v4369 = vunpack.c.l.b16 %v1316
        %v4370 = vunpack.c.h.b16 %v1316
        %v4371 = vunpack.c.l.b16 %v1317
        %v4372 = vunpack.c.h.b16 %v1317
        %v4373 = vunpack.c.l.b16 %v1318
        %v4374 = vunpack.c.h.b16 %v1318
        %v4375 = vunpack.c.l.b16 %v1319
        %v4376 = vunpack.c.h.b16 %v1319
        %v4377 = vunpack.c.l.b16 %v1320
        %v4378 = vunpack.c.h.b16 %v1320
        %v4379 = vunpack.c.l.b16 %v1321
        %v4380 = vunpack.c.h.b16 %v1321
        %v4381 = vunpack.c.l.b16 %v1322
        %v4382 = vunpack.c.h.b16 %v1322
        %v4383 = vunpack.c.l.b16 %v1323
        %v4384 = vunpack.c.h.b16 %v1323
        %v4385 = vunpack.c.l.b16 %v1324
        %v4386 = vunpack.c.h.b16 %v1324
        %v4387 = vunpack.c.l.b16 %v1325
        %v4388 = vunpack.c.h.b16 %v1325
        %v4389 = vunpack.c.l.b16 %v1326
        %v4390 = vunpack.c.h.b16 %v1326
        %v4391 = vunpack.c.l.b16 %v1327
        %v4392 = vunpack.c.h.b16 %v1327
        %v4393 = vunpack.c.l.b16 %v1328
        %v4394 = vunpack.c.h.b16 %v1328
        %v4395 = vunpack.c.l.b16 %v1329
        %v4396 = vunpack.c.h.b16 %v1329
        %v4397 = vunpack.c.l.b16 %v1330
        %v4398 = vunpack.c.h.b16 %v1330
        %v4399 = vunpack.c.l.b16 %v1331
        %v4400 = vunpack.c.h.b16 %v1331
        %v4401 = vunpack.c.l.b16 %v1332
        %v4402 = vunpack.c.h.b16 %v1332
        %v4403 = vunpack.c.l.b16 %v1333
        %v4404 = vunpack.c.h.b16 %v1333
        %v4405 = vunpack.c.l.b16 %v1334
        %v4406 = vunpack.c.h.b16 %v1334
        %v4407 = vunpack.c.l.b16 %v1335
        %v4408 = vunpack.c.h.b16 %v1335
        %v4409 = vunpack.c.l.b16 %v1336
        %v4410 = vunpack.c.h.b16 %v1336
        %v4411 = vunpack.c.l.b16 %v1337
        %v4412 = vunpack.c.h.b16 %v1337
        %v4413 = vunpack.c.l.b16 %v1338
        %v4414 = vunpack.c.h.b16 %v1338
        %v4415 = vunpack.c.l.b16 %v1339
        %v4416 = vunpack.c.h.b16 %v1339
        %v4417 = vunpack.c.l.b16 %v1340
        %v4418 = vunpack.c.h.b16 %v1340
        %v4419 = vunpack.c.l.b16 %v1341
        %v4420 = vunpack.c.h.b16 %v1341
        %v4421 = vunpack.c.l.b16 %v1342
        %v4422 = vunpack.c.h.b16 %v1342
        %v4423 = vunpack.c.l.b16 %v1343
        %v4424 = vunpack.c.h.b16 %v1343
        %v4425 = vunpack.c.l.b16 %v1344
        %v4426 = vunpack.c.h.b16 %v1344
        %v4427 = vunpack.c.l.b16 %v1345
        %v4428 = vunpack.c.h.b16 %v1345
        %v4429 = vunpack.c.l.b16 %v1346
        %v4430 = vunpack.c.h.b16 %v1346
        %v4431 = vunpack.c.l.b16 %v1347
        %v4432 = vunpack.c.h.b16 %v1347
        %v4433 = vunpack.c.l.b16 %v1348
        %v4434 = vunpack.c.h.b16 %v1348
        %v4435 = vunpack.c.l.b16 %v1349
        %v4436 = vunpack.c.h.b16 %v1349
        %v4437 = vunpack.c.l.b16 %v1350
        %v4438 = vunpack.c.h.b16 %v1350
        %v4439 = vunpack.c.l.b16 %v1351
        %v4440 = vunpack.c.h.b16 %v1351
        %v4441 = vunpack.c.l.b16 %v1352
        %v4442 = vunpack.c.h.b16 %v1352
        %v4443 = vunpack.c.l.b16 %v1353
        %v4444 = vunpack.c.h.b16 %v1353
        %v4445 = vunpack.c.l.b16 %v1354
        %v4446 = vunpack.c.h.b16 %v1354
        %v4447 = vunpack.c.l.b16 %v1355
        %v4448 = vunpack.c.h.b16 %v1355
        %v4449 = vunpack.c.l.b16 %v1356
        %v4450 = vunpack.c.h.b16 %v1356
        %v4451 = vunpack.c.l.b16 %v1357
        %v4452 = vunpack.c.h.b16 %v1357
        %v4453 = vunpack.c.l.b16 %v1358
        %v4454 = vunpack.c.h.b16 %v1358
        %v4455 = vunpack.c.l.b16 %v1359
        %v4456 = vunpack.c.h.b16 %v1359
        %v4457 = vunpack.c.l.b16 %v1360
        %v4458 = vunpack.c.h.b16 %v1360
        %v4459 = vunpack.c.l.b16 %v1361
        %v4460 = vunpack.c.h.b16 %v1361
        %v4461 = vunpack.c.l.b16 %v1362
        %v4462 = vunpack.c.h.b16 %v1362
        %v4463 = vunpack.c.l.b16 %v1363
        %v4464 = vunpack.c.h.b16 %v1363
        %v4465 = vunpack.c.l.b16 %v1364
        %v4466 = vunpack.c.h.b16 %v1364
        %v4467 = vunpack.c.l.b16 %v1365
        %v4468 = vunpack.c.h.b16 %v1365
        %v4469 = vunpack.c.l.b16 %v1366
        %v4470 = vunpack.c.h.b16 %v1366
        %v4471 = vunpack.c.l.b16 %v1367
        %v4472 = vunpack.c.h.b16 %v1367
        %v4473 = vunpack.c.l.b16 %v1368
        %v4474 = vunpack.c.h.b16 %v1368
        %v4475 = vunpack.c.l.b16 %v1369
        %v4476 = vunpack.c.h.b16 %v1369
        %v4477 = vunpack.c.l.b16 %v1370
        %v4478 = vunpack.c.h.b16 %v1370
        %v4479 = vunpack.c.l.b16 %v1371
        %v4480 = vunpack.c.h.b16 %v1371
        %v4481 = vunpack.c.l.b16 %v1372
        %v4482 = vunpack.c.h.b16 %v1372
        %v4483 = vunpack.c.l.b16 %v1373
        %v4484 = vunpack.c.h.b16 %v1373
        %v4485 = vunpack.c.l.b16 %v1374
        %v4486 = vunpack.c.h.b16 %v1374
        %v4487 = vunpack.c.l.b16 %v1375
        %v4488 = vunpack.c.h.b16 %v1375
        %v4489 = vunpack.c.l.b16 %v1376
        %v4490 = vunpack.c.h.b16 %v1376
        %v4491 = vunpack.c.l.b16 %v1377
        %v4492 = vunpack.c.h.b16 %v1377
        %v4493 = vunpack.c.l.b16 %v1378
        %v4494 = vunpack.c.h.b16 %v1378
        %v4495 = vunpack.c.l.b16 %v1379
        %v4496 = vunpack.c.h.b16 %v1379
        %v4497 = vunpack.c.l.b16 %v1380
        %v4498 = vunpack.c.h.b16 %v1380
        %v4499 = vunpack.c.l.b16 %v1381
        %v4500 = vunpack.c.h.b16 %v1381
        %v4501 = vunpack.c.l.b16 %v1382
        %v4502 = vunpack.c.h.b16 %v1382
        %v4503 = vunpack.c.l.b16 %v1383
        %v4504 = vunpack.c.h.b16 %v1383
        %v4505 = vunpack.c.l.b16 %v1384
        %v4506 = vunpack.c.h.b16 %v1384
        %v4507 = vunpack.c.l.b16 %v1385
        %v4508 = vunpack.c.h.b16 %v1385
        %v4509 = vunpack.c.l.b16 %v1386
        %v4510 = vunpack.c.h.b16 %v1386
        %v4511 = vunpack.c.l.b16 %v1387
        %v4512 = vunpack.c.h.b16 %v1387
        %v4513 = vunpack.c.l.b16 %v1388
        %v4514 = vunpack.c.h.b16 %v1388
        %v4515 = vunpack.c.l.b16 %v1389
        %v4516 = vunpack.c.h.b16 %v1389
        %v4517 = vunpack.c.l.b16 %v1390
        %v4518 = vunpack.c.h.b16 %v1390
        %v4519 = vunpack.c.l.b16 %v1391
        %v4520 = vunpack.c.h.b16 %v1391
        %v4521 = vunpack.c.l.b16 %v1392
        %v4522 = vunpack.c.h.b16 %v1392
        %v4523 = vunpack.c.l.b16 %v1393
        %v4524 = vunpack.c.h.b16 %v1393
        %v4525 = vunpack.c.l.b16 %v1394
        %v4526 = vunpack.c.h.b16 %v1394
        %v4527 = vunpack.c.l.b16 %v1395
        %v4528 = vunpack.c.h.b16 %v1395
        %v4529 = vunpack.c.l.b16 %v1396
        %v4530 = vunpack.c.h.b16 %v1396
        %v4531 = vunpack.c.l.b16 %v1397
        %v4532 = vunpack.c.h.b16 %v1397
        %v4533 = vunpack.c.l.b16 %v1398
        %v4534 = vunpack.c.h.b16 %v1398
        %v4535 = vunpack.c.l.b16 %v1399
        %v4536 = vunpack.c.h.b16 %v1399
        %v4537 = vunpack.c.l.b16 %v1400
        %v4538 = vunpack.c.h.b16 %v1400
        %v4539 = vunpack.c.l.b16 %v1401
        %v4540 = vunpack.c.h.b16 %v1401
        %v4541 = vunpack.c.l.b16 %v1402
        %v4542 = vunpack.c.h.b16 %v1402
        %v4543 = vunpack.c.l.b16 %v1403
        %v4544 = vunpack.c.h.b16 %v1403
        %v4545 = vunpack.c.l.b16 %v1404
        %v4546 = vunpack.c.h.b16 %v1404
        %v4547 = vunpack.c.l.b16 %v1405
        %v4548 = vunpack.c.h.b16 %v1405
        %v4549 = vunpack.c.l.b16 %v1406
        %v4550 = vunpack.c.h.b16 %v1406
        %v4551 = vunpack.c.l.b16 %v1407
        %v4552 = vunpack.c.h.b16 %v1407
        %v4553 = vunpack.c.l.b16 %v1408
        %v4554 = vunpack.c.h.b16 %v1408
        %v4555 = vunpack.c.l.b16 %v1409
        %v4556 = vunpack.c.h.b16 %v1409
        %v4557 = vunpack.c.l.b16 %v1410
        %v4558 = vunpack.c.h.b16 %v1410
        %v4559 = vunpack.c.l.b16 %v1411
        %v4560 = vunpack.c.h.b16 %v1411
        %v4561 = vunpack.c.l.b16 %v1412
        %v4562 = vunpack.c.h.b16 %v1412
        %v4563 = vunpack.c.l.b16 %v1413
        %v4564 = vunpack.c.h.b16 %v1413
        %v4565 = vunpack.c.l.b16 %v1414
        %v4566 = vunpack.c.h.b16 %v1414
        %v4567 = vunpack.c.l.b16 %v1415
        %v4568 = vunpack.c.h.b16 %v1415
        %v4569 = vunpack.c.l.b16 %v1416
        %v4570 = vunpack.c.h.b16 %v1416
        %v4571 = vunpack.c.l.b16 %v1417
        %v4572 = vunpack.c.h.b16 %v1417
        %v4573 = vunpack.c.l.b16 %v1418
        %v4574 = vunpack.c.h.b16 %v1418
        %v4575 = vunpack.c.l.b16 %v1419
        %v4576 = vunpack.c.h.b16 %v1419
        %v4577 = vunpack.c.l.b16 %v1420
        %v4578 = vunpack.c.h.b16 %v1420
        %v4579 = vunpack.c.l.b16 %v1421
        %v4580 = vunpack.c.h.b16 %v1421
        %v4581 = vunpack.c.l.b16 %v1422
        %v4582 = vunpack.c.h.b16 %v1422
        %v4583 = vunpack.c.l.b16 %v1423
        %v4584 = vunpack.c.h.b16 %v1423
        %v4585 = vunpack.c.l.b16 %v1424
        %v4586 = vunpack.c.h.b16 %v1424
        %v4587 = vunpack.c.l.b16 %v1425
        %v4588 = vunpack.c.h.b16 %v1425
        %v4589 = vunpack.c.l.b16 %v1426
        %v4590 = vunpack.c.h.b16 %v1426
        %v4591 = vunpack.c.l.b16 %v1427
        %v4592 = vunpack.c.h.b16 %v1427
        %v4593 = vunpack.c.l.b16 %v1428
        %v4594 = vunpack.c.h.b16 %v1428
        %v4595 = vunpack.c.l.b16 %v1429
        %v4596 = vunpack.c.h.b16 %v1429
        %v4597 = vunpack.c.l.b16 %v1430
        %v4598 = vunpack.c.h.b16 %v1430
        %v4599 = vunpack.c.l.b16 %v1431
        %v4600 = vunpack.c.h.b16 %v1431
        %v4601 = vunpack.c.l.b16 %v1432
        %v4602 = vunpack.c.h.b16 %v1432
        %v4603 = vunpack.c.l.b16 %v1433
        %v4604 = vunpack.c.h.b16 %v1433
        %v4605 = vunpack.c.l.b16 %v1434
        %v4606 = vunpack.c.h.b16 %v1434
        %v4607 = vunpack.c.l.b16 %v1435
        %v4608 = vunpack.c.h.b16 %v1435
        %v4609 = vunpack.c.l.b16 %v1436
        %v4610 = vunpack.c.h.b16 %v1436
        %v4611 = vunpack.c.l.b16 %v1437
        %v4612 = vunpack.c.h.b16 %v1437
        %v4613 = vunpack.c.l.b16 %v1438
        %v4614 = vunpack.c.h.b16 %v1438
        %v4615 = vunpack.c.l.b16 %v1439
        %v4616 = vunpack.c.h.b16 %v1439
        %v4617 = vunpack.c.l.b16 %v1440
        %v4618 = vunpack.c.h.b16 %v1440
        %v4619 = vunpack.c.l.b16 %v1441
        %v4620 = vunpack.c.h.b16 %v1441
        %v4621 = vunpack.c.l.b16 %v1442
        %v4622 = vunpack.c.h.b16 %v1442
        %v4623 = vunpack.c.l.b16 %v1443
        %v4624 = vunpack.c.h.b16 %v1443
        %v4625 = vunpack.c.l.b16 %v1444
        %v4626 = vunpack.c.h.b16 %v1444
        %v4627 = vunpack.c.l.b16 %v1445
        %v4628 = vunpack.c.h.b16 %v1445
        %v4629 = vunpack.c.l.b16 %v1446
        %v4630 = vunpack.c.h.b16 %v1446
        %v4631 = vpack.c.b16 %v2587, %v2583
        %v4632 = vpack.c.b16 %v2588, %v2584
        %v4633 = vpack.c.b16 %v2589, %v2585
        %v4634 = vpack.c.b16 %v2590, %v2586
        %v4635 = vpack.c.b16 %v2595, %v2591
        %v4636 = vpack.c.b16 %v2596, %v2592
        %v4637 = vpack.c.b16 %v2597, %v2593
        %v4638 = vpack.c.b16 %v2598, %v2594
        %v4639 = vpack.c.b16 %v2603, %v2599
        %v4640 = vpack.c.b16 %v2604, %v2600
        %v4641 = vpack.c.b16 %v2605, %v2601
        %v4642 = vpack.c.b16 %v2606, %v2602
        %v4643 = vpack.c.b16 %v2611, %v2607
        %v4644 = vpack.c.b16 %v2612, %v2608
        %v4645 = vpack.c.b16 %v2613, %v2609
        %v4646 = vpack.c.b16 %v2614, %v2610
        %v4647 = vpack.c.b16 %v2619, %v2615
        %v4648 = vpack.c.b16 %v2620, %v2616
        %v4649 = vpack.c.b16 %v2621, %v2617
        %v4650 = vpack.c.b16 %v2622, %v2618
        %v4651 = vpack.c.b16 %v2627, %v2623
        %v4652 = vpack.c.b16 %v2628, %v2624
        %v4653 = vpack.c.b16 %v2629, %v2625
        %v4654 = vpack.c.b16 %v2630, %v2626
        %v4655 = vpack.c.b16 %v2635, %v2631
        %v4656 = vpack.c.b16 %v2636, %v2632
        %v4657 = vpack.c.b16 %v2637, %v2633
        %v4658 = vpack.c.b16 %v2638, %v2634
        %v4659 = vpack.c.b16 %v2643, %v2639
        %v4660 = vpack.c.b16 %v2644, %v2640
        %v4661 = vpack.c.b16 %v2645, %v2641
        %v4662 = vpack.c.b16 %v2646, %v2642
        %v4663 = vpack.c.b16 %v2651, %v2647
        %v4664 = vpack.c.b16 %v2652, %v2648
        %v4665 = vpack.c.b16 %v2653, %v2649
        %v4666 = vpack.c.b16 %v2654, %v2650
        %v4667 = vpack.c.b16 %v2659, %v2655
        %v4668 = vpack.c.b16 %v2660, %v2656
        %v4669 = vpack.c.b16 %v2661, %v2657
        %v4670 = vpack.c.b16 %v2662, %v2658
        %v4671 = vpack.c.b16 %v2667, %v2663
        %v4672 = vpack.c.b16 %v2668, %v2664
        %v4673 = vpack.c.b16 %v2669, %v2665
        %v4674 = vpack.c.b16 %v2670, %v2666
        %v4675 = vpack.c.b16 %v2675, %v2671
        %v4676 = vpack.c.b16 %v2676, %v2672
        %v4677 = vpack.c.b16 %v2677, %v2673
        %v4678 = vpack.c.b16 %v2678, %v2674
        %v4679 = vpack.c.b16 %v2683, %v2679
        %v4680 = vpack.c.b16 %v2684, %v2680
        %v4681 = vpack.c.b16 %v2685, %v2681
        %v4682 = vpack.c.b16 %v2686, %v2682
        %v4683 = vpack.c.b16 %v2691, %v2687
        %v4684 = vpack.c.b16 %v2692, %v2688
        %v4685 = vpack.c.b16 %v2693, %v2689
        %v4686 = vpack.c.b16 %v2694, %v2690
        %v4687 = vpack.c.b16 %v2699, %v2695
        %v4688 = vpack.c.b16 %v2700, %v2696
        %v4689 = vpack.c.b16 %v2701, %v2697
        %v4690 = vpack.c.b16 %v2702, %v2698
        %v4691 = vpack.c.b16 %v2707, %v2703
        %v4692 = vpack.c.b16 %v2708, %v2704
        %v4693 = vpack.c.b16 %v2709, %v2705
        %v4694 = vpack.c.b16 %v2710, %v2706
        %v4695 = vpack.c.b16 %v2715, %v2711
        %v4696 = vpack.c.b16 %v2716, %v2712
        %v4697 = vpack.c.b16 %v2717, %v2713
        %v4698 = vpack.c.b16 %v2718, %v2714
        %v4699 = vpack.c.b16 %v2723, %v2719
        %v4700 = vpack.c.b16 %v2724, %v2720
        %v4701 = vpack.c.b16 %v2725, %v2721
        %v4702 = vpack.c.b16 %v2726, %v2722
        %v4703 = vpack.c.b16 %v2731, %v2727
        %v4704 = vpack.c.b16 %v2732, %v2728
        %v4705 = vpack.c.b16 %v2733, %v2729
        %v4706 = vpack.c.b16 %v2734, %v2730
        %v4707 = vpack.c.b16 %v2739, %v2735
        %v4708 = vpack.c.b16 %v2740, %v2736
        %v4709 = vpack.c.b16 %v2741, %v2737
        %v4710 = vpack.c.b16 %v2742, %v2738
        %v4711 = vpack.c.b16 %v2747, %v2743
        %v4712 = vpack.c.b16 %v2748, %v2744
        %v4713 = vpack.c.b16 %v2749, %v2745
        %v4714 = vpack.c.b16 %v2750, %v2746
        %v4715 = vpack.c.b16 %v2755, %v2751
        %v4716 = vpack.c.b16 %v2756, %v2752
        %v4717 = vpack.c.b16 %v2757, %v2753
        %v4718 = vpack.c.b16 %v2758, %v2754
        %v4719 = vpack.c.b16 %v2763, %v2759
        %v4720 = vpack.c.b16 %v2764, %v2760
        %v4721 = vpack.c.b16 %v2765, %v2761
        %v4722 = vpack.c.b16 %v2766, %v2762
        %v4723 = vpack.c.b16 %v2771, %v2767
        %v4724 = vpack.c.b16 %v2772, %v2768
        %v4725 = vpack.c.b16 %v2773, %v2769
        %v4726 = vpack.c.b16 %v2774, %v2770
        %v4727 = vpack.c.b16 %v2779, %v2775
        %v4728 = vpack.c.b16 %v2780, %v2776
        %v4729 = vpack.c.b16 %v2781, %v2777
        %v4730 = vpack.c.b16 %v2782, %v2778
        %v4731 = vpack.c.b16 %v2787, %v2783
        %v4732 = vpack.c.b16 %v2788, %v2784
        %v4733 = vpack.c.b16 %v2789, %v2785
        %v4734 = vpack.c.b16 %v2790, %v2786
        %v4735 = vpack.c.b16 %v2795, %v2791
        %v4736 = vpack.c.b16 %v2796, %v2792
        %v4737 = vpack.c.b16 %v2797, %v2793
        %v4738 = vpack.c.b16 %v2798, %v2794
        %v4739 = vpack.c.b16 %v2803, %v2799
        %v4740 = vpack.c.b16 %v2804, %v2800
        %v4741 = vpack.c.b16 %v2805, %v2801
        %v4742 = vpack.c.b16 %v2806, %v2802
        %v4743 = vpack.c.b16 %v2811, %v2807
        %v4744 = vpack.c.b16 %v2812, %v2808
        %v4745 = vpack.c.b16 %v2813, %v2809
        %v4746 = vpack.c.b16 %v2814, %v2810
        %v4747 = vpack.c.b16 %v2819, %v2815
        %v4748 = vpack.c.b16 %v2820, %v2816
        %v4749 = vpack.c.b16 %v2821, %v2817
        %v4750 = vpack.c.b16 %v2822, %v2818
        %v4751 = vpack.c.b16 %v2827, %v2823
        %v4752 = vpack.c.b16 %v2828, %v2824
        %v4753 = vpack.c.b16 %v2829, %v2825
        %v4754 = vpack.c.b16 %v2830, %v2826
        %v4755 = vpack.c.b16 %v2835, %v2831
        %v4756 = vpack.c.b16 %v2836, %v2832
        %v4757 = vpack.c.b16 %v2837, %v2833
        %v4758 = vpack.c.b16 %v2838, %v2834
        %v4759 = vpack.c.b16 %v2843, %v2839
        %v4760 = vpack.c.b16 %v2844, %v2840
        %v4761 = vpack.c.b16 %v2845, %v2841
        %v4762 = vpack.c.b16 %v2846, %v2842
        %v4763 = vpack.c.b16 %v2851, %v2847
        %v4764 = vpack.c.b16 %v2852, %v2848
        %v4765 = vpack.c.b16 %v2853, %v2849
        %v4766 = vpack.c.b16 %v2854, %v2850
        %v4767 = vpack.c.b16 %v2859, %v2855
        %v4768 = vpack.c.b16 %v2860, %v2856
        %v4769 = vpack.c.b16 %v2861, %v2857
        %v4770 = vpack.c.b16 %v2862, %v2858
        %v4771 = vpack.c.b16 %v2867, %v2863
        %v4772 = vpack.c.b16 %v2868, %v2864
        %v4773 = vpack.c.b16 %v2869, %v2865
        %v4774 = vpack.c.b16 %v2870, %v2866
        %v4775 = vpack.c.b16 %v2875, %v2871
        %v4776 = vpack.c.b16 %v2876, %v2872
        %v4777 = vpack.c.b16 %v2877, %v2873
        %v4778 = vpack.c.b16 %v2878, %v2874
        %v4779 = vpack.c.b16 %v2883, %v2879
        %v4780 = vpack.c.b16 %v2884, %v2880
        %v4781 = vpack.c.b16 %v2885, %v2881
        %v4782 = vpack.c.b16 %v2886, %v2882
        %v4783 = vpack.c.b16 %v2891, %v2887
        %v4784 = vpack.c.b16 %v2892, %v2888
        %v4785 = vpack.c.b16 %v2893, %v2889
        %v4786 = vpack.c.b16 %v2894, %v2890
        %v4787 = vpack.c.b16 %v2899, %v2895
        %v4788 = vpack.c.b16 %v2900, %v2896
        %v4789 = vpack.c.b16 %v2901, %v2897
        %v4790 = vpack.c.b16 %v2902, %v2898
        %v4791 = vpack.c.b16 %v2907, %v2903
        %v4792 = vpack.c.b16 %v2908, %v2904
        %v4793 = vpack.c.b16 %v2909, %v2905
        %v4794 = vpack.c.b16 %v2910, %v2906
        %v4795 = vpack.c.b16 %v2915, %v2911
        %v4796 = vpack.c.b16 %v2916, %v2912
        %v4797 = vpack.c.b16 %v2917, %v2913
        %v4798 = vpack.c.b16 %v2918, %v2914
        %v4799 = vpack.c.b16 %v2923, %v2919
        %v4800 = vpack.c.b16 %v2924, %v2920
        %v4801 = vpack.c.b16 %v2925, %v2921
        %v4802 = vpack.c.b16 %v2926, %v2922
        %v4803 = vpack.c.b16 %v2931, %v2927
        %v4804 = vpack.c.b16 %v2932, %v2928
        %v4805 = vpack.c.b16 %v2933, %v2929
        %v4806 = vpack.c.b16 %v2934, %v2930
        %v4807 = vpack.c.b16 %v2939, %v2935
        %v4808 = vpack.c.b16 %v2940, %v2936
        %v4809 = vpack.c.b16 %v2941, %v2937
        %v4810 = vpack.c.b16 %v2942, %v2938
        %v4811 = vpack.c.b16 %v2947, %v2943
        %v4812 = vpack.c.b16 %v2948, %v2944
        %v4813 = vpack.c.b16 %v2949, %v2945
        %v4814 = vpack.c.b16 %v2950, %v2946
        %v4815 = vpack.c.b16 %v2955, %v2951
        %v4816 = vpack.c.b16 %v2956, %v2952
        %v4817 = vpack.c.b16 %v2957, %v2953
        %v4818 = vpack.c.b16 %v2958, %v2954
        %v4819 = vpack.c.b16 %v2963, %v2959
        %v4820 = vpack.c.b16 %v2964, %v2960
        %v4821 = vpack.c.b16 %v2965, %v2961
        %v4822 = vpack.c.b16 %v2966, %v2962
        %v4823 = vpack.c.b16 %v2971, %v2967
        %v4824 = vpack.c.b16 %v2972, %v2968
        %v4825 = vpack.c.b16 %v2973, %v2969
        %v4826 = vpack.c.b16 %v2974, %v2970
        %v4827 = vpack.c.b16 %v2979, %v2975
        %v4828 = vpack.c.b16 %v2980, %v2976
        %v4829 = vpack.c.b16 %v2981, %v2977
        %v4830 = vpack.c.b16 %v2982, %v2978
        %v4831 = vpack.c.b16 %v2987, %v2983
        %v4832 = vpack.c.b16 %v2988, %v2984
        %v4833 = vpack.c.b16 %v2989, %v2985
        %v4834 = vpack.c.b16 %v2990, %v2986
        %v4835 = vpack.c.b16 %v2995, %v2991
        %v4836 = vpack.c.b16 %v2996, %v2992
        %v4837 = vpack.c.b16 %v2997, %v2993
        %v4838 = vpack.c.b16 %v2998, %v2994
        %v4839 = vpack.c.b16 %v3003, %v2999
        %v4840 = vpack.c.b16 %v3004, %v3000
        %v4841 = vpack.c.b16 %v3005, %v3001
        %v4842 = vpack.c.b16 %v3006, %v3002
        %v4843 = vpack.c.b16 %v3011, %v3007
        %v4844 = vpack.c.b16 %v3012, %v3008
        %v4845 = vpack.c.b16 %v3013, %v3009
        %v4846 = vpack.c.b16 %v3014, %v3010
        %v4847 = vpack.c.b16 %v3019, %v3015
        %v4848 = vpack.c.b16 %v3020, %v3016
        %v4849 = vpack.c.b16 %v3021, %v3017
        %v4850 = vpack.c.b16 %v3022, %v3018
        %v4851 = vpack.c.b16 %v3027, %v3023
        %v4852 = vpack.c.b16 %v3028, %v3024
        %v4853 = vpack.c.b16 %v3029, %v3025
        %v4854 = vpack.c.b16 %v3030, %v3026
        %v4855 = vpack.c.b16 %v3035, %v3031
        %v4856 = vpack.c.b16 %v3036, %v3032
        %v4857 = vpack.c.b16 %v3037, %v3033
        %v4858 = vpack.c.b16 %v3038, %v3034
        %v4859 = vpack.c.b16 %v3043, %v3039
        %v4860 = vpack.c.b16 %v3044, %v3040
        %v4861 = vpack.c.b16 %v3045, %v3041
        %v4862 = vpack.c.b16 %v3046, %v3042
        %v4863 = vpack.c.b16 %v3051, %v3047
        %v4864 = vpack.c.b16 %v3052, %v3048
        %v4865 = vpack.c.b16 %v3053, %v3049
        %v4866 = vpack.c.b16 %v3054, %v3050
        %v4867 = vpack.c.b16 %v3059, %v3055
        %v4868 = vpack.c.b16 %v3060, %v3056
        %v4869 = vpack.c.b16 %v3061, %v3057
        %v4870 = vpack.c.b16 %v3062, %v3058
        %v4871 = vpack.c.b16 %v3067, %v3063
        %v4872 = vpack.c.b16 %v3068, %v3064
        %v4873 = vpack.c.b16 %v3069, %v3065
        %v4874 = vpack.c.b16 %v3070, %v3066
        %v4875 = vpack.c.b16 %v3075, %v3071
        %v4876 = vpack.c.b16 %v3076, %v3072
        %v4877 = vpack.c.b16 %v3077, %v3073
        %v4878 = vpack.c.b16 %v3078, %v3074
        %v4879 = vpack.c.b16 %v3083, %v3079
        %v4880 = vpack.c.b16 %v3084, %v3080
        %v4881 = vpack.c.b16 %v3085, %v3081
        %v4882 = vpack.c.b16 %v3086, %v3082
        %v4883 = vpack.c.b16 %v3091, %v3087
        %v4884 = vpack.c.b16 %v3092, %v3088
        %v4885 = vpack.c.b16 %v3093, %v3089
        %v4886 = vpack.c.b16 %v3094, %v3090
        %v4887 = vpack.c.b16 %v3099, %v3095
        %v4888 = vpack.c.b16 %v3100, %v3096
        %v4889 = vpack.c.b16 %v3101, %v3097
        %v4890 = vpack.c.b16 %v3102, %v3098
        %v4891 = vpack.c.b16 %v3107, %v3103
        %v4892 = vpack.c.b16 %v3108, %v3104
        %v4893 = vpack.c.b16 %v3109, %v3105
        %v4894 = vpack.c.b16 %v3110, %v3106
        %v4895 = vpack.c.b16 %v3115, %v3111
        %v4896 = vpack.c.b16 %v3116, %v3112
        %v4897 = vpack.c.b16 %v3117, %v3113
        %v4898 = vpack.c.b16 %v3118, %v3114
        %v4899 = vpack.c.b16 %v3123, %v3119
        %v4900 = vpack.c.b16 %v3124, %v3120
        %v4901 = vpack.c.b16 %v3125, %v3121
        %v4902 = vpack.c.b16 %v3126, %v3122
        %v4903 = vpack.c.b16 %v3131, %v3127
        %v4904 = vpack.c.b16 %v3132, %v3128
        %v4905 = vpack.c.b16 %v3133, %v3129
        %v4906 = vpack.c.b16 %v3134, %v3130
        %v4907 = vpack.c.b16 %v3139, %v3135
        %v4908 = vpack.c.b16 %v3140, %v3136
        %v4909 = vpack.c.b16 %v3141, %v3137
        %v4910 = vpack.c.b16 %v3142, %v3138
        %v4911 = vpack.c.b16 %v3147, %v3143
        %v4912 = vpack.c.b16 %v3148, %v3144
        %v4913 = vpack.c.b16 %v3149, %v3145
        %v4914 = vpack.c.b16 %v3150, %v3146
        %v4915 = vpack.c.b16 %v3155, %v3151
        %v4916 = vpack.c.b16 %v3156, %v3152
        %v4917 = vpack.c.b16 %v3157, %v3153
        %v4918 = vpack.c.b16 %v3158, %v3154
        %v4919 = vpack.c.b16 %v3163, %v3159
        %v4920 = vpack.c.b16 %v3164, %v3160
        %v4921 = vpack.c.b16 %v3165, %v3161
        %v4922 = vpack.c.b16 %v3166, %v3162
        %v4923 = vpack.c.b16 %v3171, %v3167
        %v4924 = vpack.c.b16 %v3172, %v3168
        %v4925 = vpack.c.b16 %v3173, %v3169
        %v4926 = vpack.c.b16 %v3174, %v3170
        %v4927 = vpack.c.b16 %v3179, %v3175
        %v4928 = vpack.c.b16 %v3180, %v3176
        %v4929 = vpack.c.b16 %v3181, %v3177
        %v4930 = vpack.c.b16 %v3182, %v3178
        %v4931 = vpack.c.b16 %v3187, %v3183
        %v4932 = vpack.c.b16 %v3188, %v3184
        %v4933 = vpack.c.b16 %v3189, %v3185
        %v4934 = vpack.c.b16 %v3190, %v3186
        %v4935 = vpack.c.b16 %v3195, %v3191
        %v4936 = vpack.c.b16 %v3196, %v3192
        %v4937 = vpack.c.b16 %v3197, %v3193
        %v4938 = vpack.c.b16 %v3198, %v3194
        %v4939 = vpack.c.b16 %v3203, %v3199
        %v4940 = vpack.c.b16 %v3204, %v3200
        %v4941 = vpack.c.b16 %v3205, %v3201
        %v4942 = vpack.c.b16 %v3206, %v3202
        %v4943 = vpack.c.b16 %v3211, %v3207
        %v4944 = vpack.c.b16 %v3212, %v3208
        %v4945 = vpack.c.b16 %v3213, %v3209
        %v4946 = vpack.c.b16 %v3214, %v3210
        %v4947 = vpack.c.b16 %v3219, %v3215
        %v4948 = vpack.c.b16 %v3220, %v3216
        %v4949 = vpack.c.b16 %v3221, %v3217
        %v4950 = vpack.c.b16 %v3222, %v3218
        %v4951 = vpack.c.b16 %v3227, %v3223
        %v4952 = vpack.c.b16 %v3228, %v3224
        %v4953 = vpack.c.b16 %v3229, %v3225
        %v4954 = vpack.c.b16 %v3230, %v3226
        %v4955 = vpack.c.b16 %v3235, %v3231
        %v4956 = vpack.c.b16 %v3236, %v3232
        %v4957 = vpack.c.b16 %v3237, %v3233
        %v4958 = vpack.c.b16 %v3238, %v3234
        %v4959 = vpack.c.b16 %v3243, %v3239
        %v4960 = vpack.c.b16 %v3244, %v3240
        %v4961 = vpack.c.b16 %v3245, %v3241
        %v4962 = vpack.c.b16 %v3246, %v3242
        %v4963 = vpack.c.b16 %v3251, %v3247
        %v4964 = vpack.c.b16 %v3252, %v3248
        %v4965 = vpack.c.b16 %v3253, %v3249
        %v4966 = vpack.c.b16 %v3254, %v3250
        %v4967 = vpack.c.b16 %v3259, %v3255
        %v4968 = vpack.c.b16 %v3260, %v3256
        %v4969 = vpack.c.b16 %v3261, %v3257
        %v4970 = vpack.c.b16 %v3262, %v3258
        %v4971 = vpack.c.b16 %v3267, %v3263
        %v4972 = vpack.c.b16 %v3268, %v3264
        %v4973 = vpack.c.b16 %v3269, %v3265
        %v4974 = vpack.c.b16 %v3270, %v3266
        %v4975 = vpack.c.b16 %v3275, %v3271
        %v4976 = vpack.c.b16 %v3276, %v3272
        %v4977 = vpack.c.b16 %v3277, %v3273
        %v4978 = vpack.c.b16 %v3278, %v3274
        %v4979 = vpack.c.b16 %v3283, %v3279
        %v4980 = vpack.c.b16 %v3284, %v3280
        %v4981 = vpack.c.b16 %v3285, %v3281
        %v4982 = vpack.c.b16 %v3286, %v3282
        %v4983 = vpack.c.b16 %v3291, %v3287
        %v4984 = vpack.c.b16 %v3292, %v3288
        %v4985 = vpack.c.b16 %v3293, %v3289
        %v4986 = vpack.c.b16 %v3294, %v3290
        %v4987 = vpack.c.b16 %v3299, %v3295
        %v4988 = vpack.c.b16 %v3300, %v3296
        %v4989 = vpack.c.b16 %v3301, %v3297
        %v4990 = vpack.c.b16 %v3302, %v3298
        %v4991 = vpack.c.b16 %v3307, %v3303
        %v4992 = vpack.c.b16 %v3308, %v3304
        %v4993 = vpack.c.b16 %v3309, %v3305
        %v4994 = vpack.c.b16 %v3310, %v3306
        %v4995 = vpack.c.b16 %v3315, %v3311
        %v4996 = vpack.c.b16 %v3316, %v3312
        %v4997 = vpack.c.b16 %v3317, %v3313
        %v4998 = vpack.c.b16 %v3318, %v3314
        %v4999 = vpack.c.b16 %v3323, %v3319
        %v5000 = vpack.c.b16 %v3324, %v3320
        %v5001 = vpack.c.b16 %v3325, %v3321
        %v5002 = vpack.c.b16 %v3326, %v3322
        %v5003 = vpack.c.b16 %v3331, %v3327
        %v5004 = vpack.c.b16 %v3332, %v3328
        %v5005 = vpack.c.b16 %v3333, %v3329
        %v5006 = vpack.c.b16 %v3334, %v3330
        %v5007 = vpack.c.b16 %v3339, %v3335
        %v5008 = vpack.c.b16 %v3340, %v3336
        %v5009 = vpack.c.b16 %v3341, %v3337
        %v5010 = vpack.c.b16 %v3342, %v3338
        %v5011 = vpack.c.b16 %v3347, %v3343
        %v5012 = vpack.c.b16 %v3348, %v3344
        %v5013 = vpack.c.b16 %v3349, %v3345
        %v5014 = vpack.c.b16 %v3350, %v3346
        %v5015 = vpack.c.b16 %v3355, %v3351
        %v5016 = vpack.c.b16 %v3356, %v3352
        %v5017 = vpack.c.b16 %v3357, %v3353
        %v5018 = vpack.c.b16 %v3358, %v3354
        %v5019 = vpack.c.b16 %v3363, %v3359
        %v5020 = vpack.c.b16 %v3364, %v3360
        %v5021 = vpack.c.b16 %v3365, %v3361
        %v5022 = vpack.c.b16 %v3366, %v3362
        %v5023 = vpack.c.b16 %v3371, %v3367
        %v5024 = vpack.c.b16 %v3372, %v3368
        %v5025 = vpack.c.b16 %v3373, %v3369
        %v5026 = vpack.c.b16 %v3374, %v3370
        %v5027 = vpack.c.b16 %v3379, %v3375
        %v5028 = vpack.c.b16 %v3380, %v3376
        %v5029 = vpack.c.b16 %v3381, %v3377
        %v5030 = vpack.c.b16 %v3382, %v3378
        %v5031 = vpack.c.b16 %v3387, %v3383
        %v5032 = vpack.c.b16 %v3388, %v3384
        %v5033 = vpack.c.b16 %v3389, %v3385
        %v5034 = vpack.c.b16 %v3390, %v3386
        %v5035 = vpack.c.b16 %v3395, %v3391
        %v5036 = vpack.c.b16 %v3396, %v3392
        %v5037 = vpack.c.b16 %v3397, %v3393
        %v5038 = vpack.c.b16 %v3398, %v3394
        %v5039 = vpack.c.b16 %v3403, %v3399
        %v5040 = vpack.c.b16 %v3404, %v3400
        %v5041 = vpack.c.b16 %v3405, %v3401
        %v5042 = vpack.c.b16 %v3406, %v3402
        %v5043 = vpack.c.b16 %v3411, %v3407
        %v5044 = vpack.c.b16 %v3412, %v3408
        %v5045 = vpack.c.b16 %v3413, %v3409
        %v5046 = vpack.c.b16 %v3414, %v3410
        %v5047 = vpack.c.b16 %v3419, %v3415
        %v5048 = vpack.c.b16 %v3420, %v3416
        %v5049 = vpack.c.b16 %v3421, %v3417
        %v5050 = vpack.c.b16 %v3422, %v3418
        %v5051 = vpack.c.b16 %v3427, %v3423
        %v5052 = vpack.c.b16 %v3428, %v3424
        %v5053 = vpack.c.b16 %v3429, %v3425
        %v5054 = vpack.c.b16 %v3430, %v3426
        %v5055 = vpack.c.b16 %v3435, %v3431
        %v5056 = vpack.c.b16 %v3436, %v3432
        %v5057 = vpack.c.b16 %v3437, %v3433
        %v5058 = vpack.c.b16 %v3438, %v3434
        %v5059 = vpack.c.b16 %v3443, %v3439
        %v5060 = vpack.c.b16 %v3444, %v3440
        %v5061 = vpack.c.b16 %v3445, %v3441
        %v5062 = vpack.c.b16 %v3446, %v3442
        %v5063 = vpack.c.b16 %v3451, %v3447
        %v5064 = vpack.c.b16 %v3452, %v3448
        %v5065 = vpack.c.b16 %v3453, %v3449
        %v5066 = vpack.c.b16 %v3454, %v3450
        %v5067 = vpack.c.b16 %v3459, %v3455
        %v5068 = vpack.c.b16 %v3460, %v3456
        %v5069 = vpack.c.b16 %v3461, %v3457
        %v5070 = vpack.c.b16 %v3462, %v3458
        %v5071 = vpack.c.b16 %v3467, %v3463
        %v5072 = vpack.c.b16 %v3468, %v3464
        %v5073 = vpack.c.b16 %v3469, %v3465
        %v5074 = vpack.c.b16 %v3470, %v3466
        %v5075 = vpack.c.b16 %v3475, %v3471
        %v5076 = vpack.c.b16 %v3476, %v3472
        %v5077 = vpack.c.b16 %v3477, %v3473
        %v5078 = vpack.c.b16 %v3478, %v3474
        %v5079 = vpack.c.b16 %v3483, %v3479
        %v5080 = vpack.c.b16 %v3484, %v3480
        %v5081 = vpack.c.b16 %v3485, %v3481
        %v5082 = vpack.c.b16 %v3486, %v3482
        %v5083 = vpack.c.b16 %v3491, %v3487
        %v5084 = vpack.c.b16 %v3492, %v3488
        %v5085 = vpack.c.b16 %v3493, %v3489
        %v5086 = vpack.c.b16 %v3494, %v3490
        %v5087 = vpack.c.b16 %v3499, %v3495
        %v5088 = vpack.c.b16 %v3500, %v3496
        %v5089 = vpack.c.b16 %v3501, %v3497
        %v5090 = vpack.c.b16 %v3502, %v3498
        %v5091 = vpack.c.b16 %v3507, %v3503
        %v5092 = vpack.c.b16 %v3508, %v3504
        %v5093 = vpack.c.b16 %v3509, %v3505
        %v5094 = vpack.c.b16 %v3510, %v3506
        %v5095 = vpack.c.b16 %v3515, %v3511
        %v5096 = vpack.c.b16 %v3516, %v3512
        %v5097 = vpack.c.b16 %v3517, %v3513
        %v5098 = vpack.c.b16 %v3518, %v3514
        %v5099 = vpack.c.b16 %v3523, %v3519
        %v5100 = vpack.c.b16 %v3524, %v3520
        %v5101 = vpack.c.b16 %v3525, %v3521
        %v5102 = vpack.c.b16 %v3526, %v3522
        %v5103 = vpack.c.b16 %v3531, %v3527
        %v5104 = vpack.c.b16 %v3532, %v3528
        %v5105 = vpack.c.b16 %v3533, %v3529
        %v5106 = vpack.c.b16 %v3534, %v3530
        %v5107 = vpack.c.b16 %v3539, %v3535
        %v5108 = vpack.c.b16 %v3540, %v3536
        %v5109 = vpack.c.b16 %v3541, %v3537
        %v5110 = vpack.c.b16 %v3542, %v3538
        %v5111 = vpack.c.b16 %v3547, %v3543
        %v5112 = vpack.c.b16 %v3548, %v3544
        %v5113 = vpack.c.b16 %v3549, %v3545
        %v5114 = vpack.c.b16 %v3550, %v3546
        %v5115 = vpack.c.b16 %v3555, %v3551
        %v5116 = vpack.c.b16 %v3556, %v3552
        %v5117 = vpack.c.b16 %v3557, %v3553
        %v5118 = vpack.c.b16 %v3558, %v3554
        %v5119 = vpack.c.b16 %v3563, %v3559
        %v5120 = vpack.c.b16 %v3564, %v3560
        %v5121 = vpack.c.b16 %v3565, %v3561
        %v5122 = vpack.c.b16 %v3566, %v3562
        %v5123 = vpack.c.b16 %v3571, %v3567
        %v5124 = vpack.c.b16 %v3572, %v3568
        %v5125 = vpack.c.b16 %v3573, %v3569
        %v5126 = vpack.c.b16 %v3574, %v3570
        %v5127 = vpack.c.b16 %v3579, %v3575
        %v5128 = vpack.c.b16 %v3580, %v3576
        %v5129 = vpack.c.b16 %v3581, %v3577
        %v5130 = vpack.c.b16 %v3582, %v3578
        %v5131 = vpack.c.b16 %v3587, %v3583
        %v5132 = vpack.c.b16 %v3588, %v3584
        %v5133 = vpack.c.b16 %v3589, %v3585
        %v5134 = vpack.c.b16 %v3590, %v3586
        %v5135 = vpack.c.b16 %v3595, %v3591
        %v5136 = vpack.c.b16 %v3596, %v3592
        %v5137 = vpack.c.b16 %v3597, %v3593
        %v5138 = vpack.c.b16 %v3598, %v3594
        %v5139 = vpack.c.b16 %v3603, %v3599
        %v5140 = vpack.c.b16 %v3604, %v3600
        %v5141 = vpack.c.b16 %v3605, %v3601
        %v5142 = vpack.c.b16 %v3606, %v3602
        %v5143 = vpack.c.b16 %v3611, %v3607
        %v5144 = vpack.c.b16 %v3612, %v3608
        %v5145 = vpack.c.b16 %v3613, %v3609
        %v5146 = vpack.c.b16 %v3614, %v3610
        %v5147 = vpack.c.b16 %v3619, %v3615
        %v5148 = vpack.c.b16 %v3620, %v3616
        %v5149 = vpack.c.b16 %v3621, %v3617
        %v5150 = vpack.c.b16 %v3622, %v3618
        %v5151 = vpack.c.b16 %v3627, %v3623
        %v5152 = vpack.c.b16 %v3628, %v3624
        %v5153 = vpack.c.b16 %v3629, %v3625
        %v5154 = vpack.c.b16 %v3630, %v3626
        %v5155 = vpack.c.b16 %v3635, %v3631
        %v5156 = vpack.c.b16 %v3636, %v3632
        %v5157 = vpack.c.b16 %v3637, %v3633
        %v5158 = vpack.c.b16 %v3638, %v3634
        %v5159 = vpack.c.b16 %v3643, %v3639
        %v5160 = vpack.c.b16 %v3644, %v3640
        %v5161 = vpack.c.b16 %v3645, %v3641
        %v5162 = vpack.c.b16 %v3646, %v3642
        %v5163 = vpack.c.b16 %v3651, %v3647
        %v5164 = vpack.c.b16 %v3652, %v3648
        %v5165 = vpack.c.b16 %v3653, %v3649
        %v5166 = vpack.c.b16 %v3654, %v3650
        %v5167 = vpack.c.b16 %v3659, %v3655
        %v5168 = vpack.c.b16 %v3660, %v3656
        %v5169 = vpack.c.b16 %v3661, %v3657
        %v5170 = vpack.c.b16 %v3662, %v3658
        %v5171 = vpack.c.b16 %v3667, %v3663
        %v5172 = vpack.c.b16 %v3668, %v3664
        %v5173 = vpack.c.b16 %v3669, %v3665
        %v5174 = vpack.c.b16 %v3670, %v3666
        %v5175 = vpack.c.b16 %v3675, %v3671
        %v5176 = vpack.c.b16 %v3676, %v3672
        %v5177 = vpack.c.b16 %v3677, %v3673
        %v5178 = vpack.c.b16 %v3678, %v3674
        %v5179 = vpack.c.b16 %v3683, %v3679
        %v5180 = vpack.c.b16 %v3684, %v3680
        %v5181 = vpack.c.b16 %v3685, %v3681
        %v5182 = vpack.c.b16 %v3686, %v3682
        %v5183 = vpack.c.b16 %v3691, %v3687
        %v5184 = vpack.c.b16 %v3692, %v3688
        %v5185 = vpack.c.b16 %v3693, %v3689
        %v5186 = vpack.c.b16 %v3694, %v3690
        %v5187 = vpack.c.b16 %v3699, %v3695
        %v5188 = vpack.c.b16 %v3700, %v3696
        %v5189 = vpack.c.b16 %v3701, %v3697
        %v5190 = vpack.c.b16 %v3702, %v3698
        %v5191 = vpack.c.b16 %v3707, %v3703
        %v5192 = vpack.c.b16 %v3708, %v3704
        %v5193 = vpack.c.b16 %v3709, %v3705
        %v5194 = vpack.c.b16 %v3710, %v3706
        %v5195 = vpack.c.b16 %v3715, %v3711
        %v5196 = vpack.c.b16 %v3716, %v3712
        %v5197 = vpack.c.b16 %v3717, %v3713
        %v5198 = vpack.c.b16 %v3718, %v3714
        %v5199 = vpack.c.b16 %v3723, %v3719
        %v5200 = vpack.c.b16 %v3724, %v3720
        %v5201 = vpack.c.b16 %v3725, %v3721
        %v5202 = vpack.c.b16 %v3726, %v3722
        %v5203 = vpack.c.b16 %v3731, %v3727
        %v5204 = vpack.c.b16 %v3732, %v3728
        %v5205 = vpack.c.b16 %v3733, %v3729
        %v5206 = vpack.c.b16 %v3734, %v3730
        %v5207 = vpack.c.b16 %v3739, %v3735
        %v5208 = vpack.c.b16 %v3740, %v3736
        %v5209 = vpack.c.b16 %v3741, %v3737
        %v5210 = vpack.c.b16 %v3742, %v3738
        %v5211 = vpack.c.b16 %v3747, %v3743
        %v5212 = vpack.c.b16 %v3748, %v3744
        %v5213 = vpack.c.b16 %v3749, %v3745
        %v5214 = vpack.c.b16 %v3750, %v3746
        %v5215 = vpack.c.b16 %v3755, %v3751
        %v5216 = vpack.c.b16 %v3756, %v3752
        %v5217 = vpack.c.b16 %v3757, %v3753
        %v5218 = vpack.c.b16 %v3758, %v3754
        %v5219 = vpack.c.b16 %v3763, %v3759
        %v5220 = vpack.c.b16 %v3764, %v3760
        %v5221 = vpack.c.b16 %v3765, %v3761
        %v5222 = vpack.c.b16 %v3766, %v3762
        %v5223 = vpack.c.b16 %v3771, %v3767
        %v5224 = vpack.c.b16 %v3772, %v3768
        %v5225 = vpack.c.b16 %v3773, %v3769
        %v5226 = vpack.c.b16 %v3774, %v3770
        %v5227 = vpack.c.b16 %v3779, %v3775
        %v5228 = vpack.c.b16 %v3780, %v3776
        %v5229 = vpack.c.b16 %v3781, %v3777
        %v5230 = vpack.c.b16 %v3782, %v3778
        %v5231 = vpack.c.b16 %v3787, %v3783
        %v5232 = vpack.c.b16 %v3788, %v3784
        %v5233 = vpack.c.b16 %v3789, %v3785
        %v5234 = vpack.c.b16 %v3790, %v3786
        %v5235 = vpack.c.b16 %v3795, %v3791
        %v5236 = vpack.c.b16 %v3796, %v3792
        %v5237 = vpack.c.b16 %v3797, %v3793
        %v5238 = vpack.c.b16 %v3798, %v3794
        %v5239 = vpack.c.b16 %v3803, %v3799
        %v5240 = vpack.c.b16 %v3804, %v3800
        %v5241 = vpack.c.b16 %v3805, %v3801
        %v5242 = vpack.c.b16 %v3806, %v3802
        %v5243 = vpack.c.b16 %v3811, %v3807
        %v5244 = vpack.c.b16 %v3812, %v3808
        %v5245 = vpack.c.b16 %v3813, %v3809
        %v5246 = vpack.c.b16 %v3814, %v3810
        %v5247 = vpack.c.b16 %v3819, %v3815
        %v5248 = vpack.c.b16 %v3820, %v3816
        %v5249 = vpack.c.b16 %v3821, %v3817
        %v5250 = vpack.c.b16 %v3822, %v3818
        %v5251 = vpack.c.b16 %v3827, %v3823
        %v5252 = vpack.c.b16 %v3828, %v3824
        %v5253 = vpack.c.b16 %v3829, %v3825
        %v5254 = vpack.c.b16 %v3830, %v3826
        %v5255 = vpack.c.b16 %v3835, %v3831
        %v5256 = vpack.c.b16 %v3836, %v3832
        %v5257 = vpack.c.b16 %v3837, %v3833
        %v5258 = vpack.c.b16 %v3838, %v3834
        %v5259 = vpack.c.b16 %v3843, %v3839
        %v5260 = vpack.c.b16 %v3844, %v3840
        %v5261 = vpack.c.b16 %v3845, %v3841
        %v5262 = vpack.c.b16 %v3846, %v3842
        %v5263 = vpack.c.b16 %v3851, %v3847
        %v5264 = vpack.c.b16 %v3852, %v3848
        %v5265 = vpack.c.b16 %v3853, %v3849
        %v5266 = vpack.c.b16 %v3854, %v3850
        %v5267 = vpack.c.b16 %v3859, %v3855
        %v5268 = vpack.c.b16 %v3860, %v3856
        %v5269 = vpack.c.b16 %v3861, %v3857
        %v5270 = vpack.c.b16 %v3862, %v3858
        %v5271 = vpack.c.b16 %v3867, %v3863
        %v5272 = vpack.c.b16 %v3868, %v3864
        %v5273 = vpack.c.b16 %v3869, %v3865
        %v5274 = vpack.c.b16 %v3870, %v3866
        %v5275 = vpack.c.b16 %v3875, %v3871
        %v5276 = vpack.c.b16 %v3876, %v3872
        %v5277 = vpack.c.b16 %v3877, %v3873
        %v5278 = vpack.c.b16 %v3878, %v3874
        %v5279 = vpack.c.b16 %v3883, %v3879
        %v5280 = vpack.c.b16 %v3884, %v3880
        %v5281 = vpack.c.b16 %v3885, %v3881
        %v5282 = vpack.c.b16 %v3886, %v3882
        %v5283 = vpack.c.b16 %v3891, %v3887
        %v5284 = vpack.c.b16 %v3892, %v3888
        %v5285 = vpack.c.b16 %v3893, %v3889
        %v5286 = vpack.c.b16 %v3894, %v3890
        %v5287 = vpack.c.b16 %v3899, %v3895
        %v5288 = vpack.c.b16 %v3900, %v3896
        %v5289 = vpack.c.b16 %v3901, %v3897
        %v5290 = vpack.c.b16 %v3902, %v3898
        %v5291 = vpack.c.b16 %v3907, %v3903
        %v5292 = vpack.c.b16 %v3908, %v3904
        %v5293 = vpack.c.b16 %v3909, %v3905
        %v5294 = vpack.c.b16 %v3910, %v3906
        %v5295 = vpack.c.b16 %v3915, %v3911
        %v5296 = vpack.c.b16 %v3916, %v3912
        %v5297 = vpack.c.b16 %v3917, %v3913
        %v5298 = vpack.c.b16 %v3918, %v3914
        %v5299 = vpack.c.b16 %v3923, %v3919
        %v5300 = vpack.c.b16 %v3924, %v3920
        %v5301 = vpack.c.b16 %v3925, %v3921
        %v5302 = vpack.c.b16 %v3926, %v3922
        %v5303 = vpack.c.b16 %v3931, %v3927
        %v5304 = vpack.c.b16 %v3932, %v3928
        %v5305 = vpack.c.b16 %v3933, %v3929
        %v5306 = vpack.c.b16 %v3934, %v3930
        %v5307 = vpack.c.b16 %v3939, %v3935
        %v5308 = vpack.c.b16 %v3940, %v3936
        %v5309 = vpack.c.b16 %v3941, %v3937
        %v5310 = vpack.c.b16 %v3942, %v3938
        %v5311 = vpack.c.b16 %v3947, %v3943
        %v5312 = vpack.c.b16 %v3948, %v3944
        %v5313 = vpack.c.b16 %v3949, %v3945
        %v5314 = vpack.c.b16 %v3950, %v3946
        %v5315 = vpack.c.b16 %v3955, %v3951
        %v5316 = vpack.c.b16 %v3956, %v3952
        %v5317 = vpack.c.b16 %v3957, %v3953
        %v5318 = vpack.c.b16 %v3958, %v3954
        %v5319 = vpack.c.b16 %v3963, %v3959
        %v5320 = vpack.c.b16 %v3964, %v3960
        %v5321 = vpack.c.b16 %v3965, %v3961
        %v5322 = vpack.c.b16 %v3966, %v3962
        %v5323 = vpack.c.b16 %v3971, %v3967
        %v5324 = vpack.c.b16 %v3972, %v3968
        %v5325 = vpack.c.b16 %v3973, %v3969
        %v5326 = vpack.c.b16 %v3974, %v3970
        %v5327 = vpack.c.b16 %v3979, %v3975
        %v5328 = vpack.c.b16 %v3980, %v3976
        %v5329 = vpack.c.b16 %v3981, %v3977
        %v5330 = vpack.c.b16 %v3982, %v3978
        %v5331 = vpack.c.b16 %v3987, %v3983
        %v5332 = vpack.c.b16 %v3988, %v3984
        %v5333 = vpack.c.b16 %v3989, %v3985
        %v5334 = vpack.c.b16 %v3990, %v3986
        %v5335 = vpack.c.b16 %v3995, %v3991
        %v5336 = vpack.c.b16 %v3996, %v3992
        %v5337 = vpack.c.b16 %v3997, %v3993
        %v5338 = vpack.c.b16 %v3998, %v3994
        %v5339 = vpack.c.b16 %v4003, %v3999
        %v5340 = vpack.c.b16 %v4004, %v4000
        %v5341 = vpack.c.b16 %v4005, %v4001
        %v5342 = vpack.c.b16 %v4006, %v4002
        %v5343 = vpack.c.b16 %v4011, %v4007
        %v5344 = vpack.c.b16 %v4012, %v4008
        %v5345 = vpack.c.b16 %v4013, %v4009
        %v5346 = vpack.c.b16 %v4014, %v4010
        %v5347 = vpack.c.b16 %v4019, %v4015
        %v5348 = vpack.c.b16 %v4020, %v4016
        %v5349 = vpack.c.b16 %v4021, %v4017
        %v5350 = vpack.c.b16 %v4022, %v4018
        %v5351 = vpack.c.b16 %v4027, %v4023
        %v5352 = vpack.c.b16 %v4028, %v4024
        %v5353 = vpack.c.b16 %v4029, %v4025
        %v5354 = vpack.c.b16 %v4030, %v4026
        %v5355 = vpack.c.b16 %v4035, %v4031
        %v5356 = vpack.c.b16 %v4036, %v4032
        %v5357 = vpack.c.b16 %v4037, %v4033
        %v5358 = vpack.c.b16 %v4038, %v4034
        %v5359 = vpack.c.b16 %v4043, %v4039
        %v5360 = vpack.c.b16 %v4044, %v4040
        %v5361 = vpack.c.b16 %v4045, %v4041
        %v5362 = vpack.c.b16 %v4046, %v4042
        %v5363 = vpack.c.b16 %v4051, %v4047
        %v5364 = vpack.c.b16 %v4052, %v4048
        %v5365 = vpack.c.b16 %v4053, %v4049
        %v5366 = vpack.c.b16 %v4054, %v4050
        %v5367 = vpack.c.b16 %v4059, %v4055
        %v5368 = vpack.c.b16 %v4060, %v4056
        %v5369 = vpack.c.b16 %v4061, %v4057
        %v5370 = vpack.c.b16 %v4062, %v4058
        %v5371 = vpack.c.b16 %v4067, %v4063
        %v5372 = vpack.c.b16 %v4068, %v4064
        %v5373 = vpack.c.b16 %v4069, %v4065
        %v5374 = vpack.c.b16 %v4070, %v4066
        %v5375 = vpack.c.b16 %v4075, %v4071
        %v5376 = vpack.c.b16 %v4076, %v4072
        %v5377 = vpack.c.b16 %v4077, %v4073
        %v5378 = vpack.c.b16 %v4078, %v4074
        %v5379 = vpack.c.b16 %v4083, %v4079
        %v5380 = vpack.c.b16 %v4084, %v4080
        %v5381 = vpack.c.b16 %v4085, %v4081
        %v5382 = vpack.c.b16 %v4086, %v4082
        %v5383 = vpack.c.b16 %v4091, %v4087
        %v5384 = vpack.c.b16 %v4092, %v4088
        %v5385 = vpack.c.b16 %v4093, %v4089
        %v5386 = vpack.c.b16 %v4094, %v4090
        %v5387 = vpack.c.b16 %v4099, %v4095
        %v5388 = vpack.c.b16 %v4100, %v4096
        %v5389 = vpack.c.b16 %v4101, %v4097
        %v5390 = vpack.c.b16 %v4102, %v4098
        %v5391 = vpack.c.b16 %v4107, %v4103
        %v5392 = vpack.c.b16 %v4108, %v4104
        %v5393 = vpack.c.b16 %v4109, %v4105
        %v5394 = vpack.c.b16 %v4110, %v4106
        %v5395 = vpack.c.b16 %v4115, %v4111
        %v5396 = vpack.c.b16 %v4116, %v4112
        %v5397 = vpack.c.b16 %v4117, %v4113
        %v5398 = vpack.c.b16 %v4118, %v4114
        %v5399 = vpack.c.b16 %v4123, %v4119
        %v5400 = vpack.c.b16 %v4124, %v4120
        %v5401 = vpack.c.b16 %v4125, %v4121
        %v5402 = vpack.c.b16 %v4126, %v4122
        %v5403 = vpack.c.b16 %v4131, %v4127
        %v5404 = vpack.c.b16 %v4132, %v4128
        %v5405 = vpack.c.b16 %v4133, %v4129
        %v5406 = vpack.c.b16 %v4134, %v4130
        %v5407 = vpack.c.b16 %v4139, %v4135
        %v5408 = vpack.c.b16 %v4140, %v4136
        %v5409 = vpack.c.b16 %v4141, %v4137
        %v5410 = vpack.c.b16 %v4142, %v4138
        %v5411 = vpack.c.b16 %v4147, %v4143
        %v5412 = vpack.c.b16 %v4148, %v4144
        %v5413 = vpack.c.b16 %v4149, %v4145
        %v5414 = vpack.c.b16 %v4150, %v4146
        %v5415 = vpack.c.b16 %v4155, %v4151
        %v5416 = vpack.c.b16 %v4156, %v4152
        %v5417 = vpack.c.b16 %v4157, %v4153
        %v5418 = vpack.c.b16 %v4158, %v4154
        %v5419 = vpack.c.b16 %v4163, %v4159
        %v5420 = vpack.c.b16 %v4164, %v4160
        %v5421 = vpack.c.b16 %v4165, %v4161
        %v5422 = vpack.c.b16 %v4166, %v4162
        %v5423 = vpack.c.b16 %v4171, %v4167
        %v5424 = vpack.c.b16 %v4172, %v4168
        %v5425 = vpack.c.b16 %v4173, %v4169
        %v5426 = vpack.c.b16 %v4174, %v4170
        %v5427 = vpack.c.b16 %v4179, %v4175
        %v5428 = vpack.c.b16 %v4180, %v4176
        %v5429 = vpack.c.b16 %v4181, %v4177
        %v5430 = vpack.c.b16 %v4182, %v4178
        %v5431 = vpack.c.b16 %v4187, %v4183
        %v5432 = vpack.c.b16 %v4188, %v4184
        %v5433 = vpack.c.b16 %v4189, %v4185
        %v5434 = vpack.c.b16 %v4190, %v4186
        %v5435 = vpack.c.b16 %v4195, %v4191
        %v5436 = vpack.c.b16 %v4196, %v4192
        %v5437 = vpack.c.b16 %v4197, %v4193
        %v5438 = vpack.c.b16 %v4198, %v4194
        %v5439 = vpack.c.b16 %v4203, %v4199
        %v5440 = vpack.c.b16 %v4204, %v4200
        %v5441 = vpack.c.b16 %v4205, %v4201
        %v5442 = vpack.c.b16 %v4206, %v4202
        %v5443 = vpack.c.b16 %v4211, %v4207
        %v5444 = vpack.c.b16 %v4212, %v4208
        %v5445 = vpack.c.b16 %v4213, %v4209
        %v5446 = vpack.c.b16 %v4214, %v4210
        %v5447 = vpack.c.b16 %v4219, %v4215
        %v5448 = vpack.c.b16 %v4220, %v4216
        %v5449 = vpack.c.b16 %v4221, %v4217
        %v5450 = vpack.c.b16 %v4222, %v4218
        %v5451 = vpack.c.b16 %v4227, %v4223
        %v5452 = vpack.c.b16 %v4228, %v4224
        %v5453 = vpack.c.b16 %v4229, %v4225
        %v5454 = vpack.c.b16 %v4230, %v4226
        %v5455 = vpack.c.b16 %v4235, %v4231
        %v5456 = vpack.c.b16 %v4236, %v4232
        %v5457 = vpack.c.b16 %v4237, %v4233
        %v5458 = vpack.c.b16 %v4238, %v4234
        %v5459 = vpack.c.b16 %v4243, %v4239
        %v5460 = vpack.c.b16 %v4244, %v4240
        %v5461 = vpack.c.b16 %v4245, %v4241
        %v5462 = vpack.c.b16 %v4246, %v4242
        %v5463 = vpack.c.b16 %v4251, %v4247
        %v5464 = vpack.c.b16 %v4252, %v4248
        %v5465 = vpack.c.b16 %v4253, %v4249
        %v5466 = vpack.c.b16 %v4254, %v4250
        %v5467 = vpack.c.b16 %v4259, %v4255
        %v5468 = vpack.c.b16 %v4260, %v4256
        %v5469 = vpack.c.b16 %v4261, %v4257
        %v5470 = vpack.c.b16 %v4262, %v4258
        %v5471 = vpack.c.b16 %v4267, %v4263
        %v5472 = vpack.c.b16 %v4268, %v4264
        %v5473 = vpack.c.b16 %v4269, %v4265
        %v5474 = vpack.c.b16 %v4270, %v4266
        %v5475 = vpack.c.b16 %v4275, %v4271
        %v5476 = vpack.c.b16 %v4276, %v4272
        %v5477 = vpack.c.b16 %v4277, %v4273
        %v5478 = vpack.c.b16 %v4278, %v4274
        %v5479 = vpack.c.b16 %v4283, %v4279
        %v5480 = vpack.c.b16 %v4284, %v4280
        %v5481 = vpack.c.b16 %v4285, %v4281
        %v5482 = vpack.c.b16 %v4286, %v4282
        %v5483 = vpack.c.b16 %v4291, %v4287
        %v5484 = vpack.c.b16 %v4292, %v4288
        %v5485 = vpack.c.b16 %v4293, %v4289
        %v5486 = vpack.c.b16 %v4294, %v4290
        %v5487 = vpack.c.b16 %v4299, %v4295
        %v5488 = vpack.c.b16 %v4300, %v4296
        %v5489 = vpack.c.b16 %v4301, %v4297
        %v5490 = vpack.c.b16 %v4302, %v4298
        %v5491 = vpack.c.b16 %v4307, %v4303
        %v5492 = vpack.c.b16 %v4308, %v4304
        %v5493 = vpack.c.b16 %v4309, %v4305
        %v5494 = vpack.c.b16 %v4310, %v4306
        %v5495 = vpack.c.b16 %v4315, %v4311
        %v5496 = vpack.c.b16 %v4316, %v4312
        %v5497 = vpack.c.b16 %v4317, %v4313
        %v5498 = vpack.c.b16 %v4318, %v4314
        %v5499 = vpack.c.b16 %v4323, %v4319
        %v5500 = vpack.c.b16 %v4324, %v4320
        %v5501 = vpack.c.b16 %v4325, %v4321
        %v5502 = vpack.c.b16 %v4326, %v4322
        %v5503 = vpack.c.b16 %v4331, %v4327
        %v5504 = vpack.c.b16 %v4332, %v4328
        %v5505 = vpack.c.b16 %v4333, %v4329
        %v5506 = vpack.c.b16 %v4334, %v4330
        %v5507 = vpack.c.b16 %v4339, %v4335
        %v5508 = vpack.c.b16 %v4340, %v4336
        %v5509 = vpack.c.b16 %v4341, %v4337
        %v5510 = vpack.c.b16 %v4342, %v4338
        %v5511 = vpack.c.b16 %v4347, %v4343
        %v5512 = vpack.c.b16 %v4348, %v4344
        %v5513 = vpack.c.b16 %v4349, %v4345
        %v5514 = vpack.c.b16 %v4350, %v4346
        %v5515 = vpack.c.b16 %v4355, %v4351
        %v5516 = vpack.c.b16 %v4356, %v4352
        %v5517 = vpack.c.b16 %v4357, %v4353
        %v5518 = vpack.c.b16 %v4358, %v4354
        %v5519 = vpack.c.b16 %v4363, %v4359
        %v5520 = vpack.c.b16 %v4364, %v4360
        %v5521 = vpack.c.b16 %v4365, %v4361
        %v5522 = vpack.c.b16 %v4366, %v4362
        %v5523 = vpack.c.b16 %v4371, %v4367
        %v5524 = vpack.c.b16 %v4372, %v4368
        %v5525 = vpack.c.b16 %v4373, %v4369
        %v5526 = vpack.c.b16 %v4374, %v4370
        %v5527 = vpack.c.b16 %v4379, %v4375
        %v5528 = vpack.c.b16 %v4380, %v4376
        %v5529 = vpack.c.b16 %v4381, %v4377
        %v5530 = vpack.c.b16 %v4382, %v4378
        %v5531 = vpack.c.b16 %v4387, %v4383
        %v5532 = vpack.c.b16 %v4388, %v4384
        %v5533 = vpack.c.b16 %v4389, %v4385
        %v5534 = vpack.c.b16 %v4390, %v4386
        %v5535 = vpack.c.b16 %v4395, %v4391
        %v5536 = vpack.c.b16 %v4396, %v4392
        %v5537 = vpack.c.b16 %v4397, %v4393
        %v5538 = vpack.c.b16 %v4398, %v4394
        %v5539 = vpack.c.b16 %v4403, %v4399
        %v5540 = vpack.c.b16 %v4404, %v4400
        %v5541 = vpack.c.b16 %v4405, %v4401
        %v5542 = vpack.c.b16 %v4406, %v4402
        %v5543 = vpack.c.b16 %v4411, %v4407
        %v5544 = vpack.c.b16 %v4412, %v4408
        %v5545 = vpack.c.b16 %v4413, %v4409
        %v5546 = vpack.c.b16 %v4414, %v4410
        %v5547 = vpack.c.b16 %v4419, %v4415
        %v5548 = vpack.c.b16 %v4420, %v4416
        %v5549 = vpack.c.b16 %v4421, %v4417
        %v5550 = vpack.c.b16 %v4422, %v4418
        %v5551 = vpack.c.b16 %v4427, %v4423
        %v5552 = vpack.c.b16 %v4428, %v4424
        %v5553 = vpack.c.b16 %v4429, %v4425
        %v5554 = vpack.c.b16 %v4430, %v4426
        %v5555 = vpack.c.b16 %v4435, %v4431
        %v5556 = vpack.c.b16 %v4436, %v4432
        %v5557 = vpack.c.b16 %v4437, %v4433
        %v5558 = vpack.c.b16 %v4438, %v4434
        %v5559 = vpack.c.b16 %v4443, %v4439
        %v5560 = vpack.c.b16 %v4444, %v4440
        %v5561 = vpack.c.b16 %v4445, %v4441
        %v5562 = vpack.c.b16 %v4446, %v4442
        %v5563 = vpack.c.b16 %v4451, %v4447
        %v5564 = vpack.c.b16 %v4452, %v4448
        %v5565 = vpack.c.b16 %v4453, %v4449
        %v5566 = vpack.c.b16 %v4454, %v4450
        %v5567 = vpack.c.b16 %v4459, %v4455
        %v5568 = vpack.c.b16 %v4460, %v4456
        %v5569 = vpack.c.b16 %v4461, %v4457
        %v5570 = vpack.c.b16 %v4462, %v4458
        %v5571 = vpack.c.b16 %v4467, %v4463
        %v5572 = vpack.c.b16 %v4468, %v4464
        %v5573 = vpack.c.b16 %v4469, %v4465
        %v5574 = vpack.c.b16 %v4470, %v4466
        %v5575 = vpack.c.b16 %v4475, %v4471
        %v5576 = vpack.c.b16 %v4476, %v4472
        %v5577 = vpack.c.b16 %v4477, %v4473
        %v5578 = vpack.c.b16 %v4478, %v4474
        %v5579 = vpack.c.b16 %v4483, %v4479
        %v5580 = vpack.c.b16 %v4484, %v4480
        %v5581 = vpack.c.b16 %v4485, %v4481
        %v5582 = vpack.c.b16 %v4486, %v4482
        %v5583 = vpack.c.b16 %v4491, %v4487
        %v5584 = vpack.c.b16 %v4492, %v4488
        %v5585 = vpack.c.b16 %v4493, %v4489
        %v5586 = vpack.c.b16 %v4494, %v4490
        %v5587 = vpack.c.b16 %v4499, %v4495
        %v5588 = vpack.c.b16 %v4500, %v4496
        %v5589 = vpack.c.b16 %v4501, %v4497
        %v5590 = vpack.c.b16 %v4502, %v4498
        %v5591 = vpack.c.b16 %v4507, %v4503
        %v5592 = vpack.c.b16 %v4508, %v4504
        %v5593 = vpack.c.b16 %v4509, %v4505
        %v5594 = vpack.c.b16 %v4510, %v4506
        %v5595 = vpack.c.b16 %v4515, %v4511
        %v5596 = vpack.c.b16 %v4516, %v4512
        %v5597 = vpack.c.b16 %v4517, %v4513
        %v5598 = vpack.c.b16 %v4518, %v4514
        %v5599 = vpack.c.b16 %v4523, %v4519
        %v5600 = vpack.c.b16 %v4524, %v4520
        %v5601 = vpack.c.b16 %v4525, %v4521
        %v5602 = vpack.c.b16 %v4526, %v4522
        %v5603 = vpack.c.b16 %v4531, %v4527
        %v5604 = vpack.c.b16 %v4532, %v4528
        %v5605 = vpack.c.b16 %v4533, %v4529
        %v5606 = vpack.c.b16 %v4534, %v4530
        %v5607 = vpack.c.b16 %v4539, %v4535
        %v5608 = vpack.c.b16 %v4540, %v4536
        %v5609 = vpack.c.b16 %v4541, %v4537
        %v5610 = vpack.c.b16 %v4542, %v4538
        %v5611 = vpack.c.b16 %v4547, %v4543
        %v5612 = vpack.c.b16 %v4548, %v4544
        %v5613 = vpack.c.b16 %v4549, %v4545
        %v5614 = vpack.c.b16 %v4550, %v4546
        %v5615 = vpack.c.b16 %v4555, %v4551
        %v5616 = vpack.c.b16 %v4556, %v4552
        %v5617 = vpack.c.b16 %v4557, %v4553
        %v5618 = vpack.c.b16 %v4558, %v4554
        %v5619 = vpack.c.b16 %v4563, %v4559
        %v5620 = vpack.c.b16 %v4564, %v4560
        %v5621 = vpack.c.b16 %v4565, %v4561
        %v5622 = vpack.c.b16 %v4566, %v4562
        %v5623 = vpack.c.b16 %v4571, %v4567
        %v5624 = vpack.c.b16 %v4572, %v4568
        %v5625 = vpack.c.b16 %v4573, %v4569
        %v5626 = vpack.c.b16 %v4574, %v4570
        %v5627 = vpack.c.b16 %v4579, %v4575
        %v5628 = vpack.c.b16 %v4580, %v4576
        %v5629 = vpack.c.b16 %v4581, %v4577
        %v5630 = vpack.c.b16 %v4582, %v4578
        %v5631 = vpack.c.b16 %v4587, %v4583
        %v5632 = vpack.c.b16 %v4588, %v4584
        %v5633 = vpack.c.b16 %v4589, %v4585
        %v5634 = vpack.c.b16 %v4590, %v4586
        %v5635 = vpack.c.b16 %v4595, %v4591
        %v5636 = vpack.c.b16 %v4596, %v4592
        %v5637 = vpack.c.b16 %v4597, %v4593
        %v5638 = vpack.c.b16 %v4598, %v4594
        %v5639 = vpack.c.b16 %v4603, %v4599
        %v5640 = vpack.c.b16 %v4604, %v4600
        %v5641 = vpack.c.b16 %v4605, %v4601
        %v5642 = vpack.c.b16 %v4606, %v4602
        %v5643 = vpack.c.b16 %v4611, %v4607
        %v5644 = vpack.c.b16 %v4612, %v4608
        %v5645 = vpack.c.b16 %v4613, %v4609
        %v5646 = vpack.c.b16 %v4614, %v4610
        %v5647 = vpack.c.b16 %v4619, %v4615
        %v5648 = vpack.c.b16 %v4620, %v4616
        %v5649 = vpack.c.b16 %v4621, %v4617
        %v5650 = vpack.c.b16 %v4622, %v4618
        %v5651 = vpack.c.b16 %v4627, %v4623
        %v5652 = vpack.c.b16 %v4628, %v4624
        %v5653 = vpack.c.b16 %v4629, %v4625
        %v5654 = vpack.c.b16 %v4630, %v4626
        %6679 = vmatprep.subr.bf16.mxu0 %v4632
        %6680 = vmatpush1.bf16.msra.mxu0 %v4631
        %6681 = vmatprep.subr.bf16.mxu0 %v4636
        %6682 = vmatpush1.bf16.msra.mxu0 %v4635
        %6683 = vmatprep.subr.bf16.mxu0 %v4640
        %6684 = vmatpush1.bf16.msra.mxu0 %v4639
        %6685 = vmatprep.subr.bf16.mxu0 %v4644
        %6686 = vmatpush1.bf16.msra.mxu0 %v4643
        %6687 = vmatprep.subr.bf16.mxu0 %v4648
        %6688 = vmatpush1.bf16.msra.mxu0 %v4647
        %6689 = vmatprep.subr.bf16.mxu0 %v4652
        %6690 = vmatpush1.bf16.msra.mxu0 %v4651
        %6691 = vmatprep.subr.bf16.mxu0 %v4656
        %6692 = vmatpush1.bf16.msra.mxu0 %v4655
        %6693 = vmatprep.subr.bf16.mxu0 %v4660
        %6694 = vmatpush1.bf16.msra.mxu0 %v4659
        %6695 = vmatprep.subr.bf16.mxu0 %v4664
        %6696 = vmatpush1.bf16.msra.mxu0 %v4663
        %6697 = vmatprep.subr.bf16.mxu0 %v4668
        %6698 = vmatpush1.bf16.msra.mxu0 %v4667
        %6699 = vmatprep.subr.bf16.mxu0 %v4672
        %6700 = vmatpush1.bf16.msra.mxu0 %v4671
        %6701 = vmatprep.subr.bf16.mxu0 %v4676
        %6702 = vmatpush1.bf16.msra.mxu0 %v4675
        %6703 = vmatprep.subr.bf16.mxu0 %v4680
        %6704 = vmatpush1.bf16.msra.mxu0 %v4679
        %6705 = vmatprep.subr.bf16.mxu0 %v4684
        %6706 = vmatpush1.bf16.msra.mxu0 %v4683
        %6707 = vmatprep.subr.bf16.mxu0 %v4688
        %6708 = vmatpush1.bf16.msra.mxu0 %v4687
        %6709 = vmatprep.subr.bf16.mxu0 %v4692
        %6710 = vmatpush1.bf16.msra.mxu0 %v4691
        %6711 = vmatprep.mubr.bf16.mxu0 %v1496
        %6712 = vmatmul.mubr.bf16.gmra.mrb[0].mxu0 %v1495
        %v6713 = vpop.f32.mrb[0].mxu0
        %v6714 = vadd.f32 0.0, %v6713
        %v6715 = vpop.f32.mrb[0].mxu0
        %v6716 = vadd.f32 0.0, %v6715
        %v6717 = vpop.f32.mrb[0].mxu0
        %v6718 = vpop.f32.mrb[0].mxu0
        %6719 = vdwg.mxu0
        %6720 = vmatprep.subr.bf16.mxu0 %v4696
        %6721 = vmatpush1.bf16.msra.mxu0 %v4695
        %6722 = vmatprep.subr.bf16.mxu0 %v4700
        %6723 = vmatpush1.bf16.msra.mxu0 %v4699
        %6724 = vmatprep.subr.bf16.mxu0 %v4704
        %6725 = vmatpush1.bf16.msra.mxu0 %v4703
        %6726 = vmatprep.subr.bf16.mxu0 %v4708
        %6727 = vmatpush1.bf16.msra.mxu0 %v4707
        %6728 = vmatprep.subr.bf16.mxu0 %v4712
        %6729 = vmatpush1.bf16.msra.mxu0 %v4711
        %6730 = vmatprep.subr.bf16.mxu0 %v4716
        %6731 = vmatpush1.bf16.msra.mxu0 %v4715
        %6732 = vmatprep.subr.bf16.mxu0 %v4720
        %6733 = vmatpush1.bf16.msra.mxu0 %v4719
        %6734 = vmatprep.subr.bf16.mxu0 %v4724
        %6735 = vmatpush1.bf16.msra.mxu0 %v4723
        %6736 = vmatprep.subr.bf16.mxu0 %v4728
        %6737 = vmatpush1.bf16.msra.mxu0 %v4727
        %6738 = vmatprep.subr.bf16.mxu0 %v4732
        %6739 = vmatpush1.bf16.msra.mxu0 %v4731
        %6740 = vmatprep.subr.bf16.mxu0 %v4736
        %6741 = vmatpush1.bf16.msra.mxu0 %v4735
        %6742 = vmatprep.subr.bf16.mxu0 %v4740
        %6743 = vmatpush1.bf16.msra.mxu0 %v4739
        %6744 = vmatprep.subr.bf16.mxu0 %v4744
        %6745 = vmatpush1.bf16.msra.mxu0 %v4743
        %6746 = vmatprep.subr.bf16.mxu0 %v4748
        %6747 = vmatpush1.bf16.msra.mxu0 %v4747
        %6748 = vmatprep.subr.bf16.mxu0 %v4752
        %6749 = vmatpush1.bf16.msra.mxu0 %v4751
        %6750 = vmatprep.subr.bf16.mxu0 %v4756
        %6751 = vmatpush1.bf16.msra.mxu0 %v4755
        %6752 = vmatprep.mubr.bf16.mxu0 %v1498
        %6753 = vmatmul.mubr.bf16.gmra.mrb[0].mxu0 %v1497
        %v6754 = vpop.f32.mrb[0].mxu0
        %v6755 = vadd.f32 %v6714, %v6754
        %v6756 = vpop.f32.mrb[0].mxu0
        %v6757 = vadd.f32 %v6716, %v6756
        %v6758 = vpop.f32.mrb[0].mxu0
        %v6759 = vpop.f32.mrb[0].mxu0
        %6760 = vdwg.mxu0
        %6761 = vmatprep.subr.bf16.mxu0 %v4760
        %6762 = vmatpush1.bf16.msra.mxu0 %v4759
        %6763 = vmatprep.subr.bf16.mxu0 %v4764
        %6764 = vmatpush1.bf16.msra.mxu0 %v4763
        %6765 = vmatprep.subr.bf16.mxu0 %v4768
        %6766 = vmatpush1.bf16.msra.mxu0 %v4767
        %6767 = vmatprep.subr.bf16.mxu0 %v4772
        %6768 = vmatpush1.bf16.msra.mxu0 %v4771
        %6769 = vmatprep.subr.bf16.mxu0 %v4776
        %6770 = vmatpush1.bf16.msra.mxu0 %v4775
        %6771 = vmatprep.subr.bf16.mxu0 %v4780
        %6772 = vmatpush1.bf16.msra.mxu0 %v4779
        %6773 = vmatprep.subr.bf16.mxu0 %v4784
        %6774 = vmatpush1.bf16.msra.mxu0 %v4783
        %6775 = vmatprep.subr.bf16.mxu0 %v4788
        %6776 = vmatpush1.bf16.msra.mxu0 %v4787
        %6777 = vmatprep.subr.bf16.mxu0 %v4792
        %6778 = vmatpush1.bf16.msra.mxu0 %v4791
        %6779 = vmatprep.subr.bf16.mxu0 %v4796
        %6780 = vmatpush1.bf16.msra.mxu0 %v4795
        %6781 = vmatprep.subr.bf16.mxu0 %v4800
        %6782 = vmatpush1.bf16.msra.mxu0 %v4799
        %6783 = vmatprep.subr.bf16.mxu0 %v4804
        %6784 = vmatpush1.bf16.msra.mxu0 %v4803
        %6785 = vmatprep.subr.bf16.mxu0 %v4808
        %6786 = vmatpush1.bf16.msra.mxu0 %v4807
        %6787 = vmatprep.subr.bf16.mxu0 %v4812
        %6788 = vmatpush1.bf16.msra.mxu0 %v4811
        %6789 = vmatprep.subr.bf16.mxu0 %v4816
        %6790 = vmatpush1.bf16.msra.mxu0 %v4815
        %6791 = vmatprep.subr.bf16.mxu0 %v4820
        %6792 = vmatpush1.bf16.msra.mxu0 %v4819
        %6793 = vmatprep.mubr.bf16.mxu0 %v1500
        %6794 = vmatmul.mubr.bf16.gmra.mrb[0].mxu0 %v1499
        %v6795 = vpop.f32.mrb[0].mxu0
        %v6796 = vadd.f32 %v6755, %v6795
        %v6797 = vpop.f32.mrb[0].mxu0
        %v6798 = vadd.f32 %v6757, %v6797
        %v6799 = vpop.f32.mrb[0].mxu0
        %v6800 = vpop.f32.mrb[0].mxu0
        %6801 = vdwg.mxu0
        %6802 = vmatprep.subr.bf16.mxu0 %v4824
        %6803 = vmatpush1.bf16.msra.mxu0 %v4823
        %6804 = vmatprep.subr.bf16.mxu0 %v4828
        %6805 = vmatpush1.bf16.msra.mxu0 %v4827
        %6806 = vmatprep.subr.bf16.mxu0 %v4832
        %6807 = vmatpush1.bf16.msra.mxu0 %v4831
        %6808 = vmatprep.subr.bf16.mxu0 %v4836
        %6809 = vmatpush1.bf16.msra.mxu0 %v4835
        %6810 = vmatprep.subr.bf16.mxu0 %v4840
        %6811 = vmatpush1.bf16.msra.mxu0 %v4839
        %6812 = vmatprep.subr.bf16.mxu0 %v4844
        %6813 = vmatpush1.bf16.msra.mxu0 %v4843
        %6814 = vmatprep.subr.bf16.mxu0 %v4848
        %6815 = vmatpush1.bf16.msra.mxu0 %v4847
        %6816 = vmatprep.subr.bf16.mxu0 %v4852
        %6817 = vmatpush1.bf16.msra.mxu0 %v4851
        %6818 = vmatprep.subr.bf16.mxu0 %v4856
        %6819 = vmatpush1.bf16.msra.mxu0 %v4855
        %6820 = vmatprep.subr.bf16.mxu0 %v4860
        %6821 = vmatpush1.bf16.msra.mxu0 %v4859
        %6822 = vmatprep.subr.bf16.mxu0 %v4864
        %6823 = vmatpush1.bf16.msra.mxu0 %v4863
        %6824 = vmatprep.subr.bf16.mxu0 %v4868
        %6825 = vmatpush1.bf16.msra.mxu0 %v4867
        %6826 = vmatprep.subr.bf16.mxu0 %v4872
        %6827 = vmatpush1.bf16.msra.mxu0 %v4871
        %6828 = vmatprep.subr.bf16.mxu0 %v4876
        %6829 = vmatpush1.bf16.msra.mxu0 %v4875
        %6830 = vmatprep.subr.bf16.mxu0 %v4880
        %6831 = vmatpush1.bf16.msra.mxu0 %v4879
        %6832 = vmatprep.subr.bf16.mxu0 %v4884
        %6833 = vmatpush1.bf16.msra.mxu0 %v4883
        %6834 = vmatprep.mubr.bf16.mxu0 %v1502
        %6835 = vmatmul.mubr.bf16.gmra.mrb[0].mxu0 %v1501
        %v6836 = vpop.f32.mrb[0].mxu0
        %v6837 = vadd.f32 %v6796, %v6836
        %v6838 = vpop.f32.mrb[0].mxu0
        %v6839 = vadd.f32 %v6798, %v6838
        %v6840 = vpop.f32.mrb[0].mxu0
        %v6841 = vpop.f32.mrb[0].mxu0
        %6842 = vdwg.mxu0
        %6843 = vmatprep.subr.bf16.mxu0 %v4888
        %6844 = vmatpush1.bf16.msra.mxu0 %v4887
        %6845 = vmatprep.subr.bf16.mxu0 %v4892
        %6846 = vmatpush1.bf16.msra.mxu0 %v4891
        %6847 = vmatprep.subr.bf16.mxu0 %v4896
        %6848 = vmatpush1.bf16.msra.mxu0 %v4895
        %6849 = vmatprep.subr.bf16.mxu0 %v4900
        %6850 = vmatpush1.bf16.msra.mxu0 %v4899
        %6851 = vmatprep.subr.bf16.mxu0 %v4904
        %6852 = vmatpush1.bf16.msra.mxu0 %v4903
        %6853 = vmatprep.subr.bf16.mxu0 %v4908
        %6854 = vmatpush1.bf16.msra.mxu0 %v4907
        %6855 = vmatprep.subr.bf16.mxu0 %v4912
        %6856 = vmatpush1.bf16.msra.mxu0 %v4911
        %6857 = vmatprep.subr.bf16.mxu0 %v4916
        %6858 = vmatpush1.bf16.msra.mxu0 %v4915
        %6859 = vmatprep.subr.bf16.mxu0 %v4920
        %6860 = vmatpush1.bf16.msra.mxu0 %v4919
        %6861 = vmatprep.subr.bf16.mxu0 %v4924
        %6862 = vmatpush1.bf16.msra.mxu0 %v4923
        %6863 = vmatprep.subr.bf16.mxu0 %v4928
        %6864 = vmatpush1.bf16.msra.mxu0 %v4927
        %6865 = vmatprep.subr.bf16.mxu0 %v4932
        %6866 = vmatpush1.bf16.msra.mxu0 %v4931
        %6867 = vmatprep.subr.bf16.mxu0 %v4936
        %6868 = vmatpush1.bf16.msra.mxu0 %v4935
        %6869 = vmatprep.subr.bf16.mxu0 %v4940
        %6870 = vmatpush1.bf16.msra.mxu0 %v4939
        %6871 = vmatprep.subr.bf16.mxu0 %v4944
        %6872 = vmatpush1.bf16.msra.mxu0 %v4943
        %6873 = vmatprep.subr.bf16.mxu0 %v4948
        %6874 = vmatpush1.bf16.msra.mxu0 %v4947
        %6875 = vmatprep.mubr.bf16.mxu0 %v1504
        %6876 = vmatmul.mubr.bf16.gmra.mrb[0].mxu0 %v1503
        %v6877 = vpop.f32.mrb[0].mxu0
        %v6878 = vadd.f32 %v6837, %v6877
        %v6879 = vpop.f32.mrb[0].mxu0
        %v6880 = vadd.f32 %v6839, %v6879
        %v6881 = vpop.f32.mrb[0].mxu0
        %v6882 = vpop.f32.mrb[0].mxu0
        %6883 = vdwg.mxu0
        %6884 = vmatprep.subr.bf16.mxu0 %v4952
        %6885 = vmatpush1.bf16.msra.mxu0 %v4951
        %6886 = vmatprep.subr.bf16.mxu0 %v4956
        %6887 = vmatpush1.bf16.msra.mxu0 %v4955
        %6888 = vmatprep.subr.bf16.mxu0 %v4960
        %6889 = vmatpush1.bf16.msra.mxu0 %v4959
        %6890 = vmatprep.subr.bf16.mxu0 %v4964
        %6891 = vmatpush1.bf16.msra.mxu0 %v4963
        %6892 = vmatprep.subr.bf16.mxu0 %v4968
        %6893 = vmatpush1.bf16.msra.mxu0 %v4967
        %6894 = vmatprep.subr.bf16.mxu0 %v4972
        %6895 = vmatpush1.bf16.msra.mxu0 %v4971
        %6896 = vmatprep.subr.bf16.mxu0 %v4976
        %6897 = vmatpush1.bf16.msra.mxu0 %v4975
        %6898 = vmatprep.subr.bf16.mxu0 %v4980
        %6899 = vmatpush1.bf16.msra.mxu0 %v4979
        %6900 = vmatprep.subr.bf16.mxu0 %v4984
        %6901 = vmatpush1.bf16.msra.mxu0 %v4983
        %6902 = vmatprep.subr.bf16.mxu0 %v4988
        %6903 = vmatpush1.bf16.msra.mxu0 %v4987
        %6904 = vmatprep.subr.bf16.mxu0 %v4992
        %6905 = vmatpush1.bf16.msra.mxu0 %v4991
        %6906 = vmatprep.subr.bf16.mxu0 %v4996
        %6907 = vmatpush1.bf16.msra.mxu0 %v4995
        %6908 = vmatprep.subr.bf16.mxu0 %v5000
        %6909 = vmatpush1.bf16.msra.mxu0 %v4999
        %6910 = vmatprep.subr.bf16.mxu0 %v5004
        %6911 = vmatpush1.bf16.msra.mxu0 %v5003
        %6912 = vmatprep.subr.bf16.mxu0 %v5008
        %6913 = vmatpush1.bf16.msra.mxu0 %v5007
        %6914 = vmatprep.subr.bf16.mxu0 %v5012
        %6915 = vmatpush1.bf16.msra.mxu0 %v5011
        %6916 = vmatprep.mubr.bf16.mxu0 %v1506
        %6917 = vmatmul.mubr.bf16.gmra.mrb[0].mxu0 %v1505
        %v6918 = vpop.f32.mrb[0].mxu0
        %v6919 = vadd.f32 %v6878, %v6918
        %v6920 = vpop.f32.mrb[0].mxu0
        %v6921 = vadd.f32 %v6880, %v6920
        %v6922 = vpop.f32.mrb[0].mxu0
        %v6923 = vpop.f32.mrb[0].mxu0
        %6924 = vdwg.mxu0
        %6925 = vmatprep.subr.bf16.mxu0 %v5016
        %6926 = vmatpush1.bf16.msra.mxu0 %v5015
        %6927 = vmatprep.subr.bf16.mxu0 %v5020
        %6928 = vmatpush1.bf16.msra.mxu0 %v5019
        %6929 = vmatprep.subr.bf16.mxu0 %v5024
        %6930 = vmatpush1.bf16.msra.mxu0 %v5023
        %6931 = vmatprep.subr.bf16.mxu0 %v5028
        %6932 = vmatpush1.bf16.msra.mxu0 %v5027
        %6933 = vmatprep.subr.bf16.mxu0 %v5032
        %6934 = vmatpush1.bf16.msra.mxu0 %v5031
        %6935 = vmatprep.subr.bf16.mxu0 %v5036
        %6936 = vmatpush1.bf16.msra.mxu0 %v5035
        %6937 = vmatprep.subr.bf16.mxu0 %v5040
        %6938 = vmatpush1.bf16.msra.mxu0 %v5039
        %6939 = vmatprep.subr.bf16.mxu0 %v5044
        %6940 = vmatpush1.bf16.msra.mxu0 %v5043
        %6941 = vmatprep.subr.bf16.mxu0 %v5048
        %6942 = vmatpush1.bf16.msra.mxu0 %v5047
        %6943 = vmatprep.subr.bf16.mxu0 %v5052
        %6944 = vmatpush1.bf16.msra.mxu0 %v5051
        %6945 = vmatprep.subr.bf16.mxu0 %v5056
        %6946 = vmatpush1.bf16.msra.mxu0 %v5055
        %6947 = vmatprep.subr.bf16.mxu0 %v5060
        %6948 = vmatpush1.bf16.msra.mxu0 %v5059
        %6949 = vmatprep.subr.bf16.mxu0 %v5064
        %6950 = vmatpush1.bf16.msra.mxu0 %v5063
        %6951 = vmatprep.subr.bf16.mxu0 %v5068
        %6952 = vmatpush1.bf16.msra.mxu0 %v5067
        %6953 = vmatprep.subr.bf16.mxu0 %v5072
        %6954 = vmatpush1.bf16.msra.mxu0 %v5071
        %6955 = vmatprep.subr.bf16.mxu0 %v5076
        %6956 = vmatpush1.bf16.msra.mxu0 %v5075
        %6957 = vmatprep.mubr.bf16.mxu0 %v1508
        %6958 = vmatmul.mubr.bf16.gmra.mrb[0].mxu0 %v1507
        %v6959 = vpop.f32.mrb[0].mxu0
        %v6960 = vadd.f32 %v6919, %v6959
        %v6961 = vpop.f32.mrb[0].mxu0
        %v6962 = vadd.f32 %v6921, %v6961
        %v6963 = vpop.f32.mrb[0].mxu0
        %v6964 = vpop.f32.mrb[0].mxu0
        %6965 = vdwg.mxu0
        %6966 = vmatprep.subr.bf16.mxu0 %v5080
        %6967 = vmatpush1.bf16.msra.mxu0 %v5079
        %6968 = vmatprep.subr.bf16.mxu0 %v5084
        %6969 = vmatpush1.bf16.msra.mxu0 %v5083
        %6970 = vmatprep.subr.bf16.mxu0 %v5088
        %6971 = vmatpush1.bf16.msra.mxu0 %v5087
        %6972 = vmatprep.subr.bf16.mxu0 %v5092
        %6973 = vmatpush1.bf16.msra.mxu0 %v5091
        %6974 = vmatprep.subr.bf16.mxu0 %v5096
        %6975 = vmatpush1.bf16.msra.mxu0 %v5095
        %6976 = vmatprep.subr.bf16.mxu0 %v5100
        %6977 = vmatpush1.bf16.msra.mxu0 %v5099
        %6978 = vmatprep.subr.bf16.mxu0 %v5104
        %6979 = vmatpush1.bf16.msra.mxu0 %v5103
        %6980 = vmatprep.subr.bf16.mxu0 %v5108
        %6981 = vmatpush1.bf16.msra.mxu0 %v5107
        %6982 = vmatprep.subr.bf16.mxu0 %v5112
        %6983 = vmatpush1.bf16.msra.mxu0 %v5111
        %6984 = vmatprep.subr.bf16.mxu0 %v5116
        %6985 = vmatpush1.bf16.msra.mxu0 %v5115
        %6986 = vmatprep.subr.bf16.mxu0 %v5120
        %6987 = vmatpush1.bf16.msra.mxu0 %v5119
        %6988 = vmatprep.subr.bf16.mxu0 %v5124
        %6989 = vmatpush1.bf16.msra.mxu0 %v5123
        %6990 = vmatprep.subr.bf16.mxu0 %v5128
        %6991 = vmatpush1.bf16.msra.mxu0 %v5127
        %6992 = vmatprep.subr.bf16.mxu0 %v5132
        %6993 = vmatpush1.bf16.msra.mxu0 %v5131
        %6994 = vmatprep.subr.bf16.mxu0 %v5136
        %6995 = vmatpush1.bf16.msra.mxu0 %v5135
        %6996 = vmatprep.subr.bf16.mxu0 %v5140
        %6997 = vmatpush1.bf16.msra.mxu0 %v5139
        %6998 = vmatprep.mubr.bf16.mxu0 %v1510
        %6999 = vmatmul.mubr.bf16.gmra.mrb[0].mxu0 %v1509
        %v7000 = vpop.f32.mrb[0].mxu0
        %v7001 = vadd.f32 %v6960, %v7000
        %v7002 = vpop.f32.mrb[0].mxu0
        %v7003 = vadd.f32 %v6962, %v7002
        %v7004 = vpop.f32.mrb[0].mxu0
        %v7005 = vpop.f32.mrb[0].mxu0
        %7006 = vdwg.mxu0
        %7007 = vmatprep.subr.bf16.mxu0 %v5144
        %7008 = vmatpush1.bf16.msra.mxu0 %v5143
        %7009 = vmatprep.subr.bf16.mxu0 %v5148
        %7010 = vmatpush1.bf16.msra.mxu0 %v5147
        %7011 = vmatprep.subr.bf16.mxu0 %v5152
        %7012 = vmatpush1.bf16.msra.mxu0 %v5151
        %7013 = vmatprep.subr.bf16.mxu0 %v5156
        %7014 = vmatpush1.bf16.msra.mxu0 %v5155
        %7015 = vmatprep.subr.bf16.mxu0 %v5160
        %7016 = vmatpush1.bf16.msra.mxu0 %v5159
        %7017 = vmatprep.subr.bf16.mxu0 %v5164
        %7018 = vmatpush1.bf16.msra.mxu0 %v5163
        %7019 = vmatprep.subr.bf16.mxu0 %v5168
        %7020 = vmatpush1.bf16.msra.mxu0 %v5167
        %7021 = vmatprep.subr.bf16.mxu0 %v5172
        %7022 = vmatpush1.bf16.msra.mxu0 %v5171
        %7023 = vmatprep.subr.bf16.mxu0 %v5176
        %7024 = vmatpush1.bf16.msra.mxu0 %v5175
        %7025 = vmatprep.subr.bf16.mxu0 %v5180
        %7026 = vmatpush1.bf16.msra.mxu0 %v5179
        %7027 = vmatprep.subr.bf16.mxu0 %v5184
        %7028 = vmatpush1.bf16.msra.mxu0 %v5183
        %7029 = vmatprep.subr.bf16.mxu0 %v5188
        %7030 = vmatpush1.bf16.msra.mxu0 %v5187
        %7031 = vmatprep.subr.bf16.mxu0 %v5192
        %7032 = vmatpush1.bf16.msra.mxu0 %v5191
        %7033 = vmatprep.subr.bf16.mxu0 %v5196
        %7034 = vmatpush1.bf16.msra.mxu0 %v5195
        %7035 = vmatprep.subr.bf16.mxu0 %v5200
        %7036 = vmatpush1.bf16.msra.mxu0 %v5199
        %7037 = vmatprep.subr.bf16.mxu0 %v5204
        %7038 = vmatpush1.bf16.msra.mxu0 %v5203
        %7039 = vmatprep.mubr.bf16.mxu0 %v1512
        %7040 = vmatmul.mubr.bf16.gmra.mrb[0].mxu0 %v1511
        %v7041 = vpop.f32.mrb[0].mxu0
        %v7042 = vadd.f32 %v7001, %v7041
        %v7043 = vpop.f32.mrb[0].mxu0
        %v7044 = vadd.f32 %v7003, %v7043
        %v7045 = vpop.f32.mrb[0].mxu0
        %v7046 = vpop.f32.mrb[0].mxu0
        %7047 = vdwg.mxu0
        %7048 = vmatprep.subr.bf16.mxu0 %v5208
        %7049 = vmatpush1.bf16.msra.mxu0 %v5207
        %7050 = vmatprep.subr.bf16.mxu0 %v5212
        %7051 = vmatpush1.bf16.msra.mxu0 %v5211
        %7052 = vmatprep.subr.bf16.mxu0 %v5216
        %7053 = vmatpush1.bf16.msra.mxu0 %v5215
        %7054 = vmatprep.subr.bf16.mxu0 %v5220
        %7055 = vmatpush1.bf16.msra.mxu0 %v5219
        %7056 = vmatprep.subr.bf16.mxu0 %v5224
        %7057 = vmatpush1.bf16.msra.mxu0 %v5223
        %7058 = vmatprep.subr.bf16.mxu0 %v5228
        %7059 = vmatpush1.bf16.msra.mxu0 %v5227
        %7060 = vmatprep.subr.bf16.mxu0 %v5232
        %7061 = vmatpush1.bf16.msra.mxu0 %v5231
        %7062 = vmatprep.subr.bf16.mxu0 %v5236
        %7063 = vmatpush1.bf16.msra.mxu0 %v5235
        %7064 = vmatprep.subr.bf16.mxu0 %v5240
        %7065 = vmatpush1.bf16.msra.mxu0 %v5239
        %7066 = vmatprep.subr.bf16.mxu0 %v5244
        %7067 = vmatpush1.bf16.msra.mxu0 %v5243
        %7068 = vmatprep.subr.bf16.mxu0 %v5248
        %7069 = vmatpush1.bf16.msra.mxu0 %v5247
        %7070 = vmatprep.subr.bf16.mxu0 %v5252
        %7071 = vmatpush1.bf16.msra.mxu0 %v5251
        %7072 = vmatprep.subr.bf16.mxu0 %v5256
        %7073 = vmatpush1.bf16.msra.mxu0 %v5255
        %7074 = vmatprep.subr.bf16.mxu0 %v5260
        %7075 = vmatpush1.bf16.msra.mxu0 %v5259
        %7076 = vmatprep.subr.bf16.mxu0 %v5264
        %7077 = vmatpush1.bf16.msra.mxu0 %v5263
        %7078 = vmatprep.subr.bf16.mxu0 %v5268
        %7079 = vmatpush1.bf16.msra.mxu0 %v5267
        %7080 = vmatprep.mubr.bf16.mxu0 %v1514
        %7081 = vmatmul.mubr.bf16.gmra.mrb[0].mxu0 %v1513
        %v7082 = vpop.f32.mrb[0].mxu0
        %v7083 = vadd.f32 %v7042, %v7082
        %v7084 = vpop.f32.mrb[0].mxu0
        %v7085 = vadd.f32 %v7044, %v7084
        %v7086 = vpop.f32.mrb[0].mxu0
        %v7087 = vpop.f32.mrb[0].mxu0
        %7088 = vdwg.mxu0
        %7089 = vmatprep.subr.bf16.mxu0 %v5272
        %7090 = vmatpush1.bf16.msra.mxu0 %v5271
        %7091 = vmatprep.subr.bf16.mxu0 %v5276
        %7092 = vmatpush1.bf16.msra.mxu0 %v5275
        %7093 = vmatprep.subr.bf16.mxu0 %v5280
        %7094 = vmatpush1.bf16.msra.mxu0 %v5279
        %7095 = vmatprep.subr.bf16.mxu0 %v5284
        %7096 = vmatpush1.bf16.msra.mxu0 %v5283
        %7097 = vmatprep.subr.bf16.mxu0 %v5288
        %7098 = vmatpush1.bf16.msra.mxu0 %v5287
        %7099 = vmatprep.subr.bf16.mxu0 %v5292
        %7100 = vmatpush1.bf16.msra.mxu0 %v5291
        %7101 = vmatprep.subr.bf16.mxu0 %v5296
        %7102 = vmatpush1.bf16.msra.mxu0 %v5295
        %7103 = vmatprep.subr.bf16.mxu0 %v5300
        %7104 = vmatpush1.bf16.msra.mxu0 %v5299
        %7105 = vmatprep.subr.bf16.mxu0 %v5304
        %7106 = vmatpush1.bf16.msra.mxu0 %v5303
        %7107 = vmatprep.subr.bf16.mxu0 %v5308
        %7108 = vmatpush1.bf16.msra.mxu0 %v5307
        %7109 = vmatprep.subr.bf16.mxu0 %v5312
        %7110 = vmatpush1.bf16.msra.mxu0 %v5311
        %7111 = vmatprep.subr.bf16.mxu0 %v5316
        %7112 = vmatpush1.bf16.msra.mxu0 %v5315
        %7113 = vmatprep.subr.bf16.mxu0 %v5320
        %7114 = vmatpush1.bf16.msra.mxu0 %v5319
        %7115 = vmatprep.subr.bf16.mxu0 %v5324
        %7116 = vmatpush1.bf16.msra.mxu0 %v5323
        %7117 = vmatprep.subr.bf16.mxu0 %v5328
        %7118 = vmatpush1.bf16.msra.mxu0 %v5327
        %7119 = vmatprep.subr.bf16.mxu0 %v5332
        %7120 = vmatpush1.bf16.msra.mxu0 %v5331
        %7121 = vmatprep.mubr.bf16.mxu0 %v1516
        %7122 = vmatmul.mubr.bf16.gmra.mrb[0].mxu0 %v1515
        %v7123 = vpop.f32.mrb[0].mxu0
        %v7124 = vadd.f32 %v7083, %v7123
        %v7125 = vpop.f32.mrb[0].mxu0
        %v7126 = vadd.f32 %v7085, %v7125
        %v7127 = vpop.f32.mrb[0].mxu0
        %v7128 = vpop.f32.mrb[0].mxu0
        %7129 = vdwg.mxu0
        %7130 = vmatprep.subr.bf16.mxu0 %v5336
        %7131 = vmatpush1.bf16.msra.mxu0 %v5335
        %7132 = vmatprep.subr.bf16.mxu0 %v5340
        %7133 = vmatpush1.bf16.msra.mxu0 %v5339
        %7134 = vmatprep.subr.bf16.mxu0 %v5344
        %7135 = vmatpush1.bf16.msra.mxu0 %v5343
        %7136 = vmatprep.subr.bf16.mxu0 %v5348
        %7137 = vmatpush1.bf16.msra.mxu0 %v5347
        %7138 = vmatprep.subr.bf16.mxu0 %v5352
        %7139 = vmatpush1.bf16.msra.mxu0 %v5351
        %7140 = vmatprep.subr.bf16.mxu0 %v5356
        %7141 = vmatpush1.bf16.msra.mxu0 %v5355
        %7142 = vmatprep.subr.bf16.mxu0 %v5360
        %7143 = vmatpush1.bf16.msra.mxu0 %v5359
        %7144 = vmatprep.subr.bf16.mxu0 %v5364
        %7145 = vmatpush1.bf16.msra.mxu0 %v5363
        %7146 = vmatprep.subr.bf16.mxu0 %v5368
        %7147 = vmatpush1.bf16.msra.mxu0 %v5367
        %7148 = vmatprep.subr.bf16.mxu0 %v5372
        %7149 = vmatpush1.bf16.msra.mxu0 %v5371
        %7150 = vmatprep.subr.bf16.mxu0 %v5376
        %7151 = vmatpush1.bf16.msra.mxu0 %v5375
        %7152 = vmatprep.subr.bf16.mxu0 %v5380
        %7153 = vmatpush1.bf16.msra.mxu0 %v5379
        %7154 = vmatprep.subr.bf16.mxu0 %v5384
        %7155 = vmatpush1.bf16.msra.mxu0 %v5383
        %7156 = vmatprep.subr.bf16.mxu0 %v5388
        %7157 = vmatpush1.bf16.msra.mxu0 %v5387
        %7158 = vmatprep.subr.bf16.mxu0 %v5392
        %7159 = vmatpush1.bf16.msra.mxu0 %v5391
        %7160 = vmatprep.subr.bf16.mxu0 %v5396
        %7161 = vmatpush1.bf16.msra.mxu0 %v5395
        %7162 = vmatprep.mubr.bf16.mxu0 %v1518
        %7163 = vmatmul.mubr.bf16.gmra.mrb[0].mxu0 %v1517
        %v7164 = vpop.f32.mrb[0].mxu0
        %v7165 = vadd.f32 %v7124, %v7164
        %v7166 = vpop.f32.mrb[0].mxu0
        %v7167 = vadd.f32 %v7126, %v7166
        %v7168 = vpop.f32.mrb[0].mxu0
        %v7169 = vpop.f32.mrb[0].mxu0
        %7170 = vdwg.mxu0
        %7171 = vmatprep.subr.bf16.mxu0 %v5400
        %7172 = vmatpush1.bf16.msra.mxu0 %v5399
        %7173 = vmatprep.subr.bf16.mxu0 %v5404
        %7174 = vmatpush1.bf16.msra.mxu0 %v5403
        %7175 = vmatprep.subr.bf16.mxu0 %v5408
        %7176 = vmatpush1.bf16.msra.mxu0 %v5407
        %7177 = vmatprep.subr.bf16.mxu0 %v5412
        %7178 = vmatpush1.bf16.msra.mxu0 %v5411
        %7179 = vmatprep.subr.bf16.mxu0 %v5416
        %7180 = vmatpush1.bf16.msra.mxu0 %v5415
        %7181 = vmatprep.subr.bf16.mxu0 %v5420
        %7182 = vmatpush1.bf16.msra.mxu0 %v5419
        %7183 = vmatprep.subr.bf16.mxu0 %v5424
        %7184 = vmatpush1.bf16.msra.mxu0 %v5423
        %7185 = vmatprep.subr.bf16.mxu0 %v5428
        %7186 = vmatpush1.bf16.msra.mxu0 %v5427
        %7187 = vmatprep.subr.bf16.mxu0 %v5432
        %7188 = vmatpush1.bf16.msra.mxu0 %v5431
        %7189 = vmatprep.subr.bf16.mxu0 %v5436
        %7190 = vmatpush1.bf16.msra.mxu0 %v5435
        %7191 = vmatprep.subr.bf16.mxu0 %v5440
        %7192 = vmatpush1.bf16.msra.mxu0 %v5439
        %7193 = vmatprep.subr.bf16.mxu0 %v5444
        %7194 = vmatpush1.bf16.msra.mxu0 %v5443
        %7195 = vmatprep.subr.bf16.mxu0 %v5448
        %7196 = vmatpush1.bf16.msra.mxu0 %v5447
        %7197 = vmatprep.subr.bf16.mxu0 %v5452
        %7198 = vmatpush1.bf16.msra.mxu0 %v5451
        %7199 = vmatprep.subr.bf16.mxu0 %v5456
        %7200 = vmatpush1.bf16.msra.mxu0 %v5455
        %7201 = vmatprep.subr.bf16.mxu0 %v5460
        %7202 = vmatpush1.bf16.msra.mxu0 %v5459
        %7203 = vmatprep.mubr.bf16.mxu0 %v1520
        %7204 = vmatmul.mubr.bf16.gmra.mrb[0].mxu0 %v1519
        %v7205 = vpop.f32.mrb[0].mxu0
        %v7206 = vadd.f32 %v7165, %v7205
        %v7207 = vpop.f32.mrb[0].mxu0
        %v7208 = vadd.f32 %v7167, %v7207
        %v7209 = vpop.f32.mrb[0].mxu0
        %v7210 = vpop.f32.mrb[0].mxu0
        %7211 = vdwg.mxu0
        %7212 = vmatprep.subr.bf16.mxu0 %v5464
        %7213 = vmatpush1.bf16.msra.mxu0 %v5463
        %7214 = vmatprep.subr.bf16.mxu0 %v5468
        %7215 = vmatpush1.bf16.msra.mxu0 %v5467
        %7216 = vmatprep.subr.bf16.mxu0 %v5472
        %7217 = vmatpush1.bf16.msra.mxu0 %v5471
        %7218 = vmatprep.subr.bf16.mxu0 %v5476
        %7219 = vmatpush1.bf16.msra.mxu0 %v5475
        %7220 = vmatprep.subr.bf16.mxu0 %v5480
        %7221 = vmatpush1.bf16.msra.mxu0 %v5479
        %7222 = vmatprep.subr.bf16.mxu0 %v5484
        %7223 = vmatpush1.bf16.msra.mxu0 %v5483
        %7224 = vmatprep.subr.bf16.mxu0 %v5488
        %7225 = vmatpush1.bf16.msra.mxu0 %v5487
        %7226 = vmatprep.subr.bf16.mxu0 %v5492
        %7227 = vmatpush1.bf16.msra.mxu0 %v5491
        %7228 = vmatprep.subr.bf16.mxu0 %v5496
        %7229 = vmatpush1.bf16.msra.mxu0 %v5495
        %7230 = vmatprep.subr.bf16.mxu0 %v5500
        %7231 = vmatpush1.bf16.msra.mxu0 %v5499
        %7232 = vmatprep.subr.bf16.mxu0 %v5504
        %7233 = vmatpush1.bf16.msra.mxu0 %v5503
        %7234 = vmatprep.subr.bf16.mxu0 %v5508
        %7235 = vmatpush1.bf16.msra.mxu0 %v5507
        %7236 = vmatprep.subr.bf16.mxu0 %v5512
        %7237 = vmatpush1.bf16.msra.mxu0 %v5511
        %7238 = vmatprep.subr.bf16.mxu0 %v5516
        %7239 = vmatpush1.bf16.msra.mxu0 %v5515
        %7240 = vmatprep.subr.bf16.mxu0 %v5520
        %7241 = vmatpush1.bf16.msra.mxu0 %v5519
        %7242 = vmatprep.subr.bf16.mxu0 %v5524
        %7243 = vmatpush1.bf16.msra.mxu0 %v5523
        %7244 = vmatprep.mubr.bf16.mxu0 %v1522
        %7245 = vmatmul.mubr.bf16.gmra.mrb[0].mxu0 %v1521
        %v7246 = vpop.f32.mrb[0].mxu0
        %v7247 = vadd.f32 %v7206, %v7246
        %v7248 = vpop.f32.mrb[0].mxu0
        %v7249 = vadd.f32 %v7208, %v7248
        %v7250 = vpop.f32.mrb[0].mxu0
        %v7251 = vpop.f32.mrb[0].mxu0
        %7252 = vdwg.mxu0
        %7253 = vmatprep.subr.bf16.mxu0 %v5528
        %7254 = vmatpush1.bf16.msra.mxu0 %v5527
        %7255 = vmatprep.subr.bf16.mxu0 %v5532
        %7256 = vmatpush1.bf16.msra.mxu0 %v5531
        %7257 = vmatprep.subr.bf16.mxu0 %v5536
        %7258 = vmatpush1.bf16.msra.mxu0 %v5535
        %7259 = vmatprep.subr.bf16.mxu0 %v5540
        %7260 = vmatpush1.bf16.msra.mxu0 %v5539
        %7261 = vmatprep.subr.bf16.mxu0 %v5544
        %7262 = vmatpush1.bf16.msra.mxu0 %v5543
        %7263 = vmatprep.subr.bf16.mxu0 %v5548
        %7264 = vmatpush1.bf16.msra.mxu0 %v5547
        %7265 = vmatprep.subr.bf16.mxu0 %v5552
        %7266 = vmatpush1.bf16.msra.mxu0 %v5551
        %7267 = vmatprep.subr.bf16.mxu0 %v5556
        %7268 = vmatpush1.bf16.msra.mxu0 %v5555
        %7269 = vmatprep.subr.bf16.mxu0 %v5560
        %7270 = vmatpush1.bf16.msra.mxu0 %v5559
        %7271 = vmatprep.subr.bf16.mxu0 %v5564
        %7272 = vmatpush1.bf16.msra.mxu0 %v5563
        %7273 = vmatprep.subr.bf16.mxu0 %v5568
        %7274 = vmatpush1.bf16.msra.mxu0 %v5567
        %7275 = vmatprep.subr.bf16.mxu0 %v5572
        %7276 = vmatpush1.bf16.msra.mxu0 %v5571
        %7277 = vmatprep.subr.bf16.mxu0 %v5576
        %7278 = vmatpush1.bf16.msra.mxu0 %v5575
        %7279 = vmatprep.subr.bf16.mxu0 %v5580
        %7280 = vmatpush1.bf16.msra.mxu0 %v5579
        %7281 = vmatprep.subr.bf16.mxu0 %v5584
        %7282 = vmatpush1.bf16.msra.mxu0 %v5583
        %7283 = vmatprep.subr.bf16.mxu0 %v5588
        %7284 = vmatpush1.bf16.msra.mxu0 %v5587
        %7285 = vmatprep.mubr.bf16.mxu0 %v1524
        %7286 = vmatmul.mubr.bf16.gmra.mrb[0].mxu0 %v1523
        %v7287 = vpop.f32.mrb[0].mxu0
        %v7288 = vadd.f32 %v7247, %v7287
        %v7289 = vpop.f32.mrb[0].mxu0
        %v7290 = vadd.f32 %v7249, %v7289
        %v7291 = vpop.f32.mrb[0].mxu0
        %v7292 = vpop.f32.mrb[0].mxu0
        %7293 = vdwg.mxu0
        %7294 = vmatprep.subr.bf16.mxu0 %v5592
        %7295 = vmatpush1.bf16.msra.mxu0 %v5591
        %7296 = vmatprep.subr.bf16.mxu0 %v5596
        %7297 = vmatpush1.bf16.msra.mxu0 %v5595
        %7298 = vmatprep.subr.bf16.mxu0 %v5600
        %7299 = vmatpush1.bf16.msra.mxu0 %v5599
        %7300 = vmatprep.subr.bf16.mxu0 %v5604
        %7301 = vmatpush1.bf16.msra.mxu0 %v5603
        %7302 = vmatprep.subr.bf16.mxu0 %v5608
        %7303 = vmatpush1.bf16.msra.mxu0 %v5607
        %7304 = vmatprep.subr.bf16.mxu0 %v5612
        %7305 = vmatpush1.bf16.msra.mxu0 %v5611
        %7306 = vmatprep.subr.bf16.mxu0 %v5616
        %7307 = vmatpush1.bf16.msra.mxu0 %v5615
        %7308 = vmatprep.subr.bf16.mxu0 %v5620
        %7309 = vmatpush1.bf16.msra.mxu0 %v5619
        %7310 = vmatprep.subr.bf16.mxu0 %v5624
        %7311 = vmatpush1.bf16.msra.mxu0 %v5623
        %7312 = vmatprep.subr.bf16.mxu0 %v5628
        %7313 = vmatpush1.bf16.msra.mxu0 %v5627
        %7314 = vmatprep.subr.bf16.mxu0 %v5632
        %7315 = vmatpush1.bf16.msra.mxu0 %v5631
        %7316 = vmatprep.subr.bf16.mxu0 %v5636
        %7317 = vmatpush1.bf16.msra.mxu0 %v5635
        %7318 = vmatprep.subr.bf16.mxu0 %v5640
        %7319 = vmatpush1.bf16.msra.mxu0 %v5639
        %7320 = vmatprep.subr.bf16.mxu0 %v5644
        %7321 = vmatpush1.bf16.msra.mxu0 %v5643
        %7322 = vmatprep.subr.bf16.mxu0 %v5648
        %7323 = vmatpush1.bf16.msra.mxu0 %v5647
        %7324 = vmatprep.subr.bf16.mxu0 %v5652
        %7325 = vmatpush1.bf16.msra.mxu0 %v5651
        %7326 = vmatprep.mubr.bf16.mxu0 %v1526
        %7327 = vmatmul.mubr.bf16.gmra.mrb[0].mxu0 %v1525
        %v7328 = vpop.f32.mrb[0].mxu0
        %v7329 = vadd.f32 %v7288, %v7328
        %v7330 = vpop.f32.mrb[0].mxu0
        %v7331 = vadd.f32 %v7290, %v7330
        %v7332 = vpop.f32.mrb[0].mxu0
        %v7333 = vpop.f32.mrb[0].mxu0
        %7334 = vdwg.mxu0
        %7335 = vmatprep.subr.bf16.mxu0 %v4634
        %7336 = vmatpush1.bf16.msra.mxu0 %v4633
        %7337 = vmatprep.subr.bf16.mxu0 %v4638
        %7338 = vmatpush1.bf16.msra.mxu0 %v4637
        %7339 = vmatprep.subr.bf16.mxu0 %v4642
        %7340 = vmatpush1.bf16.msra.mxu0 %v4641
        %7341 = vmatprep.subr.bf16.mxu0 %v4646
        %7342 = vmatpush1.bf16.msra.mxu0 %v4645
        %7343 = vmatprep.subr.bf16.mxu0 %v4650
        %7344 = vmatpush1.bf16.msra.mxu0 %v4649
        %7345 = vmatprep.subr.bf16.mxu0 %v4654
        %7346 = vmatpush1.bf16.msra.mxu0 %v4653
        %7347 = vmatprep.subr.bf16.mxu0 %v4658
        %7348 = vmatpush1.bf16.msra.mxu0 %v4657
        %7349 = vmatprep.subr.bf16.mxu0 %v4662
        %7350 = vmatpush1.bf16.msra.mxu0 %v4661
        %7351 = vmatprep.subr.bf16.mxu0 %v4666
        %7352 = vmatpush1.bf16.msra.mxu0 %v4665
        %7353 = vmatprep.subr.bf16.mxu0 %v4670
        %7354 = vmatpush1.bf16.msra.mxu0 %v4669
        %7355 = vmatprep.subr.bf16.mxu0 %v4674
        %7356 = vmatpush1.bf16.msra.mxu0 %v4673
        %7357 = vmatprep.subr.bf16.mxu0 %v4678
        %7358 = vmatpush1.bf16.msra.mxu0 %v4677
        %7359 = vmatprep.subr.bf16.mxu0 %v4682
        %7360 = vmatpush1.bf16.msra.mxu0 %v4681
        %7361 = vmatprep.subr.bf16.mxu0 %v4686
        %7362 = vmatpush1.bf16.msra.mxu0 %v4685
        %7363 = vmatprep.subr.bf16.mxu0 %v4690
        %7364 = vmatpush1.bf16.msra.mxu0 %v4689
        %7365 = vmatprep.subr.bf16.mxu0 %v4694
        %7366 = vmatpush1.bf16.msra.mxu0 %v4693
        %7367 = vmatprep.mubr.bf16.mxu0 %v1496
        %7368 = vmatmul.mubr.bf16.gmra.mrb[0].mxu0 %v1495
        %v7369 = vpop.f32.mrb[0].mxu0
        %v7370 = vadd.f32 0.0, %v7369
        %v7371 = vpop.f32.mrb[0].mxu0
        %v7372 = vadd.f32 0.0, %v7371
        %v7373 = vpop.f32.mrb[0].mxu0
        %v7374 = vpop.f32.mrb[0].mxu0
        %7375 = vdwg.mxu0
        %7376 = vmatprep.subr.bf16.mxu0 %v4698
        %7377 = vmatpush1.bf16.msra.mxu0 %v4697
        %7378 = vmatprep.subr.bf16.mxu0 %v4702
        %7379 = vmatpush1.bf16.msra.mxu0 %v4701
        %7380 = vmatprep.subr.bf16.mxu0 %v4706
        %7381 = vmatpush1.bf16.msra.mxu0 %v4705
        %7382 = vmatprep.subr.bf16.mxu0 %v4710
        %7383 = vmatpush1.bf16.msra.mxu0 %v4709
        %7384 = vmatprep.subr.bf16.mxu0 %v4714
        %7385 = vmatpush1.bf16.msra.mxu0 %v4713
        %7386 = vmatprep.subr.bf16.mxu0 %v4718
        %7387 = vmatpush1.bf16.msra.mxu0 %v4717
        %7388 = vmatprep.subr.bf16.mxu0 %v4722
        %7389 = vmatpush1.bf16.msra.mxu0 %v4721
        %7390 = vmatprep.subr.bf16.mxu0 %v4726
        %7391 = vmatpush1.bf16.msra.mxu0 %v4725
        %7392 = vmatprep.subr.bf16.mxu0 %v4730
        %7393 = vmatpush1.bf16.msra.mxu0 %v4729
        %7394 = vmatprep.subr.bf16.mxu0 %v4734
        %7395 = vmatpush1.bf16.msra.mxu0 %v4733
        %7396 = vmatprep.subr.bf16.mxu0 %v4738
        %7397 = vmatpush1.bf16.msra.mxu0 %v4737
        %7398 = vmatprep.subr.bf16.mxu0 %v4742
        %7399 = vmatpush1.bf16.msra.mxu0 %v4741
        %7400 = vmatprep.subr.bf16.mxu0 %v4746
        %7401 = vmatpush1.bf16.msra.mxu0 %v4745
        %7402 = vmatprep.subr.bf16.mxu0 %v4750
        %7403 = vmatpush1.bf16.msra.mxu0 %v4749
        %7404 = vmatprep.subr.bf16.mxu0 %v4754
        %7405 = vmatpush1.bf16.msra.mxu0 %v4753
        %7406 = vmatprep.subr.bf16.mxu0 %v4758
        %7407 = vmatpush1.bf16.msra.mxu0 %v4757
        %7408 = vmatprep.mubr.bf16.mxu0 %v1498
        %7409 = vmatmul.mubr.bf16.gmra.mrb[0].mxu0 %v1497
        %v7410 = vpop.f32.mrb[0].mxu0
        %v7411 = vadd.f32 %v7370, %v7410
        %v7412 = vpop.f32.mrb[0].mxu0
        %v7413 = vadd.f32 %v7372, %v7412
        %v7414 = vpop.f32.mrb[0].mxu0
        %v7415 = vpop.f32.mrb[0].mxu0
        %7416 = vdwg.mxu0
        %7417 = vmatprep.subr.bf16.mxu0 %v4762
        %7418 = vmatpush1.bf16.msra.mxu0 %v4761
        %7419 = vmatprep.subr.bf16.mxu0 %v4766
        %7420 = vmatpush1.bf16.msra.mxu0 %v4765
        %7421 = vmatprep.subr.bf16.mxu0 %v4770
        %7422 = vmatpush1.bf16.msra.mxu0 %v4769
        %7423 = vmatprep.subr.bf16.mxu0 %v4774
        %7424 = vmatpush1.bf16.msra.mxu0 %v4773
        %7425 = vmatprep.subr.bf16.mxu0 %v4778
        %7426 = vmatpush1.bf16.msra.mxu0 %v4777
        %7427 = vmatprep.subr.bf16.mxu0 %v4782
        %7428 = vmatpush1.bf16.msra.mxu0 %v4781
        %7429 = vmatprep.subr.bf16.mxu0 %v4786
        %7430 = vmatpush1.bf16.msra.mxu0 %v4785
        %7431 = vmatprep.subr.bf16.mxu0 %v4790
        %7432 = vmatpush1.bf16.msra.mxu0 %v4789
        %7433 = vmatprep.subr.bf16.mxu0 %v4794
        %7434 = vmatpush1.bf16.msra.mxu0 %v4793
        %7435 = vmatprep.subr.bf16.mxu0 %v4798
        %7436 = vmatpush1.bf16.msra.mxu0 %v4797
        %7437 = vmatprep.subr.bf16.mxu0 %v4802
        %7438 = vmatpush1.bf16.msra.mxu0 %v4801
        %7439 = vmatprep.subr.bf16.mxu0 %v4806
        %7440 = vmatpush1.bf16.msra.mxu0 %v4805
        %7441 = vmatprep.subr.bf16.mxu0 %v4810
        %7442 = vmatpush1.bf16.msra.mxu0 %v4809
        %7443 = vmatprep.subr.bf16.mxu0 %v4814
        %7444 = vmatpush1.bf16.msra.mxu0 %v4813
        %7445 = vmatprep.subr.bf16.mxu0 %v4818
        %7446 = vmatpush1.bf16.msra.mxu0 %v4817
        %7447 = vmatprep.subr.bf16.mxu0 %v4822
        %7448 = vmatpush1.bf16.msra.mxu0 %v4821
        %7449 = vmatprep.mubr.bf16.mxu0 %v1500
        %7450 = vmatmul.mubr.bf16.gmra.mrb[0].mxu0 %v1499
        %v7451 = vpop.f32.mrb[0].mxu0
        %v7452 = vadd.f32 %v7411, %v7451
        %v7453 = vpop.f32.mrb[0].mxu0
        %v7454 = vadd.f32 %v7413, %v7453
        %v7455 = vpop.f32.mrb[0].mxu0
        %v7456 = vpop.f32.mrb[0].mxu0
        %7457 = vdwg.mxu0
        %7458 = vmatprep.subr.bf16.mxu0 %v4826
        %7459 = vmatpush1.bf16.msra.mxu0 %v4825
        %7460 = vmatprep.subr.bf16.mxu0 %v4830
        %7461 = vmatpush1.bf16.msra.mxu0 %v4829
        %7462 = vmatprep.subr.bf16.mxu0 %v4834
        %7463 = vmatpush1.bf16.msra.mxu0 %v4833
        %7464 = vmatprep.subr.bf16.mxu0 %v4838
        %7465 = vmatpush1.bf16.msra.mxu0 %v4837
        %7466 = vmatprep.subr.bf16.mxu0 %v4842
        %7467 = vmatpush1.bf16.msra.mxu0 %v4841
        %7468 = vmatprep.subr.bf16.mxu0 %v4846
        %7469 = vmatpush1.bf16.msra.mxu0 %v4845
        %7470 = vmatprep.subr.bf16.mxu0 %v4850
        %7471 = vmatpush1.bf16.msra.mxu0 %v4849
        %7472 = vmatprep.subr.bf16.mxu0 %v4854
        %7473 = vmatpush1.bf16.msra.mxu0 %v4853
        %7474 = vmatprep.subr.bf16.mxu0 %v4858
        %7475 = vmatpush1.bf16.msra.mxu0 %v4857
        %7476 = vmatprep.subr.bf16.mxu0 %v4862
        %7477 = vmatpush1.bf16.msra.mxu0 %v4861
        %7478 = vmatprep.subr.bf16.mxu0 %v4866
        %7479 = vmatpush1.bf16.msra.mxu0 %v4865
        %7480 = vmatprep.subr.bf16.mxu0 %v4870
        %7481 = vmatpush1.bf16.msra.mxu0 %v4869
        %7482 = vmatprep.subr.bf16.mxu0 %v4874
        %7483 = vmatpush1.bf16.msra.mxu0 %v4873
        %7484 = vmatprep.subr.bf16.mxu0 %v4878
        %7485 = vmatpush1.bf16.msra.mxu0 %v4877
        %7486 = vmatprep.subr.bf16.mxu0 %v4882
        %7487 = vmatpush1.bf16.msra.mxu0 %v4881
        %7488 = vmatprep.subr.bf16.mxu0 %v4886
        %7489 = vmatpush1.bf16.msra.mxu0 %v4885
        %7490 = vmatprep.mubr.bf16.mxu0 %v1502
        %7491 = vmatmul.mubr.bf16.gmra.mrb[0].mxu0 %v1501
        %v7492 = vpop.f32.mrb[0].mxu0
        %v7493 = vadd.f32 %v7452, %v7492
        %v7494 = vpop.f32.mrb[0].mxu0
        %v7495 = vadd.f32 %v7454, %v7494
        %v7496 = vpop.f32.mrb[0].mxu0
        %v7497 = vpop.f32.mrb[0].mxu0
        %7498 = vdwg.mxu0
        %7499 = vmatprep.subr.bf16.mxu0 %v4890
        %7500 = vmatpush1.bf16.msra.mxu0 %v4889
        %7501 = vmatprep.subr.bf16.mxu0 %v4894
        %7502 = vmatpush1.bf16.msra.mxu0 %v4893
        %7503 = vmatprep.subr.bf16.mxu0 %v4898
        %7504 = vmatpush1.bf16.msra.mxu0 %v4897
        %7505 = vmatprep.subr.bf16.mxu0 %v4902
        %7506 = vmatpush1.bf16.msra.mxu0 %v4901
        %7507 = vmatprep.subr.bf16.mxu0 %v4906
        %7508 = vmatpush1.bf16.msra.mxu0 %v4905
        %7509 = vmatprep.subr.bf16.mxu0 %v4910
        %7510 = vmatpush1.bf16.msra.mxu0 %v4909
        %7511 = vmatprep.subr.bf16.mxu0 %v4914
        %7512 = vmatpush1.bf16.msra.mxu0 %v4913
        %7513 = vmatprep.subr.bf16.mxu0 %v4918
        %7514 = vmatpush1.bf16.msra.mxu0 %v4917
        %7515 = vmatprep.subr.bf16.mxu0 %v4922
        %7516 = vmatpush1.bf16.msra.mxu0 %v4921
        %7517 = vmatprep.subr.bf16.mxu0 %v4926
        %7518 = vmatpush1.bf16.msra.mxu0 %v4925
        %7519 = vmatprep.subr.bf16.mxu0 %v4930
        %7520 = vmatpush1.bf16.msra.mxu0 %v4929
        %7521 = vmatprep.subr.bf16.mxu0 %v4934
        %7522 = vmatpush1.bf16.msra.mxu0 %v4933
        %7523 = vmatprep.subr.bf16.mxu0 %v4938
        %7524 = vmatpush1.bf16.msra.mxu0 %v4937
        %7525 = vmatprep.subr.bf16.mxu0 %v4942
        %7526 = vmatpush1.bf16.msra.mxu0 %v4941
        %7527 = vmatprep.subr.bf16.mxu0 %v4946
        %7528 = vmatpush1.bf16.msra.mxu0 %v4945
        %7529 = vmatprep.subr.bf16.mxu0 %v4950
        %7530 = vmatpush1.bf16.msra.mxu0 %v4949
        %7531 = vmatprep.mubr.bf16.mxu0 %v1504
        %7532 = vmatmul.mubr.bf16.gmra.mrb[0].mxu0 %v1503
        %v7533 = vpop.f32.mrb[0].mxu0
        %v7534 = vadd.f32 %v7493, %v7533
        %v7535 = vpop.f32.mrb[0].mxu0
        %v7536 = vadd.f32 %v7495, %v7535
        %v7537 = vpop.f32.mrb[0].mxu0
        %v7538 = vpop.f32.mrb[0].mxu0
        %7539 = vdwg.mxu0
        %7540 = vmatprep.subr.bf16.mxu0 %v4954
        %7541 = vmatpush1.bf16.msra.mxu0 %v4953
        %7542 = vmatprep.subr.bf16.mxu0 %v4958
        %7543 = vmatpush1.bf16.msra.mxu0 %v4957
        %7544 = vmatprep.subr.bf16.mxu0 %v4962
        %7545 = vmatpush1.bf16.msra.mxu0 %v4961
        %7546 = vmatprep.subr.bf16.mxu0 %v4966
        %7547 = vmatpush1.bf16.msra.mxu0 %v4965
        %7548 = vmatprep.subr.bf16.mxu0 %v4970
        %7549 = vmatpush1.bf16.msra.mxu0 %v4969
        %7550 = vmatprep.subr.bf16.mxu0 %v4974
        %7551 = vmatpush1.bf16.msra.mxu0 %v4973
        %7552 = vmatprep.subr.bf16.mxu0 %v4978
        %7553 = vmatpush1.bf16.msra.mxu0 %v4977
        %7554 = vmatprep.subr.bf16.mxu0 %v4982
        %7555 = vmatpush1.bf16.msra.mxu0 %v4981
        %7556 = vmatprep.subr.bf16.mxu0 %v4986
        %7557 = vmatpush1.bf16.msra.mxu0 %v4985
        %7558 = vmatprep.subr.bf16.mxu0 %v4990
        %7559 = vmatpush1.bf16.msra.mxu0 %v4989
        %7560 = vmatprep.subr.bf16.mxu0 %v4994
        %7561 = vmatpush1.bf16.msra.mxu0 %v4993
        %7562 = vmatprep.subr.bf16.mxu0 %v4998
        %7563 = vmatpush1.bf16.msra.mxu0 %v4997
        %7564 = vmatprep.subr.bf16.mxu0 %v5002
        %7565 = vmatpush1.bf16.msra.mxu0 %v5001
        %7566 = vmatprep.subr.bf16.mxu0 %v5006
        %7567 = vmatpush1.bf16.msra.mxu0 %v5005
        %7568 = vmatprep.subr.bf16.mxu0 %v5010
        %7569 = vmatpush1.bf16.msra.mxu0 %v5009
        %7570 = vmatprep.subr.bf16.mxu0 %v5014
        %7571 = vmatpush1.bf16.msra.mxu0 %v5013
        %7572 = vmatprep.mubr.bf16.mxu0 %v1506
        %7573 = vmatmul.mubr.bf16.gmra.mrb[0].mxu0 %v1505
        %v7574 = vpop.f32.mrb[0].mxu0
        %v7575 = vadd.f32 %v7534, %v7574
        %v7576 = vpop.f32.mrb[0].mxu0
        %v7577 = vadd.f32 %v7536, %v7576
        %v7578 = vpop.f32.mrb[0].mxu0
        %v7579 = vpop.f32.mrb[0].mxu0
        %7580 = vdwg.mxu0
        %7581 = vmatprep.subr.bf16.mxu0 %v5018
        %7582 = vmatpush1.bf16.msra.mxu0 %v5017
        %7583 = vmatprep.subr.bf16.mxu0 %v5022
        %7584 = vmatpush1.bf16.msra.mxu0 %v5021
        %7585 = vmatprep.subr.bf16.mxu0 %v5026
        %7586 = vmatpush1.bf16.msra.mxu0 %v5025
        %7587 = vmatprep.subr.bf16.mxu0 %v5030
        %7588 = vmatpush1.bf16.msra.mxu0 %v5029
        %7589 = vmatprep.subr.bf16.mxu0 %v5034
        %7590 = vmatpush1.bf16.msra.mxu0 %v5033
        %7591 = vmatprep.subr.bf16.mxu0 %v5038
        %7592 = vmatpush1.bf16.msra.mxu0 %v5037
        %7593 = vmatprep.subr.bf16.mxu0 %v5042
        %7594 = vmatpush1.bf16.msra.mxu0 %v5041
        %7595 = vmatprep.subr.bf16.mxu0 %v5046
        %7596 = vmatpush1.bf16.msra.mxu0 %v5045
        %7597 = vmatprep.subr.bf16.mxu0 %v5050
        %7598 = vmatpush1.bf16.msra.mxu0 %v5049
        %7599 = vmatprep.subr.bf16.mxu0 %v5054
        %7600 = vmatpush1.bf16.msra.mxu0 %v5053
        %7601 = vmatprep.subr.bf16.mxu0 %v5058
        %7602 = vmatpush1.bf16.msra.mxu0 %v5057
        %7603 = vmatprep.subr.bf16.mxu0 %v5062
        %7604 = vmatpush1.bf16.msra.mxu0 %v5061
        %7605 = vmatprep.subr.bf16.mxu0 %v5066
        %7606 = vmatpush1.bf16.msra.mxu0 %v5065
        %7607 = vmatprep.subr.bf16.mxu0 %v5070
        %7608 = vmatpush1.bf16.msra.mxu0 %v5069
        %7609 = vmatprep.subr.bf16.mxu0 %v5074
        %7610 = vmatpush1.bf16.msra.mxu0 %v5073
        %7611 = vmatprep.subr.bf16.mxu0 %v5078
        %7612 = vmatpush1.bf16.msra.mxu0 %v5077
        %7613 = vmatprep.mubr.bf16.mxu0 %v1508
        %7614 = vmatmul.mubr.bf16.gmra.mrb[0].mxu0 %v1507
        %v7615 = vpop.f32.mrb[0].mxu0
        %v7616 = vadd.f32 %v7575, %v7615
        %v7617 = vpop.f32.mrb[0].mxu0
        %v7618 = vadd.f32 %v7577, %v7617
        %v7619 = vpop.f32.mrb[0].mxu0
        %v7620 = vpop.f32.mrb[0].mxu0
        %7621 = vdwg.mxu0
        %7622 = vmatprep.subr.bf16.mxu0 %v5082
        %7623 = vmatpush1.bf16.msra.mxu0 %v5081
        %7624 = vmatprep.subr.bf16.mxu0 %v5086
        %7625 = vmatpush1.bf16.msra.mxu0 %v5085
        %7626 = vmatprep.subr.bf16.mxu0 %v5090
        %7627 = vmatpush1.bf16.msra.mxu0 %v5089
        %7628 = vmatprep.subr.bf16.mxu0 %v5094
        %7629 = vmatpush1.bf16.msra.mxu0 %v5093
        %7630 = vmatprep.subr.bf16.mxu0 %v5098
        %7631 = vmatpush1.bf16.msra.mxu0 %v5097
        %7632 = vmatprep.subr.bf16.mxu0 %v5102
        %7633 = vmatpush1.bf16.msra.mxu0 %v5101
        %7634 = vmatprep.subr.bf16.mxu0 %v5106
        %7635 = vmatpush1.bf16.msra.mxu0 %v5105
        %7636 = vmatprep.subr.bf16.mxu0 %v5110
        %7637 = vmatpush1.bf16.msra.mxu0 %v5109
        %7638 = vmatprep.subr.bf16.mxu0 %v5114
        %7639 = vmatpush1.bf16.msra.mxu0 %v5113
        %7640 = vmatprep.subr.bf16.mxu0 %v5118
        %7641 = vmatpush1.bf16.msra.mxu0 %v5117
        %7642 = vmatprep.subr.bf16.mxu0 %v5122
        %7643 = vmatpush1.bf16.msra.mxu0 %v5121
        %7644 = vmatprep.subr.bf16.mxu0 %v5126
        %7645 = vmatpush1.bf16.msra.mxu0 %v5125
        %7646 = vmatprep.subr.bf16.mxu0 %v5130
        %7647 = vmatpush1.bf16.msra.mxu0 %v5129
        %7648 = vmatprep.subr.bf16.mxu0 %v5134
        %7649 = vmatpush1.bf16.msra.mxu0 %v5133
        %7650 = vmatprep.subr.bf16.mxu0 %v5138
        %7651 = vmatpush1.bf16.msra.mxu0 %v5137
        %7652 = vmatprep.subr.bf16.mxu0 %v5142
        %7653 = vmatpush1.bf16.msra.mxu0 %v5141
        %7654 = vmatprep.mubr.bf16.mxu0 %v1510
        %7655 = vmatmul.mubr.bf16.gmra.mrb[0].mxu0 %v1509
        %v7656 = vpop.f32.mrb[0].mxu0
        %v7657 = vadd.f32 %v7616, %v7656
        %v7658 = vpop.f32.mrb[0].mxu0
        %v7659 = vadd.f32 %v7618, %v7658
        %v7660 = vpop.f32.mrb[0].mxu0
        %v7661 = vpop.f32.mrb[0].mxu0
        %7662 = vdwg.mxu0
        %7663 = vmatprep.subr.bf16.mxu0 %v5146
        %7664 = vmatpush1.bf16.msra.mxu0 %v5145
        %7665 = vmatprep.subr.bf16.mxu0 %v5150
        %7666 = vmatpush1.bf16.msra.mxu0 %v5149
        %7667 = vmatprep.subr.bf16.mxu0 %v5154
        %7668 = vmatpush1.bf16.msra.mxu0 %v5153
        %7669 = vmatprep.subr.bf16.mxu0 %v5158
        %7670 = vmatpush1.bf16.msra.mxu0 %v5157
        %7671 = vmatprep.subr.bf16.mxu0 %v5162
        %7672 = vmatpush1.bf16.msra.mxu0 %v5161
        %7673 = vmatprep.subr.bf16.mxu0 %v5166
        %7674 = vmatpush1.bf16.msra.mxu0 %v5165
        %7675 = vmatprep.subr.bf16.mxu0 %v5170
        %7676 = vmatpush1.bf16.msra.mxu0 %v5169
        %7677 = vmatprep.subr.bf16.mxu0 %v5174
        %7678 = vmatpush1.bf16.msra.mxu0 %v5173
        %7679 = vmatprep.subr.bf16.mxu0 %v5178
        %7680 = vmatpush1.bf16.msra.mxu0 %v5177
        %7681 = vmatprep.subr.bf16.mxu0 %v5182
        %7682 = vmatpush1.bf16.msra.mxu0 %v5181
        %7683 = vmatprep.subr.bf16.mxu0 %v5186
        %7684 = vmatpush1.bf16.msra.mxu0 %v5185
        %7685 = vmatprep.subr.bf16.mxu0 %v5190
        %7686 = vmatpush1.bf16.msra.mxu0 %v5189
        %7687 = vmatprep.subr.bf16.mxu0 %v5194
        %7688 = vmatpush1.bf16.msra.mxu0 %v5193
        %7689 = vmatprep.subr.bf16.mxu0 %v5198
        %7690 = vmatpush1.bf16.msra.mxu0 %v5197
        %7691 = vmatprep.subr.bf16.mxu0 %v5202
        %7692 = vmatpush1.bf16.msra.mxu0 %v5201
        %7693 = vmatprep.subr.bf16.mxu0 %v5206
        %7694 = vmatpush1.bf16.msra.mxu0 %v5205
        %7695 = vmatprep.mubr.bf16.mxu0 %v1512
        %7696 = vmatmul.mubr.bf16.gmra.mrb[0].mxu0 %v1511
        %v7697 = vpop.f32.mrb[0].mxu0
        %v7698 = vadd.f32 %v7657, %v7697
        %v7699 = vpop.f32.mrb[0].mxu0
        %v7700 = vadd.f32 %v7659, %v7699
        %v7701 = vpop.f32.mrb[0].mxu0
        %v7702 = vpop.f32.mrb[0].mxu0
        %7703 = vdwg.mxu0
        %7704 = vmatprep.subr.bf16.mxu0 %v5210
        %7705 = vmatpush1.bf16.msra.mxu0 %v5209
        %7706 = vmatprep.subr.bf16.mxu0 %v5214
        %7707 = vmatpush1.bf16.msra.mxu0 %v5213
        %7708 = vmatprep.subr.bf16.mxu0 %v5218
        %7709 = vmatpush1.bf16.msra.mxu0 %v5217
        %7710 = vmatprep.subr.bf16.mxu0 %v5222
        %7711 = vmatpush1.bf16.msra.mxu0 %v5221
        %7712 = vmatprep.subr.bf16.mxu0 %v5226
        %7713 = vmatpush1.bf16.msra.mxu0 %v5225
        %7714 = vmatprep.subr.bf16.mxu0 %v5230
        %7715 = vmatpush1.bf16.msra.mxu0 %v5229
        %7716 = vmatprep.subr.bf16.mxu0 %v5234
        %7717 = vmatpush1.bf16.msra.mxu0 %v5233
        %7718 = vmatprep.subr.bf16.mxu0 %v5238
        %7719 = vmatpush1.bf16.msra.mxu0 %v5237
        %7720 = vmatprep.subr.bf16.mxu0 %v5242
        %7721 = vmatpush1.bf16.msra.mxu0 %v5241
        %7722 = vmatprep.subr.bf16.mxu0 %v5246
        %7723 = vmatpush1.bf16.msra.mxu0 %v5245
        %7724 = vmatprep.subr.bf16.mxu0 %v5250
        %7725 = vmatpush1.bf16.msra.mxu0 %v5249
        %7726 = vmatprep.subr.bf16.mxu0 %v5254
        %7727 = vmatpush1.bf16.msra.mxu0 %v5253
        %7728 = vmatprep.subr.bf16.mxu0 %v5258
        %7729 = vmatpush1.bf16.msra.mxu0 %v5257
        %7730 = vmatprep.subr.bf16.mxu0 %v5262
        %7731 = vmatpush1.bf16.msra.mxu0 %v5261
        %7732 = vmatprep.subr.bf16.mxu0 %v5266
        %7733 = vmatpush1.bf16.msra.mxu0 %v5265
        %7734 = vmatprep.subr.bf16.mxu0 %v5270
        %7735 = vmatpush1.bf16.msra.mxu0 %v5269
        %7736 = vmatprep.mubr.bf16.mxu0 %v1514
        %7737 = vmatmul.mubr.bf16.gmra.mrb[0].mxu0 %v1513
        %v7738 = vpop.f32.mrb[0].mxu0
        %v7739 = vadd.f32 %v7698, %v7738
        %v7740 = vpop.f32.mrb[0].mxu0
        %v7741 = vadd.f32 %v7700, %v7740
        %v7742 = vpop.f32.mrb[0].mxu0
        %v7743 = vpop.f32.mrb[0].mxu0
        %7744 = vdwg.mxu0
        %7745 = vmatprep.subr.bf16.mxu0 %v5274
        %7746 = vmatpush1.bf16.msra.mxu0 %v5273
        %7747 = vmatprep.subr.bf16.mxu0 %v5278
        %7748 = vmatpush1.bf16.msra.mxu0 %v5277
        %7749 = vmatprep.subr.bf16.mxu0 %v5282
        %7750 = vmatpush1.bf16.msra.mxu0 %v5281
        %7751 = vmatprep.subr.bf16.mxu0 %v5286
        %7752 = vmatpush1.bf16.msra.mxu0 %v5285
        %7753 = vmatprep.subr.bf16.mxu0 %v5290
        %7754 = vmatpush1.bf16.msra.mxu0 %v5289
        %7755 = vmatprep.subr.bf16.mxu0 %v5294
        %7756 = vmatpush1.bf16.msra.mxu0 %v5293
        %7757 = vmatprep.subr.bf16.mxu0 %v5298
        %7758 = vmatpush1.bf16.msra.mxu0 %v5297
        %7759 = vmatprep.subr.bf16.mxu0 %v5302
        %7760 = vmatpush1.bf16.msra.mxu0 %v5301
        %7761 = vmatprep.subr.bf16.mxu0 %v5306
        %7762 = vmatpush1.bf16.msra.mxu0 %v5305
        %7763 = vmatprep.subr.bf16.mxu0 %v5310
        %7764 = vmatpush1.bf16.msra.mxu0 %v5309
        %7765 = vmatprep.subr.bf16.mxu0 %v5314
        %7766 = vmatpush1.bf16.msra.mxu0 %v5313
        %7767 = vmatprep.subr.bf16.mxu0 %v5318
        %7768 = vmatpush1.bf16.msra.mxu0 %v5317
        %7769 = vmatprep.subr.bf16.mxu0 %v5322
        %7770 = vmatpush1.bf16.msra.mxu0 %v5321
        %7771 = vmatprep.subr.bf16.mxu0 %v5326
        %7772 = vmatpush1.bf16.msra.mxu0 %v5325
        %7773 = vmatprep.subr.bf16.mxu0 %v5330
        %7774 = vmatpush1.bf16.msra.mxu0 %v5329
        %7775 = vmatprep.subr.bf16.mxu0 %v5334
        %7776 = vmatpush1.bf16.msra.mxu0 %v5333
        %7777 = vmatprep.mubr.bf16.mxu0 %v1516
        %7778 = vmatmul.mubr.bf16.gmra.mrb[0].mxu0 %v1515
        %v7779 = vpop.f32.mrb[0].mxu0
        %v7780 = vadd.f32 %v7739, %v7779
        %v7781 = vpop.f32.mrb[0].mxu0
        %v7782 = vadd.f32 %v7741, %v7781
        %v7783 = vpop.f32.mrb[0].mxu0
        %v7784 = vpop.f32.mrb[0].mxu0
        %7785 = vdwg.mxu0
        %7786 = vmatprep.subr.bf16.mxu0 %v5338
        %7787 = vmatpush1.bf16.msra.mxu0 %v5337
        %7788 = vmatprep.subr.bf16.mxu0 %v5342
        %7789 = vmatpush1.bf16.msra.mxu0 %v5341
        %7790 = vmatprep.subr.bf16.mxu0 %v5346
        %7791 = vmatpush1.bf16.msra.mxu0 %v5345
        %7792 = vmatprep.subr.bf16.mxu0 %v5350
        %7793 = vmatpush1.bf16.msra.mxu0 %v5349
        %7794 = vmatprep.subr.bf16.mxu0 %v5354
        %7795 = vmatpush1.bf16.msra.mxu0 %v5353
        %7796 = vmatprep.subr.bf16.mxu0 %v5358
        %7797 = vmatpush1.bf16.msra.mxu0 %v5357
        %7798 = vmatprep.subr.bf16.mxu0 %v5362
        %7799 = vmatpush1.bf16.msra.mxu0 %v5361
        %7800 = vmatprep.subr.bf16.mxu0 %v5366
        %7801 = vmatpush1.bf16.msra.mxu0 %v5365
        %7802 = vmatprep.subr.bf16.mxu0 %v5370
        %7803 = vmatpush1.bf16.msra.mxu0 %v5369
        %7804 = vmatprep.subr.bf16.mxu0 %v5374
        %7805 = vmatpush1.bf16.msra.mxu0 %v5373
        %7806 = vmatprep.subr.bf16.mxu0 %v5378
        %7807 = vmatpush1.bf16.msra.mxu0 %v5377
        %7808 = vmatprep.subr.bf16.mxu0 %v5382
        %7809 = vmatpush1.bf16.msra.mxu0 %v5381
        %7810 = vmatprep.subr.bf16.mxu0 %v5386
        %7811 = vmatpush1.bf16.msra.mxu0 %v5385
        %7812 = vmatprep.subr.bf16.mxu0 %v5390
        %7813 = vmatpush1.bf16.msra.mxu0 %v5389
        %7814 = vmatprep.subr.bf16.mxu0 %v5394
        %7815 = vmatpush1.bf16.msra.mxu0 %v5393
        %7816 = vmatprep.subr.bf16.mxu0 %v5398
        %7817 = vmatpush1.bf16.msra.mxu0 %v5397
        %7818 = vmatprep.mubr.bf16.mxu0 %v1518
        %7819 = vmatmul.mubr.bf16.gmra.mrb[0].mxu0 %v1517
        %v7820 = vpop.f32.mrb[0].mxu0
        %v7821 = vadd.f32 %v7780, %v7820
        %v7822 = vpop.f32.mrb[0].mxu0
        %v7823 = vadd.f32 %v7782, %v7822
        %v7824 = vpop.f32.mrb[0].mxu0
        %v7825 = vpop.f32.mrb[0].mxu0
        %7826 = vdwg.mxu0
        %7827 = vmatprep.subr.bf16.mxu0 %v5402
        %7828 = vmatpush1.bf16.msra.mxu0 %v5401
        %7829 = vmatprep.subr.bf16.mxu0 %v5406
        %7830 = vmatpush1.bf16.msra.mxu0 %v5405
        %7831 = vmatprep.subr.bf16.mxu0 %v5410
        %7832 = vmatpush1.bf16.msra.mxu0 %v5409
        %7833 = vmatprep.subr.bf16.mxu0 %v5414
        %7834 = vmatpush1.bf16.msra.mxu0 %v5413
        %7835 = vmatprep.subr.bf16.mxu0 %v5418
        %7836 = vmatpush1.bf16.msra.mxu0 %v5417
        %7837 = vmatprep.subr.bf16.mxu0 %v5422
        %7838 = vmatpush1.bf16.msra.mxu0 %v5421
        %7839 = vmatprep.subr.bf16.mxu0 %v5426
        %7840 = vmatpush1.bf16.msra.mxu0 %v5425
        %7841 = vmatprep.subr.bf16.mxu0 %v5430
        %7842 = vmatpush1.bf16.msra.mxu0 %v5429
        %7843 = vmatprep.subr.bf16.mxu0 %v5434
        %7844 = vmatpush1.bf16.msra.mxu0 %v5433
        %7845 = vmatprep.subr.bf16.mxu0 %v5438
        %7846 = vmatpush1.bf16.msra.mxu0 %v5437
        %7847 = vmatprep.subr.bf16.mxu0 %v5442
        %7848 = vmatpush1.bf16.msra.mxu0 %v5441
        %7849 = vmatprep.subr.bf16.mxu0 %v5446
        %7850 = vmatpush1.bf16.msra.mxu0 %v5445
        %7851 = vmatprep.subr.bf16.mxu0 %v5450
        %7852 = vmatpush1.bf16.msra.mxu0 %v5449
        %7853 = vmatprep.subr.bf16.mxu0 %v5454
        %7854 = vmatpush1.bf16.msra.mxu0 %v5453
        %7855 = vmatprep.subr.bf16.mxu0 %v5458
        %7856 = vmatpush1.bf16.msra.mxu0 %v5457
        %7857 = vmatprep.subr.bf16.mxu0 %v5462
        %7858 = vmatpush1.bf16.msra.mxu0 %v5461
        %7859 = vmatprep.mubr.bf16.mxu0 %v1520
        %7860 = vmatmul.mubr.bf16.gmra.mrb[0].mxu0 %v1519
        %v7861 = vpop.f32.mrb[0].mxu0
        %v7862 = vadd.f32 %v7821, %v7861
        %v7863 = vpop.f32.mrb[0].mxu0
        %v7864 = vadd.f32 %v7823, %v7863
        %v7865 = vpop.f32.mrb[0].mxu0
        %v7866 = vpop.f32.mrb[0].mxu0
        %7867 = vdwg.mxu0
        %7868 = vmatprep.subr.bf16.mxu0 %v5466
        %7869 = vmatpush1.bf16.msra.mxu0 %v5465
        %7870 = vmatprep.subr.bf16.mxu0 %v5470
        %7871 = vmatpush1.bf16.msra.mxu0 %v5469
        %7872 = vmatprep.subr.bf16.mxu0 %v5474
        %7873 = vmatpush1.bf16.msra.mxu0 %v5473
        %7874 = vmatprep.subr.bf16.mxu0 %v5478
        %7875 = vmatpush1.bf16.msra.mxu0 %v5477
        %7876 = vmatprep.subr.bf16.mxu0 %v5482
        %7877 = vmatpush1.bf16.msra.mxu0 %v5481
        %7878 = vmatprep.subr.bf16.mxu0 %v5486
        %7879 = vmatpush1.bf16.msra.mxu0 %v5485
        %7880 = vmatprep.subr.bf16.mxu0 %v5490
        %7881 = vmatpush1.bf16.msra.mxu0 %v5489
        %7882 = vmatprep.subr.bf16.mxu0 %v5494
        %7883 = vmatpush1.bf16.msra.mxu0 %v5493
        %7884 = vmatprep.subr.bf16.mxu0 %v5498
        %7885 = vmatpush1.bf16.msra.mxu0 %v5497
        %7886 = vmatprep.subr.bf16.mxu0 %v5502
        %7887 = vmatpush1.bf16.msra.mxu0 %v5501
        %7888 = vmatprep.subr.bf16.mxu0 %v5506
        %7889 = vmatpush1.bf16.msra.mxu0 %v5505
        %7890 = vmatprep.subr.bf16.mxu0 %v5510
        %7891 = vmatpush1.bf16.msra.mxu0 %v5509
        %7892 = vmatprep.subr.bf16.mxu0 %v5514
        %7893 = vmatpush1.bf16.msra.mxu0 %v5513
        %7894 = vmatprep.subr.bf16.mxu0 %v5518
        %7895 = vmatpush1.bf16.msra.mxu0 %v5517
        %7896 = vmatprep.subr.bf16.mxu0 %v5522
        %7897 = vmatpush1.bf16.msra.mxu0 %v5521
        %7898 = vmatprep.subr.bf16.mxu0 %v5526
        %7899 = vmatpush1.bf16.msra.mxu0 %v5525
        %7900 = vmatprep.mubr.bf16.mxu0 %v1522
        %7901 = vmatmul.mubr.bf16.gmra.mrb[0].mxu0 %v1521
        %v7902 = vpop.f32.mrb[0].mxu0
        %v7903 = vadd.f32 %v7862, %v7902
        %v7904 = vpop.f32.mrb[0].mxu0
        %v7905 = vadd.f32 %v7864, %v7904
        %v7906 = vpop.f32.mrb[0].mxu0
        %v7907 = vpop.f32.mrb[0].mxu0
        %7908 = vdwg.mxu0
        %7909 = vmatprep.subr.bf16.mxu0 %v5530
        %7910 = vmatpush1.bf16.msra.mxu0 %v5529
        %7911 = vmatprep.subr.bf16.mxu0 %v5534
        %7912 = vmatpush1.bf16.msra.mxu0 %v5533
        %7913 = vmatprep.subr.bf16.mxu0 %v5538
        %7914 = vmatpush1.bf16.msra.mxu0 %v5537
        %7915 = vmatprep.subr.bf16.mxu0 %v5542
        %7916 = vmatpush1.bf16.msra.mxu0 %v5541
        %7917 = vmatprep.subr.bf16.mxu0 %v5546
        %7918 = vmatpush1.bf16.msra.mxu0 %v5545
        %7919 = vmatprep.subr.bf16.mxu0 %v5550
        %7920 = vmatpush1.bf16.msra.mxu0 %v5549
        %7921 = vmatprep.subr.bf16.mxu0 %v5554
        %7922 = vmatpush1.bf16.msra.mxu0 %v5553
        %7923 = vmatprep.subr.bf16.mxu0 %v5558
        %7924 = vmatpush1.bf16.msra.mxu0 %v5557
        %7925 = vmatprep.subr.bf16.mxu0 %v5562
        %7926 = vmatpush1.bf16.msra.mxu0 %v5561
        %7927 = vmatprep.subr.bf16.mxu0 %v5566
        %7928 = vmatpush1.bf16.msra.mxu0 %v5565
        %7929 = vmatprep.subr.bf16.mxu0 %v5570
        %7930 = vmatpush1.bf16.msra.mxu0 %v5569
        %7931 = vmatprep.subr.bf16.mxu0 %v5574
        %7932 = vmatpush1.bf16.msra.mxu0 %v5573
        %7933 = vmatprep.subr.bf16.mxu0 %v5578
        %7934 = vmatpush1.bf16.msra.mxu0 %v5577
        %7935 = vmatprep.subr.bf16.mxu0 %v5582
        %7936 = vmatpush1.bf16.msra.mxu0 %v5581
        %7937 = vmatprep.subr.bf16.mxu0 %v5586
        %7938 = vmatpush1.bf16.msra.mxu0 %v5585
        %7939 = vmatprep.subr.bf16.mxu0 %v5590
        %7940 = vmatpush1.bf16.msra.mxu0 %v5589
        %7941 = vmatprep.mubr.bf16.mxu0 %v1524
        %7942 = vmatmul.mubr.bf16.gmra.mrb[0].mxu0 %v1523
        %v7943 = vpop.f32.mrb[0].mxu0
        %v7944 = vadd.f32 %v7903, %v7943
        %v7945 = vpop.f32.mrb[0].mxu0
        %v7946 = vadd.f32 %v7905, %v7945
        %v7947 = vpop.f32.mrb[0].mxu0
        %v7948 = vpop.f32.mrb[0].mxu0
        %7949 = vdwg.mxu0
        %7950 = vmatprep.subr.bf16.mxu0 %v5594
        %7951 = vmatpush1.bf16.msra.mxu0 %v5593
        %7952 = vmatprep.subr.bf16.mxu0 %v5598
        %7953 = vmatpush1.bf16.msra.mxu0 %v5597
        %7954 = vmatprep.subr.bf16.mxu0 %v5602
        %7955 = vmatpush1.bf16.msra.mxu0 %v5601
        %7956 = vmatprep.subr.bf16.mxu0 %v5606
        %7957 = vmatpush1.bf16.msra.mxu0 %v5605
        %7958 = vmatprep.subr.bf16.mxu0 %v5610
        %7959 = vmatpush1.bf16.msra.mxu0 %v5609
        %7960 = vmatprep.subr.bf16.mxu0 %v5614
        %7961 = vmatpush1.bf16.msra.mxu0 %v5613
        %7962 = vmatprep.subr.bf16.mxu0 %v5618
        %7963 = vmatpush1.bf16.msra.mxu0 %v5617
        %7964 = vmatprep.subr.bf16.mxu0 %v5622
        %7965 = vmatpush1.bf16.msra.mxu0 %v5621
        %7966 = vmatprep.subr.bf16.mxu0 %v5626
        %7967 = vmatpush1.bf16.msra.mxu0 %v5625
        %7968 = vmatprep.subr.bf16.mxu0 %v5630
        %7969 = vmatpush1.bf16.msra.mxu0 %v5629
        %7970 = vmatprep.subr.bf16.mxu0 %v5634
        %7971 = vmatpush1.bf16.msra.mxu0 %v5633
        %7972 = vmatprep.subr.bf16.mxu0 %v5638
        %7973 = vmatpush1.bf16.msra.mxu0 %v5637
        %7974 = vmatprep.subr.bf16.mxu0 %v5642
        %7975 = vmatpush1.bf16.msra.mxu0 %v5641
        %7976 = vmatprep.subr.bf16.mxu0 %v5646
        %7977 = vmatpush1.bf16.msra.mxu0 %v5645
        %7978 = vmatprep.subr.bf16.mxu0 %v5650
        %7979 = vmatpush1.bf16.msra.mxu0 %v5649
        %7980 = vmatprep.subr.bf16.mxu0 %v5654
        %7981 = vmatpush1.bf16.msra.mxu0 %v5653
        %7982 = vmatprep.mubr.bf16.mxu0 %v1526
        %7983 = vmatmul.mubr.bf16.gmra.mrb[0].mxu0 %v1525
        %v7984 = vpop.f32.mrb[0].mxu0
        %v7985 = vadd.f32 %v7944, %v7984
        %v7986 = vpop.f32.mrb[0].mxu0
        %v7987 = vadd.f32 %v7946, %v7986
        %v7988 = vpop.f32.mrb[0].mxu0
        %v7989 = vpop.f32.mrb[0].mxu0
        %7990 = vdwg.mxu0
        %v7991 = vadd.f32 %v403, %v7329
        %v7992 = vadd.f32 %v404, %v7331
        %v7993 = vadd.f32 %v405, %v7985
        %v7994 = vadd.f32 %v406, %v7987
        %7995 = vst [vmem:[#allocation2] sm:$0xff] %v7991
        %7996 = vst [vmem:[#allocation2 + $0x8] sm:$0xff] %v7992
        %7997 = vst [vmem:[#allocation2 + $0x10] sm:$0xff] %v7993
        %7998 = vst [vmem:[#allocation2 + $0x18] sm:$0xff] %v7994
        %p7999 = scmp.eq.s32.totalorder %s32, 2
        // Predicated region
        $region73: #{tpu_custom_call.1} parent=47 // pred_check
          %p8000 = pneg %p7999
        $region74: #{tpu_custom_call.1} parent=47 // pred_check_branch
          %8002 = sbr.rel (%p8000) target = $region76
        $region75: #{tpu_custom_call.1} parent=47 // pred_region
          %v8003 = vld [vmem:[#allocation2] sm:$0xff]
          %v8004 = vld [vmem:[#allocation2 + $0x8] sm:$0xff]
          %v8005 = vld [vmem:[#allocation2 + $0x10] sm:$0xff]
          %v8006 = vld [vmem:[#allocation2 + $0x18] sm:$0xff]
          %v8007 = vld [vmem:[#allocation8] sm:$0xf]
          %v8009 = vlaneseq
          %v8010 = vshrl.u32 %v8009, 7
          %v8011 = vsub.s32 0, %v8010
          %v8012 = vrot.slane %v8007, %v8011
          %v8013 = vlaneseq
          %v8014 = vshrl.u32 %v8013, 7
          %v8015 = vsub.s32 1, %v8014
          %v8016 = vrot.slane %v8007, %v8015
          %v8017 = vlaneseq
          %v8018 = vshrl.u32 %v8017, 7
          %v8019 = vsub.s32 2, %v8018
          %v8020 = vrot.slane %v8007, %v8019
          %v8021 = vlaneseq
          %v8022 = vshrl.u32 %v8021, 7
          %v8023 = vsub.s32 3, %v8022
          %v8024 = vrot.slane %v8007, %v8023
          %v8029 = vadd.f32 %v8003, %v8012
          %v8030 = vadd.f32 %v8004, %v8016
          %v8031 = vadd.f32 %v8005, %v8020
          %v8032 = vadd.f32 %v8006, %v8024
          %vm8033 = vcmp.gt.f32.partialorder %v8029, 0.0
          %vm8034 = vcmp.gt.f32.partialorder %v8030, 0.0
          %vm8035 = vcmp.gt.f32.partialorder %v8031, 0.0
          %vm8036 = vcmp.gt.f32.partialorder %v8032, 0.0
          %v8037 = vmul.f32 %v8029, 0.2
          %v8038 = vmul.f32 %v8030, 0.2
          %v8039 = vmul.f32 %v8031, 0.2
          %v8040 = vmul.f32 %v8032, 0.2
          %v8041 = vsel %vm8033, %v8029, %v8037
          %v8042 = vsel %vm8034, %v8030, %v8038
          %v8043 = vsel %vm8035, %v8031, %v8039
          %v8044 = vsel %vm8036, %v8032, %v8040
          %v8045 = vld [vmem:[#allocation9] sm:$0xff]
          %v8046 = vld [vmem:[#allocation9 + $0x8] sm:$0xff]
          %v8047 = vld [vmem:[#allocation9 + $0x10] sm:$0xff]
          %v8048 = vld [vmem:[#allocation9 + $0x18] sm:$0xff]
          %v8049 = vld [vmem:[#allocation9 + $0x20] sm:$0xff]
          %v8050 = vld [vmem:[#allocation9 + $0x28] sm:$0xff]
          %v8051 = vld [vmem:[#allocation9 + $0x30] sm:$0xff]
          %v8052 = vld [vmem:[#allocation9 + $0x38] sm:$0xff]
          %v8053 = vld [vmem:[#allocation9 + $0x40] sm:$0xff]
          %v8054 = vld [vmem:[#allocation9 + $0x48] sm:$0xff]
          %v8055 = vld [vmem:[#allocation9 + $0x50] sm:$0xff]
          %v8056 = vld [vmem:[#allocation9 + $0x58] sm:$0xff]
          %v8057 = vld [vmem:[#allocation9 + $0x60] sm:$0xff]
          %v8058 = vld [vmem:[#allocation9 + $0x68] sm:$0xff]
          %v8059 = vld [vmem:[#allocation9 + $0x70] sm:$0xff]
          %v8060 = vld [vmem:[#allocation9 + $0x78] sm:$0xff]
          %v8061 = vld [vmem:[#allocation9 + $0x80] sm:$0xff]
          %v8062 = vld [vmem:[#allocation9 + $0x88] sm:$0xff]
          %v8063 = vld [vmem:[#allocation9 + $0x90] sm:$0xff]
          %v8064 = vld [vmem:[#allocation9 + $0x98] sm:$0xff]
          %v8065 = vld [vmem:[#allocation9 + $0xa0] sm:$0xff]
          %v8066 = vld [vmem:[#allocation9 + $0xa8] sm:$0xff]
          %v8067 = vld [vmem:[#allocation9 + $0xb0] sm:$0xff]
          %v8068 = vld [vmem:[#allocation9 + $0xb8] sm:$0xff]
          %v8069 = vld [vmem:[#allocation9 + $0xc0] sm:$0xff]
          %v8070 = vld [vmem:[#allocation9 + $0xc8] sm:$0xff]
          %v8071 = vld [vmem:[#allocation9 + $0xd0] sm:$0xff]
          %v8072 = vld [vmem:[#allocation9 + $0xd8] sm:$0xff]
          %v8073 = vld [vmem:[#allocation9 + $0xe0] sm:$0xff]
          %v8074 = vld [vmem:[#allocation9 + $0xe8] sm:$0xff]
          %v8075 = vld [vmem:[#allocation9 + $0xf0] sm:$0xff]
          %v8076 = vld [vmem:[#allocation9 + $0xf8] sm:$0xff]
          %v8077 = vld [vmem:[#allocation9 + $0x100] sm:$0xff]
          %v8078 = vld [vmem:[#allocation9 + $0x108] sm:$0xff]
          %v8079 = vld [vmem:[#allocation9 + $0x110] sm:$0xff]
          %v8080 = vld [vmem:[#allocation9 + $0x118] sm:$0xff]
          %v8081 = vld [vmem:[#allocation9 + $0x120] sm:$0xff]
          %v8082 = vld [vmem:[#allocation9 + $0x128] sm:$0xff]
          %v8083 = vld [vmem:[#allocation9 + $0x130] sm:$0xff]
          %v8084 = vld [vmem:[#allocation9 + $0x138] sm:$0xff]
          %v8085 = vld [vmem:[#allocation9 + $0x140] sm:$0xff]
          %v8086 = vld [vmem:[#allocation9 + $0x148] sm:$0xff]
          %v8087 = vld [vmem:[#allocation9 + $0x150] sm:$0xff]
          %v8088 = vld [vmem:[#allocation9 + $0x158] sm:$0xff]
          %v8089 = vld [vmem:[#allocation9 + $0x160] sm:$0xff]
          %v8090 = vld [vmem:[#allocation9 + $0x168] sm:$0xff]
          %v8091 = vld [vmem:[#allocation9 + $0x170] sm:$0xff]
          %v8092 = vld [vmem:[#allocation9 + $0x178] sm:$0xff]
          %v8093 = vld [vmem:[#allocation9 + $0x180] sm:$0xff]
          %v8094 = vld [vmem:[#allocation9 + $0x188] sm:$0xff]
          %v8095 = vld [vmem:[#allocation9 + $0x190] sm:$0xff]
          %v8096 = vld [vmem:[#allocation9 + $0x198] sm:$0xff]
          %v8097 = vld [vmem:[#allocation9 + $0x1a0] sm:$0xff]
          %v8098 = vld [vmem:[#allocation9 + $0x1a8] sm:$0xff]
          %v8099 = vld [vmem:[#allocation9 + $0x1b0] sm:$0xff]
          %v8100 = vld [vmem:[#allocation9 + $0x1b8] sm:$0xff]
          %v8101 = vld [vmem:[#allocation9 + $0x1c0] sm:$0xff]
          %v8102 = vld [vmem:[#allocation9 + $0x1c8] sm:$0xff]
          %v8103 = vld [vmem:[#allocation9 + $0x1d0] sm:$0xff]
          %v8104 = vld [vmem:[#allocation9 + $0x1d8] sm:$0xff]
          %v8105 = vld [vmem:[#allocation9 + $0x1e0] sm:$0xff]
          %v8106 = vld [vmem:[#allocation9 + $0x1e8] sm:$0xff]
          %v8107 = vld [vmem:[#allocation9 + $0x1f0] sm:$0xff]
          %v8108 = vld [vmem:[#allocation9 + $0x1f8] sm:$0xff]
          %v8109 = vld [vmem:[#allocation9 + $0x200] sm:$0xff]
          %v8110 = vld [vmem:[#allocation9 + $0x208] sm:$0xff]
          %v8111 = vld [vmem:[#allocation9 + $0x210] sm:$0xff]
          %v8112 = vld [vmem:[#allocation9 + $0x218] sm:$0xff]
          %v8113 = vld [vmem:[#allocation9 + $0x220] sm:$0xff]
          %v8114 = vld [vmem:[#allocation9 + $0x228] sm:$0xff]
          %v8115 = vld [vmem:[#allocation9 + $0x230] sm:$0xff]
          %v8116 = vld [vmem:[#allocation9 + $0x238] sm:$0xff]
          %v8117 = vld [vmem:[#allocation9 + $0x240] sm:$0xff]
          %v8118 = vld [vmem:[#allocation9 + $0x248] sm:$0xff]
          %v8119 = vld [vmem:[#allocation9 + $0x250] sm:$0xff]
          %v8120 = vld [vmem:[#allocation9 + $0x258] sm:$0xff]
          %v8121 = vld [vmem:[#allocation9 + $0x260] sm:$0xff]
          %v8122 = vld [vmem:[#allocation9 + $0x268] sm:$0xff]
          %v8123 = vld [vmem:[#allocation9 + $0x270] sm:$0xff]
          %v8124 = vld [vmem:[#allocation9 + $0x278] sm:$0xff]
          %v8125 = vld [vmem:[#allocation9 + $0x280] sm:$0xff]
          %v8126 = vld [vmem:[#allocation9 + $0x288] sm:$0xff]
          %v8127 = vld [vmem:[#allocation9 + $0x290] sm:$0xff]
          %v8128 = vld [vmem:[#allocation9 + $0x298] sm:$0xff]
          %v8129 = vld [vmem:[#allocation9 + $0x2a0] sm:$0xff]
          %v8130 = vld [vmem:[#allocation9 + $0x2a8] sm:$0xff]
          %v8131 = vld [vmem:[#allocation9 + $0x2b0] sm:$0xff]
          %v8132 = vld [vmem:[#allocation9 + $0x2b8] sm:$0xff]
          %v8133 = vld [vmem:[#allocation9 + $0x2c0] sm:$0xff]
          %v8134 = vld [vmem:[#allocation9 + $0x2c8] sm:$0xff]
          %v8135 = vld [vmem:[#allocation9 + $0x2d0] sm:$0xff]
          %v8136 = vld [vmem:[#allocation9 + $0x2d8] sm:$0xff]
          %v8137 = vld [vmem:[#allocation9 + $0x2e0] sm:$0xff]
          %v8138 = vld [vmem:[#allocation9 + $0x2e8] sm:$0xff]
          %v8139 = vld [vmem:[#allocation9 + $0x2f0] sm:$0xff]
          %v8140 = vld [vmem:[#allocation9 + $0x2f8] sm:$0xff]
          %v8141 = vld [vmem:[#allocation9 + $0x300] sm:$0xff]
          %v8142 = vld [vmem:[#allocation9 + $0x308] sm:$0xff]
          %v8143 = vld [vmem:[#allocation9 + $0x310] sm:$0xff]
          %v8144 = vld [vmem:[#allocation9 + $0x318] sm:$0xff]
          %v8145 = vld [vmem:[#allocation9 + $0x320] sm:$0xff]
          %v8146 = vld [vmem:[#allocation9 + $0x328] sm:$0xff]
          %v8147 = vld [vmem:[#allocation9 + $0x330] sm:$0xff]
          %v8148 = vld [vmem:[#allocation9 + $0x338] sm:$0xff]
          %v8149 = vld [vmem:[#allocation9 + $0x340] sm:$0xff]
          %v8150 = vld [vmem:[#allocation9 + $0x348] sm:$0xff]
          %v8151 = vld [vmem:[#allocation9 + $0x350] sm:$0xff]
          %v8152 = vld [vmem:[#allocation9 + $0x358] sm:$0xff]
          %v8153 = vld [vmem:[#allocation9 + $0x360] sm:$0xff]
          %v8154 = vld [vmem:[#allocation9 + $0x368] sm:$0xff]
          %v8155 = vld [vmem:[#allocation9 + $0x370] sm:$0xff]
          %v8156 = vld [vmem:[#allocation9 + $0x378] sm:$0xff]
          %v8157 = vld [vmem:[#allocation9 + $0x380] sm:$0xff]
          %v8158 = vld [vmem:[#allocation9 + $0x388] sm:$0xff]
          %v8159 = vld [vmem:[#allocation9 + $0x390] sm:$0xff]
          %v8160 = vld [vmem:[#allocation9 + $0x398] sm:$0xff]
          %v8161 = vld [vmem:[#allocation9 + $0x3a0] sm:$0xff]
          %v8162 = vld [vmem:[#allocation9 + $0x3a8] sm:$0xff]
          %v8163 = vld [vmem:[#allocation9 + $0x3b0] sm:$0xff]
          %v8164 = vld [vmem:[#allocation9 + $0x3b8] sm:$0xff]
          %v8165 = vld [vmem:[#allocation9 + $0x3c0] sm:$0xff]
          %v8166 = vld [vmem:[#allocation9 + $0x3c8] sm:$0xff]
          %v8167 = vld [vmem:[#allocation9 + $0x3d0] sm:$0xff]
          %v8168 = vld [vmem:[#allocation9 + $0x3d8] sm:$0xff]
          %v8169 = vld [vmem:[#allocation9 + $0x3e0] sm:$0xff]
          %v8170 = vld [vmem:[#allocation9 + $0x3e8] sm:$0xff]
          %v8171 = vld [vmem:[#allocation9 + $0x3f0] sm:$0xff]
          %v8172 = vld [vmem:[#allocation9 + $0x3f8] sm:$0xff]
          %v8173 = vld [vmem:[#allocation11] sm:$0x3]
          %v8175 = vlaneseq
          %v8176 = vshrl.u32 %v8175, 7
          %v8177 = vsub.s32 0, %v8176
          %v8178 = vrot.slane %v8173, %v8177
          %v8179 = vlaneseq
          %v8180 = vshrl.u32 %v8179, 7
          %v8181 = vsub.s32 1, %v8180
          %v8182 = vrot.slane %v8173, %v8181
          %8185 = vmatprep.subr.mxu0 %v8046
          %8186 = vmatpush1.msra.mxu0 %v8045
          %8187 = vmatprep.subr.mxu0 %v8048
          %8188 = vmatpush1.msra.mxu0 %v8047
          %8189 = vmatprep.subr.mxu0 %v8050
          %8190 = vmatpush1.msra.mxu0 %v8049
          %8191 = vmatprep.subr.mxu0 %v8052
          %8192 = vmatpush1.msra.mxu0 %v8051
          %8193 = vmatprep.subr.mxu0 %v8054
          %8194 = vmatpush1.msra.mxu0 %v8053
          %8195 = vmatprep.subr.mxu0 %v8056
          %8196 = vmatpush1.msra.mxu0 %v8055
          %8197 = vmatprep.subr.mxu0 %v8058
          %8198 = vmatpush1.msra.mxu0 %v8057
          %8199 = vmatprep.subr.mxu0 %v8060
          %8200 = vmatpush1.msra.mxu0 %v8059
          %8201 = vmatprep.subr.mxu0 %v8062
          %8202 = vmatpush1.msra.mxu0 %v8061
          %8203 = vmatprep.subr.mxu0 %v8064
          %8204 = vmatpush1.msra.mxu0 %v8063
          %8205 = vmatprep.subr.mxu0 %v8066
          %8206 = vmatpush1.msra.mxu0 %v8065
          %8207 = vmatprep.subr.mxu0 %v8068
          %8208 = vmatpush1.msra.mxu0 %v8067
          %8209 = vmatprep.subr.mxu0 %v8070
          %8210 = vmatpush1.msra.mxu0 %v8069
          %8211 = vmatprep.subr.mxu0 %v8072
          %8212 = vmatpush1.msra.mxu0 %v8071
          %8213 = vmatprep.subr.mxu0 %v8074
          %8214 = vmatpush1.msra.mxu0 %v8073
          %8215 = vmatprep.subr.mxu0 %v8076
          %8216 = vmatpush1.msra.mxu0 %v8075
          %8217 = vmatprep.subr.mxu0 %v8078
          %8218 = vmatpush1.msra.mxu0 %v8077
          %8219 = vmatprep.subr.mxu0 %v8080
          %8220 = vmatpush1.msra.mxu0 %v8079
          %8221 = vmatprep.subr.mxu0 %v8082
          %8222 = vmatpush1.msra.mxu0 %v8081
          %8223 = vmatprep.subr.mxu0 %v8084
          %8224 = vmatpush1.msra.mxu0 %v8083
          %8225 = vmatprep.subr.mxu0 %v8086
          %8226 = vmatpush1.msra.mxu0 %v8085
          %8227 = vmatprep.subr.mxu0 %v8088
          %8228 = vmatpush1.msra.mxu0 %v8087
          %8229 = vmatprep.subr.mxu0 %v8090
          %8230 = vmatpush1.msra.mxu0 %v8089
          %8231 = vmatprep.subr.mxu0 %v8092
          %8232 = vmatpush1.msra.mxu0 %v8091
          %8233 = vmatprep.subr.mxu0 %v8094
          %8234 = vmatpush1.msra.mxu0 %v8093
          %8235 = vmatprep.subr.mxu0 %v8096
          %8236 = vmatpush1.msra.mxu0 %v8095
          %8237 = vmatprep.subr.mxu0 %v8098
          %8238 = vmatpush1.msra.mxu0 %v8097
          %8239 = vmatprep.subr.mxu0 %v8100
          %8240 = vmatpush1.msra.mxu0 %v8099
          %8241 = vmatprep.subr.mxu0 %v8102
          %8242 = vmatpush1.msra.mxu0 %v8101
          %8243 = vmatprep.subr.mxu0 %v8104
          %8244 = vmatpush1.msra.mxu0 %v8103
          %8245 = vmatprep.subr.mxu0 %v8106
          %8246 = vmatpush1.msra.mxu0 %v8105
          %8247 = vmatprep.subr.mxu0 %v8108
          %8248 = vmatpush1.msra.mxu0 %v8107
          %8249 = vmatprep.mubr.f32.mxu0 %v8042
          %8250 = vmatmul.mubr.f32.gmra.mrb[0].mxu0 %v8041
          %v8251 = vpop.f32.mrb[0].mxu0
          %v8252 = vadd.f32 %v8178, %v8251
          %v8253 = vpop.f32.mrb[0].mxu0
          %v8254 = vadd.f32 %v8182, %v8253
          %8255 = vdwg.mxu0
          %8256 = vmatprep.subr.mxu0 %v8110
          %8257 = vmatpush1.msra.mxu0 %v8109
          %8258 = vmatprep.subr.mxu0 %v8112
          %8259 = vmatpush1.msra.mxu0 %v8111
          %8260 = vmatprep.subr.mxu0 %v8114
          %8261 = vmatpush1.msra.mxu0 %v8113
          %8262 = vmatprep.subr.mxu0 %v8116
          %8263 = vmatpush1.msra.mxu0 %v8115
          %8264 = vmatprep.subr.mxu0 %v8118
          %8265 = vmatpush1.msra.mxu0 %v8117
          %8266 = vmatprep.subr.mxu0 %v8120
          %8267 = vmatpush1.msra.mxu0 %v8119
          %8268 = vmatprep.subr.mxu0 %v8122
          %8269 = vmatpush1.msra.mxu0 %v8121
          %8270 = vmatprep.subr.mxu0 %v8124
          %8271 = vmatpush1.msra.mxu0 %v8123
          %8272 = vmatprep.subr.mxu0 %v8126
          %8273 = vmatpush1.msra.mxu0 %v8125
          %8274 = vmatprep.subr.mxu0 %v8128
          %8275 = vmatpush1.msra.mxu0 %v8127
          %8276 = vmatprep.subr.mxu0 %v8130
          %8277 = vmatpush1.msra.mxu0 %v8129
          %8278 = vmatprep.subr.mxu0 %v8132
          %8279 = vmatpush1.msra.mxu0 %v8131
          %8280 = vmatprep.subr.mxu0 %v8134
          %8281 = vmatpush1.msra.mxu0 %v8133
          %8282 = vmatprep.subr.mxu0 %v8136
          %8283 = vmatpush1.msra.mxu0 %v8135
          %8284 = vmatprep.subr.mxu0 %v8138
          %8285 = vmatpush1.msra.mxu0 %v8137
          %8286 = vmatprep.subr.mxu0 %v8140
          %8287 = vmatpush1.msra.mxu0 %v8139
          %8288 = vmatprep.subr.mxu0 %v8142
          %8289 = vmatpush1.msra.mxu0 %v8141
          %8290 = vmatprep.subr.mxu0 %v8144
          %8291 = vmatpush1.msra.mxu0 %v8143
          %8292 = vmatprep.subr.mxu0 %v8146
          %8293 = vmatpush1.msra.mxu0 %v8145
          %8294 = vmatprep.subr.mxu0 %v8148
          %8295 = vmatpush1.msra.mxu0 %v8147
          %8296 = vmatprep.subr.mxu0 %v8150
          %8297 = vmatpush1.msra.mxu0 %v8149
          %8298 = vmatprep.subr.mxu0 %v8152
          %8299 = vmatpush1.msra.mxu0 %v8151
          %8300 = vmatprep.subr.mxu0 %v8154
          %8301 = vmatpush1.msra.mxu0 %v8153
          %8302 = vmatprep.subr.mxu0 %v8156
          %8303 = vmatpush1.msra.mxu0 %v8155
          %8304 = vmatprep.subr.mxu0 %v8158
          %8305 = vmatpush1.msra.mxu0 %v8157
          %8306 = vmatprep.subr.mxu0 %v8160
          %8307 = vmatpush1.msra.mxu0 %v8159
          %8308 = vmatprep.subr.mxu0 %v8162
          %8309 = vmatpush1.msra.mxu0 %v8161
          %8310 = vmatprep.subr.mxu0 %v8164
          %8311 = vmatpush1.msra.mxu0 %v8163
          %8312 = vmatprep.subr.mxu0 %v8166
          %8313 = vmatpush1.msra.mxu0 %v8165
          %8314 = vmatprep.subr.mxu0 %v8168
          %8315 = vmatpush1.msra.mxu0 %v8167
          %8316 = vmatprep.subr.mxu0 %v8170
          %8317 = vmatpush1.msra.mxu0 %v8169
          %8318 = vmatprep.subr.mxu0 %v8172
          %8319 = vmatpush1.msra.mxu0 %v8171
          %8320 = vmatprep.mubr.f32.mxu0 %v8044
          %8321 = vmatmul.mubr.f32.gmra.mrb[0].mxu0 %v8043
          %v8322 = vpop.f32.mrb[0].mxu0
          %v8323 = vadd.f32 %v8252, %v8322
          %v8324 = vpop.f32.mrb[0].mxu0
          %v8325 = vadd.f32 %v8254, %v8324
          %8326 = vdwg.mxu0
          %vm8327 = vcmp.gt.f32.partialorder %v8323, 0.0
          %vm8328 = vcmp.gt.f32.partialorder %v8325, 0.0
          %v8329 = vmul.f32 %v8323, 0.2
          %v8330 = vmul.f32 %v8325, 0.2
          %v8331 = vsel %vm8327, %v8323, %v8329
          %v8332 = vsel %vm8328, %v8325, %v8330
          %v8333 = vld [vmem:[%s5] sm:$0xff]
          %v8334 = vld [vmem:[%s5 + $0x8] sm:$0xff]
          %v8335 = vld [vmem:[%s5 + $0x10] sm:$0xff]
          %v8336 = vld [vmem:[%s5 + $0x18] sm:$0xff]
          %v8337 = vld [vmem:[%s5 + $0x20] sm:$0xff]
          %v8338 = vld [vmem:[%s5 + $0x28] sm:$0xff]
          %v8339 = vld [vmem:[%s5 + $0x30] sm:$0xff]
          %v8340 = vld [vmem:[%s5 + $0x38] sm:$0xff]
          %v8341 = vld [vmem:[%s5 + $0x40] sm:$0xff]
          %v8342 = vld [vmem:[%s5 + $0x48] sm:$0xff]
          %v8343 = vld [vmem:[%s5 + $0x50] sm:$0xff]
          %v8344 = vld [vmem:[%s5 + $0x58] sm:$0xff]
          %v8345 = vld [vmem:[%s5 + $0x60] sm:$0xff]
          %v8346 = vld [vmem:[%s5 + $0x68] sm:$0xff]
          %v8347 = vld [vmem:[%s5 + $0x70] sm:$0xff]
          %v8348 = vld [vmem:[%s5 + $0x78] sm:$0xff]
          %v8349 = vld [vmem:[%s5 + $0x80] sm:$0xff]
          %v8350 = vld [vmem:[%s5 + $0x88] sm:$0xff]
          %v8351 = vld [vmem:[%s5 + $0x90] sm:$0xff]
          %v8352 = vld [vmem:[%s5 + $0x98] sm:$0xff]
          %v8353 = vld [vmem:[%s5 + $0xa0] sm:$0xff]
          %v8354 = vld [vmem:[%s5 + $0xa8] sm:$0xff]
          %v8355 = vld [vmem:[%s5 + $0xb0] sm:$0xff]
          %v8356 = vld [vmem:[%s5 + $0xb8] sm:$0xff]
          %v8357 = vld [vmem:[%s5 + $0xc0] sm:$0xff]
          %v8358 = vld [vmem:[%s5 + $0xc8] sm:$0xff]
          %v8359 = vld [vmem:[%s5 + $0xd0] sm:$0xff]
          %v8360 = vld [vmem:[%s5 + $0xd8] sm:$0xff]
          %v8361 = vld [vmem:[%s5 + $0xe0] sm:$0xff]
          %v8362 = vld [vmem:[%s5 + $0xe8] sm:$0xff]
          %v8363 = vld [vmem:[%s5 + $0xf0] sm:$0xff]
          %v8364 = vld [vmem:[%s5 + $0xf8] sm:$0xff]
          %v8365 = vld [vmem:[#allocation3] sm:$0x1]
          %v8367 = vlaneseq
          %v8368 = vshrl.u32 %v8367, 7
          %v8369 = vsub.s32 0, %v8368
          %v8370 = vrot.slane %v8365, %v8369
          %8372 = vmatprep.subr.mxu0 0.0
          %8373 = vmatpush1.msra.mxu0 %v8333
          %8374 = vmatprep.subr.mxu0 0.0
          %8375 = vmatpush1.msra.mxu0 %v8334
          %8376 = vmatprep.subr.mxu0 0.0
          %8377 = vmatpush1.msra.mxu0 %v8335
          %8378 = vmatprep.subr.mxu0 0.0
          %8379 = vmatpush1.msra.mxu0 %v8336
          %8380 = vmatprep.subr.mxu0 0.0
          %8381 = vmatpush1.msra.mxu0 %v8337
          %8382 = vmatprep.subr.mxu0 0.0
          %8383 = vmatpush1.msra.mxu0 %v8338
          %8384 = vmatprep.subr.mxu0 0.0
          %8385 = vmatpush1.msra.mxu0 %v8339
          %8386 = vmatprep.subr.mxu0 0.0
          %8387 = vmatpush1.msra.mxu0 %v8340
          %8388 = vmatprep.subr.mxu0 0.0
          %8389 = vmatpush1.msra.mxu0 %v8341
          %8390 = vmatprep.subr.mxu0 0.0
          %8391 = vmatpush1.msra.mxu0 %v8342
          %8392 = vmatprep.subr.mxu0 0.0
          %8393 = vmatpush1.msra.mxu0 %v8343
          %8394 = vmatprep.subr.mxu0 0.0
          %8395 = vmatpush1.msra.mxu0 %v8344
          %8396 = vmatprep.subr.mxu0 0.0
          %8397 = vmatpush1.msra.mxu0 %v8345
          %8398 = vmatprep.subr.mxu0 0.0
          %8399 = vmatpush1.msra.mxu0 %v8346
          %8400 = vmatprep.subr.mxu0 0.0
          %8401 = vmatpush1.msra.mxu0 %v8347
          %8402 = vmatprep.subr.mxu0 0.0
          %8403 = vmatpush1.msra.mxu0 %v8348
          %8404 = vmatprep.subr.mxu0 0.0
          %8405 = vmatpush1.msra.mxu0 %v8349
          %8406 = vmatprep.subr.mxu0 0.0
          %8407 = vmatpush1.msra.mxu0 %v8350
          %8408 = vmatprep.subr.mxu0 0.0
          %8409 = vmatpush1.msra.mxu0 %v8351
          %8410 = vmatprep.subr.mxu0 0.0
          %8411 = vmatpush1.msra.mxu0 %v8352
          %8412 = vmatprep.subr.mxu0 0.0
          %8413 = vmatpush1.msra.mxu0 %v8353
          %8414 = vmatprep.subr.mxu0 0.0
          %8415 = vmatpush1.msra.mxu0 %v8354
          %8416 = vmatprep.subr.mxu0 0.0
          %8417 = vmatpush1.msra.mxu0 %v8355
          %8418 = vmatprep.subr.mxu0 0.0
          %8419 = vmatpush1.msra.mxu0 %v8356
          %8420 = vmatprep.subr.mxu0 0.0
          %8421 = vmatpush1.msra.mxu0 %v8357
          %8422 = vmatprep.subr.mxu0 0.0
          %8423 = vmatpush1.msra.mxu0 %v8358
          %8424 = vmatprep.subr.mxu0 0.0
          %8425 = vmatpush1.msra.mxu0 %v8359
          %8426 = vmatprep.subr.mxu0 0.0
          %8427 = vmatpush1.msra.mxu0 %v8360
          %8428 = vmatprep.subr.mxu0 0.0
          %8429 = vmatpush1.msra.mxu0 %v8361
          %8430 = vmatprep.subr.mxu0 0.0
          %8431 = vmatpush1.msra.mxu0 %v8362
          %8432 = vmatprep.subr.mxu0 0.0
          %8433 = vmatpush1.msra.mxu0 %v8363
          %8434 = vmatprep.subr.mxu0 0.0
          %8435 = vmatpush1.msra.mxu0 %v8364
          %8436 = vmatprep.mubr.f32.mxu0 %v8332
          %8437 = vmatmul.mubr.f32.gmra.mrb[0].mxu0 %v8331
          %v8438 = vpop.f32.mrb[0].mxu0
          %v8439 = vadd.f32 %v8370, %v8438
          %v8440 = vpop.f32.mrb[0].mxu0
          %8441 = vdwg.mxu0
          %v8442 = vxor.u32 %v8439, 2147483648
          %v8443 = vmul.f32 %v8442, 1.442695
          %v8444 = vpow.pop %v8443
          %v8445 = vadd.f32 %v8444, 1.0
          %v8446 = vrcp.pop %v8445
          %v8447 = vmul.f32 1.0, %v8446
          %vm8448 = vcmask 7168
          %8449 = vst.msk [vmem:[%s394] sm:$0xff] %vm8448, %v8447
        $region76: #{tpu_custom_call.1} parent=47 // pred_fallthru
          _
        %p8450 = scmp.lt.s32.totalorder %s31, 0
        %s8451 = scalar_select %p8450, %s31, 0
        %s8452 = smul.addr %s8451, 8
        %s8453 = scalar_lea.vmem %s7, %s8452
        // Predicated region
        $region77: #{tpu_custom_call.1} parent=47 // pred_check
          %p8454 = pneg %p216
        $region78: #{tpu_custom_call.1} parent=47 // pred_check_branch
          %8456 = sbr.rel (%p8454) target = $region80
        $region79: #{tpu_custom_call.1} parent=47 // pred_region
          _
        $region80: #{tpu_custom_call.1} parent=47 // pred_fallthru
          _
        // Predicated region
        $region81: #{tpu_custom_call.1} parent=47 // pred_check
          %p8457 = pneg %p216
        $region82: #{tpu_custom_call.1} parent=47 // pred_check_branch
          %8459 = sbr.rel (%p8457) target = $region84
        $region83: #{tpu_custom_call.1} parent=47 // pred_region
          %p8460 = scmp.lt.s32.totalorder %s31, 0
          %s8461 = scalar_select %p8460, %s31, 0
          %s8462 = smul.addr %s8461, 8
          %s8463 = scalar_lea.vmem %s7, %s8462
        $region84: #{tpu_custom_call.1} parent=47 // pred_fallthru
          _
      $region48: #{tpu_custom_call.1} parent=5 // pred_fallthru
        _
      %p8464 = scmp.le.s32.totalorder 2, %s22
      // Predicated region
      $region85: #{tpu_custom_call.1} parent=5 // pred_check
        %p8465 = pneg %p8464
      $region86: #{tpu_custom_call.1} parent=5 // pred_check_branch
        %8467 = sbr.rel (%p8465) target = $region88
      $region87: #{tpu_custom_call.1} parent=5 // pred_region
        %s8468 = ssub.s32 %s22, 2
      $region88: #{tpu_custom_call.1} parent=5 // pred_fallthru
        _
    $region6: #{tpu_custom_call.1} parent=1 // loop_footer
      %s26 = sadd.s32 1, %s22
    $region7: #{tpu_custom_call.1} parent=1 // loop_footer_branch
      %21 = sbr.rel target = $region3
    $region8: #{tpu_custom_call.1} parent=1 // loop_exit
      _
    %8469 = vsyncpa [#allocation5], 1
    %s8470 = scalar_lea.sflag [#allocation5], 1
    %8471 = vsyncpa %s8470, 1
    %8472 = vsyncpa [#allocation7], 1
    %s8473 = scalar_lea.sflag [#allocation7], 1
    %8474 = vsyncpa %s8473, 1
    %8475 = vsyncpa [#allocation10], 1

</llo_original>
